<compile_context>
chip_gen: v5e
topology: v5e:2x2
jax: 0.10.0
libtpu: 0.0.40
codegen_flags: <defaults>
</compile_context>

<pallas_src>
import functools

import jax
import jax.numpy as jnp
from jax.experimental import pallas as pl
from jax.experimental.pallas import tpu as pltpu


def _round_up(n, m):
    return -(-n // m) * m


@functools.lru_cache(maxsize=1)
def _tpu_vmem_and_cores():
    """Best-effort (VMEM capacity bytes, TensorCores per chip) with safe fallbacks."""
    vmem_cap = 64 * 1024 * 1024          # conservative fallback: v7x physical VMEM
    cores = 1
    try:
        info = pltpu.get_tpu_info()
        v = getattr(info, "vmem_capacity_bytes", None)
        if isinstance(v, int) and v > 0:
            vmem_cap = int(v)
        for name in ("num_tensorcores", "tensorcore_count", "num_cores",
                     "cores_per_chip", "core_count"):
            c = getattr(info, name, None)
            if isinstance(c, int) and 0 < c <= 8:
                cores = int(c)
                break
    except Exception:
        pass
    if cores == 1:
        try:
            kind = jax.devices()[0].device_kind.lower()
            # Dual-TensorCore / megacore chips.
            if ("v4" in kind) or ("v5p" in kind) or ("7" in kind):
                cores = 2
        except Exception:
            pass
    return vmem_cap, cores


def _lstm_recurrence_kernel(xw_ref, whh_ref, out_ref, h_ref, c_ref, *,
                            hidden, time_block):
    """One (batch_block, time_block) tile of the LSTM recurrence.

    Grid = (batch_blocks ["parallel"], seq_blocks ["arbitrary"]).
      xw_ref : (bb, TB, 4H) bf16  precomputed x @ W_ih^T + b_ih + b_hh
      whh_ref: (H, 4H)      bf16  W_hh^T, resident (single-buffered)
      out_ref: (bb, TB, H)  f32   hidden states, batch-major (no transpose later)
      h_ref, c_ref: (bb, H) f32   recurrent state carried across seq blocks
    """
    H = hidden

    @pl.when(pl.program_id(1) == 0)
    def _():
        h_ref[...] = jnp.zeros_like(h_ref)
        c_ref[...] = jnp.zeros_like(c_ref)

    w = whh_ref[...]          # bf16 (H, 4H), stays resident in VMEM
    h = h_ref[...]            # f32 state
    c = c_ref[...]

    # Static, fully-unrolled time loop: all slice/store indices are static,
    # letting the scheduler overlap gate math / stores with the next step's
    # MXU weight streaming.
    for t in range(time_block):
        gates = jnp.dot(h.astype(jnp.bfloat16), w,
                        preferred_element_type=jnp.float32)
        gates = gates + xw_ref[:, t, :].astype(jnp.float32)
        i_g = jax.nn.sigmoid(gates[:, 0 * H:1 * H])
        f_g = jax.nn.sigmoid(gates[:, 1 * H:2 * H])
        g_g = jnp.tanh(gates[:, 2 * H:3 * H])
        o_g = jax.nn.sigmoid(gates[:, 3 * H:4 * H])
        c = f_g * c + i_g * g_g
        h = o_g * jnp.tanh(c)
        out_ref[:, t, :] = h              # static sublane index, lane-dense H

    h_ref[...] = h
    c_ref[...] = c


@functools.partial(jax.jit, static_argnames=("time_block",))
def lstm_branch_forward(ip_matrix, w_ih, w_hh, b_ih, b_hh, *, time_block=16):
    """LSTMBranch.forward: ip_matrix (batch, seq, ip_size) -> x1 (batch, seq, hidden)."""
    B, S, I = ip_matrix.shape
    H = w_hh.shape[1]                     # w_hh is (4H, H)
    G = 4 * H
    if H % 128 != 0:
        # TODO(synk): support hidden sizes that are not a multiple of 128 (lane
        # width) via per-gate padding.
        raise ValueError(f"hidden size must be a multiple of 128, got {H}")
    if time_block % 8 != 0:
        raise ValueError("time_block must be a multiple of 8")
    TB = time_block

    vmem_cap, num_tc = _tpu_vmem_and_cores()

    # ---- padding & tile selection from the per-core VMEM budget -------------
    sub = 16                               # bf16 sublane packing (16, 128)
    if num_tc >= 2:
        Bp = _round_up(max(B, 2 * sub), 2 * sub)   # >=2 blocks on the parallel axis
    else:
        Bp = _round_up(max(B, sub), sub)
    Sp = _round_up(S, TB)

    # Per-core resident set:
    #   xw blocks (x2 double-buffered, bf16) + out blocks (x2, f32)
    #   + W_hh^T (x1, bf16, Buffered(1)) + h/c scratch + in-kernel temporaries.
    fixed_bytes = H * G * 2 + (4 << 20)            # weights + Mosaic scratch headroom
    per_row_bytes = (2 * TB * G * 2          # xw
                     + 2 * TB * H * 4        # out
                     + 2 * H * 4             # h, c
                     + 24 * H * 4)           # gates + gate/cell temporaries
    budget = int(vmem_cap * 0.85)
    max_rows = max((budget - fixed_bytes) // per_row_bytes, 16)

    bb = Bp // 2 if (num_tc >= 2 and Bp >= 2 * sub) else Bp
    bb = min(bb, 256, int(max_rows))
    bb = max((bb // sub) * sub, sub)
    while Bp % bb:                          # bb must divide Bp (terminates at 16)
        bb -= sub
    grid = (Bp // bb, Sp // TB)

    vmem_need = fixed_bytes + per_row_bytes * bb
    vmem_limit = int(min(vmem_cap, max(vmem_need + (8 << 20), 32 << 20)))

    # ---- hoisted input projection: one big MXU matmul, bf16 operands, f32 acc,
    #      bias folded in, stored bf16 (halves the dominant HBM stream). --------
    x = jnp.pad(ip_matrix.astype(jnp.bfloat16), ((0, Bp - B), (0, Sp - S), (0, 0)))
    bias = (b_ih + b_hh).astype(jnp.float32)
    xw = jnp.einsum("bsi,gi->bsg", x, w_ih.astype(jnp.bfloat16),
                    preferred_element_type=jnp.float32) + bias
    xw = xw.astype(jnp.bfloat16)                         # (Bp, Sp, 4H)
    whh_t = jnp.transpose(w_hh).astype(jnp.bfloat16)     # (H, 4H)

    try:
        # Constant across the grid -> single-buffer it (halves its VMEM).
        whh_spec = pl.BlockSpec((H, G), lambda b, s: (0, 0),
                                pipeline_mode=pl.Buffered(1))
    except Exception:
        whh_spec = pl.BlockSpec((H, G), lambda b, s: (0, 0))

    flops = 2 * Sp * Bp * H * G + 10 * Sp * Bp * H
    transcendentals = 5 * Sp * Bp * H
    bytes_accessed = Sp * Bp * G * 2 + Sp * Bp * H * 4 + H * G * 2

    kernel = functools.partial(_lstm_recurrence_kernel, hidden=H, time_block=TB)

    out = pl.pallas_call(
        kernel,
        out_shape=jax.ShapeDtypeStruct((Bp, Sp, H), jnp.float32),
        grid_spec=pltpu.PrefetchScalarGridSpec(
            num_scalar_prefetch=0,
            grid=grid,
            in_specs=[
                pl.BlockSpec((bb, TB, G), lambda b, s: (b, s, 0)),   # xw tile
                whh_spec,                                            # W_hh^T resident
            ],
            out_specs=pl.BlockSpec((bb, TB, H), lambda b, s: (b, s, 0)),
            scratch_shapes=[
                pltpu.VMEM((bb, H), jnp.float32),    # h state
                pltpu.VMEM((bb, H), jnp.float32),    # c state
            ],
        ),
        compiler_params=pltpu.CompilerParams(
            dimension_semantics=("parallel", "arbitrary"),
            vmem_limit_bytes=vmem_limit,
        ),
        cost_estimate=pl.CostEstimate(
            flops=int(flops),
            transcendentals=int(transcendentals),
            bytes_accessed=int(bytes_accessed),
        ),
    )(xw, whh_t)

    # Output is already batch-major (x1 = op.permute(1,0,2)); just drop padding.
    return out[:B, :S, :]


def _reference_lstm(ip_matrix, w_ih, w_hh, b_ih, b_hh):
    """Pure-JAX f32 reference (PyTorch nn.LSTM semantics, lax.scan over time)."""
    B, S, _ = ip_matrix.shape
    H = w_hh.shape[1]
    x_sbi = jnp.transpose(ip_matrix, (1, 0, 2)).astype(jnp.float32)
    bias = (b_ih + b_hh).astype(jnp.float32)

    def step(carry, x_t):
        h, c = carry
        gates = x_t @ w_ih.T + h @ w_hh.T + bias
        i_g = jax.nn.sigmoid(gates[:, 0 * H:1 * H])
        f_g = jax.nn.sigmoid(gates[:, 1 * H:2 * H])
        g_g = jnp.tanh(gates[:, 2 * H:3 * H])
        o_g = jax.nn.sigmoid(gates[:, 3 * H:4 * H])
        c = f_g * c + i_g * g_g
        h = o_g * jnp.tanh(c)
        return (h, c), h

    h0 = jnp.zeros((B, H), jnp.float32)
    c0 = jnp.zeros((B, H), jnp.float32)
    _, out = jax.lax.scan(step, (h0, c0), x_sbi)
    return jnp.transpose(out, (1, 0, 2))


if __name__ == "__main__":
    # Small shapes consistent with the module (ip_size -> op_size hidden).
    B, S, I, H = 2, 8, 32, 128

    key = jax.random.PRNGKey(0)
    k_x, k_wih, k_whh, k_bih, k_bhh = jax.random.split(key, 5)

    bound = 1.0 / float(jnp.sqrt(jnp.float32(H)))   # PyTorch nn.LSTM init range
    ip_matrix = jax.random.normal(k_x, (B, S, I), dtype=jnp.float32)
    w_ih = jax.random.uniform(k_wih, (4 * H, I), minval=-bound, maxval=bound, dtype=jnp.float32)
    w_hh = jax.random.uniform(k_whh, (4 * H, H), minval=-bound, maxval=bound, dtype=jnp.float32)
    b_ih = jax.random.uniform(k_bih, (4 * H,), minval=-bound, maxval=bound, dtype=jnp.float32)
    b_hh = jax.random.uniform(k_bhh, (4 * H,), minval=-bound, maxval=bound, dtype=jnp.float32)

    x1 = lstm_branch_forward(ip_matrix, w_ih, w_hh, b_ih, b_hh)
    jax.block_until_ready(x1)

    ref = _reference_lstm(ip_matrix, w_ih, w_hh, b_ih, b_hh)
    assert x1.shape == (B, S, H)
    max_err = float(jnp.max(jnp.abs(x1 - ref)))
    # bf16 matmul operands (f32 accumulate) -> loose-but-tight-enough tolerance.
    assert max_err < 2e-2, f"Pallas LSTM mismatch vs reference (max abs err {max_err})"

    print("KERNEL_OK")
</pallas_src>

<mosaic_0001>
module attributes {stable_mosaic.version = 11 : i64} {
  func.func @_lstm_recurrence_kernel(%arg0: i32, %arg1: i32, %arg2: memref<16x16x512xbf16, #tpu.memory_space<vmem>>, %arg3: memref<128x512xbf16, #tpu.memory_space<vmem>>, %arg4: memref<16x16x128xf32, #tpu.memory_space<vmem>>, %arg5: memref<16x128xf32, #tpu.memory_space<vmem>>, %arg6: memref<16x128xf32, #tpu.memory_space<vmem>>) attributes {dimension_semantics = [#tpu.dimension_semantics<parallel>, #tpu.dimension_semantics<arbitrary>], iteration_bounds = array<i64: 1, 1>, scalar_prefetch = 0 : i64, scratch_operands = 2 : i64, tpu.core_type = #tpu.core_type<tc>, window_params = [{transform_indices = @transform_0, window_bounds = array<i64: 16, 16, 512>}, {pipeline_mode = #tpu.pipeline_mode<synchronous>, transform_indices = @transform_1, window_bounds = array<i64: 128, 512>}, {transform_indices = @transform_2, window_bounds = array<i64: 16, 16, 128>}]} {
    %c0_i32 = arith.constant 0 : i32
    %0 = arith.cmpi eq, %arg1, %c0_i32 : i32
    %1 = arith.extui %0 : i1 to i32
    %c0_i32_0 = arith.constant 0 : i32
    %2 = arith.cmpi ne, %1, %c0_i32_0 : i32
    scf.if %2 {
      %cst_154 = arith.constant 0.000000e+00 : f32
      %552 = vector.broadcast %cst_154 : f32 to vector<16x128xf32>
      %c0_155 = arith.constant 0 : index
      %c0_156 = arith.constant 0 : index
      %553 = vector.load %arg5[%c0_155, %c0_156] : memref<16x128xf32, #tpu.memory_space<vmem>>, vector<16x128xf32>
      tpu.vector_store %arg5[%c0_155, %c0_156], %552 {strides = array<i32>} : memref<16x128xf32, #tpu.memory_space<vmem>>, vector<16x128xf32>,
      %cst_157 = arith.constant 0.000000e+00 : f32
      %554 = vector.broadcast %cst_157 : f32 to vector<16x128xf32>
      %c0_158 = arith.constant 0 : index
      %c0_159 = arith.constant 0 : index
      %555 = vector.load %arg6[%c0_158, %c0_159] : memref<16x128xf32, #tpu.memory_space<vmem>>, vector<16x128xf32>
      tpu.vector_store %arg6[%c0_158, %c0_159], %554 {strides = array<i32>} : memref<16x128xf32, #tpu.memory_space<vmem>>, vector<16x128xf32>,
    } else {
    }
    %c0 = arith.constant 0 : index
    %c0_1 = arith.constant 0 : index
    %3 = vector.load %arg3[%c0, %c0_1] : memref<128x512xbf16, #tpu.memory_space<vmem>>, vector<128x512xbf16>
    %c0_2 = arith.constant 0 : index
    %c0_3 = arith.constant 0 : index
    %4 = vector.load %arg5[%c0_2, %c0_3] : memref<16x128xf32, #tpu.memory_space<vmem>>, vector<16x128xf32>
    %c0_4 = arith.constant 0 : index
    %c0_5 = arith.constant 0 : index
    %5 = vector.load %arg6[%c0_4, %c0_5] : memref<16x128xf32, #tpu.memory_space<vmem>>, vector<16x128xf32>
    %6 = arith.truncf %4 : vector<16x128xf32> to vector<16x128xbf16>
    %cst = arith.constant dense<0.000000e+00> : vector<16x512xf32>
    %7 = tpu.matmul %6, %3, %cst {dimension_numbers = #tpu.dot_dimension_numbers<[1], [0], [0], [1], [0, 0, 1, 1], [], []>} : vector<16x128xbf16>, vector<128x512xbf16>, vector<16x512xf32> -> vector<16x512xf32>
    %c0_6 = arith.constant 0 : index
    %c0_7 = arith.constant 0 : index
    %c0_8 = arith.constant 0 : index
    %8 = vector.load %arg2[%c0_6, %c0_7, %c0_8] : memref<16x16x512xbf16, #tpu.memory_space<vmem>>, vector<16x1x512xbf16>
    %9 = vector.shape_cast %8 : vector<16x1x512xbf16> to vector<16x512xbf16>
    %10 = arith.extf %9 : vector<16x512xbf16> to vector<16x512xf32>
    %11 = arith.addf %7, %10 : vector<16x512xf32>
    %12 = vector.extract_strided_slice %11 {offsets = [0, 0], sizes = [16, 128], strides = [1, 1]} : vector<16x512xf32> to vector<16x128xf32>
    %13 = arith.negf %12 : vector<16x128xf32>
    %14 = math.exp %13 : vector<16x128xf32>
    %cst_9 = arith.constant 1.000000e+00 : f32
    %15 = vector.broadcast %cst_9 : f32 to vector<16x128xf32>
    %16 = arith.addf %15, %14 : vector<16x128xf32>
    %17 = arith.divf %15, %16 : vector<16x128xf32>
    %18 = vector.extract_strided_slice %11 {offsets = [0, 128], sizes = [16, 128], strides = [1, 1]} : vector<16x512xf32> to vector<16x128xf32>
    %19 = arith.negf %18 : vector<16x128xf32>
    %20 = math.exp %19 : vector<16x128xf32>
    %cst_10 = arith.constant 1.000000e+00 : f32
    %21 = vector.broadcast %cst_10 : f32 to vector<16x128xf32>
    %22 = arith.addf %21, %20 : vector<16x128xf32>
    %23 = arith.divf %21, %22 : vector<16x128xf32>
    %24 = vector.extract_strided_slice %11 {offsets = [0, 256], sizes = [16, 128], strides = [1, 1]} : vector<16x512xf32> to vector<16x128xf32>
    %25 = math.tanh %24 : vector<16x128xf32>
    %26 = vector.extract_strided_slice %11 {offsets = [0, 384], sizes = [16, 128], strides = [1, 1]} : vector<16x512xf32> to vector<16x128xf32>
    %27 = arith.negf %26 : vector<16x128xf32>
    %28 = math.exp %27 : vector<16x128xf32>
    %cst_11 = arith.constant 1.000000e+00 : f32
    %29 = vector.broadcast %cst_11 : f32 to vector<16x128xf32>
    %30 = arith.addf %29, %28 : vector<16x128xf32>
    %31 = arith.divf %29, %30 : vector<16x128xf32>
    %32 = arith.mulf %23, %5 : vector<16x128xf32>
    %33 = arith.mulf %17, %25 : vector<16x128xf32>
    %34 = arith.addf %32, %33 : vector<16x128xf32>
    %35 = math.tanh %34 : vector<16x128xf32>
    %36 = arith.mulf %31, %35 : vector<16x128xf32>
    %c0_12 = arith.constant 0 : index
    %c0_13 = arith.constant 0 : index
    %c0_14 = arith.constant 0 : index
    %37 = vector.load %arg4[%c0_12, %c0_13, %c0_14] : memref<16x16x128xf32, #tpu.memory_space<vmem>>, vector<16x1x128xf32>
    %38 = vector.shape_cast %37 : vector<16x1x128xf32> to vector<16x128xf32>
    %39 = vector.shape_cast %36 : vector<16x128xf32> to vector<16x1x128xf32>
    tpu.vector_store %arg4[%c0_12, %c0_13, %c0_14], %39 {strides = array<i32>} : memref<16x16x128xf32, #tpu.memory_space<vmem>>, vector<16x1x128xf32>,
    %40 = arith.truncf %36 : vector<16x128xf32> to vector<16x128xbf16>
    %cst_15 = arith.constant dense<0.000000e+00> : vector<16x512xf32>
    %41 = tpu.matmul %40, %3, %cst_15 {dimension_numbers = #tpu.dot_dimension_numbers<[1], [0], [0], [1], [0, 0, 1, 1], [], []>} : vector<16x128xbf16>, vector<128x512xbf16>, vector<16x512xf32> -> vector<16x512xf32>
    %c0_16 = arith.constant 0 : index
    %c1 = arith.constant 1 : index
    %c0_17 = arith.constant 0 : index
    %42 = vector.load %arg2[%c0_16, %c1, %c0_17] : memref<16x16x512xbf16, #tpu.memory_space<vmem>>, vector<16x1x512xbf16>
    %43 = vector.shape_cast %42 : vector<16x1x512xbf16> to vector<16x512xbf16>
    %44 = arith.extf %43 : vector<16x512xbf16> to vector<16x512xf32>
    %45 = arith.addf %41, %44 : vector<16x512xf32>
    %46 = vector.extract_strided_slice %45 {offsets = [0, 0], sizes = [16, 128], strides = [1, 1]} : vector<16x512xf32> to vector<16x128xf32>
    %47 = arith.negf %46 : vector<16x128xf32>
    %48 = math.exp %47 : vector<16x128xf32>
    %cst_18 = arith.constant 1.000000e+00 : f32
    %49 = vector.broadcast %cst_18 : f32 to vector<16x128xf32>
    %50 = arith.addf %49, %48 : vector<16x128xf32>
    %51 = arith.divf %49, %50 : vector<16x128xf32>
    %52 = vector.extract_strided_slice %45 {offsets = [0, 128], sizes = [16, 128], strides = [1, 1]} : vector<16x512xf32> to vector<16x128xf32>
    %53 = arith.negf %52 : vector<16x128xf32>
    %54 = math.exp %53 : vector<16x128xf32>
    %cst_19 = arith.constant 1.000000e+00 : f32
    %55 = vector.broadcast %cst_19 : f32 to vector<16x128xf32>
    %56 = arith.addf %55, %54 : vector<16x128xf32>
    %57 = arith.divf %55, %56 : vector<16x128xf32>
    %58 = vector.extract_strided_slice %45 {offsets = [0, 256], sizes = [16, 128], strides = [1, 1]} : vector<16x512xf32> to vector<16x128xf32>
    %59 = math.tanh %58 : vector<16x128xf32>
    %60 = vector.extract_strided_slice %45 {offsets = [0, 384], sizes = [16, 128], strides = [1, 1]} : vector<16x512xf32> to vector<16x128xf32>
    %61 = arith.negf %60 : vector<16x128xf32>
    %62 = math.exp %61 : vector<16x128xf32>
    %cst_20 = arith.constant 1.000000e+00 : f32
    %63 = vector.broadcast %cst_20 : f32 to vector<16x128xf32>
    %64 = arith.addf %63, %62 : vector<16x128xf32>
    %65 = arith.divf %63, %64 : vector<16x128xf32>
    %66 = arith.mulf %57, %34 : vector<16x128xf32>
    %67 = arith.mulf %51, %59 : vector<16x128xf32>
    %68 = arith.addf %66, %67 : vector<16x128xf32>
    %69 = math.tanh %68 : vector<16x128xf32>
    %70 = arith.mulf %65, %69 : vector<16x128xf32>
    %c0_21 = arith.constant 0 : index
    %c1_22 = arith.constant 1 : index
    %c0_23 = arith.constant 0 : index
    %71 = vector.load %arg4[%c0_21, %c1_22, %c0_23] : memref<16x16x128xf32, #tpu.memory_space<vmem>>, vector<16x1x128xf32>
    %72 = vector.shape_cast %71 : vector<16x1x128xf32> to vector<16x128xf32>
    %73 = vector.shape_cast %70 : vector<16x128xf32> to vector<16x1x128xf32>
    tpu.vector_store %arg4[%c0_21, %c1_22, %c0_23], %73 {strides = array<i32>} : memref<16x16x128xf32, #tpu.memory_space<vmem>>, vector<16x1x128xf32>,
    %74 = arith.truncf %70 : vector<16x128xf32> to vector<16x128xbf16>
    %cst_24 = arith.constant dense<0.000000e+00> : vector<16x512xf32>
    %75 = tpu.matmul %74, %3, %cst_24 {dimension_numbers = #tpu.dot_dimension_numbers<[1], [0], [0], [1], [0, 0, 1, 1], [], []>} : vector<16x128xbf16>, vector<128x512xbf16>, vector<16x512xf32> -> vector<16x512xf32>
    %c0_25 = arith.constant 0 : index
    %c2 = arith.constant 2 : index
    %c0_26 = arith.constant 0 : index
    %76 = vector.load %arg2[%c0_25, %c2, %c0_26] : memref<16x16x512xbf16, #tpu.memory_space<vmem>>, vector<16x1x512xbf16>
    %77 = vector.shape_cast %76 : vector<16x1x512xbf16> to vector<16x512xbf16>
    %78 = arith.extf %77 : vector<16x512xbf16> to vector<16x512xf32>
    %79 = arith.addf %75, %78 : vector<16x512xf32>
    %80 = vector.extract_strided_slice %79 {offsets = [0, 0], sizes = [16, 128], strides = [1, 1]} : vector<16x512xf32> to vector<16x128xf32>
    %81 = arith.negf %80 : vector<16x128xf32>
    %82 = math.exp %81 : vector<16x128xf32>
    %cst_27 = arith.constant 1.000000e+00 : f32
    %83 = vector.broadcast %cst_27 : f32 to vector<16x128xf32>
    %84 = arith.addf %83, %82 : vector<16x128xf32>
    %85 = arith.divf %83, %84 : vector<16x128xf32>
    %86 = vector.extract_strided_slice %79 {offsets = [0, 128], sizes = [16, 128], strides = [1, 1]} : vector<16x512xf32> to vector<16x128xf32>
    %87 = arith.negf %86 : vector<16x128xf32>
    %88 = math.exp %87 : vector<16x128xf32>
    %cst_28 = arith.constant 1.000000e+00 : f32
    %89 = vector.broadcast %cst_28 : f32 to vector<16x128xf32>
    %90 = arith.addf %89, %88 : vector<16x128xf32>
    %91 = arith.divf %89, %90 : vector<16x128xf32>
    %92 = vector.extract_strided_slice %79 {offsets = [0, 256], sizes = [16, 128], strides = [1, 1]} : vector<16x512xf32> to vector<16x128xf32>
    %93 = math.tanh %92 : vector<16x128xf32>
    %94 = vector.extract_strided_slice %79 {offsets = [0, 384], sizes = [16, 128], strides = [1, 1]} : vector<16x512xf32> to vector<16x128xf32>
    %95 = arith.negf %94 : vector<16x128xf32>
    %96 = math.exp %95 : vector<16x128xf32>
    %cst_29 = arith.constant 1.000000e+00 : f32
    %97 = vector.broadcast %cst_29 : f32 to vector<16x128xf32>
    %98 = arith.addf %97, %96 : vector<16x128xf32>
    %99 = arith.divf %97, %98 : vector<16x128xf32>
    %100 = arith.mulf %91, %68 : vector<16x128xf32>
    %101 = arith.mulf %85, %93 : vector<16x128xf32>
    %102 = arith.addf %100, %101 : vector<16x128xf32>
    %103 = math.tanh %102 : vector<16x128xf32>
    %104 = arith.mulf %99, %103 : vector<16x128xf32>
    %c0_30 = arith.constant 0 : index
    %c2_31 = arith.constant 2 : index
    %c0_32 = arith.constant 0 : index
    %105 = vector.load %arg4[%c0_30, %c2_31, %c0_32] : memref<16x16x128xf32, #tpu.memory_space<vmem>>, vector<16x1x128xf32>
    %106 = vector.shape_cast %105 : vector<16x1x128xf32> to vector<16x128xf32>
    %107 = vector.shape_cast %104 : vector<16x128xf32> to vector<16x1x128xf32>
    tpu.vector_store %arg4[%c0_30, %c2_31, %c0_32], %107 {strides = array<i32>} : memref<16x16x128xf32, #tpu.memory_space<vmem>>, vector<16x1x128xf32>,
    %108 = arith.truncf %104 : vector<16x128xf32> to vector<16x128xbf16>
    %cst_33 = arith.constant dense<0.000000e+00> : vector<16x512xf32>
    %109 = tpu.matmul %108, %3, %cst_33 {dimension_numbers = #tpu.dot_dimension_numbers<[1], [0], [0], [1], [0, 0, 1, 1], [], []>} : vector<16x128xbf16>, vector<128x512xbf16>, vector<16x512xf32> -> vector<16x512xf32>
    %c0_34 = arith.constant 0 : index
    %c3 = arith.constant 3 : index
    %c0_35 = arith.constant 0 : index
    %110 = vector.load %arg2[%c0_34, %c3, %c0_35] : memref<16x16x512xbf16, #tpu.memory_space<vmem>>, vector<16x1x512xbf16>
    %111 = vector.shape_cast %110 : vector<16x1x512xbf16> to vector<16x512xbf16>
    %112 = arith.extf %111 : vector<16x512xbf16> to vector<16x512xf32>
    %113 = arith.addf %109, %112 : vector<16x512xf32>
    %114 = vector.extract_strided_slice %113 {offsets = [0, 0], sizes = [16, 128], strides = [1, 1]} : vector<16x512xf32> to vector<16x128xf32>
    %115 = arith.negf %114 : vector<16x128xf32>
    %116 = math.exp %115 : vector<16x128xf32>
    %cst_36 = arith.constant 1.000000e+00 : f32
    %117 = vector.broadcast %cst_36 : f32 to vector<16x128xf32>
    %118 = arith.addf %117, %116 : vector<16x128xf32>
    %119 = arith.divf %117, %118 : vector<16x128xf32>
    %120 = vector.extract_strided_slice %113 {offsets = [0, 128], sizes = [16, 128], strides = [1, 1]} : vector<16x512xf32> to vector<16x128xf32>
    %121 = arith.negf %120 : vector<16x128xf32>
    %122 = math.exp %121 : vector<16x128xf32>
    %cst_37 = arith.constant 1.000000e+00 : f32
    %123 = vector.broadcast %cst_37 : f32 to vector<16x128xf32>
    %124 = arith.addf %123, %122 : vector<16x128xf32>
    %125 = arith.divf %123, %124 : vector<16x128xf32>
    %126 = vector.extract_strided_slice %113 {offsets = [0, 256], sizes = [16, 128], strides = [1, 1]} : vector<16x512xf32> to vector<16x128xf32>
    %127 = math.tanh %126 : vector<16x128xf32>
    %128 = vector.extract_strided_slice %113 {offsets = [0, 384], sizes = [16, 128], strides = [1, 1]} : vector<16x512xf32> to vector<16x128xf32>
    %129 = arith.negf %128 : vector<16x128xf32>
    %130 = math.exp %129 : vector<16x128xf32>
    %cst_38 = arith.constant 1.000000e+00 : f32
    %131 = vector.broadcast %cst_38 : f32 to vector<16x128xf32>
    %132 = arith.addf %131, %130 : vector<16x128xf32>
    %133 = arith.divf %131, %132 : vector<16x128xf32>
    %134 = arith.mulf %125, %102 : vector<16x128xf32>
    %135 = arith.mulf %119, %127 : vector<16x128xf32>
    %136 = arith.addf %134, %135 : vector<16x128xf32>
    %137 = math.tanh %136 : vector<16x128xf32>
    %138 = arith.mulf %133, %137 : vector<16x128xf32>
    %c0_39 = arith.constant 0 : index
    %c3_40 = arith.constant 3 : index
    %c0_41 = arith.constant 0 : index
    %139 = vector.load %arg4[%c0_39, %c3_40, %c0_41] : memref<16x16x128xf32, #tpu.memory_space<vmem>>, vector<16x1x128xf32>
    %140 = vector.shape_cast %139 : vector<16x1x128xf32> to vector<16x128xf32>
    %141 = vector.shape_cast %138 : vector<16x128xf32> to vector<16x1x128xf32>
    tpu.vector_store %arg4[%c0_39, %c3_40, %c0_41], %141 {strides = array<i32>} : memref<16x16x128xf32, #tpu.memory_space<vmem>>, vector<16x1x128xf32>,
    %142 = arith.truncf %138 : vector<16x128xf32> to vector<16x128xbf16>
    %cst_42 = arith.constant dense<0.000000e+00> : vector<16x512xf32>
    %143 = tpu.matmul %142, %3, %cst_42 {dimension_numbers = #tpu.dot_dimension_numbers<[1], [0], [0], [1], [0, 0, 1, 1], [], []>} : vector<16x128xbf16>, vector<128x512xbf16>, vector<16x512xf32> -> vector<16x512xf32>
    %c0_43 = arith.constant 0 : index
    %c4 = arith.constant 4 : index
    %c0_44 = arith.constant 0 : index
    %144 = vector.load %arg2[%c0_43, %c4, %c0_44] : memref<16x16x512xbf16, #tpu.memory_space<vmem>>, vector<16x1x512xbf16>
    %145 = vector.shape_cast %144 : vector<16x1x512xbf16> to vector<16x512xbf16>
    %146 = arith.extf %145 : vector<16x512xbf16> to vector<16x512xf32>
    %147 = arith.addf %143, %146 : vector<16x512xf32>
    %148 = vector.extract_strided_slice %147 {offsets = [0, 0], sizes = [16, 128], strides = [1, 1]} : vector<16x512xf32> to vector<16x128xf32>
    %149 = arith.negf %148 : vector<16x128xf32>
    %150 = math.exp %149 : vector<16x128xf32>
    %cst_45 = arith.constant 1.000000e+00 : f32
    %151 = vector.broadcast %cst_45 : f32 to vector<16x128xf32>
    %152 = arith.addf %151, %150 : vector<16x128xf32>
    %153 = arith.divf %151, %152 : vector<16x128xf32>
    %154 = vector.extract_strided_slice %147 {offsets = [0, 128], sizes = [16, 128], strides = [1, 1]} : vector<16x512xf32> to vector<16x128xf32>
    %155 = arith.negf %154 : vector<16x128xf32>
    %156 = math.exp %155 : vector<16x128xf32>
    %cst_46 = arith.constant 1.000000e+00 : f32
    %157 = vector.broadcast %cst_46 : f32 to vector<16x128xf32>
    %158 = arith.addf %157, %156 : vector<16x128xf32>
    %159 = arith.divf %157, %158 : vector<16x128xf32>
    %160 = vector.extract_strided_slice %147 {offsets = [0, 256], sizes = [16, 128], strides = [1, 1]} : vector<16x512xf32> to vector<16x128xf32>
    %161 = math.tanh %160 : vector<16x128xf32>
    %162 = vector.extract_strided_slice %147 {offsets = [0, 384], sizes = [16, 128], strides = [1, 1]} : vector<16x512xf32> to vector<16x128xf32>
    %163 = arith.negf %162 : vector<16x128xf32>
    %164 = math.exp %163 : vector<16x128xf32>
    %cst_47 = arith.constant 1.000000e+00 : f32
    %165 = vector.broadcast %cst_47 : f32 to vector<16x128xf32>
    %166 = arith.addf %165, %164 : vector<16x128xf32>
    %167 = arith.divf %165, %166 : vector<16x128xf32>
    %168 = arith.mulf %159, %136 : vector<16x128xf32>
    %169 = arith.mulf %153, %161 : vector<16x128xf32>
    %170 = arith.addf %168, %169 : vector<16x128xf32>
    %171 = math.tanh %170 : vector<16x128xf32>
    %172 = arith.mulf %167, %171 : vector<16x128xf32>
    %c0_48 = arith.constant 0 : index
    %c4_49 = arith.constant 4 : index
    %c0_50 = arith.constant 0 : index
    %173 = vector.load %arg4[%c0_48, %c4_49, %c0_50] : memref<16x16x128xf32, #tpu.memory_space<vmem>>, vector<16x1x128xf32>
    %174 = vector.shape_cast %173 : vector<16x1x128xf32> to vector<16x128xf32>
    %175 = vector.shape_cast %172 : vector<16x128xf32> to vector<16x1x128xf32>
    tpu.vector_store %arg4[%c0_48, %c4_49, %c0_50], %175 {strides = array<i32>} : memref<16x16x128xf32, #tpu.memory_space<vmem>>, vector<16x1x128xf32>,
    %176 = arith.truncf %172 : vector<16x128xf32> to vector<16x128xbf16>
    %cst_51 = arith.constant dense<0.000000e+00> : vector<16x512xf32>
    %177 = tpu.matmul %176, %3, %cst_51 {dimension_numbers = #tpu.dot_dimension_numbers<[1], [0], [0], [1], [0, 0, 1, 1], [], []>} : vector<16x128xbf16>, vector<128x512xbf16>, vector<16x512xf32> -> vector<16x512xf32>
    %c0_52 = arith.constant 0 : index
    %c5 = arith.constant 5 : index
    %c0_53 = arith.constant 0 : index
    %178 = vector.load %arg2[%c0_52, %c5, %c0_53] : memref<16x16x512xbf16, #tpu.memory_space<vmem>>, vector<16x1x512xbf16>
    %179 = vector.shape_cast %178 : vector<16x1x512xbf16> to vector<16x512xbf16>
    %180 = arith.extf %179 : vector<16x512xbf16> to vector<16x512xf32>
    %181 = arith.addf %177, %180 : vector<16x512xf32>
    %182 = vector.extract_strided_slice %181 {offsets = [0, 0], sizes = [16, 128], strides = [1, 1]} : vector<16x512xf32> to vector<16x128xf32>
    %183 = arith.negf %182 : vector<16x128xf32>
    %184 = math.exp %183 : vector<16x128xf32>
    %cst_54 = arith.constant 1.000000e+00 : f32
    %185 = vector.broadcast %cst_54 : f32 to vector<16x128xf32>
    %186 = arith.addf %185, %184 : vector<16x128xf32>
    %187 = arith.divf %185, %186 : vector<16x128xf32>
    %188 = vector.extract_strided_slice %181 {offsets = [0, 128], sizes = [16, 128], strides = [1, 1]} : vector<16x512xf32> to vector<16x128xf32>
    %189 = arith.negf %188 : vector<16x128xf32>
    %190 = math.exp %189 : vector<16x128xf32>
    %cst_55 = arith.constant 1.000000e+00 : f32
    %191 = vector.broadcast %cst_55 : f32 to vector<16x128xf32>
    %192 = arith.addf %191, %190 : vector<16x128xf32>
    %193 = arith.divf %191, %192 : vector<16x128xf32>
    %194 = vector.extract_strided_slice %181 {offsets = [0, 256], sizes = [16, 128], strides = [1, 1]} : vector<16x512xf32> to vector<16x128xf32>
    %195 = math.tanh %194 : vector<16x128xf32>
    %196 = vector.extract_strided_slice %181 {offsets = [0, 384], sizes = [16, 128], strides = [1, 1]} : vector<16x512xf32> to vector<16x128xf32>
    %197 = arith.negf %196 : vector<16x128xf32>
    %198 = math.exp %197 : vector<16x128xf32>
    %cst_56 = arith.constant 1.000000e+00 : f32
    %199 = vector.broadcast %cst_56 : f32 to vector<16x128xf32>
    %200 = arith.addf %199, %198 : vector<16x128xf32>
    %201 = arith.divf %199, %200 : vector<16x128xf32>
    %202 = arith.mulf %193, %170 : vector<16x128xf32>
    %203 = arith.mulf %187, %195 : vector<16x128xf32>
    %204 = arith.addf %202, %203 : vector<16x128xf32>
    %205 = math.tanh %204 : vector<16x128xf32>
    %206 = arith.mulf %201, %205 : vector<16x128xf32>
    %c0_57 = arith.constant 0 : index
    %c5_58 = arith.constant 5 : index
    %c0_59 = arith.constant 0 : index
    %207 = vector.load %arg4[%c0_57, %c5_58, %c0_59] : memref<16x16x128xf32, #tpu.memory_space<vmem>>, vector<16x1x128xf32>
    %208 = vector.shape_cast %207 : vector<16x1x128xf32> to vector<16x128xf32>
    %209 = vector.shape_cast %206 : vector<16x128xf32> to vector<16x1x128xf32>
    tpu.vector_store %arg4[%c0_57, %c5_58, %c0_59], %209 {strides = array<i32>} : memref<16x16x128xf32, #tpu.memory_space<vmem>>, vector<16x1x128xf32>,
    %210 = arith.truncf %206 : vector<16x128xf32> to vector<16x128xbf16>
    %cst_60 = arith.constant dense<0.000000e+00> : vector<16x512xf32>
    %211 = tpu.matmul %210, %3, %cst_60 {dimension_numbers = #tpu.dot_dimension_numbers<[1], [0], [0], [1], [0, 0, 1, 1], [], []>} : vector<16x128xbf16>, vector<128x512xbf16>, vector<16x512xf32> -> vector<16x512xf32>
    %c0_61 = arith.constant 0 : index
    %c6 = arith.constant 6 : index
    %c0_62 = arith.constant 0 : index
    %212 = vector.load %arg2[%c0_61, %c6, %c0_62] : memref<16x16x512xbf16, #tpu.memory_space<vmem>>, vector<16x1x512xbf16>
    %213 = vector.shape_cast %212 : vector<16x1x512xbf16> to vector<16x512xbf16>
    %214 = arith.extf %213 : vector<16x512xbf16> to vector<16x512xf32>
    %215 = arith.addf %211, %214 : vector<16x512xf32>
    %216 = vector.extract_strided_slice %215 {offsets = [0, 0], sizes = [16, 128], strides = [1, 1]} : vector<16x512xf32> to vector<16x128xf32>
    %217 = arith.negf %216 : vector<16x128xf32>
    %218 = math.exp %217 : vector<16x128xf32>
    %cst_63 = arith.constant 1.000000e+00 : f32
    %219 = vector.broadcast %cst_63 : f32 to vector<16x128xf32>
    %220 = arith.addf %219, %218 : vector<16x128xf32>
    %221 = arith.divf %219, %220 : vector<16x128xf32>
    %222 = vector.extract_strided_slice %215 {offsets = [0, 128], sizes = [16, 128], strides = [1, 1]} : vector<16x512xf32> to vector<16x128xf32>
    %223 = arith.negf %222 : vector<16x128xf32>
    %224 = math.exp %223 : vector<16x128xf32>
    %cst_64 = arith.constant 1.000000e+00 : f32
    %225 = vector.broadcast %cst_64 : f32 to vector<16x128xf32>
    %226 = arith.addf %225, %224 : vector<16x128xf32>
    %227 = arith.divf %225, %226 : vector<16x128xf32>
    %228 = vector.extract_strided_slice %215 {offsets = [0, 256], sizes = [16, 128], strides = [1, 1]} : vector<16x512xf32> to vector<16x128xf32>
    %229 = math.tanh %228 : vector<16x128xf32>
    %230 = vector.extract_strided_slice %215 {offsets = [0, 384], sizes = [16, 128], strides = [1, 1]} : vector<16x512xf32> to vector<16x128xf32>
    %231 = arith.negf %230 : vector<16x128xf32>
    %232 = math.exp %231 : vector<16x128xf32>
    %cst_65 = arith.constant 1.000000e+00 : f32
    %233 = vector.broadcast %cst_65 : f32 to vector<16x128xf32>
    %234 = arith.addf %233, %232 : vector<16x128xf32>
    %235 = arith.divf %233, %234 : vector<16x128xf32>
    %236 = arith.mulf %227, %204 : vector<16x128xf32>
    %237 = arith.mulf %221, %229 : vector<16x128xf32>
    %238 = arith.addf %236, %237 : vector<16x128xf32>
    %239 = math.tanh %238 : vector<16x128xf32>
    %240 = arith.mulf %235, %239 : vector<16x128xf32>
    %c0_66 = arith.constant 0 : index
    %c6_67 = arith.constant 6 : index
    %c0_68 = arith.constant 0 : index
    %241 = vector.load %arg4[%c0_66, %c6_67, %c0_68] : memref<16x16x128xf32, #tpu.memory_space<vmem>>, vector<16x1x128xf32>
    %242 = vector.shape_cast %241 : vector<16x1x128xf32> to vector<16x128xf32>
    %243 = vector.shape_cast %240 : vector<16x128xf32> to vector<16x1x128xf32>
    tpu.vector_store %arg4[%c0_66, %c6_67, %c0_68], %243 {strides = array<i32>} : memref<16x16x128xf32, #tpu.memory_space<vmem>>, vector<16x1x128xf32>,
    %244 = arith.truncf %240 : vector<16x128xf32> to vector<16x128xbf16>
    %cst_69 = arith.constant dense<0.000000e+00> : vector<16x512xf32>
    %245 = tpu.matmul %244, %3, %cst_69 {dimension_numbers = #tpu.dot_dimension_numbers<[1], [0], [0], [1], [0, 0, 1, 1], [], []>} : vector<16x128xbf16>, vector<128x512xbf16>, vector<16x512xf32> -> vector<16x512xf32>
    %c0_70 = arith.constant 0 : index
    %c7 = arith.constant 7 : index
    %c0_71 = arith.constant 0 : index
    %246 = vector.load %arg2[%c0_70, %c7, %c0_71] : memref<16x16x512xbf16, #tpu.memory_space<vmem>>, vector<16x1x512xbf16>
    %247 = vector.shape_cast %246 : vector<16x1x512xbf16> to vector<16x512xbf16>
    %248 = arith.extf %247 : vector<16x512xbf16> to vector<16x512xf32>
    %249 = arith.addf %245, %248 : vector<16x512xf32>
    %250 = vector.extract_strided_slice %249 {offsets = [0, 0], sizes = [16, 128], strides = [1, 1]} : vector<16x512xf32> to vector<16x128xf32>
    %251 = arith.negf %250 : vector<16x128xf32>
    %252 = math.exp %251 : vector<16x128xf32>
    %cst_72 = arith.constant 1.000000e+00 : f32
    %253 = vector.broadcast %cst_72 : f32 to vector<16x128xf32>
    %254 = arith.addf %253, %252 : vector<16x128xf32>
    %255 = arith.divf %253, %254 : vector<16x128xf32>
    %256 = vector.extract_strided_slice %249 {offsets = [0, 128], sizes = [16, 128], strides = [1, 1]} : vector<16x512xf32> to vector<16x128xf32>
    %257 = arith.negf %256 : vector<16x128xf32>
    %258 = math.exp %257 : vector<16x128xf32>
    %cst_73 = arith.constant 1.000000e+00 : f32
    %259 = vector.broadcast %cst_73 : f32 to vector<16x128xf32>
    %260 = arith.addf %259, %258 : vector<16x128xf32>
    %261 = arith.divf %259, %260 : vector<16x128xf32>
    %262 = vector.extract_strided_slice %249 {offsets = [0, 256], sizes = [16, 128], strides = [1, 1]} : vector<16x512xf32> to vector<16x128xf32>
    %263 = math.tanh %262 : vector<16x128xf32>
    %264 = vector.extract_strided_slice %249 {offsets = [0, 384], sizes = [16, 128], strides = [1, 1]} : vector<16x512xf32> to vector<16x128xf32>
    %265 = arith.negf %264 : vector<16x128xf32>
    %266 = math.exp %265 : vector<16x128xf32>
    %cst_74 = arith.constant 1.000000e+00 : f32
    %267 = vector.broadcast %cst_74 : f32 to vector<16x128xf32>
    %268 = arith.addf %267, %266 : vector<16x128xf32>
    %269 = arith.divf %267, %268 : vector<16x128xf32>
    %270 = arith.mulf %261, %238 : vector<16x128xf32>
    %271 = arith.mulf %255, %263 : vector<16x128xf32>
    %272 = arith.addf %270, %271 : vector<16x128xf32>
    %273 = math.tanh %272 : vector<16x128xf32>
    %274 = arith.mulf %269, %273 : vector<16x128xf32>
    %c0_75 = arith.constant 0 : index
    %c7_76 = arith.constant 7 : index
    %c0_77 = arith.constant 0 : index
    %275 = vector.load %arg4[%c0_75, %c7_76, %c0_77] : memref<16x16x128xf32, #tpu.memory_space<vmem>>, vector<16x1x128xf32>
    %276 = vector.shape_cast %275 : vector<16x1x128xf32> to vector<16x128xf32>
    %277 = vector.shape_cast %274 : vector<16x128xf32> to vector<16x1x128xf32>
    tpu.vector_store %arg4[%c0_75, %c7_76, %c0_77], %277 {strides = array<i32>} : memref<16x16x128xf32, #tpu.memory_space<vmem>>, vector<16x1x128xf32>,
    %278 = arith.truncf %274 : vector<16x128xf32> to vector<16x128xbf16>
    %cst_78 = arith.constant dense<0.000000e+00> : vector<16x512xf32>
    %279 = tpu.matmul %278, %3, %cst_78 {dimension_numbers = #tpu.dot_dimension_numbers<[1], [0], [0], [1], [0, 0, 1, 1], [], []>} : vector<16x128xbf16>, vector<128x512xbf16>, vector<16x512xf32> -> vector<16x512xf32>
    %c0_79 = arith.constant 0 : index
    %c8 = arith.constant 8 : index
    %c0_80 = arith.constant 0 : index
    %280 = vector.load %arg2[%c0_79, %c8, %c0_80] : memref<16x16x512xbf16, #tpu.memory_space<vmem>>, vector<16x1x512xbf16>
    %281 = vector.shape_cast %280 : vector<16x1x512xbf16> to vector<16x512xbf16>
    %282 = arith.extf %281 : vector<16x512xbf16> to vector<16x512xf32>
    %283 = arith.addf %279, %282 : vector<16x512xf32>
    %284 = vector.extract_strided_slice %283 {offsets = [0, 0], sizes = [16, 128], strides = [1, 1]} : vector<16x512xf32> to vector<16x128xf32>
    %285 = arith.negf %284 : vector<16x128xf32>
    %286 = math.exp %285 : vector<16x128xf32>
    %cst_81 = arith.constant 1.000000e+00 : f32
    %287 = vector.broadcast %cst_81 : f32 to vector<16x128xf32>
    %288 = arith.addf %287, %286 : vector<16x128xf32>
    %289 = arith.divf %287, %288 : vector<16x128xf32>
    %290 = vector.extract_strided_slice %283 {offsets = [0, 128], sizes = [16, 128], strides = [1, 1]} : vector<16x512xf32> to vector<16x128xf32>
    %291 = arith.negf %290 : vector<16x128xf32>
    %292 = math.exp %291 : vector<16x128xf32>
    %cst_82 = arith.constant 1.000000e+00 : f32
    %293 = vector.broadcast %cst_82 : f32 to vector<16x128xf32>
    %294 = arith.addf %293, %292 : vector<16x128xf32>
    %295 = arith.divf %293, %294 : vector<16x128xf32>
    %296 = vector.extract_strided_slice %283 {offsets = [0, 256], sizes = [16, 128], strides = [1, 1]} : vector<16x512xf32> to vector<16x128xf32>
    %297 = math.tanh %296 : vector<16x128xf32>
    %298 = vector.extract_strided_slice %283 {offsets = [0, 384], sizes = [16, 128], strides = [1, 1]} : vector<16x512xf32> to vector<16x128xf32>
    %299 = arith.negf %298 : vector<16x128xf32>
    %300 = math.exp %299 : vector<16x128xf32>
    %cst_83 = arith.constant 1.000000e+00 : f32
    %301 = vector.broadcast %cst_83 : f32 to vector<16x128xf32>
    %302 = arith.addf %301, %300 : vector<16x128xf32>
    %303 = arith.divf %301, %302 : vector<16x128xf32>
    %304 = arith.mulf %295, %272 : vector<16x128xf32>
    %305 = arith.mulf %289, %297 : vector<16x128xf32>
    %306 = arith.addf %304, %305 : vector<16x128xf32>
    %307 = math.tanh %306 : vector<16x128xf32>
    %308 = arith.mulf %303, %307 : vector<16x128xf32>
    %c0_84 = arith.constant 0 : index
    %c8_85 = arith.constant 8 : index
    %c0_86 = arith.constant 0 : index
    %309 = vector.load %arg4[%c0_84, %c8_85, %c0_86] : memref<16x16x128xf32, #tpu.memory_space<vmem>>, vector<16x1x128xf32>
    %310 = vector.shape_cast %309 : vector<16x1x128xf32> to vector<16x128xf32>
    %311 = vector.shape_cast %308 : vector<16x128xf32> to vector<16x1x128xf32>
    tpu.vector_store %arg4[%c0_84, %c8_85, %c0_86], %311 {strides = array<i32>} : memref<16x16x128xf32, #tpu.memory_space<vmem>>, vector<16x1x128xf32>,
    %312 = arith.truncf %308 : vector<16x128xf32> to vector<16x128xbf16>
    %cst_87 = arith.constant dense<0.000000e+00> : vector<16x512xf32>
    %313 = tpu.matmul %312, %3, %cst_87 {dimension_numbers = #tpu.dot_dimension_numbers<[1], [0], [0], [1], [0, 0, 1, 1], [], []>} : vector<16x128xbf16>, vector<128x512xbf16>, vector<16x512xf32> -> vector<16x512xf32>
    %c0_88 = arith.constant 0 : index
    %c9 = arith.constant 9 : index
    %c0_89 = arith.constant 0 : index
    %314 = vector.load %arg2[%c0_88, %c9, %c0_89] : memref<16x16x512xbf16, #tpu.memory_space<vmem>>, vector<16x1x512xbf16>
    %315 = vector.shape_cast %314 : vector<16x1x512xbf16> to vector<16x512xbf16>
    %316 = arith.extf %315 : vector<16x512xbf16> to vector<16x512xf32>
    %317 = arith.addf %313, %316 : vector<16x512xf32>
    %318 = vector.extract_strided_slice %317 {offsets = [0, 0], sizes = [16, 128], strides = [1, 1]} : vector<16x512xf32> to vector<16x128xf32>
    %319 = arith.negf %318 : vector<16x128xf32>
    %320 = math.exp %319 : vector<16x128xf32>
    %cst_90 = arith.constant 1.000000e+00 : f32
    %321 = vector.broadcast %cst_90 : f32 to vector<16x128xf32>
    %322 = arith.addf %321, %320 : vector<16x128xf32>
    %323 = arith.divf %321, %322 : vector<16x128xf32>
    %324 = vector.extract_strided_slice %317 {offsets = [0, 128], sizes = [16, 128], strides = [1, 1]} : vector<16x512xf32> to vector<16x128xf32>
    %325 = arith.negf %324 : vector<16x128xf32>
    %326 = math.exp %325 : vector<16x128xf32>
    %cst_91 = arith.constant 1.000000e+00 : f32
    %327 = vector.broadcast %cst_91 : f32 to vector<16x128xf32>
    %328 = arith.addf %327, %326 : vector<16x128xf32>
    %329 = arith.divf %327, %328 : vector<16x128xf32>
    %330 = vector.extract_strided_slice %317 {offsets = [0, 256], sizes = [16, 128], strides = [1, 1]} : vector<16x512xf32> to vector<16x128xf32>
    %331 = math.tanh %330 : vector<16x128xf32>
    %332 = vector.extract_strided_slice %317 {offsets = [0, 384], sizes = [16, 128], strides = [1, 1]} : vector<16x512xf32> to vector<16x128xf32>
    %333 = arith.negf %332 : vector<16x128xf32>
    %334 = math.exp %333 : vector<16x128xf32>
    %cst_92 = arith.constant 1.000000e+00 : f32
    %335 = vector.broadcast %cst_92 : f32 to vector<16x128xf32>
    %336 = arith.addf %335, %334 : vector<16x128xf32>
    %337 = arith.divf %335, %336 : vector<16x128xf32>
    %338 = arith.mulf %329, %306 : vector<16x128xf32>
    %339 = arith.mulf %323, %331 : vector<16x128xf32>
    %340 = arith.addf %338, %339 : vector<16x128xf32>
    %341 = math.tanh %340 : vector<16x128xf32>
    %342 = arith.mulf %337, %341 : vector<16x128xf32>
    %c0_93 = arith.constant 0 : index
    %c9_94 = arith.constant 9 : index
    %c0_95 = arith.constant 0 : index
    %343 = vector.load %arg4[%c0_93, %c9_94, %c0_95] : memref<16x16x128xf32, #tpu.memory_space<vmem>>, vector<16x1x128xf32>
    %344 = vector.shape_cast %343 : vector<16x1x128xf32> to vector<16x128xf32>
    %345 = vector.shape_cast %342 : vector<16x128xf32> to vector<16x1x128xf32>
    tpu.vector_store %arg4[%c0_93, %c9_94, %c0_95], %345 {strides = array<i32>} : memref<16x16x128xf32, #tpu.memory_space<vmem>>, vector<16x1x128xf32>,
    %346 = arith.truncf %342 : vector<16x128xf32> to vector<16x128xbf16>
    %cst_96 = arith.constant dense<0.000000e+00> : vector<16x512xf32>
    %347 = tpu.matmul %346, %3, %cst_96 {dimension_numbers = #tpu.dot_dimension_numbers<[1], [0], [0], [1], [0, 0, 1, 1], [], []>} : vector<16x128xbf16>, vector<128x512xbf16>, vector<16x512xf32> -> vector<16x512xf32>
    %c0_97 = arith.constant 0 : index
    %c10 = arith.constant 10 : index
    %c0_98 = arith.constant 0 : index
    %348 = vector.load %arg2[%c0_97, %c10, %c0_98] : memref<16x16x512xbf16, #tpu.memory_space<vmem>>, vector<16x1x512xbf16>
    %349 = vector.shape_cast %348 : vector<16x1x512xbf16> to vector<16x512xbf16>
    %350 = arith.extf %349 : vector<16x512xbf16> to vector<16x512xf32>
    %351 = arith.addf %347, %350 : vector<16x512xf32>
    %352 = vector.extract_strided_slice %351 {offsets = [0, 0], sizes = [16, 128], strides = [1, 1]} : vector<16x512xf32> to vector<16x128xf32>
    %353 = arith.negf %352 : vector<16x128xf32>
    %354 = math.exp %353 : vector<16x128xf32>
    %cst_99 = arith.constant 1.000000e+00 : f32
    %355 = vector.broadcast %cst_99 : f32 to vector<16x128xf32>
    %356 = arith.addf %355, %354 : vector<16x128xf32>
    %357 = arith.divf %355, %356 : vector<16x128xf32>
    %358 = vector.extract_strided_slice %351 {offsets = [0, 128], sizes = [16, 128], strides = [1, 1]} : vector<16x512xf32> to vector<16x128xf32>
    %359 = arith.negf %358 : vector<16x128xf32>
    %360 = math.exp %359 : vector<16x128xf32>
    %cst_100 = arith.constant 1.000000e+00 : f32
    %361 = vector.broadcast %cst_100 : f32 to vector<16x128xf32>
    %362 = arith.addf %361, %360 : vector<16x128xf32>
    %363 = arith.divf %361, %362 : vector<16x128xf32>
    %364 = vector.extract_strided_slice %351 {offsets = [0, 256], sizes = [16, 128], strides = [1, 1]} : vector<16x512xf32> to vector<16x128xf32>
    %365 = math.tanh %364 : vector<16x128xf32>
    %366 = vector.extract_strided_slice %351 {offsets = [0, 384], sizes = [16, 128], strides = [1, 1]} : vector<16x512xf32> to vector<16x128xf32>
    %367 = arith.negf %366 : vector<16x128xf32>
    %368 = math.exp %367 : vector<16x128xf32>
    %cst_101 = arith.constant 1.000000e+00 : f32
    %369 = vector.broadcast %cst_101 : f32 to vector<16x128xf32>
    %370 = arith.addf %369, %368 : vector<16x128xf32>
    %371 = arith.divf %369, %370 : vector<16x128xf32>
    %372 = arith.mulf %363, %340 : vector<16x128xf32>
    %373 = arith.mulf %357, %365 : vector<16x128xf32>
    %374 = arith.addf %372, %373 : vector<16x128xf32>
    %375 = math.tanh %374 : vector<16x128xf32>
    %376 = arith.mulf %371, %375 : vector<16x128xf32>
    %c0_102 = arith.constant 0 : index
    %c10_103 = arith.constant 10 : index
    %c0_104 = arith.constant 0 : index
    %377 = vector.load %arg4[%c0_102, %c10_103, %c0_104] : memref<16x16x128xf32, #tpu.memory_space<vmem>>, vector<16x1x128xf32>
    %378 = vector.shape_cast %377 : vector<16x1x128xf32> to vector<16x128xf32>
    %379 = vector.shape_cast %376 : vector<16x128xf32> to vector<16x1x128xf32>
    tpu.vector_store %arg4[%c0_102, %c10_103, %c0_104], %379 {strides = array<i32>} : memref<16x16x128xf32, #tpu.memory_space<vmem>>, vector<16x1x128xf32>,
    %380 = arith.truncf %376 : vector<16x128xf32> to vector<16x128xbf16>
    %cst_105 = arith.constant dense<0.000000e+00> : vector<16x512xf32>
    %381 = tpu.matmul %380, %3, %cst_105 {dimension_numbers = #tpu.dot_dimension_numbers<[1], [0], [0], [1], [0, 0, 1, 1], [], []>} : vector<16x128xbf16>, vector<128x512xbf16>, vector<16x512xf32> -> vector<16x512xf32>
    %c0_106 = arith.constant 0 : index
    %c11 = arith.constant 11 : index
    %c0_107 = arith.constant 0 : index
    %382 = vector.load %arg2[%c0_106, %c11, %c0_107] : memref<16x16x512xbf16, #tpu.memory_space<vmem>>, vector<16x1x512xbf16>
    %383 = vector.shape_cast %382 : vector<16x1x512xbf16> to vector<16x512xbf16>
    %384 = arith.extf %383 : vector<16x512xbf16> to vector<16x512xf32>
    %385 = arith.addf %381, %384 : vector<16x512xf32>
    %386 = vector.extract_strided_slice %385 {offsets = [0, 0], sizes = [16, 128], strides = [1, 1]} : vector<16x512xf32> to vector<16x128xf32>
    %387 = arith.negf %386 : vector<16x128xf32>
    %388 = math.exp %387 : vector<16x128xf32>
    %cst_108 = arith.constant 1.000000e+00 : f32
    %389 = vector.broadcast %cst_108 : f32 to vector<16x128xf32>
    %390 = arith.addf %389, %388 : vector<16x128xf32>
    %391 = arith.divf %389, %390 : vector<16x128xf32>
    %392 = vector.extract_strided_slice %385 {offsets = [0, 128], sizes = [16, 128], strides = [1, 1]} : vector<16x512xf32> to vector<16x128xf32>
    %393 = arith.negf %392 : vector<16x128xf32>
    %394 = math.exp %393 : vector<16x128xf32>
    %cst_109 = arith.constant 1.000000e+00 : f32
    %395 = vector.broadcast %cst_109 : f32 to vector<16x128xf32>
    %396 = arith.addf %395, %394 : vector<16x128xf32>
    %397 = arith.divf %395, %396 : vector<16x128xf32>
    %398 = vector.extract_strided_slice %385 {offsets = [0, 256], sizes = [16, 128], strides = [1, 1]} : vector<16x512xf32> to vector<16x128xf32>
    %399 = math.tanh %398 : vector<16x128xf32>
    %400 = vector.extract_strided_slice %385 {offsets = [0, 384], sizes = [16, 128], strides = [1, 1]} : vector<16x512xf32> to vector<16x128xf32>
    %401 = arith.negf %400 : vector<16x128xf32>
    %402 = math.exp %401 : vector<16x128xf32>
    %cst_110 = arith.constant 1.000000e+00 : f32
    %403 = vector.broadcast %cst_110 : f32 to vector<16x128xf32>
    %404 = arith.addf %403, %402 : vector<16x128xf32>
    %405 = arith.divf %403, %404 : vector<16x128xf32>
    %406 = arith.mulf %397, %374 : vector<16x128xf32>
    %407 = arith.mulf %391, %399 : vector<16x128xf32>
    %408 = arith.addf %406, %407 : vector<16x128xf32>
    %409 = math.tanh %408 : vector<16x128xf32>
    %410 = arith.mulf %405, %409 : vector<16x128xf32>
    %c0_111 = arith.constant 0 : index
    %c11_112 = arith.constant 11 : index
    %c0_113 = arith.constant 0 : index
    %411 = vector.load %arg4[%c0_111, %c11_112, %c0_113] : memref<16x16x128xf32, #tpu.memory_space<vmem>>, vector<16x1x128xf32>
    %412 = vector.shape_cast %411 : vector<16x1x128xf32> to vector<16x128xf32>
    %413 = vector.shape_cast %410 : vector<16x128xf32> to vector<16x1x128xf32>
    tpu.vector_store %arg4[%c0_111, %c11_112, %c0_113], %413 {strides = array<i32>} : memref<16x16x128xf32, #tpu.memory_space<vmem>>, vector<16x1x128xf32>,
    %414 = arith.truncf %410 : vector<16x128xf32> to vector<16x128xbf16>
    %cst_114 = arith.constant dense<0.000000e+00> : vector<16x512xf32>
    %415 = tpu.matmul %414, %3, %cst_114 {dimension_numbers = #tpu.dot_dimension_numbers<[1], [0], [0], [1], [0, 0, 1, 1], [], []>} : vector<16x128xbf16>, vector<128x512xbf16>, vector<16x512xf32> -> vector<16x512xf32>
    %c0_115 = arith.constant 0 : index
    %c12 = arith.constant 12 : index
    %c0_116 = arith.constant 0 : index
    %416 = vector.load %arg2[%c0_115, %c12, %c0_116] : memref<16x16x512xbf16, #tpu.memory_space<vmem>>, vector<16x1x512xbf16>
    %417 = vector.shape_cast %416 : vector<16x1x512xbf16> to vector<16x512xbf16>
    %418 = arith.extf %417 : vector<16x512xbf16> to vector<16x512xf32>
    %419 = arith.addf %415, %418 : vector<16x512xf32>
    %420 = vector.extract_strided_slice %419 {offsets = [0, 0], sizes = [16, 128], strides = [1, 1]} : vector<16x512xf32> to vector<16x128xf32>
    %421 = arith.negf %420 : vector<16x128xf32>
    %422 = math.exp %421 : vector<16x128xf32>
    %cst_117 = arith.constant 1.000000e+00 : f32
    %423 = vector.broadcast %cst_117 : f32 to vector<16x128xf32>
    %424 = arith.addf %423, %422 : vector<16x128xf32>
    %425 = arith.divf %423, %424 : vector<16x128xf32>
    %426 = vector.extract_strided_slice %419 {offsets = [0, 128], sizes = [16, 128], strides = [1, 1]} : vector<16x512xf32> to vector<16x128xf32>
    %427 = arith.negf %426 : vector<16x128xf32>
    %428 = math.exp %427 : vector<16x128xf32>
    %cst_118 = arith.constant 1.000000e+00 : f32
    %429 = vector.broadcast %cst_118 : f32 to vector<16x128xf32>
    %430 = arith.addf %429, %428 : vector<16x128xf32>
    %431 = arith.divf %429, %430 : vector<16x128xf32>
    %432 = vector.extract_strided_slice %419 {offsets = [0, 256], sizes = [16, 128], strides = [1, 1]} : vector<16x512xf32> to vector<16x128xf32>
    %433 = math.tanh %432 : vector<16x128xf32>
    %434 = vector.extract_strided_slice %419 {offsets = [0, 384], sizes = [16, 128], strides = [1, 1]} : vector<16x512xf32> to vector<16x128xf32>
    %435 = arith.negf %434 : vector<16x128xf32>
    %436 = math.exp %435 : vector<16x128xf32>
    %cst_119 = arith.constant 1.000000e+00 : f32
    %437 = vector.broadcast %cst_119 : f32 to vector<16x128xf32>
    %438 = arith.addf %437, %436 : vector<16x128xf32>
    %439 = arith.divf %437, %438 : vector<16x128xf32>
    %440 = arith.mulf %431, %408 : vector<16x128xf32>
    %441 = arith.mulf %425, %433 : vector<16x128xf32>
    %442 = arith.addf %440, %441 : vector<16x128xf32>
    %443 = math.tanh %442 : vector<16x128xf32>
    %444 = arith.mulf %439, %443 : vector<16x128xf32>
    %c0_120 = arith.constant 0 : index
    %c12_121 = arith.constant 12 : index
    %c0_122 = arith.constant 0 : index
    %445 = vector.load %arg4[%c0_120, %c12_121, %c0_122] : memref<16x16x128xf32, #tpu.memory_space<vmem>>, vector<16x1x128xf32>
    %446 = vector.shape_cast %445 : vector<16x1x128xf32> to vector<16x128xf32>
    %447 = vector.shape_cast %444 : vector<16x128xf32> to vector<16x1x128xf32>
    tpu.vector_store %arg4[%c0_120, %c12_121, %c0_122], %447 {strides = array<i32>} : memref<16x16x128xf32, #tpu.memory_space<vmem>>, vector<16x1x128xf32>,
    %448 = arith.truncf %444 : vector<16x128xf32> to vector<16x128xbf16>
    %cst_123 = arith.constant dense<0.000000e+00> : vector<16x512xf32>
    %449 = tpu.matmul %448, %3, %cst_123 {dimension_numbers = #tpu.dot_dimension_numbers<[1], [0], [0], [1], [0, 0, 1, 1], [], []>} : vector<16x128xbf16>, vector<128x512xbf16>, vector<16x512xf32> -> vector<16x512xf32>
    %c0_124 = arith.constant 0 : index
    %c13 = arith.constant 13 : index
    %c0_125 = arith.constant 0 : index
    %450 = vector.load %arg2[%c0_124, %c13, %c0_125] : memref<16x16x512xbf16, #tpu.memory_space<vmem>>, vector<16x1x512xbf16>
    %451 = vector.shape_cast %450 : vector<16x1x512xbf16> to vector<16x512xbf16>
    %452 = arith.extf %451 : vector<16x512xbf16> to vector<16x512xf32>
    %453 = arith.addf %449, %452 : vector<16x512xf32>
    %454 = vector.extract_strided_slice %453 {offsets = [0, 0], sizes = [16, 128], strides = [1, 1]} : vector<16x512xf32> to vector<16x128xf32>
    %455 = arith.negf %454 : vector<16x128xf32>
    %456 = math.exp %455 : vector<16x128xf32>
    %cst_126 = arith.constant 1.000000e+00 : f32
    %457 = vector.broadcast %cst_126 : f32 to vector<16x128xf32>
    %458 = arith.addf %457, %456 : vector<16x128xf32>
    %459 = arith.divf %457, %458 : vector<16x128xf32>
    %460 = vector.extract_strided_slice %453 {offsets = [0, 128], sizes = [16, 128], strides = [1, 1]} : vector<16x512xf32> to vector<16x128xf32>
    %461 = arith.negf %460 : vector<16x128xf32>
    %462 = math.exp %461 : vector<16x128xf32>
    %cst_127 = arith.constant 1.000000e+00 : f32
    %463 = vector.broadcast %cst_127 : f32 to vector<16x128xf32>
    %464 = arith.addf %463, %462 : vector<16x128xf32>
    %465 = arith.divf %463, %464 : vector<16x128xf32>
    %466 = vector.extract_strided_slice %453 {offsets = [0, 256], sizes = [16, 128], strides = [1, 1]} : vector<16x512xf32> to vector<16x128xf32>
    %467 = math.tanh %466 : vector<16x128xf32>
    %468 = vector.extract_strided_slice %453 {offsets = [0, 384], sizes = [16, 128], strides = [1, 1]} : vector<16x512xf32> to vector<16x128xf32>
    %469 = arith.negf %468 : vector<16x128xf32>
    %470 = math.exp %469 : vector<16x128xf32>
    %cst_128 = arith.constant 1.000000e+00 : f32
    %471 = vector.broadcast %cst_128 : f32 to vector<16x128xf32>
    %472 = arith.addf %471, %470 : vector<16x128xf32>
    %473 = arith.divf %471, %472 : vector<16x128xf32>
    %474 = arith.mulf %465, %442 : vector<16x128xf32>
    %475 = arith.mulf %459, %467 : vector<16x128xf32>
    %476 = arith.addf %474, %475 : vector<16x128xf32>
    %477 = math.tanh %476 : vector<16x128xf32>
    %478 = arith.mulf %473, %477 : vector<16x128xf32>
    %c0_129 = arith.constant 0 : index
    %c13_130 = arith.constant 13 : index
    %c0_131 = arith.constant 0 : index
    %479 = vector.load %arg4[%c0_129, %c13_130, %c0_131] : memref<16x16x128xf32, #tpu.memory_space<vmem>>, vector<16x1x128xf32>
    %480 = vector.shape_cast %479 : vector<16x1x128xf32> to vector<16x128xf32>
    %481 = vector.shape_cast %478 : vector<16x128xf32> to vector<16x1x128xf32>
    tpu.vector_store %arg4[%c0_129, %c13_130, %c0_131], %481 {strides = array<i32>} : memref<16x16x128xf32, #tpu.memory_space<vmem>>, vector<16x1x128xf32>,
    %482 = arith.truncf %478 : vector<16x128xf32> to vector<16x128xbf16>
    %cst_132 = arith.constant dense<0.000000e+00> : vector<16x512xf32>
    %483 = tpu.matmul %482, %3, %cst_132 {dimension_numbers = #tpu.dot_dimension_numbers<[1], [0], [0], [1], [0, 0, 1, 1], [], []>} : vector<16x128xbf16>, vector<128x512xbf16>, vector<16x512xf32> -> vector<16x512xf32>
    %c0_133 = arith.constant 0 : index
    %c14 = arith.constant 14 : index
    %c0_134 = arith.constant 0 : index
    %484 = vector.load %arg2[%c0_133, %c14, %c0_134] : memref<16x16x512xbf16, #tpu.memory_space<vmem>>, vector<16x1x512xbf16>
    %485 = vector.shape_cast %484 : vector<16x1x512xbf16> to vector<16x512xbf16>
    %486 = arith.extf %485 : vector<16x512xbf16> to vector<16x512xf32>
    %487 = arith.addf %483, %486 : vector<16x512xf32>
    %488 = vector.extract_strided_slice %487 {offsets = [0, 0], sizes = [16, 128], strides = [1, 1]} : vector<16x512xf32> to vector<16x128xf32>
    %489 = arith.negf %488 : vector<16x128xf32>
    %490 = math.exp %489 : vector<16x128xf32>
    %cst_135 = arith.constant 1.000000e+00 : f32
    %491 = vector.broadcast %cst_135 : f32 to vector<16x128xf32>
    %492 = arith.addf %491, %490 : vector<16x128xf32>
    %493 = arith.divf %491, %492 : vector<16x128xf32>
    %494 = vector.extract_strided_slice %487 {offsets = [0, 128], sizes = [16, 128], strides = [1, 1]} : vector<16x512xf32> to vector<16x128xf32>
    %495 = arith.negf %494 : vector<16x128xf32>
    %496 = math.exp %495 : vector<16x128xf32>
    %cst_136 = arith.constant 1.000000e+00 : f32
    %497 = vector.broadcast %cst_136 : f32 to vector<16x128xf32>
    %498 = arith.addf %497, %496 : vector<16x128xf32>
    %499 = arith.divf %497, %498 : vector<16x128xf32>
    %500 = vector.extract_strided_slice %487 {offsets = [0, 256], sizes = [16, 128], strides = [1, 1]} : vector<16x512xf32> to vector<16x128xf32>
    %501 = math.tanh %500 : vector<16x128xf32>
    %502 = vector.extract_strided_slice %487 {offsets = [0, 384], sizes = [16, 128], strides = [1, 1]} : vector<16x512xf32> to vector<16x128xf32>
    %503 = arith.negf %502 : vector<16x128xf32>
    %504 = math.exp %503 : vector<16x128xf32>
    %cst_137 = arith.constant 1.000000e+00 : f32
    %505 = vector.broadcast %cst_137 : f32 to vector<16x128xf32>
    %506 = arith.addf %505, %504 : vector<16x128xf32>
    %507 = arith.divf %505, %506 : vector<16x128xf32>
    %508 = arith.mulf %499, %476 : vector<16x128xf32>
    %509 = arith.mulf %493, %501 : vector<16x128xf32>
    %510 = arith.addf %508, %509 : vector<16x128xf32>
    %511 = math.tanh %510 : vector<16x128xf32>
    %512 = arith.mulf %507, %511 : vector<16x128xf32>
    %c0_138 = arith.constant 0 : index
    %c14_139 = arith.constant 14 : index
    %c0_140 = arith.constant 0 : index
    %513 = vector.load %arg4[%c0_138, %c14_139, %c0_140] : memref<16x16x128xf32, #tpu.memory_space<vmem>>, vector<16x1x128xf32>
    %514 = vector.shape_cast %513 : vector<16x1x128xf32> to vector<16x128xf32>
    %515 = vector.shape_cast %512 : vector<16x128xf32> to vector<16x1x128xf32>
    tpu.vector_store %arg4[%c0_138, %c14_139, %c0_140], %515 {strides = array<i32>} : memref<16x16x128xf32, #tpu.memory_space<vmem>>, vector<16x1x128xf32>,
    %516 = arith.truncf %512 : vector<16x128xf32> to vector<16x128xbf16>
    %cst_141 = arith.constant dense<0.000000e+00> : vector<16x512xf32>
    %517 = tpu.matmul %516, %3, %cst_141 {dimension_numbers = #tpu.dot_dimension_numbers<[1], [0], [0], [1], [0, 0, 1, 1], [], []>} : vector<16x128xbf16>, vector<128x512xbf16>, vector<16x512xf32> -> vector<16x512xf32>
    %c0_142 = arith.constant 0 : index
    %c15 = arith.constant 15 : index
    %c0_143 = arith.constant 0 : index
    %518 = vector.load %arg2[%c0_142, %c15, %c0_143] : memref<16x16x512xbf16, #tpu.memory_space<vmem>>, vector<16x1x512xbf16>
    %519 = vector.shape_cast %518 : vector<16x1x512xbf16> to vector<16x512xbf16>
    %520 = arith.extf %519 : vector<16x512xbf16> to vector<16x512xf32>
    %521 = arith.addf %517, %520 : vector<16x512xf32>
    %522 = vector.extract_strided_slice %521 {offsets = [0, 0], sizes = [16, 128], strides = [1, 1]} : vector<16x512xf32> to vector<16x128xf32>
    %523 = arith.negf %522 : vector<16x128xf32>
    %524 = math.exp %523 : vector<16x128xf32>
    %cst_144 = arith.constant 1.000000e+00 : f32
    %525 = vector.broadcast %cst_144 : f32 to vector<16x128xf32>
    %526 = arith.addf %525, %524 : vector<16x128xf32>
    %527 = arith.divf %525, %526 : vector<16x128xf32>
    %528 = vector.extract_strided_slice %521 {offsets = [0, 128], sizes = [16, 128], strides = [1, 1]} : vector<16x512xf32> to vector<16x128xf32>
    %529 = arith.negf %528 : vector<16x128xf32>
    %530 = math.exp %529 : vector<16x128xf32>
    %cst_145 = arith.constant 1.000000e+00 : f32
    %531 = vector.broadcast %cst_145 : f32 to vector<16x128xf32>
    %532 = arith.addf %531, %530 : vector<16x128xf32>
    %533 = arith.divf %531, %532 : vector<16x128xf32>
    %534 = vector.extract_strided_slice %521 {offsets = [0, 256], sizes = [16, 128], strides = [1, 1]} : vector<16x512xf32> to vector<16x128xf32>
    %535 = math.tanh %534 : vector<16x128xf32>
    %536 = vector.extract_strided_slice %521 {offsets = [0, 384], sizes = [16, 128], strides = [1, 1]} : vector<16x512xf32> to vector<16x128xf32>
    %537 = arith.negf %536 : vector<16x128xf32>
    %538 = math.exp %537 : vector<16x128xf32>
    %cst_146 = arith.constant 1.000000e+00 : f32
    %539 = vector.broadcast %cst_146 : f32 to vector<16x128xf32>
    %540 = arith.addf %539, %538 : vector<16x128xf32>
    %541 = arith.divf %539, %540 : vector<16x128xf32>
    %542 = arith.mulf %533, %510 : vector<16x128xf32>
    %543 = arith.mulf %527, %535 : vector<16x128xf32>
    %544 = arith.addf %542, %543 : vector<16x128xf32>
    %545 = math.tanh %544 : vector<16x128xf32>
    %546 = arith.mulf %541, %545 : vector<16x128xf32>
    %c0_147 = arith.constant 0 : index
    %c15_148 = arith.constant 15 : index
    %c0_149 = arith.constant 0 : index
    %547 = vector.load %arg4[%c0_147, %c15_148, %c0_149] : memref<16x16x128xf32, #tpu.memory_space<vmem>>, vector<16x1x128xf32>
    %548 = vector.shape_cast %547 : vector<16x1x128xf32> to vector<16x128xf32>
    %549 = vector.shape_cast %546 : vector<16x128xf32> to vector<16x1x128xf32>
    tpu.vector_store %arg4[%c0_147, %c15_148, %c0_149], %549 {strides = array<i32>} : memref<16x16x128xf32, #tpu.memory_space<vmem>>, vector<16x1x128xf32>,
    %c0_150 = arith.constant 0 : index
    %c0_151 = arith.constant 0 : index
    %550 = vector.load %arg5[%c0_150, %c0_151] : memref<16x128xf32, #tpu.memory_space<vmem>>, vector<16x128xf32>
    tpu.vector_store %arg5[%c0_150, %c0_151], %546 {strides = array<i32>} : memref<16x128xf32, #tpu.memory_space<vmem>>, vector<16x128xf32>,
    %c0_152 = arith.constant 0 : index
    %c0_153 = arith.constant 0 : index
    %551 = vector.load %arg6[%c0_152, %c0_153] : memref<16x128xf32, #tpu.memory_space<vmem>>, vector<16x128xf32>
    tpu.vector_store %arg6[%c0_152, %c0_153], %544 {strides = array<i32>} : memref<16x128xf32, #tpu.memory_space<vmem>>, vector<16x128xf32>,
    return
  }
  func.func @transform_0(%arg0: i32, %arg1: i32) -> (i32, i32, i32) {
    %c0_i32 = arith.constant 0 : i32
    %c0_i32_0 = arith.constant 0 : i32
    return %arg0, %arg1, %c0_i32 : i32, i32, i32
  }
  func.func @transform_1(%arg0: i32, %arg1: i32) -> (i32, i32) {
    %c0_i32 = arith.constant 0 : i32
    %c0_i32_0 = arith.constant 0 : i32
    %c0_i32_1 = arith.constant 0 : i32
    return %c0_i32, %c0_i32_0 : i32, i32
  }
  func.func @transform_2(%arg0: i32, %arg1: i32) -> (i32, i32, i32) {
    %c0_i32 = arith.constant 0 : i32
    %c0_i32_0 = arith.constant 0 : i32
    return %arg0, %arg1, %c0_i32 : i32, i32, i32
  }
}

</mosaic_0001>

<llo_original>
// kernel: lstm_branch_forward.1
$region0: #{lstm_branch_forward.1}
  #allocation0 [shape = 'u32[]', space=smem, size = 0x4, offset = 0x4, fixed_abs, tag = 'smem constant byte address 0x4 - core index']
  #allocation1 [shape = 'u32[72,128]{1,0:T(1,128)}', space=vmem, size = 0x9000, scoped, tag = 'internal scratch']
  #allocation2 [shape = 'f32[16,128]{1,0:T(8,128)}', space=vmem, size = 0x2000, scoped, tag = 'scratch operand']
  #allocation3 [shape = 'f32[16,128]{1,0:T(8,128)}', space=vmem, size = 0x2000, scoped, tag = 'scratch operand']
  %s0 = inlined_call_operand.vmem [shape: bf16[16,16,512], index: 0, kind: input, shape index: {}]
  %s1 = inlined_call_operand.vmem [shape: bf16[128,512], index: 1, kind: input, shape index: {}]
  %s2 = inlined_call_operand.vmem [shape: f32[16,16,128], index: 2, kind: output, shape index: {}]
  %s3 = sld [smem:[#allocation0]]
  $region22: #{lstm_branch_forward.1} parent=0
    _
  %s5 = ssub.s32 1, %s3
  %s6 = scalar_select 0, %s5, %s3
  // Predicated region
  $region2: #{lstm_branch_forward.1} parent=0 // pred_check
    _
  $region3: #{lstm_branch_forward.1} parent=0 // pred_check_branch
    %8 = sbr.rel (0) target = $region5
  $region4: #{lstm_branch_forward.1} parent=0 // pred_region
    _
  $region5: #{lstm_branch_forward.1} parent=0 // pred_fallthru
    _
  // Predicated region
  $region6: #{lstm_branch_forward.1} parent=0 // pred_check
    _
  $region7: #{lstm_branch_forward.1} parent=0 // pred_check_branch
    %10 = sbr.rel (0) target = $region9
  $region8: #{lstm_branch_forward.1} parent=0 // pred_region
    _
  $region9: #{lstm_branch_forward.1} parent=0 // pred_fallthru
    _
  %p11 = scmp.eq.s32.totalorder 0, 0
  // Predicated region
  $region10: #{lstm_branch_forward.1} parent=0 // pred_check
    %p12 = pneg %p11
  $region11: #{lstm_branch_forward.1} parent=0 // pred_check_branch
    %14 = sbr.rel (%p12) target = $region13
  $region12: #{lstm_branch_forward.1} parent=0 // pred_region
    %15 = vst [vmem:[#allocation2] sm:$0xff] 0.0
    %16 = vst [vmem:[#allocation2 + $0x8] sm:$0xff] 0.0
    %17 = vst [vmem:[#allocation3] sm:$0xff] 0.0
    %18 = vst [vmem:[#allocation3 + $0x8] sm:$0xff] 0.0
  $region13: #{lstm_branch_forward.1} parent=0 // pred_fallthru
    _
  %v19 = vld [vmem:[%s1] sm:$0xff]
  %v20 = vld [vmem:[%s1 + $0x8] sm:$0xff]
  %v21 = vld [vmem:[%s1 + $0x10] sm:$0xff]
  %v22 = vld [vmem:[%s1 + $0x18] sm:$0xff]
  %v23 = vld [vmem:[%s1 + $0x20] sm:$0xff]
  %v24 = vld [vmem:[%s1 + $0x28] sm:$0xff]
  %v25 = vld [vmem:[%s1 + $0x30] sm:$0xff]
  %v26 = vld [vmem:[%s1 + $0x38] sm:$0xff]
  %v27 = vld [vmem:[%s1 + $0x40] sm:$0xff]
  %v28 = vld [vmem:[%s1 + $0x48] sm:$0xff]
  %v29 = vld [vmem:[%s1 + $0x50] sm:$0xff]
  %v30 = vld [vmem:[%s1 + $0x58] sm:$0xff]
  %v31 = vld [vmem:[%s1 + $0x60] sm:$0xff]
  %v32 = vld [vmem:[%s1 + $0x68] sm:$0xff]
  %v33 = vld [vmem:[%s1 + $0x70] sm:$0xff]
  %v34 = vld [vmem:[%s1 + $0x78] sm:$0xff]
  %v35 = vld [vmem:[%s1 + $0x80] sm:$0xff]
  %v36 = vld [vmem:[%s1 + $0x88] sm:$0xff]
  %v37 = vld [vmem:[%s1 + $0x90] sm:$0xff]
  %v38 = vld [vmem:[%s1 + $0x98] sm:$0xff]
  %v39 = vld [vmem:[%s1 + $0xa0] sm:$0xff]
  %v40 = vld [vmem:[%s1 + $0xa8] sm:$0xff]
  %v41 = vld [vmem:[%s1 + $0xb0] sm:$0xff]
  %v42 = vld [vmem:[%s1 + $0xb8] sm:$0xff]
  %v43 = vld [vmem:[%s1 + $0xc0] sm:$0xff]
  %v44 = vld [vmem:[%s1 + $0xc8] sm:$0xff]
  %v45 = vld [vmem:[%s1 + $0xd0] sm:$0xff]
  %v46 = vld [vmem:[%s1 + $0xd8] sm:$0xff]
  %v47 = vld [vmem:[%s1 + $0xe0] sm:$0xff]
  %v48 = vld [vmem:[%s1 + $0xe8] sm:$0xff]
  %v49 = vld [vmem:[%s1 + $0xf0] sm:$0xff]
  %v50 = vld [vmem:[%s1 + $0xf8] sm:$0xff]
  %v51 = vld [vmem:[#allocation2] sm:$0xff]
  %v52 = vld [vmem:[#allocation2 + $0x8] sm:$0xff]
  %v53 = vld [vmem:[#allocation3] sm:$0xff]
  %v54 = vld [vmem:[#allocation3 + $0x8] sm:$0xff]
  %v55 = vpack.c.bf16 %v52, %v51
  %v56 = vld [vmem:[%s0] sm:$0x11]
  %v57 = vld [vmem:[%s0 + $0x8] sm:$0x11]
  %v58 = vld [vmem:[%s0 + $0x20] sm:$0x11]
  %v59 = vld [vmem:[%s0 + $0x28] sm:$0x11]
  %v60 = vld [vmem:[%s0 + $0x40] sm:$0x11]
  %v61 = vld [vmem:[%s0 + $0x48] sm:$0x11]
  %v62 = vld [vmem:[%s0 + $0x60] sm:$0x11]
  %v63 = vld [vmem:[%s0 + $0x68] sm:$0x11]
  %v64 = vld [vmem:[%s0 + $0x80] sm:$0x11]
  %v65 = vld [vmem:[%s0 + $0x88] sm:$0x11]
  %v66 = vld [vmem:[%s0 + $0xa0] sm:$0x11]
  %v67 = vld [vmem:[%s0 + $0xa8] sm:$0x11]
  %v68 = vld [vmem:[%s0 + $0xc0] sm:$0x11]
  %v69 = vld [vmem:[%s0 + $0xc8] sm:$0x11]
  %v70 = vld [vmem:[%s0 + $0xe0] sm:$0x11]
  %v71 = vld [vmem:[%s0 + $0xe8] sm:$0x11]
  %v72 = vld [vmem:[%s0 + $0x100] sm:$0x11]
  %v73 = vld [vmem:[%s0 + $0x108] sm:$0x11]
  %v74 = vld [vmem:[%s0 + $0x120] sm:$0x11]
  %v75 = vld [vmem:[%s0 + $0x128] sm:$0x11]
  %v76 = vld [vmem:[%s0 + $0x140] sm:$0x11]
  %v77 = vld [vmem:[%s0 + $0x148] sm:$0x11]
  %v78 = vld [vmem:[%s0 + $0x160] sm:$0x11]
  %v79 = vld [vmem:[%s0 + $0x168] sm:$0x11]
  %v80 = vld [vmem:[%s0 + $0x180] sm:$0x11]
  %v81 = vld [vmem:[%s0 + $0x188] sm:$0x11]
  %v82 = vld [vmem:[%s0 + $0x1a0] sm:$0x11]
  %v83 = vld [vmem:[%s0 + $0x1a8] sm:$0x11]
  %v84 = vld [vmem:[%s0 + $0x1c0] sm:$0x11]
  %v85 = vld [vmem:[%s0 + $0x1c8] sm:$0x11]
  %v86 = vld [vmem:[%s0 + $0x1e0] sm:$0x11]
  %v87 = vld [vmem:[%s0 + $0x1e8] sm:$0x11]
  %v88 = vunpack.c.l.bf16 %v56
  %v89 = vunpack.c.h.bf16 %v56
  %v90 = vunpack.c.l.bf16 %v57
  %v91 = vunpack.c.h.bf16 %v57
  %v92 = vunpack.c.l.bf16 %v58
  %v93 = vunpack.c.h.bf16 %v58
  %v94 = vunpack.c.l.bf16 %v59
  %v95 = vunpack.c.h.bf16 %v59
  %v96 = vunpack.c.l.bf16 %v60
  %v97 = vunpack.c.h.bf16 %v60
  %v98 = vunpack.c.l.bf16 %v61
  %v99 = vunpack.c.h.bf16 %v61
  %v100 = vunpack.c.l.bf16 %v62
  %v101 = vunpack.c.h.bf16 %v62
  %v102 = vunpack.c.l.bf16 %v63
  %v103 = vunpack.c.h.bf16 %v63
  %v104 = vunpack.c.l.bf16 %v64
  %v105 = vunpack.c.h.bf16 %v64
  %v106 = vunpack.c.l.bf16 %v65
  %v107 = vunpack.c.h.bf16 %v65
  %v108 = vunpack.c.l.bf16 %v66
  %v109 = vunpack.c.h.bf16 %v66
  %v110 = vunpack.c.l.bf16 %v67
  %v111 = vunpack.c.h.bf16 %v67
  %v112 = vunpack.c.l.bf16 %v68
  %v113 = vunpack.c.h.bf16 %v68
  %v114 = vunpack.c.l.bf16 %v69
  %v115 = vunpack.c.h.bf16 %v69
  %v116 = vunpack.c.l.bf16 %v70
  %v117 = vunpack.c.h.bf16 %v70
  %v118 = vunpack.c.l.bf16 %v71
  %v119 = vunpack.c.h.bf16 %v71
  %v120 = vunpack.c.l.bf16 %v72
  %v121 = vunpack.c.h.bf16 %v72
  %v122 = vunpack.c.l.bf16 %v73
  %v123 = vunpack.c.h.bf16 %v73
  %v124 = vunpack.c.l.bf16 %v74
  %v125 = vunpack.c.h.bf16 %v74
  %v126 = vunpack.c.l.bf16 %v75
  %v127 = vunpack.c.h.bf16 %v75
  %v128 = vunpack.c.l.bf16 %v76
  %v129 = vunpack.c.h.bf16 %v76
  %v130 = vunpack.c.l.bf16 %v77
  %v131 = vunpack.c.h.bf16 %v77
  %v132 = vunpack.c.l.bf16 %v78
  %v133 = vunpack.c.h.bf16 %v78
  %v134 = vunpack.c.l.bf16 %v79
  %v135 = vunpack.c.h.bf16 %v79
  %v136 = vunpack.c.l.bf16 %v80
  %v137 = vunpack.c.h.bf16 %v80
  %v138 = vunpack.c.l.bf16 %v81
  %v139 = vunpack.c.h.bf16 %v81
  %v140 = vunpack.c.l.bf16 %v82
  %v141 = vunpack.c.h.bf16 %v82
  %v142 = vunpack.c.l.bf16 %v83
  %v143 = vunpack.c.h.bf16 %v83
  %v144 = vunpack.c.l.bf16 %v84
  %v145 = vunpack.c.h.bf16 %v84
  %v146 = vunpack.c.l.bf16 %v85
  %v147 = vunpack.c.h.bf16 %v85
  %v148 = vunpack.c.l.bf16 %v86
  %v149 = vunpack.c.h.bf16 %v86
  %v150 = vunpack.c.l.bf16 %v87
  %v151 = vunpack.c.h.bf16 %v87
  %v184 = vunpack.c.l.b16 %v19
  %v185 = vunpack.c.h.b16 %v19
  %v186 = vunpack.c.l.b16 %v20
  %v187 = vunpack.c.h.b16 %v20
  %v188 = vunpack.c.l.b16 %v21
  %v189 = vunpack.c.h.b16 %v21
  %v190 = vunpack.c.l.b16 %v22
  %v191 = vunpack.c.h.b16 %v22
  %v192 = vunpack.c.l.b16 %v23
  %v193 = vunpack.c.h.b16 %v23
  %v194 = vunpack.c.l.b16 %v24
  %v195 = vunpack.c.h.b16 %v24
  %v196 = vunpack.c.l.b16 %v25
  %v197 = vunpack.c.h.b16 %v25
  %v198 = vunpack.c.l.b16 %v26
  %v199 = vunpack.c.h.b16 %v26
  %v200 = vunpack.c.l.b16 %v27
  %v201 = vunpack.c.h.b16 %v27
  %v202 = vunpack.c.l.b16 %v28
  %v203 = vunpack.c.h.b16 %v28
  %v204 = vunpack.c.l.b16 %v29
  %v205 = vunpack.c.h.b16 %v29
  %v206 = vunpack.c.l.b16 %v30
  %v207 = vunpack.c.h.b16 %v30
  %v208 = vunpack.c.l.b16 %v31
  %v209 = vunpack.c.h.b16 %v31
  %v210 = vunpack.c.l.b16 %v32
  %v211 = vunpack.c.h.b16 %v32
  %v212 = vunpack.c.l.b16 %v33
  %v213 = vunpack.c.h.b16 %v33
  %v214 = vunpack.c.l.b16 %v34
  %v215 = vunpack.c.h.b16 %v34
  %v216 = vunpack.c.l.b16 %v35
  %v217 = vunpack.c.h.b16 %v35
  %v218 = vunpack.c.l.b16 %v36
  %v219 = vunpack.c.h.b16 %v36
  %v220 = vunpack.c.l.b16 %v37
  %v221 = vunpack.c.h.b16 %v37
  %v222 = vunpack.c.l.b16 %v38
  %v223 = vunpack.c.h.b16 %v38
  %v224 = vunpack.c.l.b16 %v39
  %v225 = vunpack.c.h.b16 %v39
  %v226 = vunpack.c.l.b16 %v40
  %v227 = vunpack.c.h.b16 %v40
  %v228 = vunpack.c.l.b16 %v41
  %v229 = vunpack.c.h.b16 %v41
  %v230 = vunpack.c.l.b16 %v42
  %v231 = vunpack.c.h.b16 %v42
  %v232 = vunpack.c.l.b16 %v43
  %v233 = vunpack.c.h.b16 %v43
  %v234 = vunpack.c.l.b16 %v44
  %v235 = vunpack.c.h.b16 %v44
  %v236 = vunpack.c.l.b16 %v45
  %v237 = vunpack.c.h.b16 %v45
  %v238 = vunpack.c.l.b16 %v46
  %v239 = vunpack.c.h.b16 %v46
  %v240 = vunpack.c.l.b16 %v47
  %v241 = vunpack.c.h.b16 %v47
  %v242 = vunpack.c.l.b16 %v48
  %v243 = vunpack.c.h.b16 %v48
  %v244 = vunpack.c.l.b16 %v49
  %v245 = vunpack.c.h.b16 %v49
  %v246 = vunpack.c.l.b16 %v50
  %v247 = vunpack.c.h.b16 %v50
  %v248 = vpack.c.b16 %v188, %v184
  %v249 = vpack.c.b16 %v189, %v185
  %v250 = vpack.c.b16 %v190, %v186
  %v251 = vpack.c.b16 %v191, %v187
  %v252 = vpack.c.b16 %v196, %v192
  %v253 = vpack.c.b16 %v197, %v193
  %v254 = vpack.c.b16 %v198, %v194
  %v255 = vpack.c.b16 %v199, %v195
  %v256 = vpack.c.b16 %v204, %v200
  %v257 = vpack.c.b16 %v205, %v201
  %v258 = vpack.c.b16 %v206, %v202
  %v259 = vpack.c.b16 %v207, %v203
  %v260 = vpack.c.b16 %v212, %v208
  %v261 = vpack.c.b16 %v213, %v209
  %v262 = vpack.c.b16 %v214, %v210
  %v263 = vpack.c.b16 %v215, %v211
  %v264 = vpack.c.b16 %v220, %v216
  %v265 = vpack.c.b16 %v221, %v217
  %v266 = vpack.c.b16 %v222, %v218
  %v267 = vpack.c.b16 %v223, %v219
  %v268 = vpack.c.b16 %v228, %v224
  %v269 = vpack.c.b16 %v229, %v225
  %v270 = vpack.c.b16 %v230, %v226
  %v271 = vpack.c.b16 %v231, %v227
  %v272 = vpack.c.b16 %v236, %v232
  %v273 = vpack.c.b16 %v237, %v233
  %v274 = vpack.c.b16 %v238, %v234
  %v275 = vpack.c.b16 %v239, %v235
  %v276 = vpack.c.b16 %v244, %v240
  %v277 = vpack.c.b16 %v245, %v241
  %v278 = vpack.c.b16 %v246, %v242
  %v279 = vpack.c.b16 %v247, %v243
  %v376 = vrot.slane %v92, 7
  %vm377 = vcmask 1041409
  %v378 = vsel %vm377, %v376, %v88
  %v379 = vrot.slane %v96, 6
  %vm380 = vcmask 1042434
  %v381 = vsel %vm380, %v379, %v378
  %v382 = vrot.slane %v100, 5
  %vm383 = vcmask 1043459
  %v384 = vsel %vm383, %v382, %v381
  %v385 = vrot.slane %v104, 4
  %vm386 = vcmask 1044484
  %v387 = vsel %vm386, %v385, %v384
  %v388 = vrot.slane %v108, 3
  %vm389 = vcmask 1045509
  %v390 = vsel %vm389, %v388, %v387
  %v391 = vrot.slane %v112, 2
  %vm392 = vcmask 1046534
  %v393 = vsel %vm392, %v391, %v390
  %v394 = vrot.slane %v116, 1
  %vm395 = vcmask 1047559
  %v396 = vsel %vm395, %v394, %v393
  %v397 = vrot.slane %v93, 7
  %v398 = vsel %vm377, %v397, %v89
  %v399 = vrot.slane %v97, 6
  %v400 = vsel %vm380, %v399, %v398
  %v401 = vrot.slane %v101, 5
  %v402 = vsel %vm383, %v401, %v400
  %v403 = vrot.slane %v105, 4
  %v404 = vsel %vm386, %v403, %v402
  %v405 = vrot.slane %v109, 3
  %v406 = vsel %vm389, %v405, %v404
  %v407 = vrot.slane %v113, 2
  %v408 = vsel %vm392, %v407, %v406
  %v409 = vrot.slane %v117, 1
  %v410 = vsel %vm395, %v409, %v408
  %v411 = vrot.slane %v94, 7
  %v412 = vsel %vm377, %v411, %v90
  %v413 = vrot.slane %v98, 6
  %v414 = vsel %vm380, %v413, %v412
  %v415 = vrot.slane %v102, 5
  %v416 = vsel %vm383, %v415, %v414
  %v417 = vrot.slane %v106, 4
  %v418 = vsel %vm386, %v417, %v416
  %v419 = vrot.slane %v110, 3
  %v420 = vsel %vm389, %v419, %v418
  %v421 = vrot.slane %v114, 2
  %v422 = vsel %vm392, %v421, %v420
  %v423 = vrot.slane %v118, 1
  %v424 = vsel %vm395, %v423, %v422
  %v425 = vrot.slane %v95, 7
  %v426 = vsel %vm377, %v425, %v91
  %v427 = vrot.slane %v99, 6
  %v428 = vsel %vm380, %v427, %v426
  %v429 = vrot.slane %v103, 5
  %v430 = vsel %vm383, %v429, %v428
  %v431 = vrot.slane %v107, 4
  %v432 = vsel %vm386, %v431, %v430
  %v433 = vrot.slane %v111, 3
  %v434 = vsel %vm389, %v433, %v432
  %v435 = vrot.slane %v115, 2
  %v436 = vsel %vm392, %v435, %v434
  %v437 = vrot.slane %v119, 1
  %v438 = vsel %vm395, %v437, %v436
  %v439 = vrot.slane %v124, 7
  %v440 = vsel %vm377, %v439, %v120
  %v441 = vrot.slane %v128, 6
  %v442 = vsel %vm380, %v441, %v440
  %v443 = vrot.slane %v132, 5
  %v444 = vsel %vm383, %v443, %v442
  %v445 = vrot.slane %v136, 4
  %v446 = vsel %vm386, %v445, %v444
  %v447 = vrot.slane %v140, 3
  %v448 = vsel %vm389, %v447, %v446
  %v449 = vrot.slane %v144, 2
  %v450 = vsel %vm392, %v449, %v448
  %v451 = vrot.slane %v148, 1
  %v452 = vsel %vm395, %v451, %v450
  %v453 = vrot.slane %v125, 7
  %v454 = vsel %vm377, %v453, %v121
  %v455 = vrot.slane %v129, 6
  %v456 = vsel %vm380, %v455, %v454
  %v457 = vrot.slane %v133, 5
  %v458 = vsel %vm383, %v457, %v456
  %v459 = vrot.slane %v137, 4
  %v460 = vsel %vm386, %v459, %v458
  %v461 = vrot.slane %v141, 3
  %v462 = vsel %vm389, %v461, %v460
  %v463 = vrot.slane %v145, 2
  %v464 = vsel %vm392, %v463, %v462
  %v465 = vrot.slane %v149, 1
  %v466 = vsel %vm395, %v465, %v464
  %v467 = vrot.slane %v126, 7
  %v468 = vsel %vm377, %v467, %v122
  %v469 = vrot.slane %v130, 6
  %v470 = vsel %vm380, %v469, %v468
  %v471 = vrot.slane %v134, 5
  %v472 = vsel %vm383, %v471, %v470
  %v473 = vrot.slane %v138, 4
  %v474 = vsel %vm386, %v473, %v472
  %v475 = vrot.slane %v142, 3
  %v476 = vsel %vm389, %v475, %v474
  %v477 = vrot.slane %v146, 2
  %v478 = vsel %vm392, %v477, %v476
  %v479 = vrot.slane %v150, 1
  %v480 = vsel %vm395, %v479, %v478
  %v481 = vrot.slane %v127, 7
  %v482 = vsel %vm377, %v481, %v123
  %v483 = vrot.slane %v131, 6
  %v484 = vsel %vm380, %v483, %v482
  %v485 = vrot.slane %v135, 5
  %v486 = vsel %vm383, %v485, %v484
  %v487 = vrot.slane %v139, 4
  %v488 = vsel %vm386, %v487, %v486
  %v489 = vrot.slane %v143, 3
  %v490 = vsel %vm389, %v489, %v488
  %v491 = vrot.slane %v147, 2
  %v492 = vsel %vm392, %v491, %v490
  %v493 = vrot.slane %v151, 1
  %v494 = vsel %vm395, %v493, %v492
  %503 = vmatpush.bf16.msra.mxu0 %v276
  %504 = vmatpush.bf16.msra.mxu0 %v272
  %505 = vmatpush.bf16.msra.mxu0 %v268
  %506 = vmatpush.bf16.msra.mxu0 %v264
  %507 = vmatpush.bf16.msra.mxu0 %v260
  %508 = vmatpush.bf16.msra.mxu0 %v256
  %509 = vmatpush.bf16.msra.mxu0 %v252
  %510 = vmatpush.bf16.msra.mxu0 %v248
  %511 = vmatmul.bf16.gmra.mxu0 %v55
  %v512 = vpop.f32.mrf.mxu0
  %v513 = vadd.f32 %v396, %v512
  %v514 = vpop.f32.mrf.mxu0
  %v515 = vadd.f32 %v452, %v514
  %516 = vdwg.mxu0
  %517 = vmatpush.bf16.msra.mxu0 %v277
  %518 = vmatpush.bf16.msra.mxu0 %v273
  %519 = vmatpush.bf16.msra.mxu0 %v269
  %520 = vmatpush.bf16.msra.mxu0 %v265
  %521 = vmatpush.bf16.msra.mxu0 %v261
  %522 = vmatpush.bf16.msra.mxu0 %v257
  %523 = vmatpush.bf16.msra.mxu0 %v253
  %524 = vmatpush.bf16.msra.mxu0 %v249
  %525 = vmatmul.bf16.gmra.mxu0 %v55
  %v526 = vpop.f32.mrf.mxu0
  %v527 = vadd.f32 %v410, %v526
  %v528 = vpop.f32.mrf.mxu0
  %v529 = vadd.f32 %v466, %v528
  %530 = vdwg.mxu0
  %531 = vmatpush.bf16.msra.mxu0 %v278
  %532 = vmatpush.bf16.msra.mxu0 %v274
  %533 = vmatpush.bf16.msra.mxu0 %v270
  %534 = vmatpush.bf16.msra.mxu0 %v266
  %535 = vmatpush.bf16.msra.mxu0 %v262
  %536 = vmatpush.bf16.msra.mxu0 %v258
  %537 = vmatpush.bf16.msra.mxu0 %v254
  %538 = vmatpush.bf16.msra.mxu0 %v250
  %539 = vmatmul.bf16.gmra.mxu0 %v55
  %v540 = vpop.f32.mrf.mxu0
  %v541 = vadd.f32 %v424, %v540
  %v542 = vpop.f32.mrf.mxu0
  %v543 = vadd.f32 %v480, %v542
  %544 = vdwg.mxu0
  %545 = vmatpush.bf16.msra.mxu0 %v279
  %546 = vmatpush.bf16.msra.mxu0 %v275
  %547 = vmatpush.bf16.msra.mxu0 %v271
  %548 = vmatpush.bf16.msra.mxu0 %v267
  %549 = vmatpush.bf16.msra.mxu0 %v263
  %550 = vmatpush.bf16.msra.mxu0 %v259
  %551 = vmatpush.bf16.msra.mxu0 %v255
  %552 = vmatpush.bf16.msra.mxu0 %v251
  %553 = vmatmul.bf16.gmra.mxu0 %v55
  %v554 = vpop.f32.mrf.mxu0
  %v555 = vadd.f32 %v438, %v554
  %v556 = vpop.f32.mrf.mxu0
  %v557 = vadd.f32 %v494, %v556
  %558 = vdwg.mxu0
  %v559 = vxor.u32 %v513, 2147483648
  %v560 = vxor.u32 %v515, 2147483648
  %v561 = vmul.f32 %v559, 1.442695
  %v562 = vpow.pop %v561
  %v563 = vmul.f32 %v560, 1.442695
  %v564 = vpow.pop %v563
  %v565 = vadd.f32 %v562, 1.0
  %v566 = vadd.f32 %v564, 1.0
  %v567 = vrcp.pop %v565
  %v568 = vmul.f32 %v565, %v567
  %v569 = vsub.f32 1.0, %v568
  %v570 = vmul.f32 %v567, %v569
  %v571 = vadd.f32 %v567, %v570
  %vm572 = vweird.f32 %v565
  %vm573 = vweird.f32 %v567
  %vm574 = vmor %vm572, %vm573
  %v575 = vsel %vm574, %v567, %v571
  %v576 = vand.u32 2147483647, %v565
  %vm577 = vcmp.eq.f32.partialorder %v576, 8.507059e+37
  %v578 = vand.u32 %v565, 2147483648
  %v579 = vor.u32 1.1754944e-38, %v578
  %v580 = vsel %vm577, %v579, %v575
  %v581 = vmul.f32 1.0, %v580
  %v582 = vrcp.pop %v566
  %v583 = vmul.f32 %v566, %v582
  %v584 = vsub.f32 1.0, %v583
  %v585 = vmul.f32 %v582, %v584
  %v586 = vadd.f32 %v582, %v585
  %vm587 = vweird.f32 %v566
  %vm588 = vweird.f32 %v582
  %vm589 = vmor %vm587, %vm588
  %v590 = vsel %vm589, %v582, %v586
  %v591 = vand.u32 2147483647, %v566
  %vm592 = vcmp.eq.f32.partialorder %v591, 8.507059e+37
  %v593 = vand.u32 %v566, 2147483648
  %v594 = vor.u32 1.1754944e-38, %v593
  %v595 = vsel %vm592, %v594, %v590
  %v596 = vmul.f32 1.0, %v595
  %v597 = vxor.u32 %v527, 2147483648
  %v598 = vxor.u32 %v529, 2147483648
  %v599 = vmul.f32 %v597, 1.442695
  %v600 = vpow.pop %v599
  %v601 = vmul.f32 %v598, 1.442695
  %v602 = vpow.pop %v601
  %v603 = vadd.f32 %v600, 1.0
  %v604 = vadd.f32 %v602, 1.0
  %v605 = vrcp.pop %v603
  %v606 = vmul.f32 %v603, %v605
  %v607 = vsub.f32 1.0, %v606
  %v608 = vmul.f32 %v605, %v607
  %v609 = vadd.f32 %v605, %v608
  %vm610 = vweird.f32 %v603
  %vm611 = vweird.f32 %v605
  %vm612 = vmor %vm610, %vm611
  %v613 = vsel %vm612, %v605, %v609
  %v614 = vand.u32 2147483647, %v603
  %vm615 = vcmp.eq.f32.partialorder %v614, 8.507059e+37
  %v616 = vand.u32 %v603, 2147483648
  %v617 = vor.u32 1.1754944e-38, %v616
  %v618 = vsel %vm615, %v617, %v613
  %v619 = vmul.f32 1.0, %v618
  %v620 = vrcp.pop %v604
  %v621 = vmul.f32 %v604, %v620
  %v622 = vsub.f32 1.0, %v621
  %v623 = vmul.f32 %v620, %v622
  %v624 = vadd.f32 %v620, %v623
  %vm625 = vweird.f32 %v604
  %vm626 = vweird.f32 %v620
  %vm627 = vmor %vm625, %vm626
  %v628 = vsel %vm627, %v620, %v624
  %v629 = vand.u32 2147483647, %v604
  %vm630 = vcmp.eq.f32.partialorder %v629, 8.507059e+37
  %v631 = vand.u32 %v604, 2147483648
  %v632 = vor.u32 1.1754944e-38, %v631
  %v633 = vsel %vm630, %v632, %v628
  %v634 = vmul.f32 1.0, %v633
  %v635 = vtanh.pop %v541
  %v636 = vtanh.pop %v543
  %v637 = vxor.u32 %v555, 2147483648
  %v638 = vxor.u32 %v557, 2147483648
  %v639 = vmul.f32 %v637, 1.442695
  %v640 = vpow.pop %v639
  %v641 = vmul.f32 %v638, 1.442695
  %v642 = vpow.pop %v641
  %v643 = vadd.f32 %v640, 1.0
  %v644 = vadd.f32 %v642, 1.0
  %v645 = vrcp.pop %v643
  %v646 = vmul.f32 %v643, %v645
  %v647 = vsub.f32 1.0, %v646
  %v648 = vmul.f32 %v645, %v647
  %v649 = vadd.f32 %v645, %v648
  %vm650 = vweird.f32 %v643
  %vm651 = vweird.f32 %v645
  %vm652 = vmor %vm650, %vm651
  %v653 = vsel %vm652, %v645, %v649
  %v654 = vand.u32 2147483647, %v643
  %vm655 = vcmp.eq.f32.partialorder %v654, 8.507059e+37
  %v656 = vand.u32 %v643, 2147483648
  %v657 = vor.u32 1.1754944e-38, %v656
  %v658 = vsel %vm655, %v657, %v653
  %v659 = vmul.f32 1.0, %v658
  %v660 = vrcp.pop %v644
  %v661 = vmul.f32 %v644, %v660
  %v662 = vsub.f32 1.0, %v661
  %v663 = vmul.f32 %v660, %v662
  %v664 = vadd.f32 %v660, %v663
  %vm665 = vweird.f32 %v644
  %vm666 = vweird.f32 %v660
  %vm667 = vmor %vm665, %vm666
  %v668 = vsel %vm667, %v660, %v664
  %v669 = vand.u32 2147483647, %v644
  %vm670 = vcmp.eq.f32.partialorder %v669, 8.507059e+37
  %v671 = vand.u32 %v644, 2147483648
  %v672 = vor.u32 1.1754944e-38, %v671
  %v673 = vsel %vm670, %v672, %v668
  %v674 = vmul.f32 1.0, %v673
  %v675 = vmul.f32 %v619, %v53
  %v676 = vmul.f32 %v634, %v54
  %v677 = vmul.f32 %v581, %v635
  %v678 = vmul.f32 %v596, %v636
  %v679 = vadd.f32 %v675, %v677
  %v680 = vadd.f32 %v676, %v678
  %v681 = vtanh.pop %v679
  %v682 = vtanh.pop %v680
  %v683 = vmul.f32 %v659, %v681
  %v684 = vmul.f32 %v674, %v682
  %v687 = vrot.slane %v683, 1
  %v688 = vrot.slane %v683, 2
  %v689 = vrot.slane %v683, 3
  %v690 = vrot.slane %v683, 4
  %v691 = vrot.slane %v683, 5
  %v692 = vrot.slane %v683, 6
  %v693 = vrot.slane %v683, 7
  %v694 = vrot.slane %v684, 1
  %v695 = vrot.slane %v684, 2
  %v696 = vrot.slane %v684, 3
  %v697 = vrot.slane %v684, 4
  %v698 = vrot.slane %v684, 5
  %v699 = vrot.slane %v684, 6
  %v700 = vrot.slane %v684, 7
  %715 = vst [vmem:[%s2] sm:$0x1] %v683
  %716 = vst [vmem:[%s2 + $0x10] sm:$0x1] %v687
  %717 = vst [vmem:[%s2 + $0x20] sm:$0x1] %v688
  %718 = vst [vmem:[%s2 + $0x30] sm:$0x1] %v689
  %719 = vst [vmem:[%s2 + $0x40] sm:$0x1] %v690
  %720 = vst [vmem:[%s2 + $0x50] sm:$0x1] %v691
  %721 = vst [vmem:[%s2 + $0x60] sm:$0x1] %v692
  %722 = vst [vmem:[%s2 + $0x70] sm:$0x1] %v693
  %723 = vst [vmem:[%s2 + $0x80] sm:$0x1] %v684
  %724 = vst [vmem:[%s2 + $0x90] sm:$0x1] %v694
  %725 = vst [vmem:[%s2 + $0xa0] sm:$0x1] %v695
  %726 = vst [vmem:[%s2 + $0xb0] sm:$0x1] %v696
  %727 = vst [vmem:[%s2 + $0xc0] sm:$0x1] %v697
  %728 = vst [vmem:[%s2 + $0xd0] sm:$0x1] %v698
  %729 = vst [vmem:[%s2 + $0xe0] sm:$0x1] %v699
  %730 = vst [vmem:[%s2 + $0xf0] sm:$0x1] %v700
  %v731 = vpack.c.bf16 %v684, %v683
  %v732 = vld [vmem:[%s0] sm:$0x11]
  %v733 = vld [vmem:[%s0 + $0x8] sm:$0x11]
  %v734 = vld [vmem:[%s0 + $0x20] sm:$0x11]
  %v735 = vld [vmem:[%s0 + $0x28] sm:$0x11]
  %v736 = vld [vmem:[%s0 + $0x40] sm:$0x11]
  %v737 = vld [vmem:[%s0 + $0x48] sm:$0x11]
  %v738 = vld [vmem:[%s0 + $0x60] sm:$0x11]
  %v739 = vld [vmem:[%s0 + $0x68] sm:$0x11]
  %v740 = vld [vmem:[%s0 + $0x80] sm:$0x11]
  %v741 = vld [vmem:[%s0 + $0x88] sm:$0x11]
  %v742 = vld [vmem:[%s0 + $0xa0] sm:$0x11]
  %v743 = vld [vmem:[%s0 + $0xa8] sm:$0x11]
  %v744 = vld [vmem:[%s0 + $0xc0] sm:$0x11]
  %v745 = vld [vmem:[%s0 + $0xc8] sm:$0x11]
  %v746 = vld [vmem:[%s0 + $0xe0] sm:$0x11]
  %v747 = vld [vmem:[%s0 + $0xe8] sm:$0x11]
  %v748 = vld [vmem:[%s0 + $0x100] sm:$0x11]
  %v749 = vld [vmem:[%s0 + $0x108] sm:$0x11]
  %v750 = vld [vmem:[%s0 + $0x120] sm:$0x11]
  %v751 = vld [vmem:[%s0 + $0x128] sm:$0x11]
  %v752 = vld [vmem:[%s0 + $0x140] sm:$0x11]
  %v753 = vld [vmem:[%s0 + $0x148] sm:$0x11]
  %v754 = vld [vmem:[%s0 + $0x160] sm:$0x11]
  %v755 = vld [vmem:[%s0 + $0x168] sm:$0x11]
  %v756 = vld [vmem:[%s0 + $0x180] sm:$0x11]
  %v757 = vld [vmem:[%s0 + $0x188] sm:$0x11]
  %v758 = vld [vmem:[%s0 + $0x1a0] sm:$0x11]
  %v759 = vld [vmem:[%s0 + $0x1a8] sm:$0x11]
  %v760 = vld [vmem:[%s0 + $0x1c0] sm:$0x11]
  %v761 = vld [vmem:[%s0 + $0x1c8] sm:$0x11]
  %v762 = vld [vmem:[%s0 + $0x1e0] sm:$0x11]
  %v763 = vld [vmem:[%s0 + $0x1e8] sm:$0x11]
  %v764 = vunpack.c.l.bf16 %v732
  %v765 = vunpack.c.h.bf16 %v732
  %v766 = vunpack.c.l.bf16 %v733
  %v767 = vunpack.c.h.bf16 %v733
  %v768 = vunpack.c.l.bf16 %v734
  %v769 = vunpack.c.h.bf16 %v734
  %v770 = vunpack.c.l.bf16 %v735
  %v771 = vunpack.c.h.bf16 %v735
  %v772 = vunpack.c.l.bf16 %v736
  %v773 = vunpack.c.h.bf16 %v736
  %v774 = vunpack.c.l.bf16 %v737
  %v775 = vunpack.c.h.bf16 %v737
  %v776 = vunpack.c.l.bf16 %v738
  %v777 = vunpack.c.h.bf16 %v738
  %v778 = vunpack.c.l.bf16 %v739
  %v779 = vunpack.c.h.bf16 %v739
  %v780 = vunpack.c.l.bf16 %v740
  %v781 = vunpack.c.h.bf16 %v740
  %v782 = vunpack.c.l.bf16 %v741
  %v783 = vunpack.c.h.bf16 %v741
  %v784 = vunpack.c.l.bf16 %v742
  %v785 = vunpack.c.h.bf16 %v742
  %v786 = vunpack.c.l.bf16 %v743
  %v787 = vunpack.c.h.bf16 %v743
  %v788 = vunpack.c.l.bf16 %v744
  %v789 = vunpack.c.h.bf16 %v744
  %v790 = vunpack.c.l.bf16 %v745
  %v791 = vunpack.c.h.bf16 %v745
  %v792 = vunpack.c.l.bf16 %v746
  %v793 = vunpack.c.h.bf16 %v746
  %v794 = vunpack.c.l.bf16 %v747
  %v795 = vunpack.c.h.bf16 %v747
  %v796 = vunpack.c.l.bf16 %v748
  %v797 = vunpack.c.h.bf16 %v748
  %v798 = vunpack.c.l.bf16 %v749
  %v799 = vunpack.c.h.bf16 %v749
  %v800 = vunpack.c.l.bf16 %v750
  %v801 = vunpack.c.h.bf16 %v750
  %v802 = vunpack.c.l.bf16 %v751
  %v803 = vunpack.c.h.bf16 %v751
  %v804 = vunpack.c.l.bf16 %v752
  %v805 = vunpack.c.h.bf16 %v752
  %v806 = vunpack.c.l.bf16 %v753
  %v807 = vunpack.c.h.bf16 %v753
  %v808 = vunpack.c.l.bf16 %v754
  %v809 = vunpack.c.h.bf16 %v754
  %v810 = vunpack.c.l.bf16 %v755
  %v811 = vunpack.c.h.bf16 %v755
  %v812 = vunpack.c.l.bf16 %v756
  %v813 = vunpack.c.h.bf16 %v756
  %v814 = vunpack.c.l.bf16 %v757
  %v815 = vunpack.c.h.bf16 %v757
  %v816 = vunpack.c.l.bf16 %v758
  %v817 = vunpack.c.h.bf16 %v758
  %v818 = vunpack.c.l.bf16 %v759
  %v819 = vunpack.c.h.bf16 %v759
  %v820 = vunpack.c.l.bf16 %v760
  %v821 = vunpack.c.h.bf16 %v760
  %v822 = vunpack.c.l.bf16 %v761
  %v823 = vunpack.c.h.bf16 %v761
  %v824 = vunpack.c.l.bf16 %v762
  %v825 = vunpack.c.h.bf16 %v762
  %v826 = vunpack.c.l.bf16 %v763
  %v827 = vunpack.c.h.bf16 %v763
  %v892 = vrot.slane %v764, 1
  %v893 = vsel %vm377, %v768, %v892
  %v894 = vrot.slane %v772, 7
  %v895 = vsel %vm380, %v894, %v893
  %v896 = vrot.slane %v776, 6
  %v897 = vsel %vm383, %v896, %v895
  %v898 = vrot.slane %v780, 5
  %v899 = vsel %vm386, %v898, %v897
  %v900 = vrot.slane %v784, 4
  %v901 = vsel %vm389, %v900, %v899
  %v902 = vrot.slane %v788, 3
  %v903 = vsel %vm392, %v902, %v901
  %v904 = vrot.slane %v792, 2
  %v905 = vsel %vm395, %v904, %v903
  %v906 = vrot.slane %v765, 1
  %v907 = vsel %vm377, %v769, %v906
  %v908 = vrot.slane %v773, 7
  %v909 = vsel %vm380, %v908, %v907
  %v910 = vrot.slane %v777, 6
  %v911 = vsel %vm383, %v910, %v909
  %v912 = vrot.slane %v781, 5
  %v913 = vsel %vm386, %v912, %v911
  %v914 = vrot.slane %v785, 4
  %v915 = vsel %vm389, %v914, %v913
  %v916 = vrot.slane %v789, 3
  %v917 = vsel %vm392, %v916, %v915
  %v918 = vrot.slane %v793, 2
  %v919 = vsel %vm395, %v918, %v917
  %v920 = vrot.slane %v766, 1
  %v921 = vsel %vm377, %v770, %v920
  %v922 = vrot.slane %v774, 7
  %v923 = vsel %vm380, %v922, %v921
  %v924 = vrot.slane %v778, 6
  %v925 = vsel %vm383, %v924, %v923
  %v926 = vrot.slane %v782, 5
  %v927 = vsel %vm386, %v926, %v925
  %v928 = vrot.slane %v786, 4
  %v929 = vsel %vm389, %v928, %v927
  %v930 = vrot.slane %v790, 3
  %v931 = vsel %vm392, %v930, %v929
  %v932 = vrot.slane %v794, 2
  %v933 = vsel %vm395, %v932, %v931
  %v934 = vrot.slane %v767, 1
  %v935 = vsel %vm377, %v771, %v934
  %v936 = vrot.slane %v775, 7
  %v937 = vsel %vm380, %v936, %v935
  %v938 = vrot.slane %v779, 6
  %v939 = vsel %vm383, %v938, %v937
  %v940 = vrot.slane %v783, 5
  %v941 = vsel %vm386, %v940, %v939
  %v942 = vrot.slane %v787, 4
  %v943 = vsel %vm389, %v942, %v941
  %v944 = vrot.slane %v791, 3
  %v945 = vsel %vm392, %v944, %v943
  %v946 = vrot.slane %v795, 2
  %v947 = vsel %vm395, %v946, %v945
  %v948 = vrot.slane %v796, 1
  %v949 = vsel %vm377, %v800, %v948
  %v950 = vrot.slane %v804, 7
  %v951 = vsel %vm380, %v950, %v949
  %v952 = vrot.slane %v808, 6
  %v953 = vsel %vm383, %v952, %v951
  %v954 = vrot.slane %v812, 5
  %v955 = vsel %vm386, %v954, %v953
  %v956 = vrot.slane %v816, 4
  %v957 = vsel %vm389, %v956, %v955
  %v958 = vrot.slane %v820, 3
  %v959 = vsel %vm392, %v958, %v957
  %v960 = vrot.slane %v824, 2
  %v961 = vsel %vm395, %v960, %v959
  %v962 = vrot.slane %v797, 1
  %v963 = vsel %vm377, %v801, %v962
  %v964 = vrot.slane %v805, 7
  %v965 = vsel %vm380, %v964, %v963
  %v966 = vrot.slane %v809, 6
  %v967 = vsel %vm383, %v966, %v965
  %v968 = vrot.slane %v813, 5
  %v969 = vsel %vm386, %v968, %v967
  %v970 = vrot.slane %v817, 4
  %v971 = vsel %vm389, %v970, %v969
  %v972 = vrot.slane %v821, 3
  %v973 = vsel %vm392, %v972, %v971
  %v974 = vrot.slane %v825, 2
  %v975 = vsel %vm395, %v974, %v973
  %v976 = vrot.slane %v798, 1
  %v977 = vsel %vm377, %v802, %v976
  %v978 = vrot.slane %v806, 7
  %v979 = vsel %vm380, %v978, %v977
  %v980 = vrot.slane %v810, 6
  %v981 = vsel %vm383, %v980, %v979
  %v982 = vrot.slane %v814, 5
  %v983 = vsel %vm386, %v982, %v981
  %v984 = vrot.slane %v818, 4
  %v985 = vsel %vm389, %v984, %v983
  %v986 = vrot.slane %v822, 3
  %v987 = vsel %vm392, %v986, %v985
  %v988 = vrot.slane %v826, 2
  %v989 = vsel %vm395, %v988, %v987
  %v990 = vrot.slane %v799, 1
  %v991 = vsel %vm377, %v803, %v990
  %v992 = vrot.slane %v807, 7
  %v993 = vsel %vm380, %v992, %v991
  %v994 = vrot.slane %v811, 6
  %v995 = vsel %vm383, %v994, %v993
  %v996 = vrot.slane %v815, 5
  %v997 = vsel %vm386, %v996, %v995
  %v998 = vrot.slane %v819, 4
  %v999 = vsel %vm389, %v998, %v997
  %v1000 = vrot.slane %v823, 3
  %v1001 = vsel %vm392, %v1000, %v999
  %v1002 = vrot.slane %v827, 2
  %v1003 = vsel %vm395, %v1002, %v1001
  %1012 = vmatpush.bf16.msra.mxu0 %v276
  %1013 = vmatpush.bf16.msra.mxu0 %v272
  %1014 = vmatpush.bf16.msra.mxu0 %v268
  %1015 = vmatpush.bf16.msra.mxu0 %v264
  %1016 = vmatpush.bf16.msra.mxu0 %v260
  %1017 = vmatpush.bf16.msra.mxu0 %v256
  %1018 = vmatpush.bf16.msra.mxu0 %v252
  %1019 = vmatpush.bf16.msra.mxu0 %v248
  %1020 = vmatmul.bf16.gmra.mxu0 %v731
  %v1021 = vpop.f32.mrf.mxu0
  %v1022 = vadd.f32 %v905, %v1021
  %v1023 = vpop.f32.mrf.mxu0
  %v1024 = vadd.f32 %v961, %v1023
  %1025 = vdwg.mxu0
  %1026 = vmatpush.bf16.msra.mxu0 %v277
  %1027 = vmatpush.bf16.msra.mxu0 %v273
  %1028 = vmatpush.bf16.msra.mxu0 %v269
  %1029 = vmatpush.bf16.msra.mxu0 %v265
  %1030 = vmatpush.bf16.msra.mxu0 %v261
  %1031 = vmatpush.bf16.msra.mxu0 %v257
  %1032 = vmatpush.bf16.msra.mxu0 %v253
  %1033 = vmatpush.bf16.msra.mxu0 %v249
  %1034 = vmatmul.bf16.gmra.mxu0 %v731
  %v1035 = vpop.f32.mrf.mxu0
  %v1036 = vadd.f32 %v919, %v1035
  %v1037 = vpop.f32.mrf.mxu0
  %v1038 = vadd.f32 %v975, %v1037
  %1039 = vdwg.mxu0
  %1040 = vmatpush.bf16.msra.mxu0 %v278
  %1041 = vmatpush.bf16.msra.mxu0 %v274
  %1042 = vmatpush.bf16.msra.mxu0 %v270
  %1043 = vmatpush.bf16.msra.mxu0 %v266
  %1044 = vmatpush.bf16.msra.mxu0 %v262
  %1045 = vmatpush.bf16.msra.mxu0 %v258
  %1046 = vmatpush.bf16.msra.mxu0 %v254
  %1047 = vmatpush.bf16.msra.mxu0 %v250
  %1048 = vmatmul.bf16.gmra.mxu0 %v731
  %v1049 = vpop.f32.mrf.mxu0
  %v1050 = vadd.f32 %v933, %v1049
  %v1051 = vpop.f32.mrf.mxu0
  %v1052 = vadd.f32 %v989, %v1051
  %1053 = vdwg.mxu0
  %1054 = vmatpush.bf16.msra.mxu0 %v279
  %1055 = vmatpush.bf16.msra.mxu0 %v275
  %1056 = vmatpush.bf16.msra.mxu0 %v271
  %1057 = vmatpush.bf16.msra.mxu0 %v267
  %1058 = vmatpush.bf16.msra.mxu0 %v263
  %1059 = vmatpush.bf16.msra.mxu0 %v259
  %1060 = vmatpush.bf16.msra.mxu0 %v255
  %1061 = vmatpush.bf16.msra.mxu0 %v251
  %1062 = vmatmul.bf16.gmra.mxu0 %v731
  %v1063 = vpop.f32.mrf.mxu0
  %v1064 = vadd.f32 %v947, %v1063
  %v1065 = vpop.f32.mrf.mxu0
  %v1066 = vadd.f32 %v1003, %v1065
  %1067 = vdwg.mxu0
  %v1068 = vxor.u32 %v1022, 2147483648
  %v1069 = vxor.u32 %v1024, 2147483648
  %v1070 = vmul.f32 %v1068, 1.442695
  %v1071 = vpow.pop %v1070
  %v1072 = vmul.f32 %v1069, 1.442695
  %v1073 = vpow.pop %v1072
  %v1074 = vadd.f32 %v1071, 1.0
  %v1075 = vadd.f32 %v1073, 1.0
  %v1076 = vrcp.pop %v1074
  %v1077 = vmul.f32 %v1074, %v1076
  %v1078 = vsub.f32 1.0, %v1077
  %v1079 = vmul.f32 %v1076, %v1078
  %v1080 = vadd.f32 %v1076, %v1079
  %vm1081 = vweird.f32 %v1074
  %vm1082 = vweird.f32 %v1076
  %vm1083 = vmor %vm1081, %vm1082
  %v1084 = vsel %vm1083, %v1076, %v1080
  %v1085 = vand.u32 2147483647, %v1074
  %vm1086 = vcmp.eq.f32.partialorder %v1085, 8.507059e+37
  %v1087 = vand.u32 %v1074, 2147483648
  %v1088 = vor.u32 1.1754944e-38, %v1087
  %v1089 = vsel %vm1086, %v1088, %v1084
  %v1090 = vmul.f32 1.0, %v1089
  %v1091 = vrcp.pop %v1075
  %v1092 = vmul.f32 %v1075, %v1091
  %v1093 = vsub.f32 1.0, %v1092
  %v1094 = vmul.f32 %v1091, %v1093
  %v1095 = vadd.f32 %v1091, %v1094
  %vm1096 = vweird.f32 %v1075
  %vm1097 = vweird.f32 %v1091
  %vm1098 = vmor %vm1096, %vm1097
  %v1099 = vsel %vm1098, %v1091, %v1095
  %v1100 = vand.u32 2147483647, %v1075
  %vm1101 = vcmp.eq.f32.partialorder %v1100, 8.507059e+37
  %v1102 = vand.u32 %v1075, 2147483648
  %v1103 = vor.u32 1.1754944e-38, %v1102
  %v1104 = vsel %vm1101, %v1103, %v1099
  %v1105 = vmul.f32 1.0, %v1104
  %v1106 = vxor.u32 %v1036, 2147483648
  %v1107 = vxor.u32 %v1038, 2147483648
  %v1108 = vmul.f32 %v1106, 1.442695
  %v1109 = vpow.pop %v1108
  %v1110 = vmul.f32 %v1107, 1.442695
  %v1111 = vpow.pop %v1110
  %v1112 = vadd.f32 %v1109, 1.0
  %v1113 = vadd.f32 %v1111, 1.0
  %v1114 = vrcp.pop %v1112
  %v1115 = vmul.f32 %v1112, %v1114
  %v1116 = vsub.f32 1.0, %v1115
  %v1117 = vmul.f32 %v1114, %v1116
  %v1118 = vadd.f32 %v1114, %v1117
  %vm1119 = vweird.f32 %v1112
  %vm1120 = vweird.f32 %v1114
  %vm1121 = vmor %vm1119, %vm1120
  %v1122 = vsel %vm1121, %v1114, %v1118
  %v1123 = vand.u32 2147483647, %v1112
  %vm1124 = vcmp.eq.f32.partialorder %v1123, 8.507059e+37
  %v1125 = vand.u32 %v1112, 2147483648
  %v1126 = vor.u32 1.1754944e-38, %v1125
  %v1127 = vsel %vm1124, %v1126, %v1122
  %v1128 = vmul.f32 1.0, %v1127
  %v1129 = vrcp.pop %v1113
  %v1130 = vmul.f32 %v1113, %v1129
  %v1131 = vsub.f32 1.0, %v1130
  %v1132 = vmul.f32 %v1129, %v1131
  %v1133 = vadd.f32 %v1129, %v1132
  %vm1134 = vweird.f32 %v1113
  %vm1135 = vweird.f32 %v1129
  %vm1136 = vmor %vm1134, %vm1135
  %v1137 = vsel %vm1136, %v1129, %v1133
  %v1138 = vand.u32 2147483647, %v1113
  %vm1139 = vcmp.eq.f32.partialorder %v1138, 8.507059e+37
  %v1140 = vand.u32 %v1113, 2147483648
  %v1141 = vor.u32 1.1754944e-38, %v1140
  %v1142 = vsel %vm1139, %v1141, %v1137
  %v1143 = vmul.f32 1.0, %v1142
  %v1144 = vtanh.pop %v1050
  %v1145 = vtanh.pop %v1052
  %v1146 = vxor.u32 %v1064, 2147483648
  %v1147 = vxor.u32 %v1066, 2147483648
  %v1148 = vmul.f32 %v1146, 1.442695
  %v1149 = vpow.pop %v1148
  %v1150 = vmul.f32 %v1147, 1.442695
  %v1151 = vpow.pop %v1150
  %v1152 = vadd.f32 %v1149, 1.0
  %v1153 = vadd.f32 %v1151, 1.0
  %v1154 = vrcp.pop %v1152
  %v1155 = vmul.f32 %v1152, %v1154
  %v1156 = vsub.f32 1.0, %v1155
  %v1157 = vmul.f32 %v1154, %v1156
  %v1158 = vadd.f32 %v1154, %v1157
  %vm1159 = vweird.f32 %v1152
  %vm1160 = vweird.f32 %v1154
  %vm1161 = vmor %vm1159, %vm1160
  %v1162 = vsel %vm1161, %v1154, %v1158
  %v1163 = vand.u32 2147483647, %v1152
  %vm1164 = vcmp.eq.f32.partialorder %v1163, 8.507059e+37
  %v1165 = vand.u32 %v1152, 2147483648
  %v1166 = vor.u32 1.1754944e-38, %v1165
  %v1167 = vsel %vm1164, %v1166, %v1162
  %v1168 = vmul.f32 1.0, %v1167
  %v1169 = vrcp.pop %v1153
  %v1170 = vmul.f32 %v1153, %v1169
  %v1171 = vsub.f32 1.0, %v1170
  %v1172 = vmul.f32 %v1169, %v1171
  %v1173 = vadd.f32 %v1169, %v1172
  %vm1174 = vweird.f32 %v1153
  %vm1175 = vweird.f32 %v1169
  %vm1176 = vmor %vm1174, %vm1175
  %v1177 = vsel %vm1176, %v1169, %v1173
  %v1178 = vand.u32 2147483647, %v1153
  %vm1179 = vcmp.eq.f32.partialorder %v1178, 8.507059e+37
  %v1180 = vand.u32 %v1153, 2147483648
  %v1181 = vor.u32 1.1754944e-38, %v1180
  %v1182 = vsel %vm1179, %v1181, %v1177
  %v1183 = vmul.f32 1.0, %v1182
  %v1184 = vmul.f32 %v1128, %v679
  %v1185 = vmul.f32 %v1143, %v680
  %v1186 = vmul.f32 %v1090, %v1144
  %v1187 = vmul.f32 %v1105, %v1145
  %v1188 = vadd.f32 %v1184, %v1186
  %v1189 = vadd.f32 %v1185, %v1187
  %v1190 = vtanh.pop %v1188
  %v1191 = vtanh.pop %v1189
  %v1192 = vmul.f32 %v1168, %v1190
  %v1193 = vmul.f32 %v1183, %v1191
  %v1196 = vrot.slane %v1192, 1
  %v1197 = vrot.slane %v1192, 2
  %v1198 = vrot.slane %v1192, 3
  %v1199 = vrot.slane %v1192, 4
  %v1200 = vrot.slane %v1192, 5
  %v1201 = vrot.slane %v1192, 6
  %v1202 = vrot.slane %v1192, 7
  %v1203 = vrot.slane %v1193, 1
  %v1204 = vrot.slane %v1193, 2
  %v1205 = vrot.slane %v1193, 3
  %v1206 = vrot.slane %v1193, 4
  %v1207 = vrot.slane %v1193, 5
  %v1208 = vrot.slane %v1193, 6
  %v1209 = vrot.slane %v1193, 7
  %1224 = vst [vmem:[%s2 + $0x1] sm:$0x1] %v1192
  %1225 = vst [vmem:[%s2 + $0x11] sm:$0x1] %v1196
  %1226 = vst [vmem:[%s2 + $0x21] sm:$0x1] %v1197
  %1227 = vst [vmem:[%s2 + $0x31] sm:$0x1] %v1198
  %1228 = vst [vmem:[%s2 + $0x41] sm:$0x1] %v1199
  %1229 = vst [vmem:[%s2 + $0x51] sm:$0x1] %v1200
  %1230 = vst [vmem:[%s2 + $0x61] sm:$0x1] %v1201
  %1231 = vst [vmem:[%s2 + $0x71] sm:$0x1] %v1202
  %1232 = vst [vmem:[%s2 + $0x81] sm:$0x1] %v1193
  %1233 = vst [vmem:[%s2 + $0x91] sm:$0x1] %v1203
  %1234 = vst [vmem:[%s2 + $0xa1] sm:$0x1] %v1204
  %1235 = vst [vmem:[%s2 + $0xb1] sm:$0x1] %v1205
  %1236 = vst [vmem:[%s2 + $0xc1] sm:$0x1] %v1206
  %1237 = vst [vmem:[%s2 + $0xd1] sm:$0x1] %v1207
  %1238 = vst [vmem:[%s2 + $0xe1] sm:$0x1] %v1208
  %1239 = vst [vmem:[%s2 + $0xf1] sm:$0x1] %v1209
  %v1240 = vpack.c.bf16 %v1193, %v1192
  %v1241 = vld [vmem:[%s0] sm:$0x22]
  %v1242 = vld [vmem:[%s0 + $0x8] sm:$0x22]
  %v1243 = vld [vmem:[%s0 + $0x20] sm:$0x22]
  %v1244 = vld [vmem:[%s0 + $0x28] sm:$0x22]
  %v1245 = vld [vmem:[%s0 + $0x40] sm:$0x22]
  %v1246 = vld [vmem:[%s0 + $0x48] sm:$0x22]
  %v1247 = vld [vmem:[%s0 + $0x60] sm:$0x22]
  %v1248 = vld [vmem:[%s0 + $0x68] sm:$0x22]
  %v1249 = vld [vmem:[%s0 + $0x80] sm:$0x22]
  %v1250 = vld [vmem:[%s0 + $0x88] sm:$0x22]
  %v1251 = vld [vmem:[%s0 + $0xa0] sm:$0x22]
  %v1252 = vld [vmem:[%s0 + $0xa8] sm:$0x22]
  %v1253 = vld [vmem:[%s0 + $0xc0] sm:$0x22]
  %v1254 = vld [vmem:[%s0 + $0xc8] sm:$0x22]
  %v1255 = vld [vmem:[%s0 + $0xe0] sm:$0x22]
  %v1256 = vld [vmem:[%s0 + $0xe8] sm:$0x22]
  %v1257 = vld [vmem:[%s0 + $0x100] sm:$0x22]
  %v1258 = vld [vmem:[%s0 + $0x108] sm:$0x22]
  %v1259 = vld [vmem:[%s0 + $0x120] sm:$0x22]
  %v1260 = vld [vmem:[%s0 + $0x128] sm:$0x22]
  %v1261 = vld [vmem:[%s0 + $0x140] sm:$0x22]
  %v1262 = vld [vmem:[%s0 + $0x148] sm:$0x22]
  %v1263 = vld [vmem:[%s0 + $0x160] sm:$0x22]
  %v1264 = vld [vmem:[%s0 + $0x168] sm:$0x22]
  %v1265 = vld [vmem:[%s0 + $0x180] sm:$0x22]
  %v1266 = vld [vmem:[%s0 + $0x188] sm:$0x22]
  %v1267 = vld [vmem:[%s0 + $0x1a0] sm:$0x22]
  %v1268 = vld [vmem:[%s0 + $0x1a8] sm:$0x22]
  %v1269 = vld [vmem:[%s0 + $0x1c0] sm:$0x22]
  %v1270 = vld [vmem:[%s0 + $0x1c8] sm:$0x22]
  %v1271 = vld [vmem:[%s0 + $0x1e0] sm:$0x22]
  %v1272 = vld [vmem:[%s0 + $0x1e8] sm:$0x22]
  %v1273 = vunpack.c.l.bf16 %v1241
  %v1274 = vunpack.c.h.bf16 %v1241
  %v1275 = vunpack.c.l.bf16 %v1242
  %v1276 = vunpack.c.h.bf16 %v1242
  %v1277 = vunpack.c.l.bf16 %v1243
  %v1278 = vunpack.c.h.bf16 %v1243
  %v1279 = vunpack.c.l.bf16 %v1244
  %v1280 = vunpack.c.h.bf16 %v1244
  %v1281 = vunpack.c.l.bf16 %v1245
  %v1282 = vunpack.c.h.bf16 %v1245
  %v1283 = vunpack.c.l.bf16 %v1246
  %v1284 = vunpack.c.h.bf16 %v1246
  %v1285 = vunpack.c.l.bf16 %v1247
  %v1286 = vunpack.c.h.bf16 %v1247
  %v1287 = vunpack.c.l.bf16 %v1248
  %v1288 = vunpack.c.h.bf16 %v1248
  %v1289 = vunpack.c.l.bf16 %v1249
  %v1290 = vunpack.c.h.bf16 %v1249
  %v1291 = vunpack.c.l.bf16 %v1250
  %v1292 = vunpack.c.h.bf16 %v1250
  %v1293 = vunpack.c.l.bf16 %v1251
  %v1294 = vunpack.c.h.bf16 %v1251
  %v1295 = vunpack.c.l.bf16 %v1252
  %v1296 = vunpack.c.h.bf16 %v1252
  %v1297 = vunpack.c.l.bf16 %v1253
  %v1298 = vunpack.c.h.bf16 %v1253
  %v1299 = vunpack.c.l.bf16 %v1254
  %v1300 = vunpack.c.h.bf16 %v1254
  %v1301 = vunpack.c.l.bf16 %v1255
  %v1302 = vunpack.c.h.bf16 %v1255
  %v1303 = vunpack.c.l.bf16 %v1256
  %v1304 = vunpack.c.h.bf16 %v1256
  %v1305 = vunpack.c.l.bf16 %v1257
  %v1306 = vunpack.c.h.bf16 %v1257
  %v1307 = vunpack.c.l.bf16 %v1258
  %v1308 = vunpack.c.h.bf16 %v1258
  %v1309 = vunpack.c.l.bf16 %v1259
  %v1310 = vunpack.c.h.bf16 %v1259
  %v1311 = vunpack.c.l.bf16 %v1260
  %v1312 = vunpack.c.h.bf16 %v1260
  %v1313 = vunpack.c.l.bf16 %v1261
  %v1314 = vunpack.c.h.bf16 %v1261
  %v1315 = vunpack.c.l.bf16 %v1262
  %v1316 = vunpack.c.h.bf16 %v1262
  %v1317 = vunpack.c.l.bf16 %v1263
  %v1318 = vunpack.c.h.bf16 %v1263
  %v1319 = vunpack.c.l.bf16 %v1264
  %v1320 = vunpack.c.h.bf16 %v1264
  %v1321 = vunpack.c.l.bf16 %v1265
  %v1322 = vunpack.c.h.bf16 %v1265
  %v1323 = vunpack.c.l.bf16 %v1266
  %v1324 = vunpack.c.h.bf16 %v1266
  %v1325 = vunpack.c.l.bf16 %v1267
  %v1326 = vunpack.c.h.bf16 %v1267
  %v1327 = vunpack.c.l.bf16 %v1268
  %v1328 = vunpack.c.h.bf16 %v1268
  %v1329 = vunpack.c.l.bf16 %v1269
  %v1330 = vunpack.c.h.bf16 %v1269
  %v1331 = vunpack.c.l.bf16 %v1270
  %v1332 = vunpack.c.h.bf16 %v1270
  %v1333 = vunpack.c.l.bf16 %v1271
  %v1334 = vunpack.c.h.bf16 %v1271
  %v1335 = vunpack.c.l.bf16 %v1272
  %v1336 = vunpack.c.h.bf16 %v1272
  %v1401 = vrot.slane %v1273, 2
  %v1402 = vrot.slane %v1277, 1
  %v1403 = vsel %vm377, %v1402, %v1401
  %v1404 = vsel %vm380, %v1281, %v1403
  %v1405 = vrot.slane %v1285, 7
  %v1406 = vsel %vm383, %v1405, %v1404
  %v1407 = vrot.slane %v1289, 6
  %v1408 = vsel %vm386, %v1407, %v1406
  %v1409 = vrot.slane %v1293, 5
  %v1410 = vsel %vm389, %v1409, %v1408
  %v1411 = vrot.slane %v1297, 4
  %v1412 = vsel %vm392, %v1411, %v1410
  %v1413 = vrot.slane %v1301, 3
  %v1414 = vsel %vm395, %v1413, %v1412
  %v1415 = vrot.slane %v1274, 2
  %v1416 = vrot.slane %v1278, 1
  %v1417 = vsel %vm377, %v1416, %v1415
  %v1418 = vsel %vm380, %v1282, %v1417
  %v1419 = vrot.slane %v1286, 7
  %v1420 = vsel %vm383, %v1419, %v1418
  %v1421 = vrot.slane %v1290, 6
  %v1422 = vsel %vm386, %v1421, %v1420
  %v1423 = vrot.slane %v1294, 5
  %v1424 = vsel %vm389, %v1423, %v1422
  %v1425 = vrot.slane %v1298, 4
  %v1426 = vsel %vm392, %v1425, %v1424
  %v1427 = vrot.slane %v1302, 3
  %v1428 = vsel %vm395, %v1427, %v1426
  %v1429 = vrot.slane %v1275, 2
  %v1430 = vrot.slane %v1279, 1
  %v1431 = vsel %vm377, %v1430, %v1429
  %v1432 = vsel %vm380, %v1283, %v1431
  %v1433 = vrot.slane %v1287, 7
  %v1434 = vsel %vm383, %v1433, %v1432
  %v1435 = vrot.slane %v1291, 6
  %v1436 = vsel %vm386, %v1435, %v1434
  %v1437 = vrot.slane %v1295, 5
  %v1438 = vsel %vm389, %v1437, %v1436
  %v1439 = vrot.slane %v1299, 4
  %v1440 = vsel %vm392, %v1439, %v1438
  %v1441 = vrot.slane %v1303, 3
  %v1442 = vsel %vm395, %v1441, %v1440
  %v1443 = vrot.slane %v1276, 2
  %v1444 = vrot.slane %v1280, 1
  %v1445 = vsel %vm377, %v1444, %v1443
  %v1446 = vsel %vm380, %v1284, %v1445
  %v1447 = vrot.slane %v1288, 7
  %v1448 = vsel %vm383, %v1447, %v1446
  %v1449 = vrot.slane %v1292, 6
  %v1450 = vsel %vm386, %v1449, %v1448
  %v1451 = vrot.slane %v1296, 5
  %v1452 = vsel %vm389, %v1451, %v1450
  %v1453 = vrot.slane %v1300, 4
  %v1454 = vsel %vm392, %v1453, %v1452
  %v1455 = vrot.slane %v1304, 3
  %v1456 = vsel %vm395, %v1455, %v1454
  %v1457 = vrot.slane %v1305, 2
  %v1458 = vrot.slane %v1309, 1
  %v1459 = vsel %vm377, %v1458, %v1457
  %v1460 = vsel %vm380, %v1313, %v1459
  %v1461 = vrot.slane %v1317, 7
  %v1462 = vsel %vm383, %v1461, %v1460
  %v1463 = vrot.slane %v1321, 6
  %v1464 = vsel %vm386, %v1463, %v1462
  %v1465 = vrot.slane %v1325, 5
  %v1466 = vsel %vm389, %v1465, %v1464
  %v1467 = vrot.slane %v1329, 4
  %v1468 = vsel %vm392, %v1467, %v1466
  %v1469 = vrot.slane %v1333, 3
  %v1470 = vsel %vm395, %v1469, %v1468
  %v1471 = vrot.slane %v1306, 2
  %v1472 = vrot.slane %v1310, 1
  %v1473 = vsel %vm377, %v1472, %v1471
  %v1474 = vsel %vm380, %v1314, %v1473
  %v1475 = vrot.slane %v1318, 7
  %v1476 = vsel %vm383, %v1475, %v1474
  %v1477 = vrot.slane %v1322, 6
  %v1478 = vsel %vm386, %v1477, %v1476
  %v1479 = vrot.slane %v1326, 5
  %v1480 = vsel %vm389, %v1479, %v1478
  %v1481 = vrot.slane %v1330, 4
  %v1482 = vsel %vm392, %v1481, %v1480
  %v1483 = vrot.slane %v1334, 3
  %v1484 = vsel %vm395, %v1483, %v1482
  %v1485 = vrot.slane %v1307, 2
  %v1486 = vrot.slane %v1311, 1
  %v1487 = vsel %vm377, %v1486, %v1485
  %v1488 = vsel %vm380, %v1315, %v1487
  %v1489 = vrot.slane %v1319, 7
  %v1490 = vsel %vm383, %v1489, %v1488
  %v1491 = vrot.slane %v1323, 6
  %v1492 = vsel %vm386, %v1491, %v1490
  %v1493 = vrot.slane %v1327, 5
  %v1494 = vsel %vm389, %v1493, %v1492
  %v1495 = vrot.slane %v1331, 4
  %v1496 = vsel %vm392, %v1495, %v1494
  %v1497 = vrot.slane %v1335, 3
  %v1498 = vsel %vm395, %v1497, %v1496
  %v1499 = vrot.slane %v1308, 2
  %v1500 = vrot.slane %v1312, 1
  %v1501 = vsel %vm377, %v1500, %v1499
  %v1502 = vsel %vm380, %v1316, %v1501
  %v1503 = vrot.slane %v1320, 7
  %v1504 = vsel %vm383, %v1503, %v1502
  %v1505 = vrot.slane %v1324, 6
  %v1506 = vsel %vm386, %v1505, %v1504
  %v1507 = vrot.slane %v1328, 5
  %v1508 = vsel %vm389, %v1507, %v1506
  %v1509 = vrot.slane %v1332, 4
  %v1510 = vsel %vm392, %v1509, %v1508
  %v1511 = vrot.slane %v1336, 3
  %v1512 = vsel %vm395, %v1511, %v1510
  %1521 = vmatpush.bf16.msra.mxu0 %v276
  %1522 = vmatpush.bf16.msra.mxu0 %v272
  %1523 = vmatpush.bf16.msra.mxu0 %v268
  %1524 = vmatpush.bf16.msra.mxu0 %v264
  %1525 = vmatpush.bf16.msra.mxu0 %v260
  %1526 = vmatpush.bf16.msra.mxu0 %v256
  %1527 = vmatpush.bf16.msra.mxu0 %v252
  %1528 = vmatpush.bf16.msra.mxu0 %v248
  %1529 = vmatmul.bf16.gmra.mxu0 %v1240
  %v1530 = vpop.f32.mrf.mxu0
  %v1531 = vadd.f32 %v1414, %v1530
  %v1532 = vpop.f32.mrf.mxu0
  %v1533 = vadd.f32 %v1470, %v1532
  %1534 = vdwg.mxu0
  %1535 = vmatpush.bf16.msra.mxu0 %v277
  %1536 = vmatpush.bf16.msra.mxu0 %v273
  %1537 = vmatpush.bf16.msra.mxu0 %v269
  %1538 = vmatpush.bf16.msra.mxu0 %v265
  %1539 = vmatpush.bf16.msra.mxu0 %v261
  %1540 = vmatpush.bf16.msra.mxu0 %v257
  %1541 = vmatpush.bf16.msra.mxu0 %v253
  %1542 = vmatpush.bf16.msra.mxu0 %v249
  %1543 = vmatmul.bf16.gmra.mxu0 %v1240
  %v1544 = vpop.f32.mrf.mxu0
  %v1545 = vadd.f32 %v1428, %v1544
  %v1546 = vpop.f32.mrf.mxu0
  %v1547 = vadd.f32 %v1484, %v1546
  %1548 = vdwg.mxu0
  %1549 = vmatpush.bf16.msra.mxu0 %v278
  %1550 = vmatpush.bf16.msra.mxu0 %v274
  %1551 = vmatpush.bf16.msra.mxu0 %v270
  %1552 = vmatpush.bf16.msra.mxu0 %v266
  %1553 = vmatpush.bf16.msra.mxu0 %v262
  %1554 = vmatpush.bf16.msra.mxu0 %v258
  %1555 = vmatpush.bf16.msra.mxu0 %v254
  %1556 = vmatpush.bf16.msra.mxu0 %v250
  %1557 = vmatmul.bf16.gmra.mxu0 %v1240
  %v1558 = vpop.f32.mrf.mxu0
  %v1559 = vadd.f32 %v1442, %v1558
  %v1560 = vpop.f32.mrf.mxu0
  %v1561 = vadd.f32 %v1498, %v1560
  %1562 = vdwg.mxu0
  %1563 = vmatpush.bf16.msra.mxu0 %v279
  %1564 = vmatpush.bf16.msra.mxu0 %v275
  %1565 = vmatpush.bf16.msra.mxu0 %v271
  %1566 = vmatpush.bf16.msra.mxu0 %v267
  %1567 = vmatpush.bf16.msra.mxu0 %v263
  %1568 = vmatpush.bf16.msra.mxu0 %v259
  %1569 = vmatpush.bf16.msra.mxu0 %v255
  %1570 = vmatpush.bf16.msra.mxu0 %v251
  %1571 = vmatmul.bf16.gmra.mxu0 %v1240
  %v1572 = vpop.f32.mrf.mxu0
  %v1573 = vadd.f32 %v1456, %v1572
  %v1574 = vpop.f32.mrf.mxu0
  %v1575 = vadd.f32 %v1512, %v1574
  %1576 = vdwg.mxu0
  %v1577 = vxor.u32 %v1531, 2147483648
  %v1578 = vxor.u32 %v1533, 2147483648
  %v1579 = vmul.f32 %v1577, 1.442695
  %v1580 = vpow.pop %v1579
  %v1581 = vmul.f32 %v1578, 1.442695
  %v1582 = vpow.pop %v1581
  %v1583 = vadd.f32 %v1580, 1.0
  %v1584 = vadd.f32 %v1582, 1.0
  %v1585 = vrcp.pop %v1583
  %v1586 = vmul.f32 %v1583, %v1585
  %v1587 = vsub.f32 1.0, %v1586
  %v1588 = vmul.f32 %v1585, %v1587
  %v1589 = vadd.f32 %v1585, %v1588
  %vm1590 = vweird.f32 %v1583
  %vm1591 = vweird.f32 %v1585
  %vm1592 = vmor %vm1590, %vm1591
  %v1593 = vsel %vm1592, %v1585, %v1589
  %v1594 = vand.u32 2147483647, %v1583
  %vm1595 = vcmp.eq.f32.partialorder %v1594, 8.507059e+37
  %v1596 = vand.u32 %v1583, 2147483648
  %v1597 = vor.u32 1.1754944e-38, %v1596
  %v1598 = vsel %vm1595, %v1597, %v1593
  %v1599 = vmul.f32 1.0, %v1598
  %v1600 = vrcp.pop %v1584
  %v1601 = vmul.f32 %v1584, %v1600
  %v1602 = vsub.f32 1.0, %v1601
  %v1603 = vmul.f32 %v1600, %v1602
  %v1604 = vadd.f32 %v1600, %v1603
  %vm1605 = vweird.f32 %v1584
  %vm1606 = vweird.f32 %v1600
  %vm1607 = vmor %vm1605, %vm1606
  %v1608 = vsel %vm1607, %v1600, %v1604
  %v1609 = vand.u32 2147483647, %v1584
  %vm1610 = vcmp.eq.f32.partialorder %v1609, 8.507059e+37
  %v1611 = vand.u32 %v1584, 2147483648
  %v1612 = vor.u32 1.1754944e-38, %v1611
  %v1613 = vsel %vm1610, %v1612, %v1608
  %v1614 = vmul.f32 1.0, %v1613
  %v1615 = vxor.u32 %v1545, 2147483648
  %v1616 = vxor.u32 %v1547, 2147483648
  %v1617 = vmul.f32 %v1615, 1.442695
  %v1618 = vpow.pop %v1617
  %v1619 = vmul.f32 %v1616, 1.442695
  %v1620 = vpow.pop %v1619
  %v1621 = vadd.f32 %v1618, 1.0
  %v1622 = vadd.f32 %v1620, 1.0
  %v1623 = vrcp.pop %v1621
  %v1624 = vmul.f32 %v1621, %v1623
  %v1625 = vsub.f32 1.0, %v1624
  %v1626 = vmul.f32 %v1623, %v1625
  %v1627 = vadd.f32 %v1623, %v1626
  %vm1628 = vweird.f32 %v1621
  %vm1629 = vweird.f32 %v1623
  %vm1630 = vmor %vm1628, %vm1629
  %v1631 = vsel %vm1630, %v1623, %v1627
  %v1632 = vand.u32 2147483647, %v1621
  %vm1633 = vcmp.eq.f32.partialorder %v1632, 8.507059e+37
  %v1634 = vand.u32 %v1621, 2147483648
  %v1635 = vor.u32 1.1754944e-38, %v1634
  %v1636 = vsel %vm1633, %v1635, %v1631
  %v1637 = vmul.f32 1.0, %v1636
  %v1638 = vrcp.pop %v1622
  %v1639 = vmul.f32 %v1622, %v1638
  %v1640 = vsub.f32 1.0, %v1639
  %v1641 = vmul.f32 %v1638, %v1640
  %v1642 = vadd.f32 %v1638, %v1641
  %vm1643 = vweird.f32 %v1622
  %vm1644 = vweird.f32 %v1638
  %vm1645 = vmor %vm1643, %vm1644
  %v1646 = vsel %vm1645, %v1638, %v1642
  %v1647 = vand.u32 2147483647, %v1622
  %vm1648 = vcmp.eq.f32.partialorder %v1647, 8.507059e+37
  %v1649 = vand.u32 %v1622, 2147483648
  %v1650 = vor.u32 1.1754944e-38, %v1649
  %v1651 = vsel %vm1648, %v1650, %v1646
  %v1652 = vmul.f32 1.0, %v1651
  %v1653 = vtanh.pop %v1559
  %v1654 = vtanh.pop %v1561
  %v1655 = vxor.u32 %v1573, 2147483648
  %v1656 = vxor.u32 %v1575, 2147483648
  %v1657 = vmul.f32 %v1655, 1.442695
  %v1658 = vpow.pop %v1657
  %v1659 = vmul.f32 %v1656, 1.442695
  %v1660 = vpow.pop %v1659
  %v1661 = vadd.f32 %v1658, 1.0
  %v1662 = vadd.f32 %v1660, 1.0
  %v1663 = vrcp.pop %v1661
  %v1664 = vmul.f32 %v1661, %v1663
  %v1665 = vsub.f32 1.0, %v1664
  %v1666 = vmul.f32 %v1663, %v1665
  %v1667 = vadd.f32 %v1663, %v1666
  %vm1668 = vweird.f32 %v1661
  %vm1669 = vweird.f32 %v1663
  %vm1670 = vmor %vm1668, %vm1669
  %v1671 = vsel %vm1670, %v1663, %v1667
  %v1672 = vand.u32 2147483647, %v1661
  %vm1673 = vcmp.eq.f32.partialorder %v1672, 8.507059e+37
  %v1674 = vand.u32 %v1661, 2147483648
  %v1675 = vor.u32 1.1754944e-38, %v1674
  %v1676 = vsel %vm1673, %v1675, %v1671
  %v1677 = vmul.f32 1.0, %v1676
  %v1678 = vrcp.pop %v1662
  %v1679 = vmul.f32 %v1662, %v1678
  %v1680 = vsub.f32 1.0, %v1679
  %v1681 = vmul.f32 %v1678, %v1680
  %v1682 = vadd.f32 %v1678, %v1681
  %vm1683 = vweird.f32 %v1662
  %vm1684 = vweird.f32 %v1678
  %vm1685 = vmor %vm1683, %vm1684
  %v1686 = vsel %vm1685, %v1678, %v1682
  %v1687 = vand.u32 2147483647, %v1662
  %vm1688 = vcmp.eq.f32.partialorder %v1687, 8.507059e+37
  %v1689 = vand.u32 %v1662, 2147483648
  %v1690 = vor.u32 1.1754944e-38, %v1689
  %v1691 = vsel %vm1688, %v1690, %v1686
  %v1692 = vmul.f32 1.0, %v1691
  %v1693 = vmul.f32 %v1637, %v1188
  %v1694 = vmul.f32 %v1652, %v1189
  %v1695 = vmul.f32 %v1599, %v1653
  %v1696 = vmul.f32 %v1614, %v1654
  %v1697 = vadd.f32 %v1693, %v1695
  %v1698 = vadd.f32 %v1694, %v1696
  %v1699 = vtanh.pop %v1697
  %v1700 = vtanh.pop %v1698
  %v1701 = vmul.f32 %v1677, %v1699
  %v1702 = vmul.f32 %v1692, %v1700
  %v1705 = vrot.slane %v1701, 1
  %v1706 = vrot.slane %v1701, 2
  %v1707 = vrot.slane %v1701, 3
  %v1708 = vrot.slane %v1701, 4
  %v1709 = vrot.slane %v1701, 5
  %v1710 = vrot.slane %v1701, 6
  %v1711 = vrot.slane %v1701, 7
  %v1712 = vrot.slane %v1702, 1
  %v1713 = vrot.slane %v1702, 2
  %v1714 = vrot.slane %v1702, 3
  %v1715 = vrot.slane %v1702, 4
  %v1716 = vrot.slane %v1702, 5
  %v1717 = vrot.slane %v1702, 6
  %v1718 = vrot.slane %v1702, 7
  %1733 = vst [vmem:[%s2 + $0x2] sm:$0x1] %v1701
  %1734 = vst [vmem:[%s2 + $0x12] sm:$0x1] %v1705
  %1735 = vst [vmem:[%s2 + $0x22] sm:$0x1] %v1706
  %1736 = vst [vmem:[%s2 + $0x32] sm:$0x1] %v1707
  %1737 = vst [vmem:[%s2 + $0x42] sm:$0x1] %v1708
  %1738 = vst [vmem:[%s2 + $0x52] sm:$0x1] %v1709
  %1739 = vst [vmem:[%s2 + $0x62] sm:$0x1] %v1710
  %1740 = vst [vmem:[%s2 + $0x72] sm:$0x1] %v1711
  %1741 = vst [vmem:[%s2 + $0x82] sm:$0x1] %v1702
  %1742 = vst [vmem:[%s2 + $0x92] sm:$0x1] %v1712
  %1743 = vst [vmem:[%s2 + $0xa2] sm:$0x1] %v1713
  %1744 = vst [vmem:[%s2 + $0xb2] sm:$0x1] %v1714
  %1745 = vst [vmem:[%s2 + $0xc2] sm:$0x1] %v1715
  %1746 = vst [vmem:[%s2 + $0xd2] sm:$0x1] %v1716
  %1747 = vst [vmem:[%s2 + $0xe2] sm:$0x1] %v1717
  %1748 = vst [vmem:[%s2 + $0xf2] sm:$0x1] %v1718
  %v1749 = vpack.c.bf16 %v1702, %v1701
  %v1750 = vld [vmem:[%s0] sm:$0x22]
  %v1751 = vld [vmem:[%s0 + $0x8] sm:$0x22]
  %v1752 = vld [vmem:[%s0 + $0x20] sm:$0x22]
  %v1753 = vld [vmem:[%s0 + $0x28] sm:$0x22]
  %v1754 = vld [vmem:[%s0 + $0x40] sm:$0x22]
  %v1755 = vld [vmem:[%s0 + $0x48] sm:$0x22]
  %v1756 = vld [vmem:[%s0 + $0x60] sm:$0x22]
  %v1757 = vld [vmem:[%s0 + $0x68] sm:$0x22]
  %v1758 = vld [vmem:[%s0 + $0x80] sm:$0x22]
  %v1759 = vld [vmem:[%s0 + $0x88] sm:$0x22]
  %v1760 = vld [vmem:[%s0 + $0xa0] sm:$0x22]
  %v1761 = vld [vmem:[%s0 + $0xa8] sm:$0x22]
  %v1762 = vld [vmem:[%s0 + $0xc0] sm:$0x22]
  %v1763 = vld [vmem:[%s0 + $0xc8] sm:$0x22]
  %v1764 = vld [vmem:[%s0 + $0xe0] sm:$0x22]
  %v1765 = vld [vmem:[%s0 + $0xe8] sm:$0x22]
  %v1766 = vld [vmem:[%s0 + $0x100] sm:$0x22]
  %v1767 = vld [vmem:[%s0 + $0x108] sm:$0x22]
  %v1768 = vld [vmem:[%s0 + $0x120] sm:$0x22]
  %v1769 = vld [vmem:[%s0 + $0x128] sm:$0x22]
  %v1770 = vld [vmem:[%s0 + $0x140] sm:$0x22]
  %v1771 = vld [vmem:[%s0 + $0x148] sm:$0x22]
  %v1772 = vld [vmem:[%s0 + $0x160] sm:$0x22]
  %v1773 = vld [vmem:[%s0 + $0x168] sm:$0x22]
  %v1774 = vld [vmem:[%s0 + $0x180] sm:$0x22]
  %v1775 = vld [vmem:[%s0 + $0x188] sm:$0x22]
  %v1776 = vld [vmem:[%s0 + $0x1a0] sm:$0x22]
  %v1777 = vld [vmem:[%s0 + $0x1a8] sm:$0x22]
  %v1778 = vld [vmem:[%s0 + $0x1c0] sm:$0x22]
  %v1779 = vld [vmem:[%s0 + $0x1c8] sm:$0x22]
  %v1780 = vld [vmem:[%s0 + $0x1e0] sm:$0x22]
  %v1781 = vld [vmem:[%s0 + $0x1e8] sm:$0x22]
  %v1782 = vunpack.c.l.bf16 %v1750
  %v1783 = vunpack.c.h.bf16 %v1750
  %v1784 = vunpack.c.l.bf16 %v1751
  %v1785 = vunpack.c.h.bf16 %v1751
  %v1786 = vunpack.c.l.bf16 %v1752
  %v1787 = vunpack.c.h.bf16 %v1752
  %v1788 = vunpack.c.l.bf16 %v1753
  %v1789 = vunpack.c.h.bf16 %v1753
  %v1790 = vunpack.c.l.bf16 %v1754
  %v1791 = vunpack.c.h.bf16 %v1754
  %v1792 = vunpack.c.l.bf16 %v1755
  %v1793 = vunpack.c.h.bf16 %v1755
  %v1794 = vunpack.c.l.bf16 %v1756
  %v1795 = vunpack.c.h.bf16 %v1756
  %v1796 = vunpack.c.l.bf16 %v1757
  %v1797 = vunpack.c.h.bf16 %v1757
  %v1798 = vunpack.c.l.bf16 %v1758
  %v1799 = vunpack.c.h.bf16 %v1758
  %v1800 = vunpack.c.l.bf16 %v1759
  %v1801 = vunpack.c.h.bf16 %v1759
  %v1802 = vunpack.c.l.bf16 %v1760
  %v1803 = vunpack.c.h.bf16 %v1760
  %v1804 = vunpack.c.l.bf16 %v1761
  %v1805 = vunpack.c.h.bf16 %v1761
  %v1806 = vunpack.c.l.bf16 %v1762
  %v1807 = vunpack.c.h.bf16 %v1762
  %v1808 = vunpack.c.l.bf16 %v1763
  %v1809 = vunpack.c.h.bf16 %v1763
  %v1810 = vunpack.c.l.bf16 %v1764
  %v1811 = vunpack.c.h.bf16 %v1764
  %v1812 = vunpack.c.l.bf16 %v1765
  %v1813 = vunpack.c.h.bf16 %v1765
  %v1814 = vunpack.c.l.bf16 %v1766
  %v1815 = vunpack.c.h.bf16 %v1766
  %v1816 = vunpack.c.l.bf16 %v1767
  %v1817 = vunpack.c.h.bf16 %v1767
  %v1818 = vunpack.c.l.bf16 %v1768
  %v1819 = vunpack.c.h.bf16 %v1768
  %v1820 = vunpack.c.l.bf16 %v1769
  %v1821 = vunpack.c.h.bf16 %v1769
  %v1822 = vunpack.c.l.bf16 %v1770
  %v1823 = vunpack.c.h.bf16 %v1770
  %v1824 = vunpack.c.l.bf16 %v1771
  %v1825 = vunpack.c.h.bf16 %v1771
  %v1826 = vunpack.c.l.bf16 %v1772
  %v1827 = vunpack.c.h.bf16 %v1772
  %v1828 = vunpack.c.l.bf16 %v1773
  %v1829 = vunpack.c.h.bf16 %v1773
  %v1830 = vunpack.c.l.bf16 %v1774
  %v1831 = vunpack.c.h.bf16 %v1774
  %v1832 = vunpack.c.l.bf16 %v1775
  %v1833 = vunpack.c.h.bf16 %v1775
  %v1834 = vunpack.c.l.bf16 %v1776
  %v1835 = vunpack.c.h.bf16 %v1776
  %v1836 = vunpack.c.l.bf16 %v1777
  %v1837 = vunpack.c.h.bf16 %v1777
  %v1838 = vunpack.c.l.bf16 %v1778
  %v1839 = vunpack.c.h.bf16 %v1778
  %v1840 = vunpack.c.l.bf16 %v1779
  %v1841 = vunpack.c.h.bf16 %v1779
  %v1842 = vunpack.c.l.bf16 %v1780
  %v1843 = vunpack.c.h.bf16 %v1780
  %v1844 = vunpack.c.l.bf16 %v1781
  %v1845 = vunpack.c.h.bf16 %v1781
  %v1910 = vrot.slane %v1782, 3
  %v1911 = vrot.slane %v1786, 2
  %v1912 = vsel %vm377, %v1911, %v1910
  %v1913 = vrot.slane %v1790, 1
  %v1914 = vsel %vm380, %v1913, %v1912
  %v1915 = vsel %vm383, %v1794, %v1914
  %v1916 = vrot.slane %v1798, 7
  %v1917 = vsel %vm386, %v1916, %v1915
  %v1918 = vrot.slane %v1802, 6
  %v1919 = vsel %vm389, %v1918, %v1917
  %v1920 = vrot.slane %v1806, 5
  %v1921 = vsel %vm392, %v1920, %v1919
  %v1922 = vrot.slane %v1810, 4
  %v1923 = vsel %vm395, %v1922, %v1921
  %v1924 = vrot.slane %v1783, 3
  %v1925 = vrot.slane %v1787, 2
  %v1926 = vsel %vm377, %v1925, %v1924
  %v1927 = vrot.slane %v1791, 1
  %v1928 = vsel %vm380, %v1927, %v1926
  %v1929 = vsel %vm383, %v1795, %v1928
  %v1930 = vrot.slane %v1799, 7
  %v1931 = vsel %vm386, %v1930, %v1929
  %v1932 = vrot.slane %v1803, 6
  %v1933 = vsel %vm389, %v1932, %v1931
  %v1934 = vrot.slane %v1807, 5
  %v1935 = vsel %vm392, %v1934, %v1933
  %v1936 = vrot.slane %v1811, 4
  %v1937 = vsel %vm395, %v1936, %v1935
  %v1938 = vrot.slane %v1784, 3
  %v1939 = vrot.slane %v1788, 2
  %v1940 = vsel %vm377, %v1939, %v1938
  %v1941 = vrot.slane %v1792, 1
  %v1942 = vsel %vm380, %v1941, %v1940
  %v1943 = vsel %vm383, %v1796, %v1942
  %v1944 = vrot.slane %v1800, 7
  %v1945 = vsel %vm386, %v1944, %v1943
  %v1946 = vrot.slane %v1804, 6
  %v1947 = vsel %vm389, %v1946, %v1945
  %v1948 = vrot.slane %v1808, 5
  %v1949 = vsel %vm392, %v1948, %v1947
  %v1950 = vrot.slane %v1812, 4
  %v1951 = vsel %vm395, %v1950, %v1949
  %v1952 = vrot.slane %v1785, 3
  %v1953 = vrot.slane %v1789, 2
  %v1954 = vsel %vm377, %v1953, %v1952
  %v1955 = vrot.slane %v1793, 1
  %v1956 = vsel %vm380, %v1955, %v1954
  %v1957 = vsel %vm383, %v1797, %v1956
  %v1958 = vrot.slane %v1801, 7
  %v1959 = vsel %vm386, %v1958, %v1957
  %v1960 = vrot.slane %v1805, 6
  %v1961 = vsel %vm389, %v1960, %v1959
  %v1962 = vrot.slane %v1809, 5
  %v1963 = vsel %vm392, %v1962, %v1961
  %v1964 = vrot.slane %v1813, 4
  %v1965 = vsel %vm395, %v1964, %v1963
  %v1966 = vrot.slane %v1814, 3
  %v1967 = vrot.slane %v1818, 2
  %v1968 = vsel %vm377, %v1967, %v1966
  %v1969 = vrot.slane %v1822, 1
  %v1970 = vsel %vm380, %v1969, %v1968
  %v1971 = vsel %vm383, %v1826, %v1970
  %v1972 = vrot.slane %v1830, 7
  %v1973 = vsel %vm386, %v1972, %v1971
  %v1974 = vrot.slane %v1834, 6
  %v1975 = vsel %vm389, %v1974, %v1973
  %v1976 = vrot.slane %v1838, 5
  %v1977 = vsel %vm392, %v1976, %v1975
  %v1978 = vrot.slane %v1842, 4
  %v1979 = vsel %vm395, %v1978, %v1977
  %v1980 = vrot.slane %v1815, 3
  %v1981 = vrot.slane %v1819, 2
  %v1982 = vsel %vm377, %v1981, %v1980
  %v1983 = vrot.slane %v1823, 1
  %v1984 = vsel %vm380, %v1983, %v1982
  %v1985 = vsel %vm383, %v1827, %v1984
  %v1986 = vrot.slane %v1831, 7
  %v1987 = vsel %vm386, %v1986, %v1985
  %v1988 = vrot.slane %v1835, 6
  %v1989 = vsel %vm389, %v1988, %v1987
  %v1990 = vrot.slane %v1839, 5
  %v1991 = vsel %vm392, %v1990, %v1989
  %v1992 = vrot.slane %v1843, 4
  %v1993 = vsel %vm395, %v1992, %v1991
  %v1994 = vrot.slane %v1816, 3
  %v1995 = vrot.slane %v1820, 2
  %v1996 = vsel %vm377, %v1995, %v1994
  %v1997 = vrot.slane %v1824, 1
  %v1998 = vsel %vm380, %v1997, %v1996
  %v1999 = vsel %vm383, %v1828, %v1998
  %v2000 = vrot.slane %v1832, 7
  %v2001 = vsel %vm386, %v2000, %v1999
  %v2002 = vrot.slane %v1836, 6
  %v2003 = vsel %vm389, %v2002, %v2001
  %v2004 = vrot.slane %v1840, 5
  %v2005 = vsel %vm392, %v2004, %v2003
  %v2006 = vrot.slane %v1844, 4
  %v2007 = vsel %vm395, %v2006, %v2005
  %v2008 = vrot.slane %v1817, 3
  %v2009 = vrot.slane %v1821, 2
  %v2010 = vsel %vm377, %v2009, %v2008
  %v2011 = vrot.slane %v1825, 1
  %v2012 = vsel %vm380, %v2011, %v2010
  %v2013 = vsel %vm383, %v1829, %v2012
  %v2014 = vrot.slane %v1833, 7
  %v2015 = vsel %vm386, %v2014, %v2013
  %v2016 = vrot.slane %v1837, 6
  %v2017 = vsel %vm389, %v2016, %v2015
  %v2018 = vrot.slane %v1841, 5
  %v2019 = vsel %vm392, %v2018, %v2017
  %v2020 = vrot.slane %v1845, 4
  %v2021 = vsel %vm395, %v2020, %v2019
  %2030 = vmatpush.bf16.msra.mxu0 %v276
  %2031 = vmatpush.bf16.msra.mxu0 %v272
  %2032 = vmatpush.bf16.msra.mxu0 %v268
  %2033 = vmatpush.bf16.msra.mxu0 %v264
  %2034 = vmatpush.bf16.msra.mxu0 %v260
  %2035 = vmatpush.bf16.msra.mxu0 %v256
  %2036 = vmatpush.bf16.msra.mxu0 %v252
  %2037 = vmatpush.bf16.msra.mxu0 %v248
  %2038 = vmatmul.bf16.gmra.mxu0 %v1749
  %v2039 = vpop.f32.mrf.mxu0
  %v2040 = vadd.f32 %v1923, %v2039
  %v2041 = vpop.f32.mrf.mxu0
  %v2042 = vadd.f32 %v1979, %v2041
  %2043 = vdwg.mxu0
  %2044 = vmatpush.bf16.msra.mxu0 %v277
  %2045 = vmatpush.bf16.msra.mxu0 %v273
  %2046 = vmatpush.bf16.msra.mxu0 %v269
  %2047 = vmatpush.bf16.msra.mxu0 %v265
  %2048 = vmatpush.bf16.msra.mxu0 %v261
  %2049 = vmatpush.bf16.msra.mxu0 %v257
  %2050 = vmatpush.bf16.msra.mxu0 %v253
  %2051 = vmatpush.bf16.msra.mxu0 %v249
  %2052 = vmatmul.bf16.gmra.mxu0 %v1749
  %v2053 = vpop.f32.mrf.mxu0
  %v2054 = vadd.f32 %v1937, %v2053
  %v2055 = vpop.f32.mrf.mxu0
  %v2056 = vadd.f32 %v1993, %v2055
  %2057 = vdwg.mxu0
  %2058 = vmatpush.bf16.msra.mxu0 %v278
  %2059 = vmatpush.bf16.msra.mxu0 %v274
  %2060 = vmatpush.bf16.msra.mxu0 %v270
  %2061 = vmatpush.bf16.msra.mxu0 %v266
  %2062 = vmatpush.bf16.msra.mxu0 %v262
  %2063 = vmatpush.bf16.msra.mxu0 %v258
  %2064 = vmatpush.bf16.msra.mxu0 %v254
  %2065 = vmatpush.bf16.msra.mxu0 %v250
  %2066 = vmatmul.bf16.gmra.mxu0 %v1749
  %v2067 = vpop.f32.mrf.mxu0
  %v2068 = vadd.f32 %v1951, %v2067
  %v2069 = vpop.f32.mrf.mxu0
  %v2070 = vadd.f32 %v2007, %v2069
  %2071 = vdwg.mxu0
  %2072 = vmatpush.bf16.msra.mxu0 %v279
  %2073 = vmatpush.bf16.msra.mxu0 %v275
  %2074 = vmatpush.bf16.msra.mxu0 %v271
  %2075 = vmatpush.bf16.msra.mxu0 %v267
  %2076 = vmatpush.bf16.msra.mxu0 %v263
  %2077 = vmatpush.bf16.msra.mxu0 %v259
  %2078 = vmatpush.bf16.msra.mxu0 %v255
  %2079 = vmatpush.bf16.msra.mxu0 %v251
  %2080 = vmatmul.bf16.gmra.mxu0 %v1749
  %v2081 = vpop.f32.mrf.mxu0
  %v2082 = vadd.f32 %v1965, %v2081
  %v2083 = vpop.f32.mrf.mxu0
  %v2084 = vadd.f32 %v2021, %v2083
  %2085 = vdwg.mxu0
  %v2086 = vxor.u32 %v2040, 2147483648
  %v2087 = vxor.u32 %v2042, 2147483648
  %v2088 = vmul.f32 %v2086, 1.442695
  %v2089 = vpow.pop %v2088
  %v2090 = vmul.f32 %v2087, 1.442695
  %v2091 = vpow.pop %v2090
  %v2092 = vadd.f32 %v2089, 1.0
  %v2093 = vadd.f32 %v2091, 1.0
  %v2094 = vrcp.pop %v2092
  %v2095 = vmul.f32 %v2092, %v2094
  %v2096 = vsub.f32 1.0, %v2095
  %v2097 = vmul.f32 %v2094, %v2096
  %v2098 = vadd.f32 %v2094, %v2097
  %vm2099 = vweird.f32 %v2092
  %vm2100 = vweird.f32 %v2094
  %vm2101 = vmor %vm2099, %vm2100
  %v2102 = vsel %vm2101, %v2094, %v2098
  %v2103 = vand.u32 2147483647, %v2092
  %vm2104 = vcmp.eq.f32.partialorder %v2103, 8.507059e+37
  %v2105 = vand.u32 %v2092, 2147483648
  %v2106 = vor.u32 1.1754944e-38, %v2105
  %v2107 = vsel %vm2104, %v2106, %v2102
  %v2108 = vmul.f32 1.0, %v2107
  %v2109 = vrcp.pop %v2093
  %v2110 = vmul.f32 %v2093, %v2109
  %v2111 = vsub.f32 1.0, %v2110
  %v2112 = vmul.f32 %v2109, %v2111
  %v2113 = vadd.f32 %v2109, %v2112
  %vm2114 = vweird.f32 %v2093
  %vm2115 = vweird.f32 %v2109
  %vm2116 = vmor %vm2114, %vm2115
  %v2117 = vsel %vm2116, %v2109, %v2113
  %v2118 = vand.u32 2147483647, %v2093
  %vm2119 = vcmp.eq.f32.partialorder %v2118, 8.507059e+37
  %v2120 = vand.u32 %v2093, 2147483648
  %v2121 = vor.u32 1.1754944e-38, %v2120
  %v2122 = vsel %vm2119, %v2121, %v2117
  %v2123 = vmul.f32 1.0, %v2122
  %v2124 = vxor.u32 %v2054, 2147483648
  %v2125 = vxor.u32 %v2056, 2147483648
  %v2126 = vmul.f32 %v2124, 1.442695
  %v2127 = vpow.pop %v2126
  %v2128 = vmul.f32 %v2125, 1.442695
  %v2129 = vpow.pop %v2128
  %v2130 = vadd.f32 %v2127, 1.0
  %v2131 = vadd.f32 %v2129, 1.0
  %v2132 = vrcp.pop %v2130
  %v2133 = vmul.f32 %v2130, %v2132
  %v2134 = vsub.f32 1.0, %v2133
  %v2135 = vmul.f32 %v2132, %v2134
  %v2136 = vadd.f32 %v2132, %v2135
  %vm2137 = vweird.f32 %v2130
  %vm2138 = vweird.f32 %v2132
  %vm2139 = vmor %vm2137, %vm2138
  %v2140 = vsel %vm2139, %v2132, %v2136
  %v2141 = vand.u32 2147483647, %v2130
  %vm2142 = vcmp.eq.f32.partialorder %v2141, 8.507059e+37
  %v2143 = vand.u32 %v2130, 2147483648
  %v2144 = vor.u32 1.1754944e-38, %v2143
  %v2145 = vsel %vm2142, %v2144, %v2140
  %v2146 = vmul.f32 1.0, %v2145
  %v2147 = vrcp.pop %v2131
  %v2148 = vmul.f32 %v2131, %v2147
  %v2149 = vsub.f32 1.0, %v2148
  %v2150 = vmul.f32 %v2147, %v2149
  %v2151 = vadd.f32 %v2147, %v2150
  %vm2152 = vweird.f32 %v2131
  %vm2153 = vweird.f32 %v2147
  %vm2154 = vmor %vm2152, %vm2153
  %v2155 = vsel %vm2154, %v2147, %v2151
  %v2156 = vand.u32 2147483647, %v2131
  %vm2157 = vcmp.eq.f32.partialorder %v2156, 8.507059e+37
  %v2158 = vand.u32 %v2131, 2147483648
  %v2159 = vor.u32 1.1754944e-38, %v2158
  %v2160 = vsel %vm2157, %v2159, %v2155
  %v2161 = vmul.f32 1.0, %v2160
  %v2162 = vtanh.pop %v2068
  %v2163 = vtanh.pop %v2070
  %v2164 = vxor.u32 %v2082, 2147483648
  %v2165 = vxor.u32 %v2084, 2147483648
  %v2166 = vmul.f32 %v2164, 1.442695
  %v2167 = vpow.pop %v2166
  %v2168 = vmul.f32 %v2165, 1.442695
  %v2169 = vpow.pop %v2168
  %v2170 = vadd.f32 %v2167, 1.0
  %v2171 = vadd.f32 %v2169, 1.0
  %v2172 = vrcp.pop %v2170
  %v2173 = vmul.f32 %v2170, %v2172
  %v2174 = vsub.f32 1.0, %v2173
  %v2175 = vmul.f32 %v2172, %v2174
  %v2176 = vadd.f32 %v2172, %v2175
  %vm2177 = vweird.f32 %v2170
  %vm2178 = vweird.f32 %v2172
  %vm2179 = vmor %vm2177, %vm2178
  %v2180 = vsel %vm2179, %v2172, %v2176
  %v2181 = vand.u32 2147483647, %v2170
  %vm2182 = vcmp.eq.f32.partialorder %v2181, 8.507059e+37
  %v2183 = vand.u32 %v2170, 2147483648
  %v2184 = vor.u32 1.1754944e-38, %v2183
  %v2185 = vsel %vm2182, %v2184, %v2180
  %v2186 = vmul.f32 1.0, %v2185
  %v2187 = vrcp.pop %v2171
  %v2188 = vmul.f32 %v2171, %v2187
  %v2189 = vsub.f32 1.0, %v2188
  %v2190 = vmul.f32 %v2187, %v2189
  %v2191 = vadd.f32 %v2187, %v2190
  %vm2192 = vweird.f32 %v2171
  %vm2193 = vweird.f32 %v2187
  %vm2194 = vmor %vm2192, %vm2193
  %v2195 = vsel %vm2194, %v2187, %v2191
  %v2196 = vand.u32 2147483647, %v2171
  %vm2197 = vcmp.eq.f32.partialorder %v2196, 8.507059e+37
  %v2198 = vand.u32 %v2171, 2147483648
  %v2199 = vor.u32 1.1754944e-38, %v2198
  %v2200 = vsel %vm2197, %v2199, %v2195
  %v2201 = vmul.f32 1.0, %v2200
  %v2202 = vmul.f32 %v2146, %v1697
  %v2203 = vmul.f32 %v2161, %v1698
  %v2204 = vmul.f32 %v2108, %v2162
  %v2205 = vmul.f32 %v2123, %v2163
  %v2206 = vadd.f32 %v2202, %v2204
  %v2207 = vadd.f32 %v2203, %v2205
  %v2208 = vtanh.pop %v2206
  %v2209 = vtanh.pop %v2207
  %v2210 = vmul.f32 %v2186, %v2208
  %v2211 = vmul.f32 %v2201, %v2209
  %v2214 = vrot.slane %v2210, 1
  %v2215 = vrot.slane %v2210, 2
  %v2216 = vrot.slane %v2210, 3
  %v2217 = vrot.slane %v2210, 4
  %v2218 = vrot.slane %v2210, 5
  %v2219 = vrot.slane %v2210, 6
  %v2220 = vrot.slane %v2210, 7
  %v2221 = vrot.slane %v2211, 1
  %v2222 = vrot.slane %v2211, 2
  %v2223 = vrot.slane %v2211, 3
  %v2224 = vrot.slane %v2211, 4
  %v2225 = vrot.slane %v2211, 5
  %v2226 = vrot.slane %v2211, 6
  %v2227 = vrot.slane %v2211, 7
  %2242 = vst [vmem:[%s2 + $0x3] sm:$0x1] %v2210
  %2243 = vst [vmem:[%s2 + $0x13] sm:$0x1] %v2214
  %2244 = vst [vmem:[%s2 + $0x23] sm:$0x1] %v2215
  %2245 = vst [vmem:[%s2 + $0x33] sm:$0x1] %v2216
  %2246 = vst [vmem:[%s2 + $0x43] sm:$0x1] %v2217
  %2247 = vst [vmem:[%s2 + $0x53] sm:$0x1] %v2218
  %2248 = vst [vmem:[%s2 + $0x63] sm:$0x1] %v2219
  %2249 = vst [vmem:[%s2 + $0x73] sm:$0x1] %v2220
  %2250 = vst [vmem:[%s2 + $0x83] sm:$0x1] %v2211
  %2251 = vst [vmem:[%s2 + $0x93] sm:$0x1] %v2221
  %2252 = vst [vmem:[%s2 + $0xa3] sm:$0x1] %v2222
  %2253 = vst [vmem:[%s2 + $0xb3] sm:$0x1] %v2223
  %2254 = vst [vmem:[%s2 + $0xc3] sm:$0x1] %v2224
  %2255 = vst [vmem:[%s2 + $0xd3] sm:$0x1] %v2225
  %2256 = vst [vmem:[%s2 + $0xe3] sm:$0x1] %v2226
  %2257 = vst [vmem:[%s2 + $0xf3] sm:$0x1] %v2227
  %v2258 = vpack.c.bf16 %v2211, %v2210
  %v2259 = vld [vmem:[%s0] sm:$0x44]
  %v2260 = vld [vmem:[%s0 + $0x8] sm:$0x44]
  %v2261 = vld [vmem:[%s0 + $0x20] sm:$0x44]
  %v2262 = vld [vmem:[%s0 + $0x28] sm:$0x44]
  %v2263 = vld [vmem:[%s0 + $0x40] sm:$0x44]
  %v2264 = vld [vmem:[%s0 + $0x48] sm:$0x44]
  %v2265 = vld [vmem:[%s0 + $0x60] sm:$0x44]
  %v2266 = vld [vmem:[%s0 + $0x68] sm:$0x44]
  %v2267 = vld [vmem:[%s0 + $0x80] sm:$0x44]
  %v2268 = vld [vmem:[%s0 + $0x88] sm:$0x44]
  %v2269 = vld [vmem:[%s0 + $0xa0] sm:$0x44]
  %v2270 = vld [vmem:[%s0 + $0xa8] sm:$0x44]
  %v2271 = vld [vmem:[%s0 + $0xc0] sm:$0x44]
  %v2272 = vld [vmem:[%s0 + $0xc8] sm:$0x44]
  %v2273 = vld [vmem:[%s0 + $0xe0] sm:$0x44]
  %v2274 = vld [vmem:[%s0 + $0xe8] sm:$0x44]
  %v2275 = vld [vmem:[%s0 + $0x100] sm:$0x44]
  %v2276 = vld [vmem:[%s0 + $0x108] sm:$0x44]
  %v2277 = vld [vmem:[%s0 + $0x120] sm:$0x44]
  %v2278 = vld [vmem:[%s0 + $0x128] sm:$0x44]
  %v2279 = vld [vmem:[%s0 + $0x140] sm:$0x44]
  %v2280 = vld [vmem:[%s0 + $0x148] sm:$0x44]
  %v2281 = vld [vmem:[%s0 + $0x160] sm:$0x44]
  %v2282 = vld [vmem:[%s0 + $0x168] sm:$0x44]
  %v2283 = vld [vmem:[%s0 + $0x180] sm:$0x44]
  %v2284 = vld [vmem:[%s0 + $0x188] sm:$0x44]
  %v2285 = vld [vmem:[%s0 + $0x1a0] sm:$0x44]
  %v2286 = vld [vmem:[%s0 + $0x1a8] sm:$0x44]
  %v2287 = vld [vmem:[%s0 + $0x1c0] sm:$0x44]
  %v2288 = vld [vmem:[%s0 + $0x1c8] sm:$0x44]
  %v2289 = vld [vmem:[%s0 + $0x1e0] sm:$0x44]
  %v2290 = vld [vmem:[%s0 + $0x1e8] sm:$0x44]
  %v2291 = vunpack.c.l.bf16 %v2259
  %v2292 = vunpack.c.h.bf16 %v2259
  %v2293 = vunpack.c.l.bf16 %v2260
  %v2294 = vunpack.c.h.bf16 %v2260
  %v2295 = vunpack.c.l.bf16 %v2261
  %v2296 = vunpack.c.h.bf16 %v2261
  %v2297 = vunpack.c.l.bf16 %v2262
  %v2298 = vunpack.c.h.bf16 %v2262
  %v2299 = vunpack.c.l.bf16 %v2263
  %v2300 = vunpack.c.h.bf16 %v2263
  %v2301 = vunpack.c.l.bf16 %v2264
  %v2302 = vunpack.c.h.bf16 %v2264
  %v2303 = vunpack.c.l.bf16 %v2265
  %v2304 = vunpack.c.h.bf16 %v2265
  %v2305 = vunpack.c.l.bf16 %v2266
  %v2306 = vunpack.c.h.bf16 %v2266
  %v2307 = vunpack.c.l.bf16 %v2267
  %v2308 = vunpack.c.h.bf16 %v2267
  %v2309 = vunpack.c.l.bf16 %v2268
  %v2310 = vunpack.c.h.bf16 %v2268
  %v2311 = vunpack.c.l.bf16 %v2269
  %v2312 = vunpack.c.h.bf16 %v2269
  %v2313 = vunpack.c.l.bf16 %v2270
  %v2314 = vunpack.c.h.bf16 %v2270
  %v2315 = vunpack.c.l.bf16 %v2271
  %v2316 = vunpack.c.h.bf16 %v2271
  %v2317 = vunpack.c.l.bf16 %v2272
  %v2318 = vunpack.c.h.bf16 %v2272
  %v2319 = vunpack.c.l.bf16 %v2273
  %v2320 = vunpack.c.h.bf16 %v2273
  %v2321 = vunpack.c.l.bf16 %v2274
  %v2322 = vunpack.c.h.bf16 %v2274
  %v2323 = vunpack.c.l.bf16 %v2275
  %v2324 = vunpack.c.h.bf16 %v2275
  %v2325 = vunpack.c.l.bf16 %v2276
  %v2326 = vunpack.c.h.bf16 %v2276
  %v2327 = vunpack.c.l.bf16 %v2277
  %v2328 = vunpack.c.h.bf16 %v2277
  %v2329 = vunpack.c.l.bf16 %v2278
  %v2330 = vunpack.c.h.bf16 %v2278
  %v2331 = vunpack.c.l.bf16 %v2279
  %v2332 = vunpack.c.h.bf16 %v2279
  %v2333 = vunpack.c.l.bf16 %v2280
  %v2334 = vunpack.c.h.bf16 %v2280
  %v2335 = vunpack.c.l.bf16 %v2281
  %v2336 = vunpack.c.h.bf16 %v2281
  %v2337 = vunpack.c.l.bf16 %v2282
  %v2338 = vunpack.c.h.bf16 %v2282
  %v2339 = vunpack.c.l.bf16 %v2283
  %v2340 = vunpack.c.h.bf16 %v2283
  %v2341 = vunpack.c.l.bf16 %v2284
  %v2342 = vunpack.c.h.bf16 %v2284
  %v2343 = vunpack.c.l.bf16 %v2285
  %v2344 = vunpack.c.h.bf16 %v2285
  %v2345 = vunpack.c.l.bf16 %v2286
  %v2346 = vunpack.c.h.bf16 %v2286
  %v2347 = vunpack.c.l.bf16 %v2287
  %v2348 = vunpack.c.h.bf16 %v2287
  %v2349 = vunpack.c.l.bf16 %v2288
  %v2350 = vunpack.c.h.bf16 %v2288
  %v2351 = vunpack.c.l.bf16 %v2289
  %v2352 = vunpack.c.h.bf16 %v2289
  %v2353 = vunpack.c.l.bf16 %v2290
  %v2354 = vunpack.c.h.bf16 %v2290
  %v2419 = vrot.slane %v2291, 4
  %v2420 = vrot.slane %v2295, 3
  %v2421 = vsel %vm377, %v2420, %v2419
  %v2422 = vrot.slane %v2299, 2
  %v2423 = vsel %vm380, %v2422, %v2421
  %v2424 = vrot.slane %v2303, 1
  %v2425 = vsel %vm383, %v2424, %v2423
  %v2426 = vsel %vm386, %v2307, %v2425
  %v2427 = vrot.slane %v2311, 7
  %v2428 = vsel %vm389, %v2427, %v2426
  %v2429 = vrot.slane %v2315, 6
  %v2430 = vsel %vm392, %v2429, %v2428
  %v2431 = vrot.slane %v2319, 5
  %v2432 = vsel %vm395, %v2431, %v2430
  %v2433 = vrot.slane %v2292, 4
  %v2434 = vrot.slane %v2296, 3
  %v2435 = vsel %vm377, %v2434, %v2433
  %v2436 = vrot.slane %v2300, 2
  %v2437 = vsel %vm380, %v2436, %v2435
  %v2438 = vrot.slane %v2304, 1
  %v2439 = vsel %vm383, %v2438, %v2437
  %v2440 = vsel %vm386, %v2308, %v2439
  %v2441 = vrot.slane %v2312, 7
  %v2442 = vsel %vm389, %v2441, %v2440
  %v2443 = vrot.slane %v2316, 6
  %v2444 = vsel %vm392, %v2443, %v2442
  %v2445 = vrot.slane %v2320, 5
  %v2446 = vsel %vm395, %v2445, %v2444
  %v2447 = vrot.slane %v2293, 4
  %v2448 = vrot.slane %v2297, 3
  %v2449 = vsel %vm377, %v2448, %v2447
  %v2450 = vrot.slane %v2301, 2
  %v2451 = vsel %vm380, %v2450, %v2449
  %v2452 = vrot.slane %v2305, 1
  %v2453 = vsel %vm383, %v2452, %v2451
  %v2454 = vsel %vm386, %v2309, %v2453
  %v2455 = vrot.slane %v2313, 7
  %v2456 = vsel %vm389, %v2455, %v2454
  %v2457 = vrot.slane %v2317, 6
  %v2458 = vsel %vm392, %v2457, %v2456
  %v2459 = vrot.slane %v2321, 5
  %v2460 = vsel %vm395, %v2459, %v2458
  %v2461 = vrot.slane %v2294, 4
  %v2462 = vrot.slane %v2298, 3
  %v2463 = vsel %vm377, %v2462, %v2461
  %v2464 = vrot.slane %v2302, 2
  %v2465 = vsel %vm380, %v2464, %v2463
  %v2466 = vrot.slane %v2306, 1
  %v2467 = vsel %vm383, %v2466, %v2465
  %v2468 = vsel %vm386, %v2310, %v2467
  %v2469 = vrot.slane %v2314, 7
  %v2470 = vsel %vm389, %v2469, %v2468
  %v2471 = vrot.slane %v2318, 6
  %v2472 = vsel %vm392, %v2471, %v2470
  %v2473 = vrot.slane %v2322, 5
  %v2474 = vsel %vm395, %v2473, %v2472
  %v2475 = vrot.slane %v2323, 4
  %v2476 = vrot.slane %v2327, 3
  %v2477 = vsel %vm377, %v2476, %v2475
  %v2478 = vrot.slane %v2331, 2
  %v2479 = vsel %vm380, %v2478, %v2477
  %v2480 = vrot.slane %v2335, 1
  %v2481 = vsel %vm383, %v2480, %v2479
  %v2482 = vsel %vm386, %v2339, %v2481
  %v2483 = vrot.slane %v2343, 7
  %v2484 = vsel %vm389, %v2483, %v2482
  %v2485 = vrot.slane %v2347, 6
  %v2486 = vsel %vm392, %v2485, %v2484
  %v2487 = vrot.slane %v2351, 5
  %v2488 = vsel %vm395, %v2487, %v2486
  %v2489 = vrot.slane %v2324, 4
  %v2490 = vrot.slane %v2328, 3
  %v2491 = vsel %vm377, %v2490, %v2489
  %v2492 = vrot.slane %v2332, 2
  %v2493 = vsel %vm380, %v2492, %v2491
  %v2494 = vrot.slane %v2336, 1
  %v2495 = vsel %vm383, %v2494, %v2493
  %v2496 = vsel %vm386, %v2340, %v2495
  %v2497 = vrot.slane %v2344, 7
  %v2498 = vsel %vm389, %v2497, %v2496
  %v2499 = vrot.slane %v2348, 6
  %v2500 = vsel %vm392, %v2499, %v2498
  %v2501 = vrot.slane %v2352, 5
  %v2502 = vsel %vm395, %v2501, %v2500
  %v2503 = vrot.slane %v2325, 4
  %v2504 = vrot.slane %v2329, 3
  %v2505 = vsel %vm377, %v2504, %v2503
  %v2506 = vrot.slane %v2333, 2
  %v2507 = vsel %vm380, %v2506, %v2505
  %v2508 = vrot.slane %v2337, 1
  %v2509 = vsel %vm383, %v2508, %v2507
  %v2510 = vsel %vm386, %v2341, %v2509
  %v2511 = vrot.slane %v2345, 7
  %v2512 = vsel %vm389, %v2511, %v2510
  %v2513 = vrot.slane %v2349, 6
  %v2514 = vsel %vm392, %v2513, %v2512
  %v2515 = vrot.slane %v2353, 5
  %v2516 = vsel %vm395, %v2515, %v2514
  %v2517 = vrot.slane %v2326, 4
  %v2518 = vrot.slane %v2330, 3
  %v2519 = vsel %vm377, %v2518, %v2517
  %v2520 = vrot.slane %v2334, 2
  %v2521 = vsel %vm380, %v2520, %v2519
  %v2522 = vrot.slane %v2338, 1
  %v2523 = vsel %vm383, %v2522, %v2521
  %v2524 = vsel %vm386, %v2342, %v2523
  %v2525 = vrot.slane %v2346, 7
  %v2526 = vsel %vm389, %v2525, %v2524
  %v2527 = vrot.slane %v2350, 6
  %v2528 = vsel %vm392, %v2527, %v2526
  %v2529 = vrot.slane %v2354, 5
  %v2530 = vsel %vm395, %v2529, %v2528
  %2539 = vmatpush.bf16.msra.mxu0 %v276
  %2540 = vmatpush.bf16.msra.mxu0 %v272
  %2541 = vmatpush.bf16.msra.mxu0 %v268
  %2542 = vmatpush.bf16.msra.mxu0 %v264
  %2543 = vmatpush.bf16.msra.mxu0 %v260
  %2544 = vmatpush.bf16.msra.mxu0 %v256
  %2545 = vmatpush.bf16.msra.mxu0 %v252
  %2546 = vmatpush.bf16.msra.mxu0 %v248
  %2547 = vmatmul.bf16.gmra.mxu0 %v2258
  %v2548 = vpop.f32.mrf.mxu0
  %v2549 = vadd.f32 %v2432, %v2548
  %v2550 = vpop.f32.mrf.mxu0
  %v2551 = vadd.f32 %v2488, %v2550
  %2552 = vdwg.mxu0
  %2553 = vmatpush.bf16.msra.mxu0 %v277
  %2554 = vmatpush.bf16.msra.mxu0 %v273
  %2555 = vmatpush.bf16.msra.mxu0 %v269
  %2556 = vmatpush.bf16.msra.mxu0 %v265
  %2557 = vmatpush.bf16.msra.mxu0 %v261
  %2558 = vmatpush.bf16.msra.mxu0 %v257
  %2559 = vmatpush.bf16.msra.mxu0 %v253
  %2560 = vmatpush.bf16.msra.mxu0 %v249
  %2561 = vmatmul.bf16.gmra.mxu0 %v2258
  %v2562 = vpop.f32.mrf.mxu0
  %v2563 = vadd.f32 %v2446, %v2562
  %v2564 = vpop.f32.mrf.mxu0
  %v2565 = vadd.f32 %v2502, %v2564
  %2566 = vdwg.mxu0
  %2567 = vmatpush.bf16.msra.mxu0 %v278
  %2568 = vmatpush.bf16.msra.mxu0 %v274
  %2569 = vmatpush.bf16.msra.mxu0 %v270
  %2570 = vmatpush.bf16.msra.mxu0 %v266
  %2571 = vmatpush.bf16.msra.mxu0 %v262
  %2572 = vmatpush.bf16.msra.mxu0 %v258
  %2573 = vmatpush.bf16.msra.mxu0 %v254
  %2574 = vmatpush.bf16.msra.mxu0 %v250
  %2575 = vmatmul.bf16.gmra.mxu0 %v2258
  %v2576 = vpop.f32.mrf.mxu0
  %v2577 = vadd.f32 %v2460, %v2576
  %v2578 = vpop.f32.mrf.mxu0
  %v2579 = vadd.f32 %v2516, %v2578
  %2580 = vdwg.mxu0
  %2581 = vmatpush.bf16.msra.mxu0 %v279
  %2582 = vmatpush.bf16.msra.mxu0 %v275
  %2583 = vmatpush.bf16.msra.mxu0 %v271
  %2584 = vmatpush.bf16.msra.mxu0 %v267
  %2585 = vmatpush.bf16.msra.mxu0 %v263
  %2586 = vmatpush.bf16.msra.mxu0 %v259
  %2587 = vmatpush.bf16.msra.mxu0 %v255
  %2588 = vmatpush.bf16.msra.mxu0 %v251
  %2589 = vmatmul.bf16.gmra.mxu0 %v2258
  %v2590 = vpop.f32.mrf.mxu0
  %v2591 = vadd.f32 %v2474, %v2590
  %v2592 = vpop.f32.mrf.mxu0
  %v2593 = vadd.f32 %v2530, %v2592
  %2594 = vdwg.mxu0
  %v2595 = vxor.u32 %v2549, 2147483648
  %v2596 = vxor.u32 %v2551, 2147483648
  %v2597 = vmul.f32 %v2595, 1.442695
  %v2598 = vpow.pop %v2597
  %v2599 = vmul.f32 %v2596, 1.442695
  %v2600 = vpow.pop %v2599
  %v2601 = vadd.f32 %v2598, 1.0
  %v2602 = vadd.f32 %v2600, 1.0
  %v2603 = vrcp.pop %v2601
  %v2604 = vmul.f32 %v2601, %v2603
  %v2605 = vsub.f32 1.0, %v2604
  %v2606 = vmul.f32 %v2603, %v2605
  %v2607 = vadd.f32 %v2603, %v2606
  %vm2608 = vweird.f32 %v2601
  %vm2609 = vweird.f32 %v2603
  %vm2610 = vmor %vm2608, %vm2609
  %v2611 = vsel %vm2610, %v2603, %v2607
  %v2612 = vand.u32 2147483647, %v2601
  %vm2613 = vcmp.eq.f32.partialorder %v2612, 8.507059e+37
  %v2614 = vand.u32 %v2601, 2147483648
  %v2615 = vor.u32 1.1754944e-38, %v2614
  %v2616 = vsel %vm2613, %v2615, %v2611
  %v2617 = vmul.f32 1.0, %v2616
  %v2618 = vrcp.pop %v2602
  %v2619 = vmul.f32 %v2602, %v2618
  %v2620 = vsub.f32 1.0, %v2619
  %v2621 = vmul.f32 %v2618, %v2620
  %v2622 = vadd.f32 %v2618, %v2621
  %vm2623 = vweird.f32 %v2602
  %vm2624 = vweird.f32 %v2618
  %vm2625 = vmor %vm2623, %vm2624
  %v2626 = vsel %vm2625, %v2618, %v2622
  %v2627 = vand.u32 2147483647, %v2602
  %vm2628 = vcmp.eq.f32.partialorder %v2627, 8.507059e+37
  %v2629 = vand.u32 %v2602, 2147483648
  %v2630 = vor.u32 1.1754944e-38, %v2629
  %v2631 = vsel %vm2628, %v2630, %v2626
  %v2632 = vmul.f32 1.0, %v2631
  %v2633 = vxor.u32 %v2563, 2147483648
  %v2634 = vxor.u32 %v2565, 2147483648
  %v2635 = vmul.f32 %v2633, 1.442695
  %v2636 = vpow.pop %v2635
  %v2637 = vmul.f32 %v2634, 1.442695
  %v2638 = vpow.pop %v2637
  %v2639 = vadd.f32 %v2636, 1.0
  %v2640 = vadd.f32 %v2638, 1.0
  %v2641 = vrcp.pop %v2639
  %v2642 = vmul.f32 %v2639, %v2641
  %v2643 = vsub.f32 1.0, %v2642
  %v2644 = vmul.f32 %v2641, %v2643
  %v2645 = vadd.f32 %v2641, %v2644
  %vm2646 = vweird.f32 %v2639
  %vm2647 = vweird.f32 %v2641
  %vm2648 = vmor %vm2646, %vm2647
  %v2649 = vsel %vm2648, %v2641, %v2645
  %v2650 = vand.u32 2147483647, %v2639
  %vm2651 = vcmp.eq.f32.partialorder %v2650, 8.507059e+37
  %v2652 = vand.u32 %v2639, 2147483648
  %v2653 = vor.u32 1.1754944e-38, %v2652
  %v2654 = vsel %vm2651, %v2653, %v2649
  %v2655 = vmul.f32 1.0, %v2654
  %v2656 = vrcp.pop %v2640
  %v2657 = vmul.f32 %v2640, %v2656
  %v2658 = vsub.f32 1.0, %v2657
  %v2659 = vmul.f32 %v2656, %v2658
  %v2660 = vadd.f32 %v2656, %v2659
  %vm2661 = vweird.f32 %v2640
  %vm2662 = vweird.f32 %v2656
  %vm2663 = vmor %vm2661, %vm2662
  %v2664 = vsel %vm2663, %v2656, %v2660
  %v2665 = vand.u32 2147483647, %v2640
  %vm2666 = vcmp.eq.f32.partialorder %v2665, 8.507059e+37
  %v2667 = vand.u32 %v2640, 2147483648
  %v2668 = vor.u32 1.1754944e-38, %v2667
  %v2669 = vsel %vm2666, %v2668, %v2664
  %v2670 = vmul.f32 1.0, %v2669
  %v2671 = vtanh.pop %v2577
  %v2672 = vtanh.pop %v2579
  %v2673 = vxor.u32 %v2591, 2147483648
  %v2674 = vxor.u32 %v2593, 2147483648
  %v2675 = vmul.f32 %v2673, 1.442695
  %v2676 = vpow.pop %v2675
  %v2677 = vmul.f32 %v2674, 1.442695
  %v2678 = vpow.pop %v2677
  %v2679 = vadd.f32 %v2676, 1.0
  %v2680 = vadd.f32 %v2678, 1.0
  %v2681 = vrcp.pop %v2679
  %v2682 = vmul.f32 %v2679, %v2681
  %v2683 = vsub.f32 1.0, %v2682
  %v2684 = vmul.f32 %v2681, %v2683
  %v2685 = vadd.f32 %v2681, %v2684
  %vm2686 = vweird.f32 %v2679
  %vm2687 = vweird.f32 %v2681
  %vm2688 = vmor %vm2686, %vm2687
  %v2689 = vsel %vm2688, %v2681, %v2685
  %v2690 = vand.u32 2147483647, %v2679
  %vm2691 = vcmp.eq.f32.partialorder %v2690, 8.507059e+37
  %v2692 = vand.u32 %v2679, 2147483648
  %v2693 = vor.u32 1.1754944e-38, %v2692
  %v2694 = vsel %vm2691, %v2693, %v2689
  %v2695 = vmul.f32 1.0, %v2694
  %v2696 = vrcp.pop %v2680
  %v2697 = vmul.f32 %v2680, %v2696
  %v2698 = vsub.f32 1.0, %v2697
  %v2699 = vmul.f32 %v2696, %v2698
  %v2700 = vadd.f32 %v2696, %v2699
  %vm2701 = vweird.f32 %v2680
  %vm2702 = vweird.f32 %v2696
  %vm2703 = vmor %vm2701, %vm2702
  %v2704 = vsel %vm2703, %v2696, %v2700
  %v2705 = vand.u32 2147483647, %v2680
  %vm2706 = vcmp.eq.f32.partialorder %v2705, 8.507059e+37
  %v2707 = vand.u32 %v2680, 2147483648
  %v2708 = vor.u32 1.1754944e-38, %v2707
  %v2709 = vsel %vm2706, %v2708, %v2704
  %v2710 = vmul.f32 1.0, %v2709
  %v2711 = vmul.f32 %v2655, %v2206
  %v2712 = vmul.f32 %v2670, %v2207
  %v2713 = vmul.f32 %v2617, %v2671
  %v2714 = vmul.f32 %v2632, %v2672
  %v2715 = vadd.f32 %v2711, %v2713
  %v2716 = vadd.f32 %v2712, %v2714
  %v2717 = vtanh.pop %v2715
  %v2718 = vtanh.pop %v2716
  %v2719 = vmul.f32 %v2695, %v2717
  %v2720 = vmul.f32 %v2710, %v2718
  %v2723 = vrot.slane %v2719, 1
  %v2724 = vrot.slane %v2719, 2
  %v2725 = vrot.slane %v2719, 3
  %v2726 = vrot.slane %v2719, 4
  %v2727 = vrot.slane %v2719, 5
  %v2728 = vrot.slane %v2719, 6
  %v2729 = vrot.slane %v2719, 7
  %v2730 = vrot.slane %v2720, 1
  %v2731 = vrot.slane %v2720, 2
  %v2732 = vrot.slane %v2720, 3
  %v2733 = vrot.slane %v2720, 4
  %v2734 = vrot.slane %v2720, 5
  %v2735 = vrot.slane %v2720, 6
  %v2736 = vrot.slane %v2720, 7
  %2751 = vst [vmem:[%s2 + $0x4] sm:$0x1] %v2719
  %2752 = vst [vmem:[%s2 + $0x14] sm:$0x1] %v2723
  %2753 = vst [vmem:[%s2 + $0x24] sm:$0x1] %v2724
  %2754 = vst [vmem:[%s2 + $0x34] sm:$0x1] %v2725
  %2755 = vst [vmem:[%s2 + $0x44] sm:$0x1] %v2726
  %2756 = vst [vmem:[%s2 + $0x54] sm:$0x1] %v2727
  %2757 = vst [vmem:[%s2 + $0x64] sm:$0x1] %v2728
  %2758 = vst [vmem:[%s2 + $0x74] sm:$0x1] %v2729
  %2759 = vst [vmem:[%s2 + $0x84] sm:$0x1] %v2720
  %2760 = vst [vmem:[%s2 + $0x94] sm:$0x1] %v2730
  %2761 = vst [vmem:[%s2 + $0xa4] sm:$0x1] %v2731
  %2762 = vst [vmem:[%s2 + $0xb4] sm:$0x1] %v2732
  %2763 = vst [vmem:[%s2 + $0xc4] sm:$0x1] %v2733
  %2764 = vst [vmem:[%s2 + $0xd4] sm:$0x1] %v2734
  %2765 = vst [vmem:[%s2 + $0xe4] sm:$0x1] %v2735
  %2766 = vst [vmem:[%s2 + $0xf4] sm:$0x1] %v2736
  %v2767 = vpack.c.bf16 %v2720, %v2719
  %v2768 = vld [vmem:[%s0] sm:$0x44]
  %v2769 = vld [vmem:[%s0 + $0x8] sm:$0x44]
  %v2770 = vld [vmem:[%s0 + $0x20] sm:$0x44]
  %v2771 = vld [vmem:[%s0 + $0x28] sm:$0x44]
  %v2772 = vld [vmem:[%s0 + $0x40] sm:$0x44]
  %v2773 = vld [vmem:[%s0 + $0x48] sm:$0x44]
  %v2774 = vld [vmem:[%s0 + $0x60] sm:$0x44]
  %v2775 = vld [vmem:[%s0 + $0x68] sm:$0x44]
  %v2776 = vld [vmem:[%s0 + $0x80] sm:$0x44]
  %v2777 = vld [vmem:[%s0 + $0x88] sm:$0x44]
  %v2778 = vld [vmem:[%s0 + $0xa0] sm:$0x44]
  %v2779 = vld [vmem:[%s0 + $0xa8] sm:$0x44]
  %v2780 = vld [vmem:[%s0 + $0xc0] sm:$0x44]
  %v2781 = vld [vmem:[%s0 + $0xc8] sm:$0x44]
  %v2782 = vld [vmem:[%s0 + $0xe0] sm:$0x44]
  %v2783 = vld [vmem:[%s0 + $0xe8] sm:$0x44]
  %v2784 = vld [vmem:[%s0 + $0x100] sm:$0x44]
  %v2785 = vld [vmem:[%s0 + $0x108] sm:$0x44]
  %v2786 = vld [vmem:[%s0 + $0x120] sm:$0x44]
  %v2787 = vld [vmem:[%s0 + $0x128] sm:$0x44]
  %v2788 = vld [vmem:[%s0 + $0x140] sm:$0x44]
  %v2789 = vld [vmem:[%s0 + $0x148] sm:$0x44]
  %v2790 = vld [vmem:[%s0 + $0x160] sm:$0x44]
  %v2791 = vld [vmem:[%s0 + $0x168] sm:$0x44]
  %v2792 = vld [vmem:[%s0 + $0x180] sm:$0x44]
  %v2793 = vld [vmem:[%s0 + $0x188] sm:$0x44]
  %v2794 = vld [vmem:[%s0 + $0x1a0] sm:$0x44]
  %v2795 = vld [vmem:[%s0 + $0x1a8] sm:$0x44]
  %v2796 = vld [vmem:[%s0 + $0x1c0] sm:$0x44]
  %v2797 = vld [vmem:[%s0 + $0x1c8] sm:$0x44]
  %v2798 = vld [vmem:[%s0 + $0x1e0] sm:$0x44]
  %v2799 = vld [vmem:[%s0 + $0x1e8] sm:$0x44]
  %v2800 = vunpack.c.l.bf16 %v2768
  %v2801 = vunpack.c.h.bf16 %v2768
  %v2802 = vunpack.c.l.bf16 %v2769
  %v2803 = vunpack.c.h.bf16 %v2769
  %v2804 = vunpack.c.l.bf16 %v2770
  %v2805 = vunpack.c.h.bf16 %v2770
  %v2806 = vunpack.c.l.bf16 %v2771
  %v2807 = vunpack.c.h.bf16 %v2771
  %v2808 = vunpack.c.l.bf16 %v2772
  %v2809 = vunpack.c.h.bf16 %v2772
  %v2810 = vunpack.c.l.bf16 %v2773
  %v2811 = vunpack.c.h.bf16 %v2773
  %v2812 = vunpack.c.l.bf16 %v2774
  %v2813 = vunpack.c.h.bf16 %v2774
  %v2814 = vunpack.c.l.bf16 %v2775
  %v2815 = vunpack.c.h.bf16 %v2775
  %v2816 = vunpack.c.l.bf16 %v2776
  %v2817 = vunpack.c.h.bf16 %v2776
  %v2818 = vunpack.c.l.bf16 %v2777
  %v2819 = vunpack.c.h.bf16 %v2777
  %v2820 = vunpack.c.l.bf16 %v2778
  %v2821 = vunpack.c.h.bf16 %v2778
  %v2822 = vunpack.c.l.bf16 %v2779
  %v2823 = vunpack.c.h.bf16 %v2779
  %v2824 = vunpack.c.l.bf16 %v2780
  %v2825 = vunpack.c.h.bf16 %v2780
  %v2826 = vunpack.c.l.bf16 %v2781
  %v2827 = vunpack.c.h.bf16 %v2781
  %v2828 = vunpack.c.l.bf16 %v2782
  %v2829 = vunpack.c.h.bf16 %v2782
  %v2830 = vunpack.c.l.bf16 %v2783
  %v2831 = vunpack.c.h.bf16 %v2783
  %v2832 = vunpack.c.l.bf16 %v2784
  %v2833 = vunpack.c.h.bf16 %v2784
  %v2834 = vunpack.c.l.bf16 %v2785
  %v2835 = vunpack.c.h.bf16 %v2785
  %v2836 = vunpack.c.l.bf16 %v2786
  %v2837 = vunpack.c.h.bf16 %v2786
  %v2838 = vunpack.c.l.bf16 %v2787
  %v2839 = vunpack.c.h.bf16 %v2787
  %v2840 = vunpack.c.l.bf16 %v2788
  %v2841 = vunpack.c.h.bf16 %v2788
  %v2842 = vunpack.c.l.bf16 %v2789
  %v2843 = vunpack.c.h.bf16 %v2789
  %v2844 = vunpack.c.l.bf16 %v2790
  %v2845 = vunpack.c.h.bf16 %v2790
  %v2846 = vunpack.c.l.bf16 %v2791
  %v2847 = vunpack.c.h.bf16 %v2791
  %v2848 = vunpack.c.l.bf16 %v2792
  %v2849 = vunpack.c.h.bf16 %v2792
  %v2850 = vunpack.c.l.bf16 %v2793
  %v2851 = vunpack.c.h.bf16 %v2793
  %v2852 = vunpack.c.l.bf16 %v2794
  %v2853 = vunpack.c.h.bf16 %v2794
  %v2854 = vunpack.c.l.bf16 %v2795
  %v2855 = vunpack.c.h.bf16 %v2795
  %v2856 = vunpack.c.l.bf16 %v2796
  %v2857 = vunpack.c.h.bf16 %v2796
  %v2858 = vunpack.c.l.bf16 %v2797
  %v2859 = vunpack.c.h.bf16 %v2797
  %v2860 = vunpack.c.l.bf16 %v2798
  %v2861 = vunpack.c.h.bf16 %v2798
  %v2862 = vunpack.c.l.bf16 %v2799
  %v2863 = vunpack.c.h.bf16 %v2799
  %v2928 = vrot.slane %v2800, 5
  %v2929 = vrot.slane %v2804, 4
  %v2930 = vsel %vm377, %v2929, %v2928
  %v2931 = vrot.slane %v2808, 3
  %v2932 = vsel %vm380, %v2931, %v2930
  %v2933 = vrot.slane %v2812, 2
  %v2934 = vsel %vm383, %v2933, %v2932
  %v2935 = vrot.slane %v2816, 1
  %v2936 = vsel %vm386, %v2935, %v2934
  %v2937 = vsel %vm389, %v2820, %v2936
  %v2938 = vrot.slane %v2824, 7
  %v2939 = vsel %vm392, %v2938, %v2937
  %v2940 = vrot.slane %v2828, 6
  %v2941 = vsel %vm395, %v2940, %v2939
  %v2942 = vrot.slane %v2801, 5
  %v2943 = vrot.slane %v2805, 4
  %v2944 = vsel %vm377, %v2943, %v2942
  %v2945 = vrot.slane %v2809, 3
  %v2946 = vsel %vm380, %v2945, %v2944
  %v2947 = vrot.slane %v2813, 2
  %v2948 = vsel %vm383, %v2947, %v2946
  %v2949 = vrot.slane %v2817, 1
  %v2950 = vsel %vm386, %v2949, %v2948
  %v2951 = vsel %vm389, %v2821, %v2950
  %v2952 = vrot.slane %v2825, 7
  %v2953 = vsel %vm392, %v2952, %v2951
  %v2954 = vrot.slane %v2829, 6
  %v2955 = vsel %vm395, %v2954, %v2953
  %v2956 = vrot.slane %v2802, 5
  %v2957 = vrot.slane %v2806, 4
  %v2958 = vsel %vm377, %v2957, %v2956
  %v2959 = vrot.slane %v2810, 3
  %v2960 = vsel %vm380, %v2959, %v2958
  %v2961 = vrot.slane %v2814, 2
  %v2962 = vsel %vm383, %v2961, %v2960
  %v2963 = vrot.slane %v2818, 1
  %v2964 = vsel %vm386, %v2963, %v2962
  %v2965 = vsel %vm389, %v2822, %v2964
  %v2966 = vrot.slane %v2826, 7
  %v2967 = vsel %vm392, %v2966, %v2965
  %v2968 = vrot.slane %v2830, 6
  %v2969 = vsel %vm395, %v2968, %v2967
  %v2970 = vrot.slane %v2803, 5
  %v2971 = vrot.slane %v2807, 4
  %v2972 = vsel %vm377, %v2971, %v2970
  %v2973 = vrot.slane %v2811, 3
  %v2974 = vsel %vm380, %v2973, %v2972
  %v2975 = vrot.slane %v2815, 2
  %v2976 = vsel %vm383, %v2975, %v2974
  %v2977 = vrot.slane %v2819, 1
  %v2978 = vsel %vm386, %v2977, %v2976
  %v2979 = vsel %vm389, %v2823, %v2978
  %v2980 = vrot.slane %v2827, 7
  %v2981 = vsel %vm392, %v2980, %v2979
  %v2982 = vrot.slane %v2831, 6
  %v2983 = vsel %vm395, %v2982, %v2981
  %v2984 = vrot.slane %v2832, 5
  %v2985 = vrot.slane %v2836, 4
  %v2986 = vsel %vm377, %v2985, %v2984
  %v2987 = vrot.slane %v2840, 3
  %v2988 = vsel %vm380, %v2987, %v2986
  %v2989 = vrot.slane %v2844, 2
  %v2990 = vsel %vm383, %v2989, %v2988
  %v2991 = vrot.slane %v2848, 1
  %v2992 = vsel %vm386, %v2991, %v2990
  %v2993 = vsel %vm389, %v2852, %v2992
  %v2994 = vrot.slane %v2856, 7
  %v2995 = vsel %vm392, %v2994, %v2993
  %v2996 = vrot.slane %v2860, 6
  %v2997 = vsel %vm395, %v2996, %v2995
  %v2998 = vrot.slane %v2833, 5
  %v2999 = vrot.slane %v2837, 4
  %v3000 = vsel %vm377, %v2999, %v2998
  %v3001 = vrot.slane %v2841, 3
  %v3002 = vsel %vm380, %v3001, %v3000
  %v3003 = vrot.slane %v2845, 2
  %v3004 = vsel %vm383, %v3003, %v3002
  %v3005 = vrot.slane %v2849, 1
  %v3006 = vsel %vm386, %v3005, %v3004
  %v3007 = vsel %vm389, %v2853, %v3006
  %v3008 = vrot.slane %v2857, 7
  %v3009 = vsel %vm392, %v3008, %v3007
  %v3010 = vrot.slane %v2861, 6
  %v3011 = vsel %vm395, %v3010, %v3009
  %v3012 = vrot.slane %v2834, 5
  %v3013 = vrot.slane %v2838, 4
  %v3014 = vsel %vm377, %v3013, %v3012
  %v3015 = vrot.slane %v2842, 3
  %v3016 = vsel %vm380, %v3015, %v3014
  %v3017 = vrot.slane %v2846, 2
  %v3018 = vsel %vm383, %v3017, %v3016
  %v3019 = vrot.slane %v2850, 1
  %v3020 = vsel %vm386, %v3019, %v3018
  %v3021 = vsel %vm389, %v2854, %v3020
  %v3022 = vrot.slane %v2858, 7
  %v3023 = vsel %vm392, %v3022, %v3021
  %v3024 = vrot.slane %v2862, 6
  %v3025 = vsel %vm395, %v3024, %v3023
  %v3026 = vrot.slane %v2835, 5
  %v3027 = vrot.slane %v2839, 4
  %v3028 = vsel %vm377, %v3027, %v3026
  %v3029 = vrot.slane %v2843, 3
  %v3030 = vsel %vm380, %v3029, %v3028
  %v3031 = vrot.slane %v2847, 2
  %v3032 = vsel %vm383, %v3031, %v3030
  %v3033 = vrot.slane %v2851, 1
  %v3034 = vsel %vm386, %v3033, %v3032
  %v3035 = vsel %vm389, %v2855, %v3034
  %v3036 = vrot.slane %v2859, 7
  %v3037 = vsel %vm392, %v3036, %v3035
  %v3038 = vrot.slane %v2863, 6
  %v3039 = vsel %vm395, %v3038, %v3037
  %3048 = vmatpush.bf16.msra.mxu0 %v276
  %3049 = vmatpush.bf16.msra.mxu0 %v272
  %3050 = vmatpush.bf16.msra.mxu0 %v268
  %3051 = vmatpush.bf16.msra.mxu0 %v264
  %3052 = vmatpush.bf16.msra.mxu0 %v260
  %3053 = vmatpush.bf16.msra.mxu0 %v256
  %3054 = vmatpush.bf16.msra.mxu0 %v252
  %3055 = vmatpush.bf16.msra.mxu0 %v248
  %3056 = vmatmul.bf16.gmra.mxu0 %v2767
  %v3057 = vpop.f32.mrf.mxu0
  %v3058 = vadd.f32 %v2941, %v3057
  %v3059 = vpop.f32.mrf.mxu0
  %v3060 = vadd.f32 %v2997, %v3059
  %3061 = vdwg.mxu0
  %3062 = vmatpush.bf16.msra.mxu0 %v277
  %3063 = vmatpush.bf16.msra.mxu0 %v273
  %3064 = vmatpush.bf16.msra.mxu0 %v269
  %3065 = vmatpush.bf16.msra.mxu0 %v265
  %3066 = vmatpush.bf16.msra.mxu0 %v261
  %3067 = vmatpush.bf16.msra.mxu0 %v257
  %3068 = vmatpush.bf16.msra.mxu0 %v253
  %3069 = vmatpush.bf16.msra.mxu0 %v249
  %3070 = vmatmul.bf16.gmra.mxu0 %v2767
  %v3071 = vpop.f32.mrf.mxu0
  %v3072 = vadd.f32 %v2955, %v3071
  %v3073 = vpop.f32.mrf.mxu0
  %v3074 = vadd.f32 %v3011, %v3073
  %3075 = vdwg.mxu0
  %3076 = vmatpush.bf16.msra.mxu0 %v278
  %3077 = vmatpush.bf16.msra.mxu0 %v274
  %3078 = vmatpush.bf16.msra.mxu0 %v270
  %3079 = vmatpush.bf16.msra.mxu0 %v266
  %3080 = vmatpush.bf16.msra.mxu0 %v262
  %3081 = vmatpush.bf16.msra.mxu0 %v258
  %3082 = vmatpush.bf16.msra.mxu0 %v254
  %3083 = vmatpush.bf16.msra.mxu0 %v250
  %3084 = vmatmul.bf16.gmra.mxu0 %v2767
  %v3085 = vpop.f32.mrf.mxu0
  %v3086 = vadd.f32 %v2969, %v3085
  %v3087 = vpop.f32.mrf.mxu0
  %v3088 = vadd.f32 %v3025, %v3087
  %3089 = vdwg.mxu0
  %3090 = vmatpush.bf16.msra.mxu0 %v279
  %3091 = vmatpush.bf16.msra.mxu0 %v275
  %3092 = vmatpush.bf16.msra.mxu0 %v271
  %3093 = vmatpush.bf16.msra.mxu0 %v267
  %3094 = vmatpush.bf16.msra.mxu0 %v263
  %3095 = vmatpush.bf16.msra.mxu0 %v259
  %3096 = vmatpush.bf16.msra.mxu0 %v255
  %3097 = vmatpush.bf16.msra.mxu0 %v251
  %3098 = vmatmul.bf16.gmra.mxu0 %v2767
  %v3099 = vpop.f32.mrf.mxu0
  %v3100 = vadd.f32 %v2983, %v3099
  %v3101 = vpop.f32.mrf.mxu0
  %v3102 = vadd.f32 %v3039, %v3101
  %3103 = vdwg.mxu0
  %v3104 = vxor.u32 %v3058, 2147483648
  %v3105 = vxor.u32 %v3060, 2147483648
  %v3106 = vmul.f32 %v3104, 1.442695
  %v3107 = vpow.pop %v3106
  %v3108 = vmul.f32 %v3105, 1.442695
  %v3109 = vpow.pop %v3108
  %v3110 = vadd.f32 %v3107, 1.0
  %v3111 = vadd.f32 %v3109, 1.0
  %v3112 = vrcp.pop %v3110
  %v3113 = vmul.f32 %v3110, %v3112
  %v3114 = vsub.f32 1.0, %v3113
  %v3115 = vmul.f32 %v3112, %v3114
  %v3116 = vadd.f32 %v3112, %v3115
  %vm3117 = vweird.f32 %v3110
  %vm3118 = vweird.f32 %v3112
  %vm3119 = vmor %vm3117, %vm3118
  %v3120 = vsel %vm3119, %v3112, %v3116
  %v3121 = vand.u32 2147483647, %v3110
  %vm3122 = vcmp.eq.f32.partialorder %v3121, 8.507059e+37
  %v3123 = vand.u32 %v3110, 2147483648
  %v3124 = vor.u32 1.1754944e-38, %v3123
  %v3125 = vsel %vm3122, %v3124, %v3120
  %v3126 = vmul.f32 1.0, %v3125
  %v3127 = vrcp.pop %v3111
  %v3128 = vmul.f32 %v3111, %v3127
  %v3129 = vsub.f32 1.0, %v3128
  %v3130 = vmul.f32 %v3127, %v3129
  %v3131 = vadd.f32 %v3127, %v3130
  %vm3132 = vweird.f32 %v3111
  %vm3133 = vweird.f32 %v3127
  %vm3134 = vmor %vm3132, %vm3133
  %v3135 = vsel %vm3134, %v3127, %v3131
  %v3136 = vand.u32 2147483647, %v3111
  %vm3137 = vcmp.eq.f32.partialorder %v3136, 8.507059e+37
  %v3138 = vand.u32 %v3111, 2147483648
  %v3139 = vor.u32 1.1754944e-38, %v3138
  %v3140 = vsel %vm3137, %v3139, %v3135
  %v3141 = vmul.f32 1.0, %v3140
  %v3142 = vxor.u32 %v3072, 2147483648
  %v3143 = vxor.u32 %v3074, 2147483648
  %v3144 = vmul.f32 %v3142, 1.442695
  %v3145 = vpow.pop %v3144
  %v3146 = vmul.f32 %v3143, 1.442695
  %v3147 = vpow.pop %v3146
  %v3148 = vadd.f32 %v3145, 1.0
  %v3149 = vadd.f32 %v3147, 1.0
  %v3150 = vrcp.pop %v3148
  %v3151 = vmul.f32 %v3148, %v3150
  %v3152 = vsub.f32 1.0, %v3151
  %v3153 = vmul.f32 %v3150, %v3152
  %v3154 = vadd.f32 %v3150, %v3153
  %vm3155 = vweird.f32 %v3148
  %vm3156 = vweird.f32 %v3150
  %vm3157 = vmor %vm3155, %vm3156
  %v3158 = vsel %vm3157, %v3150, %v3154
  %v3159 = vand.u32 2147483647, %v3148
  %vm3160 = vcmp.eq.f32.partialorder %v3159, 8.507059e+37
  %v3161 = vand.u32 %v3148, 2147483648
  %v3162 = vor.u32 1.1754944e-38, %v3161
  %v3163 = vsel %vm3160, %v3162, %v3158
  %v3164 = vmul.f32 1.0, %v3163
  %v3165 = vrcp.pop %v3149
  %v3166 = vmul.f32 %v3149, %v3165
  %v3167 = vsub.f32 1.0, %v3166
  %v3168 = vmul.f32 %v3165, %v3167
  %v3169 = vadd.f32 %v3165, %v3168
  %vm3170 = vweird.f32 %v3149
  %vm3171 = vweird.f32 %v3165
  %vm3172 = vmor %vm3170, %vm3171
  %v3173 = vsel %vm3172, %v3165, %v3169
  %v3174 = vand.u32 2147483647, %v3149
  %vm3175 = vcmp.eq.f32.partialorder %v3174, 8.507059e+37
  %v3176 = vand.u32 %v3149, 2147483648
  %v3177 = vor.u32 1.1754944e-38, %v3176
  %v3178 = vsel %vm3175, %v3177, %v3173
  %v3179 = vmul.f32 1.0, %v3178
  %v3180 = vtanh.pop %v3086
  %v3181 = vtanh.pop %v3088
  %v3182 = vxor.u32 %v3100, 2147483648
  %v3183 = vxor.u32 %v3102, 2147483648
  %v3184 = vmul.f32 %v3182, 1.442695
  %v3185 = vpow.pop %v3184
  %v3186 = vmul.f32 %v3183, 1.442695
  %v3187 = vpow.pop %v3186
  %v3188 = vadd.f32 %v3185, 1.0
  %v3189 = vadd.f32 %v3187, 1.0
  %v3190 = vrcp.pop %v3188
  %v3191 = vmul.f32 %v3188, %v3190
  %v3192 = vsub.f32 1.0, %v3191
  %v3193 = vmul.f32 %v3190, %v3192
  %v3194 = vadd.f32 %v3190, %v3193
  %vm3195 = vweird.f32 %v3188
  %vm3196 = vweird.f32 %v3190
  %vm3197 = vmor %vm3195, %vm3196
  %v3198 = vsel %vm3197, %v3190, %v3194
  %v3199 = vand.u32 2147483647, %v3188
  %vm3200 = vcmp.eq.f32.partialorder %v3199, 8.507059e+37
  %v3201 = vand.u32 %v3188, 2147483648
  %v3202 = vor.u32 1.1754944e-38, %v3201
  %v3203 = vsel %vm3200, %v3202, %v3198
  %v3204 = vmul.f32 1.0, %v3203
  %v3205 = vrcp.pop %v3189
  %v3206 = vmul.f32 %v3189, %v3205
  %v3207 = vsub.f32 1.0, %v3206
  %v3208 = vmul.f32 %v3205, %v3207
  %v3209 = vadd.f32 %v3205, %v3208
  %vm3210 = vweird.f32 %v3189
  %vm3211 = vweird.f32 %v3205
  %vm3212 = vmor %vm3210, %vm3211
  %v3213 = vsel %vm3212, %v3205, %v3209
  %v3214 = vand.u32 2147483647, %v3189
  %vm3215 = vcmp.eq.f32.partialorder %v3214, 8.507059e+37
  %v3216 = vand.u32 %v3189, 2147483648
  %v3217 = vor.u32 1.1754944e-38, %v3216
  %v3218 = vsel %vm3215, %v3217, %v3213
  %v3219 = vmul.f32 1.0, %v3218
  %v3220 = vmul.f32 %v3164, %v2715
  %v3221 = vmul.f32 %v3179, %v2716
  %v3222 = vmul.f32 %v3126, %v3180
  %v3223 = vmul.f32 %v3141, %v3181
  %v3224 = vadd.f32 %v3220, %v3222
  %v3225 = vadd.f32 %v3221, %v3223
  %v3226 = vtanh.pop %v3224
  %v3227 = vtanh.pop %v3225
  %v3228 = vmul.f32 %v3204, %v3226
  %v3229 = vmul.f32 %v3219, %v3227
  %v3232 = vrot.slane %v3228, 1
  %v3233 = vrot.slane %v3228, 2
  %v3234 = vrot.slane %v3228, 3
  %v3235 = vrot.slane %v3228, 4
  %v3236 = vrot.slane %v3228, 5
  %v3237 = vrot.slane %v3228, 6
  %v3238 = vrot.slane %v3228, 7
  %v3239 = vrot.slane %v3229, 1
  %v3240 = vrot.slane %v3229, 2
  %v3241 = vrot.slane %v3229, 3
  %v3242 = vrot.slane %v3229, 4
  %v3243 = vrot.slane %v3229, 5
  %v3244 = vrot.slane %v3229, 6
  %v3245 = vrot.slane %v3229, 7
  %3260 = vst [vmem:[%s2 + $0x5] sm:$0x1] %v3228
  %3261 = vst [vmem:[%s2 + $0x15] sm:$0x1] %v3232
  %3262 = vst [vmem:[%s2 + $0x25] sm:$0x1] %v3233
  %3263 = vst [vmem:[%s2 + $0x35] sm:$0x1] %v3234
  %3264 = vst [vmem:[%s2 + $0x45] sm:$0x1] %v3235
  %3265 = vst [vmem:[%s2 + $0x55] sm:$0x1] %v3236
  %3266 = vst [vmem:[%s2 + $0x65] sm:$0x1] %v3237
  %3267 = vst [vmem:[%s2 + $0x75] sm:$0x1] %v3238
  %3268 = vst [vmem:[%s2 + $0x85] sm:$0x1] %v3229
  %3269 = vst [vmem:[%s2 + $0x95] sm:$0x1] %v3239
  %3270 = vst [vmem:[%s2 + $0xa5] sm:$0x1] %v3240
  %3271 = vst [vmem:[%s2 + $0xb5] sm:$0x1] %v3241
  %3272 = vst [vmem:[%s2 + $0xc5] sm:$0x1] %v3242
  %3273 = vst [vmem:[%s2 + $0xd5] sm:$0x1] %v3243
  %3274 = vst [vmem:[%s2 + $0xe5] sm:$0x1] %v3244
  %3275 = vst [vmem:[%s2 + $0xf5] sm:$0x1] %v3245
  %v3276 = vpack.c.bf16 %v3229, %v3228
  %v3277 = vld [vmem:[%s0] sm:$0x88]
  %v3278 = vld [vmem:[%s0 + $0x8] sm:$0x88]
  %v3279 = vld [vmem:[%s0 + $0x20] sm:$0x88]
  %v3280 = vld [vmem:[%s0 + $0x28] sm:$0x88]
  %v3281 = vld [vmem:[%s0 + $0x40] sm:$0x88]
  %v3282 = vld [vmem:[%s0 + $0x48] sm:$0x88]
  %v3283 = vld [vmem:[%s0 + $0x60] sm:$0x88]
  %v3284 = vld [vmem:[%s0 + $0x68] sm:$0x88]
  %v3285 = vld [vmem:[%s0 + $0x80] sm:$0x88]
  %v3286 = vld [vmem:[%s0 + $0x88] sm:$0x88]
  %v3287 = vld [vmem:[%s0 + $0xa0] sm:$0x88]
  %v3288 = vld [vmem:[%s0 + $0xa8] sm:$0x88]
  %v3289 = vld [vmem:[%s0 + $0xc0] sm:$0x88]
  %v3290 = vld [vmem:[%s0 + $0xc8] sm:$0x88]
  %v3291 = vld [vmem:[%s0 + $0xe0] sm:$0x88]
  %v3292 = vld [vmem:[%s0 + $0xe8] sm:$0x88]
  %v3293 = vld [vmem:[%s0 + $0x100] sm:$0x88]
  %v3294 = vld [vmem:[%s0 + $0x108] sm:$0x88]
  %v3295 = vld [vmem:[%s0 + $0x120] sm:$0x88]
  %v3296 = vld [vmem:[%s0 + $0x128] sm:$0x88]
  %v3297 = vld [vmem:[%s0 + $0x140] sm:$0x88]
  %v3298 = vld [vmem:[%s0 + $0x148] sm:$0x88]
  %v3299 = vld [vmem:[%s0 + $0x160] sm:$0x88]
  %v3300 = vld [vmem:[%s0 + $0x168] sm:$0x88]
  %v3301 = vld [vmem:[%s0 + $0x180] sm:$0x88]
  %v3302 = vld [vmem:[%s0 + $0x188] sm:$0x88]
  %v3303 = vld [vmem:[%s0 + $0x1a0] sm:$0x88]
  %v3304 = vld [vmem:[%s0 + $0x1a8] sm:$0x88]
  %v3305 = vld [vmem:[%s0 + $0x1c0] sm:$0x88]
  %v3306 = vld [vmem:[%s0 + $0x1c8] sm:$0x88]
  %v3307 = vld [vmem:[%s0 + $0x1e0] sm:$0x88]
  %v3308 = vld [vmem:[%s0 + $0x1e8] sm:$0x88]
  %v3309 = vunpack.c.l.bf16 %v3277
  %v3310 = vunpack.c.h.bf16 %v3277
  %v3311 = vunpack.c.l.bf16 %v3278
  %v3312 = vunpack.c.h.bf16 %v3278
  %v3313 = vunpack.c.l.bf16 %v3279
  %v3314 = vunpack.c.h.bf16 %v3279
  %v3315 = vunpack.c.l.bf16 %v3280
  %v3316 = vunpack.c.h.bf16 %v3280
  %v3317 = vunpack.c.l.bf16 %v3281
  %v3318 = vunpack.c.h.bf16 %v3281
  %v3319 = vunpack.c.l.bf16 %v3282
  %v3320 = vunpack.c.h.bf16 %v3282
  %v3321 = vunpack.c.l.bf16 %v3283
  %v3322 = vunpack.c.h.bf16 %v3283
  %v3323 = vunpack.c.l.bf16 %v3284
  %v3324 = vunpack.c.h.bf16 %v3284
  %v3325 = vunpack.c.l.bf16 %v3285
  %v3326 = vunpack.c.h.bf16 %v3285
  %v3327 = vunpack.c.l.bf16 %v3286
  %v3328 = vunpack.c.h.bf16 %v3286
  %v3329 = vunpack.c.l.bf16 %v3287
  %v3330 = vunpack.c.h.bf16 %v3287
  %v3331 = vunpack.c.l.bf16 %v3288
  %v3332 = vunpack.c.h.bf16 %v3288
  %v3333 = vunpack.c.l.bf16 %v3289
  %v3334 = vunpack.c.h.bf16 %v3289
  %v3335 = vunpack.c.l.bf16 %v3290
  %v3336 = vunpack.c.h.bf16 %v3290
  %v3337 = vunpack.c.l.bf16 %v3291
  %v3338 = vunpack.c.h.bf16 %v3291
  %v3339 = vunpack.c.l.bf16 %v3292
  %v3340 = vunpack.c.h.bf16 %v3292
  %v3341 = vunpack.c.l.bf16 %v3293
  %v3342 = vunpack.c.h.bf16 %v3293
  %v3343 = vunpack.c.l.bf16 %v3294
  %v3344 = vunpack.c.h.bf16 %v3294
  %v3345 = vunpack.c.l.bf16 %v3295
  %v3346 = vunpack.c.h.bf16 %v3295
  %v3347 = vunpack.c.l.bf16 %v3296
  %v3348 = vunpack.c.h.bf16 %v3296
  %v3349 = vunpack.c.l.bf16 %v3297
  %v3350 = vunpack.c.h.bf16 %v3297
  %v3351 = vunpack.c.l.bf16 %v3298
  %v3352 = vunpack.c.h.bf16 %v3298
  %v3353 = vunpack.c.l.bf16 %v3299
  %v3354 = vunpack.c.h.bf16 %v3299
  %v3355 = vunpack.c.l.bf16 %v3300
  %v3356 = vunpack.c.h.bf16 %v3300
  %v3357 = vunpack.c.l.bf16 %v3301
  %v3358 = vunpack.c.h.bf16 %v3301
  %v3359 = vunpack.c.l.bf16 %v3302
  %v3360 = vunpack.c.h.bf16 %v3302
  %v3361 = vunpack.c.l.bf16 %v3303
  %v3362 = vunpack.c.h.bf16 %v3303
  %v3363 = vunpack.c.l.bf16 %v3304
  %v3364 = vunpack.c.h.bf16 %v3304
  %v3365 = vunpack.c.l.bf16 %v3305
  %v3366 = vunpack.c.h.bf16 %v3305
  %v3367 = vunpack.c.l.bf16 %v3306
  %v3368 = vunpack.c.h.bf16 %v3306
  %v3369 = vunpack.c.l.bf16 %v3307
  %v3370 = vunpack.c.h.bf16 %v3307
  %v3371 = vunpack.c.l.bf16 %v3308
  %v3372 = vunpack.c.h.bf16 %v3308
  %v3437 = vrot.slane %v3309, 6
  %v3438 = vrot.slane %v3313, 5
  %v3439 = vsel %vm377, %v3438, %v3437
  %v3440 = vrot.slane %v3317, 4
  %v3441 = vsel %vm380, %v3440, %v3439
  %v3442 = vrot.slane %v3321, 3
  %v3443 = vsel %vm383, %v3442, %v3441
  %v3444 = vrot.slane %v3325, 2
  %v3445 = vsel %vm386, %v3444, %v3443
  %v3446 = vrot.slane %v3329, 1
  %v3447 = vsel %vm389, %v3446, %v3445
  %v3448 = vsel %vm392, %v3333, %v3447
  %v3449 = vrot.slane %v3337, 7
  %v3450 = vsel %vm395, %v3449, %v3448
  %v3451 = vrot.slane %v3310, 6
  %v3452 = vrot.slane %v3314, 5
  %v3453 = vsel %vm377, %v3452, %v3451
  %v3454 = vrot.slane %v3318, 4
  %v3455 = vsel %vm380, %v3454, %v3453
  %v3456 = vrot.slane %v3322, 3
  %v3457 = vsel %vm383, %v3456, %v3455
  %v3458 = vrot.slane %v3326, 2
  %v3459 = vsel %vm386, %v3458, %v3457
  %v3460 = vrot.slane %v3330, 1
  %v3461 = vsel %vm389, %v3460, %v3459
  %v3462 = vsel %vm392, %v3334, %v3461
  %v3463 = vrot.slane %v3338, 7
  %v3464 = vsel %vm395, %v3463, %v3462
  %v3465 = vrot.slane %v3311, 6
  %v3466 = vrot.slane %v3315, 5
  %v3467 = vsel %vm377, %v3466, %v3465
  %v3468 = vrot.slane %v3319, 4
  %v3469 = vsel %vm380, %v3468, %v3467
  %v3470 = vrot.slane %v3323, 3
  %v3471 = vsel %vm383, %v3470, %v3469
  %v3472 = vrot.slane %v3327, 2
  %v3473 = vsel %vm386, %v3472, %v3471
  %v3474 = vrot.slane %v3331, 1
  %v3475 = vsel %vm389, %v3474, %v3473
  %v3476 = vsel %vm392, %v3335, %v3475
  %v3477 = vrot.slane %v3339, 7
  %v3478 = vsel %vm395, %v3477, %v3476
  %v3479 = vrot.slane %v3312, 6
  %v3480 = vrot.slane %v3316, 5
  %v3481 = vsel %vm377, %v3480, %v3479
  %v3482 = vrot.slane %v3320, 4
  %v3483 = vsel %vm380, %v3482, %v3481
  %v3484 = vrot.slane %v3324, 3
  %v3485 = vsel %vm383, %v3484, %v3483
  %v3486 = vrot.slane %v3328, 2
  %v3487 = vsel %vm386, %v3486, %v3485
  %v3488 = vrot.slane %v3332, 1
  %v3489 = vsel %vm389, %v3488, %v3487
  %v3490 = vsel %vm392, %v3336, %v3489
  %v3491 = vrot.slane %v3340, 7
  %v3492 = vsel %vm395, %v3491, %v3490
  %v3493 = vrot.slane %v3341, 6
  %v3494 = vrot.slane %v3345, 5
  %v3495 = vsel %vm377, %v3494, %v3493
  %v3496 = vrot.slane %v3349, 4
  %v3497 = vsel %vm380, %v3496, %v3495
  %v3498 = vrot.slane %v3353, 3
  %v3499 = vsel %vm383, %v3498, %v3497
  %v3500 = vrot.slane %v3357, 2
  %v3501 = vsel %vm386, %v3500, %v3499
  %v3502 = vrot.slane %v3361, 1
  %v3503 = vsel %vm389, %v3502, %v3501
  %v3504 = vsel %vm392, %v3365, %v3503
  %v3505 = vrot.slane %v3369, 7
  %v3506 = vsel %vm395, %v3505, %v3504
  %v3507 = vrot.slane %v3342, 6
  %v3508 = vrot.slane %v3346, 5
  %v3509 = vsel %vm377, %v3508, %v3507
  %v3510 = vrot.slane %v3350, 4
  %v3511 = vsel %vm380, %v3510, %v3509
  %v3512 = vrot.slane %v3354, 3
  %v3513 = vsel %vm383, %v3512, %v3511
  %v3514 = vrot.slane %v3358, 2
  %v3515 = vsel %vm386, %v3514, %v3513
  %v3516 = vrot.slane %v3362, 1
  %v3517 = vsel %vm389, %v3516, %v3515
  %v3518 = vsel %vm392, %v3366, %v3517
  %v3519 = vrot.slane %v3370, 7
  %v3520 = vsel %vm395, %v3519, %v3518
  %v3521 = vrot.slane %v3343, 6
  %v3522 = vrot.slane %v3347, 5
  %v3523 = vsel %vm377, %v3522, %v3521
  %v3524 = vrot.slane %v3351, 4
  %v3525 = vsel %vm380, %v3524, %v3523
  %v3526 = vrot.slane %v3355, 3
  %v3527 = vsel %vm383, %v3526, %v3525
  %v3528 = vrot.slane %v3359, 2
  %v3529 = vsel %vm386, %v3528, %v3527
  %v3530 = vrot.slane %v3363, 1
  %v3531 = vsel %vm389, %v3530, %v3529
  %v3532 = vsel %vm392, %v3367, %v3531
  %v3533 = vrot.slane %v3371, 7
  %v3534 = vsel %vm395, %v3533, %v3532
  %v3535 = vrot.slane %v3344, 6
  %v3536 = vrot.slane %v3348, 5
  %v3537 = vsel %vm377, %v3536, %v3535
  %v3538 = vrot.slane %v3352, 4
  %v3539 = vsel %vm380, %v3538, %v3537
  %v3540 = vrot.slane %v3356, 3
  %v3541 = vsel %vm383, %v3540, %v3539
  %v3542 = vrot.slane %v3360, 2
  %v3543 = vsel %vm386, %v3542, %v3541
  %v3544 = vrot.slane %v3364, 1
  %v3545 = vsel %vm389, %v3544, %v3543
  %v3546 = vsel %vm392, %v3368, %v3545
  %v3547 = vrot.slane %v3372, 7
  %v3548 = vsel %vm395, %v3547, %v3546
  %3557 = vmatpush.bf16.msra.mxu0 %v276
  %3558 = vmatpush.bf16.msra.mxu0 %v272
  %3559 = vmatpush.bf16.msra.mxu0 %v268
  %3560 = vmatpush.bf16.msra.mxu0 %v264
  %3561 = vmatpush.bf16.msra.mxu0 %v260
  %3562 = vmatpush.bf16.msra.mxu0 %v256
  %3563 = vmatpush.bf16.msra.mxu0 %v252
  %3564 = vmatpush.bf16.msra.mxu0 %v248
  %3565 = vmatmul.bf16.gmra.mxu0 %v3276
  %v3566 = vpop.f32.mrf.mxu0
  %v3567 = vadd.f32 %v3450, %v3566
  %v3568 = vpop.f32.mrf.mxu0
  %v3569 = vadd.f32 %v3506, %v3568
  %3570 = vdwg.mxu0
  %3571 = vmatpush.bf16.msra.mxu0 %v277
  %3572 = vmatpush.bf16.msra.mxu0 %v273
  %3573 = vmatpush.bf16.msra.mxu0 %v269
  %3574 = vmatpush.bf16.msra.mxu0 %v265
  %3575 = vmatpush.bf16.msra.mxu0 %v261
  %3576 = vmatpush.bf16.msra.mxu0 %v257
  %3577 = vmatpush.bf16.msra.mxu0 %v253
  %3578 = vmatpush.bf16.msra.mxu0 %v249
  %3579 = vmatmul.bf16.gmra.mxu0 %v3276
  %v3580 = vpop.f32.mrf.mxu0
  %v3581 = vadd.f32 %v3464, %v3580
  %v3582 = vpop.f32.mrf.mxu0
  %v3583 = vadd.f32 %v3520, %v3582
  %3584 = vdwg.mxu0
  %3585 = vmatpush.bf16.msra.mxu0 %v278
  %3586 = vmatpush.bf16.msra.mxu0 %v274
  %3587 = vmatpush.bf16.msra.mxu0 %v270
  %3588 = vmatpush.bf16.msra.mxu0 %v266
  %3589 = vmatpush.bf16.msra.mxu0 %v262
  %3590 = vmatpush.bf16.msra.mxu0 %v258
  %3591 = vmatpush.bf16.msra.mxu0 %v254
  %3592 = vmatpush.bf16.msra.mxu0 %v250
  %3593 = vmatmul.bf16.gmra.mxu0 %v3276
  %v3594 = vpop.f32.mrf.mxu0
  %v3595 = vadd.f32 %v3478, %v3594
  %v3596 = vpop.f32.mrf.mxu0
  %v3597 = vadd.f32 %v3534, %v3596
  %3598 = vdwg.mxu0
  %3599 = vmatpush.bf16.msra.mxu0 %v279
  %3600 = vmatpush.bf16.msra.mxu0 %v275
  %3601 = vmatpush.bf16.msra.mxu0 %v271
  %3602 = vmatpush.bf16.msra.mxu0 %v267
  %3603 = vmatpush.bf16.msra.mxu0 %v263
  %3604 = vmatpush.bf16.msra.mxu0 %v259
  %3605 = vmatpush.bf16.msra.mxu0 %v255
  %3606 = vmatpush.bf16.msra.mxu0 %v251
  %3607 = vmatmul.bf16.gmra.mxu0 %v3276
  %v3608 = vpop.f32.mrf.mxu0
  %v3609 = vadd.f32 %v3492, %v3608
  %v3610 = vpop.f32.mrf.mxu0
  %v3611 = vadd.f32 %v3548, %v3610
  %3612 = vdwg.mxu0
  %v3613 = vxor.u32 %v3567, 2147483648
  %v3614 = vxor.u32 %v3569, 2147483648
  %v3615 = vmul.f32 %v3613, 1.442695
  %v3616 = vpow.pop %v3615
  %v3617 = vmul.f32 %v3614, 1.442695
  %v3618 = vpow.pop %v3617
  %v3619 = vadd.f32 %v3616, 1.0
  %v3620 = vadd.f32 %v3618, 1.0
  %v3621 = vrcp.pop %v3619
  %v3622 = vmul.f32 %v3619, %v3621
  %v3623 = vsub.f32 1.0, %v3622
  %v3624 = vmul.f32 %v3621, %v3623
  %v3625 = vadd.f32 %v3621, %v3624
  %vm3626 = vweird.f32 %v3619
  %vm3627 = vweird.f32 %v3621
  %vm3628 = vmor %vm3626, %vm3627
  %v3629 = vsel %vm3628, %v3621, %v3625
  %v3630 = vand.u32 2147483647, %v3619
  %vm3631 = vcmp.eq.f32.partialorder %v3630, 8.507059e+37
  %v3632 = vand.u32 %v3619, 2147483648
  %v3633 = vor.u32 1.1754944e-38, %v3632
  %v3634 = vsel %vm3631, %v3633, %v3629
  %v3635 = vmul.f32 1.0, %v3634
  %v3636 = vrcp.pop %v3620
  %v3637 = vmul.f32 %v3620, %v3636
  %v3638 = vsub.f32 1.0, %v3637
  %v3639 = vmul.f32 %v3636, %v3638
  %v3640 = vadd.f32 %v3636, %v3639
  %vm3641 = vweird.f32 %v3620
  %vm3642 = vweird.f32 %v3636
  %vm3643 = vmor %vm3641, %vm3642
  %v3644 = vsel %vm3643, %v3636, %v3640
  %v3645 = vand.u32 2147483647, %v3620
  %vm3646 = vcmp.eq.f32.partialorder %v3645, 8.507059e+37
  %v3647 = vand.u32 %v3620, 2147483648
  %v3648 = vor.u32 1.1754944e-38, %v3647
  %v3649 = vsel %vm3646, %v3648, %v3644
  %v3650 = vmul.f32 1.0, %v3649
  %v3651 = vxor.u32 %v3581, 2147483648
  %v3652 = vxor.u32 %v3583, 2147483648
  %v3653 = vmul.f32 %v3651, 1.442695
  %v3654 = vpow.pop %v3653
  %v3655 = vmul.f32 %v3652, 1.442695
  %v3656 = vpow.pop %v3655
  %v3657 = vadd.f32 %v3654, 1.0
  %v3658 = vadd.f32 %v3656, 1.0
  %v3659 = vrcp.pop %v3657
  %v3660 = vmul.f32 %v3657, %v3659
  %v3661 = vsub.f32 1.0, %v3660
  %v3662 = vmul.f32 %v3659, %v3661
  %v3663 = vadd.f32 %v3659, %v3662
  %vm3664 = vweird.f32 %v3657
  %vm3665 = vweird.f32 %v3659
  %vm3666 = vmor %vm3664, %vm3665
  %v3667 = vsel %vm3666, %v3659, %v3663
  %v3668 = vand.u32 2147483647, %v3657
  %vm3669 = vcmp.eq.f32.partialorder %v3668, 8.507059e+37
  %v3670 = vand.u32 %v3657, 2147483648
  %v3671 = vor.u32 1.1754944e-38, %v3670
  %v3672 = vsel %vm3669, %v3671, %v3667
  %v3673 = vmul.f32 1.0, %v3672
  %v3674 = vrcp.pop %v3658
  %v3675 = vmul.f32 %v3658, %v3674
  %v3676 = vsub.f32 1.0, %v3675
  %v3677 = vmul.f32 %v3674, %v3676
  %v3678 = vadd.f32 %v3674, %v3677
  %vm3679 = vweird.f32 %v3658
  %vm3680 = vweird.f32 %v3674
  %vm3681 = vmor %vm3679, %vm3680
  %v3682 = vsel %vm3681, %v3674, %v3678
  %v3683 = vand.u32 2147483647, %v3658
  %vm3684 = vcmp.eq.f32.partialorder %v3683, 8.507059e+37
  %v3685 = vand.u32 %v3658, 2147483648
  %v3686 = vor.u32 1.1754944e-38, %v3685
  %v3687 = vsel %vm3684, %v3686, %v3682
  %v3688 = vmul.f32 1.0, %v3687
  %v3689 = vtanh.pop %v3595
  %v3690 = vtanh.pop %v3597
  %v3691 = vxor.u32 %v3609, 2147483648
  %v3692 = vxor.u32 %v3611, 2147483648
  %v3693 = vmul.f32 %v3691, 1.442695
  %v3694 = vpow.pop %v3693
  %v3695 = vmul.f32 %v3692, 1.442695
  %v3696 = vpow.pop %v3695
  %v3697 = vadd.f32 %v3694, 1.0
  %v3698 = vadd.f32 %v3696, 1.0
  %v3699 = vrcp.pop %v3697
  %v3700 = vmul.f32 %v3697, %v3699
  %v3701 = vsub.f32 1.0, %v3700
  %v3702 = vmul.f32 %v3699, %v3701
  %v3703 = vadd.f32 %v3699, %v3702
  %vm3704 = vweird.f32 %v3697
  %vm3705 = vweird.f32 %v3699
  %vm3706 = vmor %vm3704, %vm3705
  %v3707 = vsel %vm3706, %v3699, %v3703
  %v3708 = vand.u32 2147483647, %v3697
  %vm3709 = vcmp.eq.f32.partialorder %v3708, 8.507059e+37
  %v3710 = vand.u32 %v3697, 2147483648
  %v3711 = vor.u32 1.1754944e-38, %v3710
  %v3712 = vsel %vm3709, %v3711, %v3707
  %v3713 = vmul.f32 1.0, %v3712
  %v3714 = vrcp.pop %v3698
  %v3715 = vmul.f32 %v3698, %v3714
  %v3716 = vsub.f32 1.0, %v3715
  %v3717 = vmul.f32 %v3714, %v3716
  %v3718 = vadd.f32 %v3714, %v3717
  %vm3719 = vweird.f32 %v3698
  %vm3720 = vweird.f32 %v3714
  %vm3721 = vmor %vm3719, %vm3720
  %v3722 = vsel %vm3721, %v3714, %v3718
  %v3723 = vand.u32 2147483647, %v3698
  %vm3724 = vcmp.eq.f32.partialorder %v3723, 8.507059e+37
  %v3725 = vand.u32 %v3698, 2147483648
  %v3726 = vor.u32 1.1754944e-38, %v3725
  %v3727 = vsel %vm3724, %v3726, %v3722
  %v3728 = vmul.f32 1.0, %v3727
  %v3729 = vmul.f32 %v3673, %v3224
  %v3730 = vmul.f32 %v3688, %v3225
  %v3731 = vmul.f32 %v3635, %v3689
  %v3732 = vmul.f32 %v3650, %v3690
  %v3733 = vadd.f32 %v3729, %v3731
  %v3734 = vadd.f32 %v3730, %v3732
  %v3735 = vtanh.pop %v3733
  %v3736 = vtanh.pop %v3734
  %v3737 = vmul.f32 %v3713, %v3735
  %v3738 = vmul.f32 %v3728, %v3736
  %v3741 = vrot.slane %v3737, 1
  %v3742 = vrot.slane %v3737, 2
  %v3743 = vrot.slane %v3737, 3
  %v3744 = vrot.slane %v3737, 4
  %v3745 = vrot.slane %v3737, 5
  %v3746 = vrot.slane %v3737, 6
  %v3747 = vrot.slane %v3737, 7
  %v3748 = vrot.slane %v3738, 1
  %v3749 = vrot.slane %v3738, 2
  %v3750 = vrot.slane %v3738, 3
  %v3751 = vrot.slane %v3738, 4
  %v3752 = vrot.slane %v3738, 5
  %v3753 = vrot.slane %v3738, 6
  %v3754 = vrot.slane %v3738, 7
  %3769 = vst [vmem:[%s2 + $0x6] sm:$0x1] %v3737
  %3770 = vst [vmem:[%s2 + $0x16] sm:$0x1] %v3741
  %3771 = vst [vmem:[%s2 + $0x26] sm:$0x1] %v3742
  %3772 = vst [vmem:[%s2 + $0x36] sm:$0x1] %v3743
  %3773 = vst [vmem:[%s2 + $0x46] sm:$0x1] %v3744
  %3774 = vst [vmem:[%s2 + $0x56] sm:$0x1] %v3745
  %3775 = vst [vmem:[%s2 + $0x66] sm:$0x1] %v3746
  %3776 = vst [vmem:[%s2 + $0x76] sm:$0x1] %v3747
  %3777 = vst [vmem:[%s2 + $0x86] sm:$0x1] %v3738
  %3778 = vst [vmem:[%s2 + $0x96] sm:$0x1] %v3748
  %3779 = vst [vmem:[%s2 + $0xa6] sm:$0x1] %v3749
  %3780 = vst [vmem:[%s2 + $0xb6] sm:$0x1] %v3750
  %3781 = vst [vmem:[%s2 + $0xc6] sm:$0x1] %v3751
  %3782 = vst [vmem:[%s2 + $0xd6] sm:$0x1] %v3752
  %3783 = vst [vmem:[%s2 + $0xe6] sm:$0x1] %v3753
  %3784 = vst [vmem:[%s2 + $0xf6] sm:$0x1] %v3754
  %v3785 = vpack.c.bf16 %v3738, %v3737
  %v3786 = vld [vmem:[%s0] sm:$0x88]
  %v3787 = vld [vmem:[%s0 + $0x8] sm:$0x88]
  %v3788 = vld [vmem:[%s0 + $0x20] sm:$0x88]
  %v3789 = vld [vmem:[%s0 + $0x28] sm:$0x88]
  %v3790 = vld [vmem:[%s0 + $0x40] sm:$0x88]
  %v3791 = vld [vmem:[%s0 + $0x48] sm:$0x88]
  %v3792 = vld [vmem:[%s0 + $0x60] sm:$0x88]
  %v3793 = vld [vmem:[%s0 + $0x68] sm:$0x88]
  %v3794 = vld [vmem:[%s0 + $0x80] sm:$0x88]
  %v3795 = vld [vmem:[%s0 + $0x88] sm:$0x88]
  %v3796 = vld [vmem:[%s0 + $0xa0] sm:$0x88]
  %v3797 = vld [vmem:[%s0 + $0xa8] sm:$0x88]
  %v3798 = vld [vmem:[%s0 + $0xc0] sm:$0x88]
  %v3799 = vld [vmem:[%s0 + $0xc8] sm:$0x88]
  %v3800 = vld [vmem:[%s0 + $0xe0] sm:$0x88]
  %v3801 = vld [vmem:[%s0 + $0xe8] sm:$0x88]
  %v3802 = vld [vmem:[%s0 + $0x100] sm:$0x88]
  %v3803 = vld [vmem:[%s0 + $0x108] sm:$0x88]
  %v3804 = vld [vmem:[%s0 + $0x120] sm:$0x88]
  %v3805 = vld [vmem:[%s0 + $0x128] sm:$0x88]
  %v3806 = vld [vmem:[%s0 + $0x140] sm:$0x88]
  %v3807 = vld [vmem:[%s0 + $0x148] sm:$0x88]
  %v3808 = vld [vmem:[%s0 + $0x160] sm:$0x88]
  %v3809 = vld [vmem:[%s0 + $0x168] sm:$0x88]
  %v3810 = vld [vmem:[%s0 + $0x180] sm:$0x88]
  %v3811 = vld [vmem:[%s0 + $0x188] sm:$0x88]
  %v3812 = vld [vmem:[%s0 + $0x1a0] sm:$0x88]
  %v3813 = vld [vmem:[%s0 + $0x1a8] sm:$0x88]
  %v3814 = vld [vmem:[%s0 + $0x1c0] sm:$0x88]
  %v3815 = vld [vmem:[%s0 + $0x1c8] sm:$0x88]
  %v3816 = vld [vmem:[%s0 + $0x1e0] sm:$0x88]
  %v3817 = vld [vmem:[%s0 + $0x1e8] sm:$0x88]
  %v3818 = vunpack.c.l.bf16 %v3786
  %v3819 = vunpack.c.h.bf16 %v3786
  %v3820 = vunpack.c.l.bf16 %v3787
  %v3821 = vunpack.c.h.bf16 %v3787
  %v3822 = vunpack.c.l.bf16 %v3788
  %v3823 = vunpack.c.h.bf16 %v3788
  %v3824 = vunpack.c.l.bf16 %v3789
  %v3825 = vunpack.c.h.bf16 %v3789
  %v3826 = vunpack.c.l.bf16 %v3790
  %v3827 = vunpack.c.h.bf16 %v3790
  %v3828 = vunpack.c.l.bf16 %v3791
  %v3829 = vunpack.c.h.bf16 %v3791
  %v3830 = vunpack.c.l.bf16 %v3792
  %v3831 = vunpack.c.h.bf16 %v3792
  %v3832 = vunpack.c.l.bf16 %v3793
  %v3833 = vunpack.c.h.bf16 %v3793
  %v3834 = vunpack.c.l.bf16 %v3794
  %v3835 = vunpack.c.h.bf16 %v3794
  %v3836 = vunpack.c.l.bf16 %v3795
  %v3837 = vunpack.c.h.bf16 %v3795
  %v3838 = vunpack.c.l.bf16 %v3796
  %v3839 = vunpack.c.h.bf16 %v3796
  %v3840 = vunpack.c.l.bf16 %v3797
  %v3841 = vunpack.c.h.bf16 %v3797
  %v3842 = vunpack.c.l.bf16 %v3798
  %v3843 = vunpack.c.h.bf16 %v3798
  %v3844 = vunpack.c.l.bf16 %v3799
  %v3845 = vunpack.c.h.bf16 %v3799
  %v3846 = vunpack.c.l.bf16 %v3800
  %v3847 = vunpack.c.h.bf16 %v3800
  %v3848 = vunpack.c.l.bf16 %v3801
  %v3849 = vunpack.c.h.bf16 %v3801
  %v3850 = vunpack.c.l.bf16 %v3802
  %v3851 = vunpack.c.h.bf16 %v3802
  %v3852 = vunpack.c.l.bf16 %v3803
  %v3853 = vunpack.c.h.bf16 %v3803
  %v3854 = vunpack.c.l.bf16 %v3804
  %v3855 = vunpack.c.h.bf16 %v3804
  %v3856 = vunpack.c.l.bf16 %v3805
  %v3857 = vunpack.c.h.bf16 %v3805
  %v3858 = vunpack.c.l.bf16 %v3806
  %v3859 = vunpack.c.h.bf16 %v3806
  %v3860 = vunpack.c.l.bf16 %v3807
  %v3861 = vunpack.c.h.bf16 %v3807
  %v3862 = vunpack.c.l.bf16 %v3808
  %v3863 = vunpack.c.h.bf16 %v3808
  %v3864 = vunpack.c.l.bf16 %v3809
  %v3865 = vunpack.c.h.bf16 %v3809
  %v3866 = vunpack.c.l.bf16 %v3810
  %v3867 = vunpack.c.h.bf16 %v3810
  %v3868 = vunpack.c.l.bf16 %v3811
  %v3869 = vunpack.c.h.bf16 %v3811
  %v3870 = vunpack.c.l.bf16 %v3812
  %v3871 = vunpack.c.h.bf16 %v3812
  %v3872 = vunpack.c.l.bf16 %v3813
  %v3873 = vunpack.c.h.bf16 %v3813
  %v3874 = vunpack.c.l.bf16 %v3814
  %v3875 = vunpack.c.h.bf16 %v3814
  %v3876 = vunpack.c.l.bf16 %v3815
  %v3877 = vunpack.c.h.bf16 %v3815
  %v3878 = vunpack.c.l.bf16 %v3816
  %v3879 = vunpack.c.h.bf16 %v3816
  %v3880 = vunpack.c.l.bf16 %v3817
  %v3881 = vunpack.c.h.bf16 %v3817
  %v3946 = vrot.slane %v3818, 7
  %v3947 = vrot.slane %v3822, 6
  %v3948 = vsel %vm377, %v3947, %v3946
  %v3949 = vrot.slane %v3826, 5
  %v3950 = vsel %vm380, %v3949, %v3948
  %v3951 = vrot.slane %v3830, 4
  %v3952 = vsel %vm383, %v3951, %v3950
  %v3953 = vrot.slane %v3834, 3
  %v3954 = vsel %vm386, %v3953, %v3952
  %v3955 = vrot.slane %v3838, 2
  %v3956 = vsel %vm389, %v3955, %v3954
  %v3957 = vrot.slane %v3842, 1
  %v3958 = vsel %vm392, %v3957, %v3956
  %v3959 = vsel %vm395, %v3846, %v3958
  %v3960 = vrot.slane %v3819, 7
  %v3961 = vrot.slane %v3823, 6
  %v3962 = vsel %vm377, %v3961, %v3960
  %v3963 = vrot.slane %v3827, 5
  %v3964 = vsel %vm380, %v3963, %v3962
  %v3965 = vrot.slane %v3831, 4
  %v3966 = vsel %vm383, %v3965, %v3964
  %v3967 = vrot.slane %v3835, 3
  %v3968 = vsel %vm386, %v3967, %v3966
  %v3969 = vrot.slane %v3839, 2
  %v3970 = vsel %vm389, %v3969, %v3968
  %v3971 = vrot.slane %v3843, 1
  %v3972 = vsel %vm392, %v3971, %v3970
  %v3973 = vsel %vm395, %v3847, %v3972
  %v3974 = vrot.slane %v3820, 7
  %v3975 = vrot.slane %v3824, 6
  %v3976 = vsel %vm377, %v3975, %v3974
  %v3977 = vrot.slane %v3828, 5
  %v3978 = vsel %vm380, %v3977, %v3976
  %v3979 = vrot.slane %v3832, 4
  %v3980 = vsel %vm383, %v3979, %v3978
  %v3981 = vrot.slane %v3836, 3
  %v3982 = vsel %vm386, %v3981, %v3980
  %v3983 = vrot.slane %v3840, 2
  %v3984 = vsel %vm389, %v3983, %v3982
  %v3985 = vrot.slane %v3844, 1
  %v3986 = vsel %vm392, %v3985, %v3984
  %v3987 = vsel %vm395, %v3848, %v3986
  %v3988 = vrot.slane %v3821, 7
  %v3989 = vrot.slane %v3825, 6
  %v3990 = vsel %vm377, %v3989, %v3988
  %v3991 = vrot.slane %v3829, 5
  %v3992 = vsel %vm380, %v3991, %v3990
  %v3993 = vrot.slane %v3833, 4
  %v3994 = vsel %vm383, %v3993, %v3992
  %v3995 = vrot.slane %v3837, 3
  %v3996 = vsel %vm386, %v3995, %v3994
  %v3997 = vrot.slane %v3841, 2
  %v3998 = vsel %vm389, %v3997, %v3996
  %v3999 = vrot.slane %v3845, 1
  %v4000 = vsel %vm392, %v3999, %v3998
  %v4001 = vsel %vm395, %v3849, %v4000
  %v4002 = vrot.slane %v3850, 7
  %v4003 = vrot.slane %v3854, 6
  %v4004 = vsel %vm377, %v4003, %v4002
  %v4005 = vrot.slane %v3858, 5
  %v4006 = vsel %vm380, %v4005, %v4004
  %v4007 = vrot.slane %v3862, 4
  %v4008 = vsel %vm383, %v4007, %v4006
  %v4009 = vrot.slane %v3866, 3
  %v4010 = vsel %vm386, %v4009, %v4008
  %v4011 = vrot.slane %v3870, 2
  %v4012 = vsel %vm389, %v4011, %v4010
  %v4013 = vrot.slane %v3874, 1
  %v4014 = vsel %vm392, %v4013, %v4012
  %v4015 = vsel %vm395, %v3878, %v4014
  %v4016 = vrot.slane %v3851, 7
  %v4017 = vrot.slane %v3855, 6
  %v4018 = vsel %vm377, %v4017, %v4016
  %v4019 = vrot.slane %v3859, 5
  %v4020 = vsel %vm380, %v4019, %v4018
  %v4021 = vrot.slane %v3863, 4
  %v4022 = vsel %vm383, %v4021, %v4020
  %v4023 = vrot.slane %v3867, 3
  %v4024 = vsel %vm386, %v4023, %v4022
  %v4025 = vrot.slane %v3871, 2
  %v4026 = vsel %vm389, %v4025, %v4024
  %v4027 = vrot.slane %v3875, 1
  %v4028 = vsel %vm392, %v4027, %v4026
  %v4029 = vsel %vm395, %v3879, %v4028
  %v4030 = vrot.slane %v3852, 7
  %v4031 = vrot.slane %v3856, 6
  %v4032 = vsel %vm377, %v4031, %v4030
  %v4033 = vrot.slane %v3860, 5
  %v4034 = vsel %vm380, %v4033, %v4032
  %v4035 = vrot.slane %v3864, 4
  %v4036 = vsel %vm383, %v4035, %v4034
  %v4037 = vrot.slane %v3868, 3
  %v4038 = vsel %vm386, %v4037, %v4036
  %v4039 = vrot.slane %v3872, 2
  %v4040 = vsel %vm389, %v4039, %v4038
  %v4041 = vrot.slane %v3876, 1
  %v4042 = vsel %vm392, %v4041, %v4040
  %v4043 = vsel %vm395, %v3880, %v4042
  %v4044 = vrot.slane %v3853, 7
  %v4045 = vrot.slane %v3857, 6
  %v4046 = vsel %vm377, %v4045, %v4044
  %v4047 = vrot.slane %v3861, 5
  %v4048 = vsel %vm380, %v4047, %v4046
  %v4049 = vrot.slane %v3865, 4
  %v4050 = vsel %vm383, %v4049, %v4048
  %v4051 = vrot.slane %v3869, 3
  %v4052 = vsel %vm386, %v4051, %v4050
  %v4053 = vrot.slane %v3873, 2
  %v4054 = vsel %vm389, %v4053, %v4052
  %v4055 = vrot.slane %v3877, 1
  %v4056 = vsel %vm392, %v4055, %v4054
  %v4057 = vsel %vm395, %v3881, %v4056
  %4066 = vmatpush.bf16.msra.mxu0 %v276
  %4067 = vmatpush.bf16.msra.mxu0 %v272
  %4068 = vmatpush.bf16.msra.mxu0 %v268
  %4069 = vmatpush.bf16.msra.mxu0 %v264
  %4070 = vmatpush.bf16.msra.mxu0 %v260
  %4071 = vmatpush.bf16.msra.mxu0 %v256
  %4072 = vmatpush.bf16.msra.mxu0 %v252
  %4073 = vmatpush.bf16.msra.mxu0 %v248
  %4074 = vmatmul.bf16.gmra.mxu0 %v3785
  %v4075 = vpop.f32.mrf.mxu0
  %v4076 = vadd.f32 %v3959, %v4075
  %v4077 = vpop.f32.mrf.mxu0
  %v4078 = vadd.f32 %v4015, %v4077
  %4079 = vdwg.mxu0
  %4080 = vmatpush.bf16.msra.mxu0 %v277
  %4081 = vmatpush.bf16.msra.mxu0 %v273
  %4082 = vmatpush.bf16.msra.mxu0 %v269
  %4083 = vmatpush.bf16.msra.mxu0 %v265
  %4084 = vmatpush.bf16.msra.mxu0 %v261
  %4085 = vmatpush.bf16.msra.mxu0 %v257
  %4086 = vmatpush.bf16.msra.mxu0 %v253
  %4087 = vmatpush.bf16.msra.mxu0 %v249
  %4088 = vmatmul.bf16.gmra.mxu0 %v3785
  %v4089 = vpop.f32.mrf.mxu0
  %v4090 = vadd.f32 %v3973, %v4089
  %v4091 = vpop.f32.mrf.mxu0
  %v4092 = vadd.f32 %v4029, %v4091
  %4093 = vdwg.mxu0
  %4094 = vmatpush.bf16.msra.mxu0 %v278
  %4095 = vmatpush.bf16.msra.mxu0 %v274
  %4096 = vmatpush.bf16.msra.mxu0 %v270
  %4097 = vmatpush.bf16.msra.mxu0 %v266
  %4098 = vmatpush.bf16.msra.mxu0 %v262
  %4099 = vmatpush.bf16.msra.mxu0 %v258
  %4100 = vmatpush.bf16.msra.mxu0 %v254
  %4101 = vmatpush.bf16.msra.mxu0 %v250
  %4102 = vmatmul.bf16.gmra.mxu0 %v3785
  %v4103 = vpop.f32.mrf.mxu0
  %v4104 = vadd.f32 %v3987, %v4103
  %v4105 = vpop.f32.mrf.mxu0
  %v4106 = vadd.f32 %v4043, %v4105
  %4107 = vdwg.mxu0
  %4108 = vmatpush.bf16.msra.mxu0 %v279
  %4109 = vmatpush.bf16.msra.mxu0 %v275
  %4110 = vmatpush.bf16.msra.mxu0 %v271
  %4111 = vmatpush.bf16.msra.mxu0 %v267
  %4112 = vmatpush.bf16.msra.mxu0 %v263
  %4113 = vmatpush.bf16.msra.mxu0 %v259
  %4114 = vmatpush.bf16.msra.mxu0 %v255
  %4115 = vmatpush.bf16.msra.mxu0 %v251
  %4116 = vmatmul.bf16.gmra.mxu0 %v3785
  %v4117 = vpop.f32.mrf.mxu0
  %v4118 = vadd.f32 %v4001, %v4117
  %v4119 = vpop.f32.mrf.mxu0
  %v4120 = vadd.f32 %v4057, %v4119
  %4121 = vdwg.mxu0
  %v4122 = vxor.u32 %v4076, 2147483648
  %v4123 = vxor.u32 %v4078, 2147483648
  %v4124 = vmul.f32 %v4122, 1.442695
  %v4125 = vpow.pop %v4124
  %v4126 = vmul.f32 %v4123, 1.442695
  %v4127 = vpow.pop %v4126
  %v4128 = vadd.f32 %v4125, 1.0
  %v4129 = vadd.f32 %v4127, 1.0
  %v4130 = vrcp.pop %v4128
  %v4131 = vmul.f32 %v4128, %v4130
  %v4132 = vsub.f32 1.0, %v4131
  %v4133 = vmul.f32 %v4130, %v4132
  %v4134 = vadd.f32 %v4130, %v4133
  %vm4135 = vweird.f32 %v4128
  %vm4136 = vweird.f32 %v4130
  %vm4137 = vmor %vm4135, %vm4136
  %v4138 = vsel %vm4137, %v4130, %v4134
  %v4139 = vand.u32 2147483647, %v4128
  %vm4140 = vcmp.eq.f32.partialorder %v4139, 8.507059e+37
  %v4141 = vand.u32 %v4128, 2147483648
  %v4142 = vor.u32 1.1754944e-38, %v4141
  %v4143 = vsel %vm4140, %v4142, %v4138
  %v4144 = vmul.f32 1.0, %v4143
  %v4145 = vrcp.pop %v4129
  %v4146 = vmul.f32 %v4129, %v4145
  %v4147 = vsub.f32 1.0, %v4146
  %v4148 = vmul.f32 %v4145, %v4147
  %v4149 = vadd.f32 %v4145, %v4148
  %vm4150 = vweird.f32 %v4129
  %vm4151 = vweird.f32 %v4145
  %vm4152 = vmor %vm4150, %vm4151
  %v4153 = vsel %vm4152, %v4145, %v4149
  %v4154 = vand.u32 2147483647, %v4129
  %vm4155 = vcmp.eq.f32.partialorder %v4154, 8.507059e+37
  %v4156 = vand.u32 %v4129, 2147483648
  %v4157 = vor.u32 1.1754944e-38, %v4156
  %v4158 = vsel %vm4155, %v4157, %v4153
  %v4159 = vmul.f32 1.0, %v4158
  %v4160 = vxor.u32 %v4090, 2147483648
  %v4161 = vxor.u32 %v4092, 2147483648
  %v4162 = vmul.f32 %v4160, 1.442695
  %v4163 = vpow.pop %v4162
  %v4164 = vmul.f32 %v4161, 1.442695
  %v4165 = vpow.pop %v4164
  %v4166 = vadd.f32 %v4163, 1.0
  %v4167 = vadd.f32 %v4165, 1.0
  %v4168 = vrcp.pop %v4166
  %v4169 = vmul.f32 %v4166, %v4168
  %v4170 = vsub.f32 1.0, %v4169
  %v4171 = vmul.f32 %v4168, %v4170
  %v4172 = vadd.f32 %v4168, %v4171
  %vm4173 = vweird.f32 %v4166
  %vm4174 = vweird.f32 %v4168
  %vm4175 = vmor %vm4173, %vm4174
  %v4176 = vsel %vm4175, %v4168, %v4172
  %v4177 = vand.u32 2147483647, %v4166
  %vm4178 = vcmp.eq.f32.partialorder %v4177, 8.507059e+37
  %v4179 = vand.u32 %v4166, 2147483648
  %v4180 = vor.u32 1.1754944e-38, %v4179
  %v4181 = vsel %vm4178, %v4180, %v4176
  %v4182 = vmul.f32 1.0, %v4181
  %v4183 = vrcp.pop %v4167
  %v4184 = vmul.f32 %v4167, %v4183
  %v4185 = vsub.f32 1.0, %v4184
  %v4186 = vmul.f32 %v4183, %v4185
  %v4187 = vadd.f32 %v4183, %v4186
  %vm4188 = vweird.f32 %v4167
  %vm4189 = vweird.f32 %v4183
  %vm4190 = vmor %vm4188, %vm4189
  %v4191 = vsel %vm4190, %v4183, %v4187
  %v4192 = vand.u32 2147483647, %v4167
  %vm4193 = vcmp.eq.f32.partialorder %v4192, 8.507059e+37
  %v4194 = vand.u32 %v4167, 2147483648
  %v4195 = vor.u32 1.1754944e-38, %v4194
  %v4196 = vsel %vm4193, %v4195, %v4191
  %v4197 = vmul.f32 1.0, %v4196
  %v4198 = vtanh.pop %v4104
  %v4199 = vtanh.pop %v4106
  %v4200 = vxor.u32 %v4118, 2147483648
  %v4201 = vxor.u32 %v4120, 2147483648
  %v4202 = vmul.f32 %v4200, 1.442695
  %v4203 = vpow.pop %v4202
  %v4204 = vmul.f32 %v4201, 1.442695
  %v4205 = vpow.pop %v4204
  %v4206 = vadd.f32 %v4203, 1.0
  %v4207 = vadd.f32 %v4205, 1.0
  %v4208 = vrcp.pop %v4206
  %v4209 = vmul.f32 %v4206, %v4208
  %v4210 = vsub.f32 1.0, %v4209
  %v4211 = vmul.f32 %v4208, %v4210
  %v4212 = vadd.f32 %v4208, %v4211
  %vm4213 = vweird.f32 %v4206
  %vm4214 = vweird.f32 %v4208
  %vm4215 = vmor %vm4213, %vm4214
  %v4216 = vsel %vm4215, %v4208, %v4212
  %v4217 = vand.u32 2147483647, %v4206
  %vm4218 = vcmp.eq.f32.partialorder %v4217, 8.507059e+37
  %v4219 = vand.u32 %v4206, 2147483648
  %v4220 = vor.u32 1.1754944e-38, %v4219
  %v4221 = vsel %vm4218, %v4220, %v4216
  %v4222 = vmul.f32 1.0, %v4221
  %v4223 = vrcp.pop %v4207
  %v4224 = vmul.f32 %v4207, %v4223
  %v4225 = vsub.f32 1.0, %v4224
  %v4226 = vmul.f32 %v4223, %v4225
  %v4227 = vadd.f32 %v4223, %v4226
  %vm4228 = vweird.f32 %v4207
  %vm4229 = vweird.f32 %v4223
  %vm4230 = vmor %vm4228, %vm4229
  %v4231 = vsel %vm4230, %v4223, %v4227
  %v4232 = vand.u32 2147483647, %v4207
  %vm4233 = vcmp.eq.f32.partialorder %v4232, 8.507059e+37
  %v4234 = vand.u32 %v4207, 2147483648
  %v4235 = vor.u32 1.1754944e-38, %v4234
  %v4236 = vsel %vm4233, %v4235, %v4231
  %v4237 = vmul.f32 1.0, %v4236
  %v4238 = vmul.f32 %v4182, %v3733
  %v4239 = vmul.f32 %v4197, %v3734
  %v4240 = vmul.f32 %v4144, %v4198
  %v4241 = vmul.f32 %v4159, %v4199
  %v4242 = vadd.f32 %v4238, %v4240
  %v4243 = vadd.f32 %v4239, %v4241
  %v4244 = vtanh.pop %v4242
  %v4245 = vtanh.pop %v4243
  %v4246 = vmul.f32 %v4222, %v4244
  %v4247 = vmul.f32 %v4237, %v4245
  %v4250 = vrot.slane %v4246, 1
  %v4251 = vrot.slane %v4246, 2
  %v4252 = vrot.slane %v4246, 3
  %v4253 = vrot.slane %v4246, 4
  %v4254 = vrot.slane %v4246, 5
  %v4255 = vrot.slane %v4246, 6
  %v4256 = vrot.slane %v4246, 7
  %v4257 = vrot.slane %v4247, 1
  %v4258 = vrot.slane %v4247, 2
  %v4259 = vrot.slane %v4247, 3
  %v4260 = vrot.slane %v4247, 4
  %v4261 = vrot.slane %v4247, 5
  %v4262 = vrot.slane %v4247, 6
  %v4263 = vrot.slane %v4247, 7
  %4278 = vst [vmem:[%s2 + $0x7] sm:$0x1] %v4246
  %4279 = vst [vmem:[%s2 + $0x17] sm:$0x1] %v4250
  %4280 = vst [vmem:[%s2 + $0x27] sm:$0x1] %v4251
  %4281 = vst [vmem:[%s2 + $0x37] sm:$0x1] %v4252
  %4282 = vst [vmem:[%s2 + $0x47] sm:$0x1] %v4253
  %4283 = vst [vmem:[%s2 + $0x57] sm:$0x1] %v4254
  %4284 = vst [vmem:[%s2 + $0x67] sm:$0x1] %v4255
  %4285 = vst [vmem:[%s2 + $0x77] sm:$0x1] %v4256
  %4286 = vst [vmem:[%s2 + $0x87] sm:$0x1] %v4247
  %4287 = vst [vmem:[%s2 + $0x97] sm:$0x1] %v4257
  %4288 = vst [vmem:[%s2 + $0xa7] sm:$0x1] %v4258
  %4289 = vst [vmem:[%s2 + $0xb7] sm:$0x1] %v4259
  %4290 = vst [vmem:[%s2 + $0xc7] sm:$0x1] %v4260
  %4291 = vst [vmem:[%s2 + $0xd7] sm:$0x1] %v4261
  %4292 = vst [vmem:[%s2 + $0xe7] sm:$0x1] %v4262
  %4293 = vst [vmem:[%s2 + $0xf7] sm:$0x1] %v4263
  %v4294 = vpack.c.bf16 %v4247, %v4246
  %v4295 = vld [vmem:[%s0 + $0x10] sm:$0x11]
  %v4296 = vld [vmem:[%s0 + $0x18] sm:$0x11]
  %v4297 = vld [vmem:[%s0 + $0x30] sm:$0x11]
  %v4298 = vld [vmem:[%s0 + $0x38] sm:$0x11]
  %v4299 = vld [vmem:[%s0 + $0x50] sm:$0x11]
  %v4300 = vld [vmem:[%s0 + $0x58] sm:$0x11]
  %v4301 = vld [vmem:[%s0 + $0x70] sm:$0x11]
  %v4302 = vld [vmem:[%s0 + $0x78] sm:$0x11]
  %v4303 = vld [vmem:[%s0 + $0x90] sm:$0x11]
  %v4304 = vld [vmem:[%s0 + $0x98] sm:$0x11]
  %v4305 = vld [vmem:[%s0 + $0xb0] sm:$0x11]
  %v4306 = vld [vmem:[%s0 + $0xb8] sm:$0x11]
  %v4307 = vld [vmem:[%s0 + $0xd0] sm:$0x11]
  %v4308 = vld [vmem:[%s0 + $0xd8] sm:$0x11]
  %v4309 = vld [vmem:[%s0 + $0xf0] sm:$0x11]
  %v4310 = vld [vmem:[%s0 + $0xf8] sm:$0x11]
  %v4311 = vld [vmem:[%s0 + $0x110] sm:$0x11]
  %v4312 = vld [vmem:[%s0 + $0x118] sm:$0x11]
  %v4313 = vld [vmem:[%s0 + $0x130] sm:$0x11]
  %v4314 = vld [vmem:[%s0 + $0x138] sm:$0x11]
  %v4315 = vld [vmem:[%s0 + $0x150] sm:$0x11]
  %v4316 = vld [vmem:[%s0 + $0x158] sm:$0x11]
  %v4317 = vld [vmem:[%s0 + $0x170] sm:$0x11]
  %v4318 = vld [vmem:[%s0 + $0x178] sm:$0x11]
  %v4319 = vld [vmem:[%s0 + $0x190] sm:$0x11]
  %v4320 = vld [vmem:[%s0 + $0x198] sm:$0x11]
  %v4321 = vld [vmem:[%s0 + $0x1b0] sm:$0x11]
  %v4322 = vld [vmem:[%s0 + $0x1b8] sm:$0x11]
  %v4323 = vld [vmem:[%s0 + $0x1d0] sm:$0x11]
  %v4324 = vld [vmem:[%s0 + $0x1d8] sm:$0x11]
  %v4325 = vld [vmem:[%s0 + $0x1f0] sm:$0x11]
  %v4326 = vld [vmem:[%s0 + $0x1f8] sm:$0x11]
  %v4327 = vunpack.c.l.bf16 %v4295
  %v4328 = vunpack.c.h.bf16 %v4295
  %v4329 = vunpack.c.l.bf16 %v4296
  %v4330 = vunpack.c.h.bf16 %v4296
  %v4331 = vunpack.c.l.bf16 %v4297
  %v4332 = vunpack.c.h.bf16 %v4297
  %v4333 = vunpack.c.l.bf16 %v4298
  %v4334 = vunpack.c.h.bf16 %v4298
  %v4335 = vunpack.c.l.bf16 %v4299
  %v4336 = vunpack.c.h.bf16 %v4299
  %v4337 = vunpack.c.l.bf16 %v4300
  %v4338 = vunpack.c.h.bf16 %v4300
  %v4339 = vunpack.c.l.bf16 %v4301
  %v4340 = vunpack.c.h.bf16 %v4301
  %v4341 = vunpack.c.l.bf16 %v4302
  %v4342 = vunpack.c.h.bf16 %v4302
  %v4343 = vunpack.c.l.bf16 %v4303
  %v4344 = vunpack.c.h.bf16 %v4303
  %v4345 = vunpack.c.l.bf16 %v4304
  %v4346 = vunpack.c.h.bf16 %v4304
  %v4347 = vunpack.c.l.bf16 %v4305
  %v4348 = vunpack.c.h.bf16 %v4305
  %v4349 = vunpack.c.l.bf16 %v4306
  %v4350 = vunpack.c.h.bf16 %v4306
  %v4351 = vunpack.c.l.bf16 %v4307
  %v4352 = vunpack.c.h.bf16 %v4307
  %v4353 = vunpack.c.l.bf16 %v4308
  %v4354 = vunpack.c.h.bf16 %v4308
  %v4355 = vunpack.c.l.bf16 %v4309
  %v4356 = vunpack.c.h.bf16 %v4309
  %v4357 = vunpack.c.l.bf16 %v4310
  %v4358 = vunpack.c.h.bf16 %v4310
  %v4359 = vunpack.c.l.bf16 %v4311
  %v4360 = vunpack.c.h.bf16 %v4311
  %v4361 = vunpack.c.l.bf16 %v4312
  %v4362 = vunpack.c.h.bf16 %v4312
  %v4363 = vunpack.c.l.bf16 %v4313
  %v4364 = vunpack.c.h.bf16 %v4313
  %v4365 = vunpack.c.l.bf16 %v4314
  %v4366 = vunpack.c.h.bf16 %v4314
  %v4367 = vunpack.c.l.bf16 %v4315
  %v4368 = vunpack.c.h.bf16 %v4315
  %v4369 = vunpack.c.l.bf16 %v4316
  %v4370 = vunpack.c.h.bf16 %v4316
  %v4371 = vunpack.c.l.bf16 %v4317
  %v4372 = vunpack.c.h.bf16 %v4317
  %v4373 = vunpack.c.l.bf16 %v4318
  %v4374 = vunpack.c.h.bf16 %v4318
  %v4375 = vunpack.c.l.bf16 %v4319
  %v4376 = vunpack.c.h.bf16 %v4319
  %v4377 = vunpack.c.l.bf16 %v4320
  %v4378 = vunpack.c.h.bf16 %v4320
  %v4379 = vunpack.c.l.bf16 %v4321
  %v4380 = vunpack.c.h.bf16 %v4321
  %v4381 = vunpack.c.l.bf16 %v4322
  %v4382 = vunpack.c.h.bf16 %v4322
  %v4383 = vunpack.c.l.bf16 %v4323
  %v4384 = vunpack.c.h.bf16 %v4323
  %v4385 = vunpack.c.l.bf16 %v4324
  %v4386 = vunpack.c.h.bf16 %v4324
  %v4387 = vunpack.c.l.bf16 %v4325
  %v4388 = vunpack.c.h.bf16 %v4325
  %v4389 = vunpack.c.l.bf16 %v4326
  %v4390 = vunpack.c.h.bf16 %v4326
  %v4455 = vrot.slane %v4331, 7
  %v4456 = vsel %vm377, %v4455, %v4327
  %v4457 = vrot.slane %v4335, 6
  %v4458 = vsel %vm380, %v4457, %v4456
  %v4459 = vrot.slane %v4339, 5
  %v4460 = vsel %vm383, %v4459, %v4458
  %v4461 = vrot.slane %v4343, 4
  %v4462 = vsel %vm386, %v4461, %v4460
  %v4463 = vrot.slane %v4347, 3
  %v4464 = vsel %vm389, %v4463, %v4462
  %v4465 = vrot.slane %v4351, 2
  %v4466 = vsel %vm392, %v4465, %v4464
  %v4467 = vrot.slane %v4355, 1
  %v4468 = vsel %vm395, %v4467, %v4466
  %v4469 = vrot.slane %v4332, 7
  %v4470 = vsel %vm377, %v4469, %v4328
  %v4471 = vrot.slane %v4336, 6
  %v4472 = vsel %vm380, %v4471, %v4470
  %v4473 = vrot.slane %v4340, 5
  %v4474 = vsel %vm383, %v4473, %v4472
  %v4475 = vrot.slane %v4344, 4
  %v4476 = vsel %vm386, %v4475, %v4474
  %v4477 = vrot.slane %v4348, 3
  %v4478 = vsel %vm389, %v4477, %v4476
  %v4479 = vrot.slane %v4352, 2
  %v4480 = vsel %vm392, %v4479, %v4478
  %v4481 = vrot.slane %v4356, 1
  %v4482 = vsel %vm395, %v4481, %v4480
  %v4483 = vrot.slane %v4333, 7
  %v4484 = vsel %vm377, %v4483, %v4329
  %v4485 = vrot.slane %v4337, 6
  %v4486 = vsel %vm380, %v4485, %v4484
  %v4487 = vrot.slane %v4341, 5
  %v4488 = vsel %vm383, %v4487, %v4486
  %v4489 = vrot.slane %v4345, 4
  %v4490 = vsel %vm386, %v4489, %v4488
  %v4491 = vrot.slane %v4349, 3
  %v4492 = vsel %vm389, %v4491, %v4490
  %v4493 = vrot.slane %v4353, 2
  %v4494 = vsel %vm392, %v4493, %v4492
  %v4495 = vrot.slane %v4357, 1
  %v4496 = vsel %vm395, %v4495, %v4494
  %v4497 = vrot.slane %v4334, 7
  %v4498 = vsel %vm377, %v4497, %v4330
  %v4499 = vrot.slane %v4338, 6
  %v4500 = vsel %vm380, %v4499, %v4498
  %v4501 = vrot.slane %v4342, 5
  %v4502 = vsel %vm383, %v4501, %v4500
  %v4503 = vrot.slane %v4346, 4
  %v4504 = vsel %vm386, %v4503, %v4502
  %v4505 = vrot.slane %v4350, 3
  %v4506 = vsel %vm389, %v4505, %v4504
  %v4507 = vrot.slane %v4354, 2
  %v4508 = vsel %vm392, %v4507, %v4506
  %v4509 = vrot.slane %v4358, 1
  %v4510 = vsel %vm395, %v4509, %v4508
  %v4511 = vrot.slane %v4363, 7
  %v4512 = vsel %vm377, %v4511, %v4359
  %v4513 = vrot.slane %v4367, 6
  %v4514 = vsel %vm380, %v4513, %v4512
  %v4515 = vrot.slane %v4371, 5
  %v4516 = vsel %vm383, %v4515, %v4514
  %v4517 = vrot.slane %v4375, 4
  %v4518 = vsel %vm386, %v4517, %v4516
  %v4519 = vrot.slane %v4379, 3
  %v4520 = vsel %vm389, %v4519, %v4518
  %v4521 = vrot.slane %v4383, 2
  %v4522 = vsel %vm392, %v4521, %v4520
  %v4523 = vrot.slane %v4387, 1
  %v4524 = vsel %vm395, %v4523, %v4522
  %v4525 = vrot.slane %v4364, 7
  %v4526 = vsel %vm377, %v4525, %v4360
  %v4527 = vrot.slane %v4368, 6
  %v4528 = vsel %vm380, %v4527, %v4526
  %v4529 = vrot.slane %v4372, 5
  %v4530 = vsel %vm383, %v4529, %v4528
  %v4531 = vrot.slane %v4376, 4
  %v4532 = vsel %vm386, %v4531, %v4530
  %v4533 = vrot.slane %v4380, 3
  %v4534 = vsel %vm389, %v4533, %v4532
  %v4535 = vrot.slane %v4384, 2
  %v4536 = vsel %vm392, %v4535, %v4534
  %v4537 = vrot.slane %v4388, 1
  %v4538 = vsel %vm395, %v4537, %v4536
  %v4539 = vrot.slane %v4365, 7
  %v4540 = vsel %vm377, %v4539, %v4361
  %v4541 = vrot.slane %v4369, 6
  %v4542 = vsel %vm380, %v4541, %v4540
  %v4543 = vrot.slane %v4373, 5
  %v4544 = vsel %vm383, %v4543, %v4542
  %v4545 = vrot.slane %v4377, 4
  %v4546 = vsel %vm386, %v4545, %v4544
  %v4547 = vrot.slane %v4381, 3
  %v4548 = vsel %vm389, %v4547, %v4546
  %v4549 = vrot.slane %v4385, 2
  %v4550 = vsel %vm392, %v4549, %v4548
  %v4551 = vrot.slane %v4389, 1
  %v4552 = vsel %vm395, %v4551, %v4550
  %v4553 = vrot.slane %v4366, 7
  %v4554 = vsel %vm377, %v4553, %v4362
  %v4555 = vrot.slane %v4370, 6
  %v4556 = vsel %vm380, %v4555, %v4554
  %v4557 = vrot.slane %v4374, 5
  %v4558 = vsel %vm383, %v4557, %v4556
  %v4559 = vrot.slane %v4378, 4
  %v4560 = vsel %vm386, %v4559, %v4558
  %v4561 = vrot.slane %v4382, 3
  %v4562 = vsel %vm389, %v4561, %v4560
  %v4563 = vrot.slane %v4386, 2
  %v4564 = vsel %vm392, %v4563, %v4562
  %v4565 = vrot.slane %v4390, 1
  %v4566 = vsel %vm395, %v4565, %v4564
  %4575 = vmatpush.bf16.msra.mxu0 %v276
  %4576 = vmatpush.bf16.msra.mxu0 %v272
  %4577 = vmatpush.bf16.msra.mxu0 %v268
  %4578 = vmatpush.bf16.msra.mxu0 %v264
  %4579 = vmatpush.bf16.msra.mxu0 %v260
  %4580 = vmatpush.bf16.msra.mxu0 %v256
  %4581 = vmatpush.bf16.msra.mxu0 %v252
  %4582 = vmatpush.bf16.msra.mxu0 %v248
  %4583 = vmatmul.bf16.gmra.mxu0 %v4294
  %v4584 = vpop.f32.mrf.mxu0
  %v4585 = vadd.f32 %v4468, %v4584
  %v4586 = vpop.f32.mrf.mxu0
  %v4587 = vadd.f32 %v4524, %v4586
  %4588 = vdwg.mxu0
  %4589 = vmatpush.bf16.msra.mxu0 %v277
  %4590 = vmatpush.bf16.msra.mxu0 %v273
  %4591 = vmatpush.bf16.msra.mxu0 %v269
  %4592 = vmatpush.bf16.msra.mxu0 %v265
  %4593 = vmatpush.bf16.msra.mxu0 %v261
  %4594 = vmatpush.bf16.msra.mxu0 %v257
  %4595 = vmatpush.bf16.msra.mxu0 %v253
  %4596 = vmatpush.bf16.msra.mxu0 %v249
  %4597 = vmatmul.bf16.gmra.mxu0 %v4294
  %v4598 = vpop.f32.mrf.mxu0
  %v4599 = vadd.f32 %v4482, %v4598
  %v4600 = vpop.f32.mrf.mxu0
  %v4601 = vadd.f32 %v4538, %v4600
  %4602 = vdwg.mxu0
  %4603 = vmatpush.bf16.msra.mxu0 %v278
  %4604 = vmatpush.bf16.msra.mxu0 %v274
  %4605 = vmatpush.bf16.msra.mxu0 %v270
  %4606 = vmatpush.bf16.msra.mxu0 %v266
  %4607 = vmatpush.bf16.msra.mxu0 %v262
  %4608 = vmatpush.bf16.msra.mxu0 %v258
  %4609 = vmatpush.bf16.msra.mxu0 %v254
  %4610 = vmatpush.bf16.msra.mxu0 %v250
  %4611 = vmatmul.bf16.gmra.mxu0 %v4294
  %v4612 = vpop.f32.mrf.mxu0
  %v4613 = vadd.f32 %v4496, %v4612
  %v4614 = vpop.f32.mrf.mxu0
  %v4615 = vadd.f32 %v4552, %v4614
  %4616 = vdwg.mxu0
  %4617 = vmatpush.bf16.msra.mxu0 %v279
  %4618 = vmatpush.bf16.msra.mxu0 %v275
  %4619 = vmatpush.bf16.msra.mxu0 %v271
  %4620 = vmatpush.bf16.msra.mxu0 %v267
  %4621 = vmatpush.bf16.msra.mxu0 %v263
  %4622 = vmatpush.bf16.msra.mxu0 %v259
  %4623 = vmatpush.bf16.msra.mxu0 %v255
  %4624 = vmatpush.bf16.msra.mxu0 %v251
  %4625 = vmatmul.bf16.gmra.mxu0 %v4294
  %v4626 = vpop.f32.mrf.mxu0
  %v4627 = vadd.f32 %v4510, %v4626
  %v4628 = vpop.f32.mrf.mxu0
  %v4629 = vadd.f32 %v4566, %v4628
  %4630 = vdwg.mxu0
  %v4631 = vxor.u32 %v4585, 2147483648
  %v4632 = vxor.u32 %v4587, 2147483648
  %v4633 = vmul.f32 %v4631, 1.442695
  %v4634 = vpow.pop %v4633
  %v4635 = vmul.f32 %v4632, 1.442695
  %v4636 = vpow.pop %v4635
  %v4637 = vadd.f32 %v4634, 1.0
  %v4638 = vadd.f32 %v4636, 1.0
  %v4639 = vrcp.pop %v4637
  %v4640 = vmul.f32 %v4637, %v4639
  %v4641 = vsub.f32 1.0, %v4640
  %v4642 = vmul.f32 %v4639, %v4641
  %v4643 = vadd.f32 %v4639, %v4642
  %vm4644 = vweird.f32 %v4637
  %vm4645 = vweird.f32 %v4639
  %vm4646 = vmor %vm4644, %vm4645
  %v4647 = vsel %vm4646, %v4639, %v4643
  %v4648 = vand.u32 2147483647, %v4637
  %vm4649 = vcmp.eq.f32.partialorder %v4648, 8.507059e+37
  %v4650 = vand.u32 %v4637, 2147483648
  %v4651 = vor.u32 1.1754944e-38, %v4650
  %v4652 = vsel %vm4649, %v4651, %v4647
  %v4653 = vmul.f32 1.0, %v4652
  %v4654 = vrcp.pop %v4638
  %v4655 = vmul.f32 %v4638, %v4654
  %v4656 = vsub.f32 1.0, %v4655
  %v4657 = vmul.f32 %v4654, %v4656
  %v4658 = vadd.f32 %v4654, %v4657
  %vm4659 = vweird.f32 %v4638
  %vm4660 = vweird.f32 %v4654
  %vm4661 = vmor %vm4659, %vm4660
  %v4662 = vsel %vm4661, %v4654, %v4658
  %v4663 = vand.u32 2147483647, %v4638
  %vm4664 = vcmp.eq.f32.partialorder %v4663, 8.507059e+37
  %v4665 = vand.u32 %v4638, 2147483648
  %v4666 = vor.u32 1.1754944e-38, %v4665
  %v4667 = vsel %vm4664, %v4666, %v4662
  %v4668 = vmul.f32 1.0, %v4667
  %v4669 = vxor.u32 %v4599, 2147483648
  %v4670 = vxor.u32 %v4601, 2147483648
  %v4671 = vmul.f32 %v4669, 1.442695
  %v4672 = vpow.pop %v4671
  %v4673 = vmul.f32 %v4670, 1.442695
  %v4674 = vpow.pop %v4673
  %v4675 = vadd.f32 %v4672, 1.0
  %v4676 = vadd.f32 %v4674, 1.0
  %v4677 = vrcp.pop %v4675
  %v4678 = vmul.f32 %v4675, %v4677
  %v4679 = vsub.f32 1.0, %v4678
  %v4680 = vmul.f32 %v4677, %v4679
  %v4681 = vadd.f32 %v4677, %v4680
  %vm4682 = vweird.f32 %v4675
  %vm4683 = vweird.f32 %v4677
  %vm4684 = vmor %vm4682, %vm4683
  %v4685 = vsel %vm4684, %v4677, %v4681
  %v4686 = vand.u32 2147483647, %v4675
  %vm4687 = vcmp.eq.f32.partialorder %v4686, 8.507059e+37
  %v4688 = vand.u32 %v4675, 2147483648
  %v4689 = vor.u32 1.1754944e-38, %v4688
  %v4690 = vsel %vm4687, %v4689, %v4685
  %v4691 = vmul.f32 1.0, %v4690
  %v4692 = vrcp.pop %v4676
  %v4693 = vmul.f32 %v4676, %v4692
  %v4694 = vsub.f32 1.0, %v4693
  %v4695 = vmul.f32 %v4692, %v4694
  %v4696 = vadd.f32 %v4692, %v4695
  %vm4697 = vweird.f32 %v4676
  %vm4698 = vweird.f32 %v4692
  %vm4699 = vmor %vm4697, %vm4698
  %v4700 = vsel %vm4699, %v4692, %v4696
  %v4701 = vand.u32 2147483647, %v4676
  %vm4702 = vcmp.eq.f32.partialorder %v4701, 8.507059e+37
  %v4703 = vand.u32 %v4676, 2147483648
  %v4704 = vor.u32 1.1754944e-38, %v4703
  %v4705 = vsel %vm4702, %v4704, %v4700
  %v4706 = vmul.f32 1.0, %v4705
  %v4707 = vtanh.pop %v4613
  %v4708 = vtanh.pop %v4615
  %v4709 = vxor.u32 %v4627, 2147483648
  %v4710 = vxor.u32 %v4629, 2147483648
  %v4711 = vmul.f32 %v4709, 1.442695
  %v4712 = vpow.pop %v4711
  %v4713 = vmul.f32 %v4710, 1.442695
  %v4714 = vpow.pop %v4713
  %v4715 = vadd.f32 %v4712, 1.0
  %v4716 = vadd.f32 %v4714, 1.0
  %v4717 = vrcp.pop %v4715
  %v4718 = vmul.f32 %v4715, %v4717
  %v4719 = vsub.f32 1.0, %v4718
  %v4720 = vmul.f32 %v4717, %v4719
  %v4721 = vadd.f32 %v4717, %v4720
  %vm4722 = vweird.f32 %v4715
  %vm4723 = vweird.f32 %v4717
  %vm4724 = vmor %vm4722, %vm4723
  %v4725 = vsel %vm4724, %v4717, %v4721
  %v4726 = vand.u32 2147483647, %v4715
  %vm4727 = vcmp.eq.f32.partialorder %v4726, 8.507059e+37
  %v4728 = vand.u32 %v4715, 2147483648
  %v4729 = vor.u32 1.1754944e-38, %v4728
  %v4730 = vsel %vm4727, %v4729, %v4725
  %v4731 = vmul.f32 1.0, %v4730
  %v4732 = vrcp.pop %v4716
  %v4733 = vmul.f32 %v4716, %v4732
  %v4734 = vsub.f32 1.0, %v4733
  %v4735 = vmul.f32 %v4732, %v4734
  %v4736 = vadd.f32 %v4732, %v4735
  %vm4737 = vweird.f32 %v4716
  %vm4738 = vweird.f32 %v4732
  %vm4739 = vmor %vm4737, %vm4738
  %v4740 = vsel %vm4739, %v4732, %v4736
  %v4741 = vand.u32 2147483647, %v4716
  %vm4742 = vcmp.eq.f32.partialorder %v4741, 8.507059e+37
  %v4743 = vand.u32 %v4716, 2147483648
  %v4744 = vor.u32 1.1754944e-38, %v4743
  %v4745 = vsel %vm4742, %v4744, %v4740
  %v4746 = vmul.f32 1.0, %v4745
  %v4747 = vmul.f32 %v4691, %v4242
  %v4748 = vmul.f32 %v4706, %v4243
  %v4749 = vmul.f32 %v4653, %v4707
  %v4750 = vmul.f32 %v4668, %v4708
  %v4751 = vadd.f32 %v4747, %v4749
  %v4752 = vadd.f32 %v4748, %v4750
  %v4753 = vtanh.pop %v4751
  %v4754 = vtanh.pop %v4752
  %v4755 = vmul.f32 %v4731, %v4753
  %v4756 = vmul.f32 %v4746, %v4754
  %v4759 = vrot.slane %v4755, 1
  %v4760 = vrot.slane %v4755, 2
  %v4761 = vrot.slane %v4755, 3
  %v4762 = vrot.slane %v4755, 4
  %v4763 = vrot.slane %v4755, 5
  %v4764 = vrot.slane %v4755, 6
  %v4765 = vrot.slane %v4755, 7
  %v4766 = vrot.slane %v4756, 1
  %v4767 = vrot.slane %v4756, 2
  %v4768 = vrot.slane %v4756, 3
  %v4769 = vrot.slane %v4756, 4
  %v4770 = vrot.slane %v4756, 5
  %v4771 = vrot.slane %v4756, 6
  %v4772 = vrot.slane %v4756, 7
  %4787 = vst [vmem:[%s2 + $0x8] sm:$0x1] %v4755
  %4788 = vst [vmem:[%s2 + $0x18] sm:$0x1] %v4759
  %4789 = vst [vmem:[%s2 + $0x28] sm:$0x1] %v4760
  %4790 = vst [vmem:[%s2 + $0x38] sm:$0x1] %v4761
  %4791 = vst [vmem:[%s2 + $0x48] sm:$0x1] %v4762
  %4792 = vst [vmem:[%s2 + $0x58] sm:$0x1] %v4763
  %4793 = vst [vmem:[%s2 + $0x68] sm:$0x1] %v4764
  %4794 = vst [vmem:[%s2 + $0x78] sm:$0x1] %v4765
  %4795 = vst [vmem:[%s2 + $0x88] sm:$0x1] %v4756
  %4796 = vst [vmem:[%s2 + $0x98] sm:$0x1] %v4766
  %4797 = vst [vmem:[%s2 + $0xa8] sm:$0x1] %v4767
  %4798 = vst [vmem:[%s2 + $0xb8] sm:$0x1] %v4768
  %4799 = vst [vmem:[%s2 + $0xc8] sm:$0x1] %v4769
  %4800 = vst [vmem:[%s2 + $0xd8] sm:$0x1] %v4770
  %4801 = vst [vmem:[%s2 + $0xe8] sm:$0x1] %v4771
  %4802 = vst [vmem:[%s2 + $0xf8] sm:$0x1] %v4772
  %v4803 = vpack.c.bf16 %v4756, %v4755
  %v4804 = vld [vmem:[%s0 + $0x10] sm:$0x11]
  %v4805 = vld [vmem:[%s0 + $0x18] sm:$0x11]
  %v4806 = vld [vmem:[%s0 + $0x30] sm:$0x11]
  %v4807 = vld [vmem:[%s0 + $0x38] sm:$0x11]
  %v4808 = vld [vmem:[%s0 + $0x50] sm:$0x11]
  %v4809 = vld [vmem:[%s0 + $0x58] sm:$0x11]
  %v4810 = vld [vmem:[%s0 + $0x70] sm:$0x11]
  %v4811 = vld [vmem:[%s0 + $0x78] sm:$0x11]
  %v4812 = vld [vmem:[%s0 + $0x90] sm:$0x11]
  %v4813 = vld [vmem:[%s0 + $0x98] sm:$0x11]
  %v4814 = vld [vmem:[%s0 + $0xb0] sm:$0x11]
  %v4815 = vld [vmem:[%s0 + $0xb8] sm:$0x11]
  %v4816 = vld [vmem:[%s0 + $0xd0] sm:$0x11]
  %v4817 = vld [vmem:[%s0 + $0xd8] sm:$0x11]
  %v4818 = vld [vmem:[%s0 + $0xf0] sm:$0x11]
  %v4819 = vld [vmem:[%s0 + $0xf8] sm:$0x11]
  %v4820 = vld [vmem:[%s0 + $0x110] sm:$0x11]
  %v4821 = vld [vmem:[%s0 + $0x118] sm:$0x11]
  %v4822 = vld [vmem:[%s0 + $0x130] sm:$0x11]
  %v4823 = vld [vmem:[%s0 + $0x138] sm:$0x11]
  %v4824 = vld [vmem:[%s0 + $0x150] sm:$0x11]
  %v4825 = vld [vmem:[%s0 + $0x158] sm:$0x11]
  %v4826 = vld [vmem:[%s0 + $0x170] sm:$0x11]
  %v4827 = vld [vmem:[%s0 + $0x178] sm:$0x11]
  %v4828 = vld [vmem:[%s0 + $0x190] sm:$0x11]
  %v4829 = vld [vmem:[%s0 + $0x198] sm:$0x11]
  %v4830 = vld [vmem:[%s0 + $0x1b0] sm:$0x11]
  %v4831 = vld [vmem:[%s0 + $0x1b8] sm:$0x11]
  %v4832 = vld [vmem:[%s0 + $0x1d0] sm:$0x11]
  %v4833 = vld [vmem:[%s0 + $0x1d8] sm:$0x11]
  %v4834 = vld [vmem:[%s0 + $0x1f0] sm:$0x11]
  %v4835 = vld [vmem:[%s0 + $0x1f8] sm:$0x11]
  %v4836 = vunpack.c.l.bf16 %v4804
  %v4837 = vunpack.c.h.bf16 %v4804
  %v4838 = vunpack.c.l.bf16 %v4805
  %v4839 = vunpack.c.h.bf16 %v4805
  %v4840 = vunpack.c.l.bf16 %v4806
  %v4841 = vunpack.c.h.bf16 %v4806
  %v4842 = vunpack.c.l.bf16 %v4807
  %v4843 = vunpack.c.h.bf16 %v4807
  %v4844 = vunpack.c.l.bf16 %v4808
  %v4845 = vunpack.c.h.bf16 %v4808
  %v4846 = vunpack.c.l.bf16 %v4809
  %v4847 = vunpack.c.h.bf16 %v4809
  %v4848 = vunpack.c.l.bf16 %v4810
  %v4849 = vunpack.c.h.bf16 %v4810
  %v4850 = vunpack.c.l.bf16 %v4811
  %v4851 = vunpack.c.h.bf16 %v4811
  %v4852 = vunpack.c.l.bf16 %v4812
  %v4853 = vunpack.c.h.bf16 %v4812
  %v4854 = vunpack.c.l.bf16 %v4813
  %v4855 = vunpack.c.h.bf16 %v4813
  %v4856 = vunpack.c.l.bf16 %v4814
  %v4857 = vunpack.c.h.bf16 %v4814
  %v4858 = vunpack.c.l.bf16 %v4815
  %v4859 = vunpack.c.h.bf16 %v4815
  %v4860 = vunpack.c.l.bf16 %v4816
  %v4861 = vunpack.c.h.bf16 %v4816
  %v4862 = vunpack.c.l.bf16 %v4817
  %v4863 = vunpack.c.h.bf16 %v4817
  %v4864 = vunpack.c.l.bf16 %v4818
  %v4865 = vunpack.c.h.bf16 %v4818
  %v4866 = vunpack.c.l.bf16 %v4819
  %v4867 = vunpack.c.h.bf16 %v4819
  %v4868 = vunpack.c.l.bf16 %v4820
  %v4869 = vunpack.c.h.bf16 %v4820
  %v4870 = vunpack.c.l.bf16 %v4821
  %v4871 = vunpack.c.h.bf16 %v4821
  %v4872 = vunpack.c.l.bf16 %v4822
  %v4873 = vunpack.c.h.bf16 %v4822
  %v4874 = vunpack.c.l.bf16 %v4823
  %v4875 = vunpack.c.h.bf16 %v4823
  %v4876 = vunpack.c.l.bf16 %v4824
  %v4877 = vunpack.c.h.bf16 %v4824
  %v4878 = vunpack.c.l.bf16 %v4825
  %v4879 = vunpack.c.h.bf16 %v4825
  %v4880 = vunpack.c.l.bf16 %v4826
  %v4881 = vunpack.c.h.bf16 %v4826
  %v4882 = vunpack.c.l.bf16 %v4827
  %v4883 = vunpack.c.h.bf16 %v4827
  %v4884 = vunpack.c.l.bf16 %v4828
  %v4885 = vunpack.c.h.bf16 %v4828
  %v4886 = vunpack.c.l.bf16 %v4829
  %v4887 = vunpack.c.h.bf16 %v4829
  %v4888 = vunpack.c.l.bf16 %v4830
  %v4889 = vunpack.c.h.bf16 %v4830
  %v4890 = vunpack.c.l.bf16 %v4831
  %v4891 = vunpack.c.h.bf16 %v4831
  %v4892 = vunpack.c.l.bf16 %v4832
  %v4893 = vunpack.c.h.bf16 %v4832
  %v4894 = vunpack.c.l.bf16 %v4833
  %v4895 = vunpack.c.h.bf16 %v4833
  %v4896 = vunpack.c.l.bf16 %v4834
  %v4897 = vunpack.c.h.bf16 %v4834
  %v4898 = vunpack.c.l.bf16 %v4835
  %v4899 = vunpack.c.h.bf16 %v4835
  %v4964 = vrot.slane %v4836, 1
  %v4965 = vsel %vm377, %v4840, %v4964
  %v4966 = vrot.slane %v4844, 7
  %v4967 = vsel %vm380, %v4966, %v4965
  %v4968 = vrot.slane %v4848, 6
  %v4969 = vsel %vm383, %v4968, %v4967
  %v4970 = vrot.slane %v4852, 5
  %v4971 = vsel %vm386, %v4970, %v4969
  %v4972 = vrot.slane %v4856, 4
  %v4973 = vsel %vm389, %v4972, %v4971
  %v4974 = vrot.slane %v4860, 3
  %v4975 = vsel %vm392, %v4974, %v4973
  %v4976 = vrot.slane %v4864, 2
  %v4977 = vsel %vm395, %v4976, %v4975
  %v4978 = vrot.slane %v4837, 1
  %v4979 = vsel %vm377, %v4841, %v4978
  %v4980 = vrot.slane %v4845, 7
  %v4981 = vsel %vm380, %v4980, %v4979
  %v4982 = vrot.slane %v4849, 6
  %v4983 = vsel %vm383, %v4982, %v4981
  %v4984 = vrot.slane %v4853, 5
  %v4985 = vsel %vm386, %v4984, %v4983
  %v4986 = vrot.slane %v4857, 4
  %v4987 = vsel %vm389, %v4986, %v4985
  %v4988 = vrot.slane %v4861, 3
  %v4989 = vsel %vm392, %v4988, %v4987
  %v4990 = vrot.slane %v4865, 2
  %v4991 = vsel %vm395, %v4990, %v4989
  %v4992 = vrot.slane %v4838, 1
  %v4993 = vsel %vm377, %v4842, %v4992
  %v4994 = vrot.slane %v4846, 7
  %v4995 = vsel %vm380, %v4994, %v4993
  %v4996 = vrot.slane %v4850, 6
  %v4997 = vsel %vm383, %v4996, %v4995
  %v4998 = vrot.slane %v4854, 5
  %v4999 = vsel %vm386, %v4998, %v4997
  %v5000 = vrot.slane %v4858, 4
  %v5001 = vsel %vm389, %v5000, %v4999
  %v5002 = vrot.slane %v4862, 3
  %v5003 = vsel %vm392, %v5002, %v5001
  %v5004 = vrot.slane %v4866, 2
  %v5005 = vsel %vm395, %v5004, %v5003
  %v5006 = vrot.slane %v4839, 1
  %v5007 = vsel %vm377, %v4843, %v5006
  %v5008 = vrot.slane %v4847, 7
  %v5009 = vsel %vm380, %v5008, %v5007
  %v5010 = vrot.slane %v4851, 6
  %v5011 = vsel %vm383, %v5010, %v5009
  %v5012 = vrot.slane %v4855, 5
  %v5013 = vsel %vm386, %v5012, %v5011
  %v5014 = vrot.slane %v4859, 4
  %v5015 = vsel %vm389, %v5014, %v5013
  %v5016 = vrot.slane %v4863, 3
  %v5017 = vsel %vm392, %v5016, %v5015
  %v5018 = vrot.slane %v4867, 2
  %v5019 = vsel %vm395, %v5018, %v5017
  %v5020 = vrot.slane %v4868, 1
  %v5021 = vsel %vm377, %v4872, %v5020
  %v5022 = vrot.slane %v4876, 7
  %v5023 = vsel %vm380, %v5022, %v5021
  %v5024 = vrot.slane %v4880, 6
  %v5025 = vsel %vm383, %v5024, %v5023
  %v5026 = vrot.slane %v4884, 5
  %v5027 = vsel %vm386, %v5026, %v5025
  %v5028 = vrot.slane %v4888, 4
  %v5029 = vsel %vm389, %v5028, %v5027
  %v5030 = vrot.slane %v4892, 3
  %v5031 = vsel %vm392, %v5030, %v5029
  %v5032 = vrot.slane %v4896, 2
  %v5033 = vsel %vm395, %v5032, %v5031
  %v5034 = vrot.slane %v4869, 1
  %v5035 = vsel %vm377, %v4873, %v5034
  %v5036 = vrot.slane %v4877, 7
  %v5037 = vsel %vm380, %v5036, %v5035
  %v5038 = vrot.slane %v4881, 6
  %v5039 = vsel %vm383, %v5038, %v5037
  %v5040 = vrot.slane %v4885, 5
  %v5041 = vsel %vm386, %v5040, %v5039
  %v5042 = vrot.slane %v4889, 4
  %v5043 = vsel %vm389, %v5042, %v5041
  %v5044 = vrot.slane %v4893, 3
  %v5045 = vsel %vm392, %v5044, %v5043
  %v5046 = vrot.slane %v4897, 2
  %v5047 = vsel %vm395, %v5046, %v5045
  %v5048 = vrot.slane %v4870, 1
  %v5049 = vsel %vm377, %v4874, %v5048
  %v5050 = vrot.slane %v4878, 7
  %v5051 = vsel %vm380, %v5050, %v5049
  %v5052 = vrot.slane %v4882, 6
  %v5053 = vsel %vm383, %v5052, %v5051
  %v5054 = vrot.slane %v4886, 5
  %v5055 = vsel %vm386, %v5054, %v5053
  %v5056 = vrot.slane %v4890, 4
  %v5057 = vsel %vm389, %v5056, %v5055
  %v5058 = vrot.slane %v4894, 3
  %v5059 = vsel %vm392, %v5058, %v5057
  %v5060 = vrot.slane %v4898, 2
  %v5061 = vsel %vm395, %v5060, %v5059
  %v5062 = vrot.slane %v4871, 1
  %v5063 = vsel %vm377, %v4875, %v5062
  %v5064 = vrot.slane %v4879, 7
  %v5065 = vsel %vm380, %v5064, %v5063
  %v5066 = vrot.slane %v4883, 6
  %v5067 = vsel %vm383, %v5066, %v5065
  %v5068 = vrot.slane %v4887, 5
  %v5069 = vsel %vm386, %v5068, %v5067
  %v5070 = vrot.slane %v4891, 4
  %v5071 = vsel %vm389, %v5070, %v5069
  %v5072 = vrot.slane %v4895, 3
  %v5073 = vsel %vm392, %v5072, %v5071
  %v5074 = vrot.slane %v4899, 2
  %v5075 = vsel %vm395, %v5074, %v5073
  %5084 = vmatpush.bf16.msra.mxu0 %v276
  %5085 = vmatpush.bf16.msra.mxu0 %v272
  %5086 = vmatpush.bf16.msra.mxu0 %v268
  %5087 = vmatpush.bf16.msra.mxu0 %v264
  %5088 = vmatpush.bf16.msra.mxu0 %v260
  %5089 = vmatpush.bf16.msra.mxu0 %v256
  %5090 = vmatpush.bf16.msra.mxu0 %v252
  %5091 = vmatpush.bf16.msra.mxu0 %v248
  %5092 = vmatmul.bf16.gmra.mxu0 %v4803
  %v5093 = vpop.f32.mrf.mxu0
  %v5094 = vadd.f32 %v4977, %v5093
  %v5095 = vpop.f32.mrf.mxu0
  %v5096 = vadd.f32 %v5033, %v5095
  %5097 = vdwg.mxu0
  %5098 = vmatpush.bf16.msra.mxu0 %v277
  %5099 = vmatpush.bf16.msra.mxu0 %v273
  %5100 = vmatpush.bf16.msra.mxu0 %v269
  %5101 = vmatpush.bf16.msra.mxu0 %v265
  %5102 = vmatpush.bf16.msra.mxu0 %v261
  %5103 = vmatpush.bf16.msra.mxu0 %v257
  %5104 = vmatpush.bf16.msra.mxu0 %v253
  %5105 = vmatpush.bf16.msra.mxu0 %v249
  %5106 = vmatmul.bf16.gmra.mxu0 %v4803
  %v5107 = vpop.f32.mrf.mxu0
  %v5108 = vadd.f32 %v4991, %v5107
  %v5109 = vpop.f32.mrf.mxu0
  %v5110 = vadd.f32 %v5047, %v5109
  %5111 = vdwg.mxu0
  %5112 = vmatpush.bf16.msra.mxu0 %v278
  %5113 = vmatpush.bf16.msra.mxu0 %v274
  %5114 = vmatpush.bf16.msra.mxu0 %v270
  %5115 = vmatpush.bf16.msra.mxu0 %v266
  %5116 = vmatpush.bf16.msra.mxu0 %v262
  %5117 = vmatpush.bf16.msra.mxu0 %v258
  %5118 = vmatpush.bf16.msra.mxu0 %v254
  %5119 = vmatpush.bf16.msra.mxu0 %v250
  %5120 = vmatmul.bf16.gmra.mxu0 %v4803
  %v5121 = vpop.f32.mrf.mxu0
  %v5122 = vadd.f32 %v5005, %v5121
  %v5123 = vpop.f32.mrf.mxu0
  %v5124 = vadd.f32 %v5061, %v5123
  %5125 = vdwg.mxu0
  %5126 = vmatpush.bf16.msra.mxu0 %v279
  %5127 = vmatpush.bf16.msra.mxu0 %v275
  %5128 = vmatpush.bf16.msra.mxu0 %v271
  %5129 = vmatpush.bf16.msra.mxu0 %v267
  %5130 = vmatpush.bf16.msra.mxu0 %v263
  %5131 = vmatpush.bf16.msra.mxu0 %v259
  %5132 = vmatpush.bf16.msra.mxu0 %v255
  %5133 = vmatpush.bf16.msra.mxu0 %v251
  %5134 = vmatmul.bf16.gmra.mxu0 %v4803
  %v5135 = vpop.f32.mrf.mxu0
  %v5136 = vadd.f32 %v5019, %v5135
  %v5137 = vpop.f32.mrf.mxu0
  %v5138 = vadd.f32 %v5075, %v5137
  %5139 = vdwg.mxu0
  %v5140 = vxor.u32 %v5094, 2147483648
  %v5141 = vxor.u32 %v5096, 2147483648
  %v5142 = vmul.f32 %v5140, 1.442695
  %v5143 = vpow.pop %v5142
  %v5144 = vmul.f32 %v5141, 1.442695
  %v5145 = vpow.pop %v5144
  %v5146 = vadd.f32 %v5143, 1.0
  %v5147 = vadd.f32 %v5145, 1.0
  %v5148 = vrcp.pop %v5146
  %v5149 = vmul.f32 %v5146, %v5148
  %v5150 = vsub.f32 1.0, %v5149
  %v5151 = vmul.f32 %v5148, %v5150
  %v5152 = vadd.f32 %v5148, %v5151
  %vm5153 = vweird.f32 %v5146
  %vm5154 = vweird.f32 %v5148
  %vm5155 = vmor %vm5153, %vm5154
  %v5156 = vsel %vm5155, %v5148, %v5152
  %v5157 = vand.u32 2147483647, %v5146
  %vm5158 = vcmp.eq.f32.partialorder %v5157, 8.507059e+37
  %v5159 = vand.u32 %v5146, 2147483648
  %v5160 = vor.u32 1.1754944e-38, %v5159
  %v5161 = vsel %vm5158, %v5160, %v5156
  %v5162 = vmul.f32 1.0, %v5161
  %v5163 = vrcp.pop %v5147
  %v5164 = vmul.f32 %v5147, %v5163
  %v5165 = vsub.f32 1.0, %v5164
  %v5166 = vmul.f32 %v5163, %v5165
  %v5167 = vadd.f32 %v5163, %v5166
  %vm5168 = vweird.f32 %v5147
  %vm5169 = vweird.f32 %v5163
  %vm5170 = vmor %vm5168, %vm5169
  %v5171 = vsel %vm5170, %v5163, %v5167
  %v5172 = vand.u32 2147483647, %v5147
  %vm5173 = vcmp.eq.f32.partialorder %v5172, 8.507059e+37
  %v5174 = vand.u32 %v5147, 2147483648
  %v5175 = vor.u32 1.1754944e-38, %v5174
  %v5176 = vsel %vm5173, %v5175, %v5171
  %v5177 = vmul.f32 1.0, %v5176
  %v5178 = vxor.u32 %v5108, 2147483648
  %v5179 = vxor.u32 %v5110, 2147483648
  %v5180 = vmul.f32 %v5178, 1.442695
  %v5181 = vpow.pop %v5180
  %v5182 = vmul.f32 %v5179, 1.442695
  %v5183 = vpow.pop %v5182
  %v5184 = vadd.f32 %v5181, 1.0
  %v5185 = vadd.f32 %v5183, 1.0
  %v5186 = vrcp.pop %v5184
  %v5187 = vmul.f32 %v5184, %v5186
  %v5188 = vsub.f32 1.0, %v5187
  %v5189 = vmul.f32 %v5186, %v5188
  %v5190 = vadd.f32 %v5186, %v5189
  %vm5191 = vweird.f32 %v5184
  %vm5192 = vweird.f32 %v5186
  %vm5193 = vmor %vm5191, %vm5192
  %v5194 = vsel %vm5193, %v5186, %v5190
  %v5195 = vand.u32 2147483647, %v5184
  %vm5196 = vcmp.eq.f32.partialorder %v5195, 8.507059e+37
  %v5197 = vand.u32 %v5184, 2147483648
  %v5198 = vor.u32 1.1754944e-38, %v5197
  %v5199 = vsel %vm5196, %v5198, %v5194
  %v5200 = vmul.f32 1.0, %v5199
  %v5201 = vrcp.pop %v5185
  %v5202 = vmul.f32 %v5185, %v5201
  %v5203 = vsub.f32 1.0, %v5202
  %v5204 = vmul.f32 %v5201, %v5203
  %v5205 = vadd.f32 %v5201, %v5204
  %vm5206 = vweird.f32 %v5185
  %vm5207 = vweird.f32 %v5201
  %vm5208 = vmor %vm5206, %vm5207
  %v5209 = vsel %vm5208, %v5201, %v5205
  %v5210 = vand.u32 2147483647, %v5185
  %vm5211 = vcmp.eq.f32.partialorder %v5210, 8.507059e+37
  %v5212 = vand.u32 %v5185, 2147483648
  %v5213 = vor.u32 1.1754944e-38, %v5212
  %v5214 = vsel %vm5211, %v5213, %v5209
  %v5215 = vmul.f32 1.0, %v5214
  %v5216 = vtanh.pop %v5122
  %v5217 = vtanh.pop %v5124
  %v5218 = vxor.u32 %v5136, 2147483648
  %v5219 = vxor.u32 %v5138, 2147483648
  %v5220 = vmul.f32 %v5218, 1.442695
  %v5221 = vpow.pop %v5220
  %v5222 = vmul.f32 %v5219, 1.442695
  %v5223 = vpow.pop %v5222
  %v5224 = vadd.f32 %v5221, 1.0
  %v5225 = vadd.f32 %v5223, 1.0
  %v5226 = vrcp.pop %v5224
  %v5227 = vmul.f32 %v5224, %v5226
  %v5228 = vsub.f32 1.0, %v5227
  %v5229 = vmul.f32 %v5226, %v5228
  %v5230 = vadd.f32 %v5226, %v5229
  %vm5231 = vweird.f32 %v5224
  %vm5232 = vweird.f32 %v5226
  %vm5233 = vmor %vm5231, %vm5232
  %v5234 = vsel %vm5233, %v5226, %v5230
  %v5235 = vand.u32 2147483647, %v5224
  %vm5236 = vcmp.eq.f32.partialorder %v5235, 8.507059e+37
  %v5237 = vand.u32 %v5224, 2147483648
  %v5238 = vor.u32 1.1754944e-38, %v5237
  %v5239 = vsel %vm5236, %v5238, %v5234
  %v5240 = vmul.f32 1.0, %v5239
  %v5241 = vrcp.pop %v5225
  %v5242 = vmul.f32 %v5225, %v5241
  %v5243 = vsub.f32 1.0, %v5242
  %v5244 = vmul.f32 %v5241, %v5243
  %v5245 = vadd.f32 %v5241, %v5244
  %vm5246 = vweird.f32 %v5225
  %vm5247 = vweird.f32 %v5241
  %vm5248 = vmor %vm5246, %vm5247
  %v5249 = vsel %vm5248, %v5241, %v5245
  %v5250 = vand.u32 2147483647, %v5225
  %vm5251 = vcmp.eq.f32.partialorder %v5250, 8.507059e+37
  %v5252 = vand.u32 %v5225, 2147483648
  %v5253 = vor.u32 1.1754944e-38, %v5252
  %v5254 = vsel %vm5251, %v5253, %v5249
  %v5255 = vmul.f32 1.0, %v5254
  %v5256 = vmul.f32 %v5200, %v4751
  %v5257 = vmul.f32 %v5215, %v4752
  %v5258 = vmul.f32 %v5162, %v5216
  %v5259 = vmul.f32 %v5177, %v5217
  %v5260 = vadd.f32 %v5256, %v5258
  %v5261 = vadd.f32 %v5257, %v5259
  %v5262 = vtanh.pop %v5260
  %v5263 = vtanh.pop %v5261
  %v5264 = vmul.f32 %v5240, %v5262
  %v5265 = vmul.f32 %v5255, %v5263
  %v5268 = vrot.slane %v5264, 1
  %v5269 = vrot.slane %v5264, 2
  %v5270 = vrot.slane %v5264, 3
  %v5271 = vrot.slane %v5264, 4
  %v5272 = vrot.slane %v5264, 5
  %v5273 = vrot.slane %v5264, 6
  %v5274 = vrot.slane %v5264, 7
  %v5275 = vrot.slane %v5265, 1
  %v5276 = vrot.slane %v5265, 2
  %v5277 = vrot.slane %v5265, 3
  %v5278 = vrot.slane %v5265, 4
  %v5279 = vrot.slane %v5265, 5
  %v5280 = vrot.slane %v5265, 6
  %v5281 = vrot.slane %v5265, 7
  %5296 = vst [vmem:[%s2 + $0x9] sm:$0x1] %v5264
  %5297 = vst [vmem:[%s2 + $0x19] sm:$0x1] %v5268
  %5298 = vst [vmem:[%s2 + $0x29] sm:$0x1] %v5269
  %5299 = vst [vmem:[%s2 + $0x39] sm:$0x1] %v5270
  %5300 = vst [vmem:[%s2 + $0x49] sm:$0x1] %v5271
  %5301 = vst [vmem:[%s2 + $0x59] sm:$0x1] %v5272
  %5302 = vst [vmem:[%s2 + $0x69] sm:$0x1] %v5273
  %5303 = vst [vmem:[%s2 + $0x79] sm:$0x1] %v5274
  %5304 = vst [vmem:[%s2 + $0x89] sm:$0x1] %v5265
  %5305 = vst [vmem:[%s2 + $0x99] sm:$0x1] %v5275
  %5306 = vst [vmem:[%s2 + $0xa9] sm:$0x1] %v5276
  %5307 = vst [vmem:[%s2 + $0xb9] sm:$0x1] %v5277
  %5308 = vst [vmem:[%s2 + $0xc9] sm:$0x1] %v5278
  %5309 = vst [vmem:[%s2 + $0xd9] sm:$0x1] %v5279
  %5310 = vst [vmem:[%s2 + $0xe9] sm:$0x1] %v5280
  %5311 = vst [vmem:[%s2 + $0xf9] sm:$0x1] %v5281
  %v5312 = vpack.c.bf16 %v5265, %v5264
  %v5313 = vld [vmem:[%s0 + $0x10] sm:$0x22]
  %v5314 = vld [vmem:[%s0 + $0x18] sm:$0x22]
  %v5315 = vld [vmem:[%s0 + $0x30] sm:$0x22]
  %v5316 = vld [vmem:[%s0 + $0x38] sm:$0x22]
  %v5317 = vld [vmem:[%s0 + $0x50] sm:$0x22]
  %v5318 = vld [vmem:[%s0 + $0x58] sm:$0x22]
  %v5319 = vld [vmem:[%s0 + $0x70] sm:$0x22]
  %v5320 = vld [vmem:[%s0 + $0x78] sm:$0x22]
  %v5321 = vld [vmem:[%s0 + $0x90] sm:$0x22]
  %v5322 = vld [vmem:[%s0 + $0x98] sm:$0x22]
  %v5323 = vld [vmem:[%s0 + $0xb0] sm:$0x22]
  %v5324 = vld [vmem:[%s0 + $0xb8] sm:$0x22]
  %v5325 = vld [vmem:[%s0 + $0xd0] sm:$0x22]
  %v5326 = vld [vmem:[%s0 + $0xd8] sm:$0x22]
  %v5327 = vld [vmem:[%s0 + $0xf0] sm:$0x22]
  %v5328 = vld [vmem:[%s0 + $0xf8] sm:$0x22]
  %v5329 = vld [vmem:[%s0 + $0x110] sm:$0x22]
  %v5330 = vld [vmem:[%s0 + $0x118] sm:$0x22]
  %v5331 = vld [vmem:[%s0 + $0x130] sm:$0x22]
  %v5332 = vld [vmem:[%s0 + $0x138] sm:$0x22]
  %v5333 = vld [vmem:[%s0 + $0x150] sm:$0x22]
  %v5334 = vld [vmem:[%s0 + $0x158] sm:$0x22]
  %v5335 = vld [vmem:[%s0 + $0x170] sm:$0x22]
  %v5336 = vld [vmem:[%s0 + $0x178] sm:$0x22]
  %v5337 = vld [vmem:[%s0 + $0x190] sm:$0x22]
  %v5338 = vld [vmem:[%s0 + $0x198] sm:$0x22]
  %v5339 = vld [vmem:[%s0 + $0x1b0] sm:$0x22]
  %v5340 = vld [vmem:[%s0 + $0x1b8] sm:$0x22]
  %v5341 = vld [vmem:[%s0 + $0x1d0] sm:$0x22]
  %v5342 = vld [vmem:[%s0 + $0x1d8] sm:$0x22]
  %v5343 = vld [vmem:[%s0 + $0x1f0] sm:$0x22]
  %v5344 = vld [vmem:[%s0 + $0x1f8] sm:$0x22]
  %v5345 = vunpack.c.l.bf16 %v5313
  %v5346 = vunpack.c.h.bf16 %v5313
  %v5347 = vunpack.c.l.bf16 %v5314
  %v5348 = vunpack.c.h.bf16 %v5314
  %v5349 = vunpack.c.l.bf16 %v5315
  %v5350 = vunpack.c.h.bf16 %v5315
  %v5351 = vunpack.c.l.bf16 %v5316
  %v5352 = vunpack.c.h.bf16 %v5316
  %v5353 = vunpack.c.l.bf16 %v5317
  %v5354 = vunpack.c.h.bf16 %v5317
  %v5355 = vunpack.c.l.bf16 %v5318
  %v5356 = vunpack.c.h.bf16 %v5318
  %v5357 = vunpack.c.l.bf16 %v5319
  %v5358 = vunpack.c.h.bf16 %v5319
  %v5359 = vunpack.c.l.bf16 %v5320
  %v5360 = vunpack.c.h.bf16 %v5320
  %v5361 = vunpack.c.l.bf16 %v5321
  %v5362 = vunpack.c.h.bf16 %v5321
  %v5363 = vunpack.c.l.bf16 %v5322
  %v5364 = vunpack.c.h.bf16 %v5322
  %v5365 = vunpack.c.l.bf16 %v5323
  %v5366 = vunpack.c.h.bf16 %v5323
  %v5367 = vunpack.c.l.bf16 %v5324
  %v5368 = vunpack.c.h.bf16 %v5324
  %v5369 = vunpack.c.l.bf16 %v5325
  %v5370 = vunpack.c.h.bf16 %v5325
  %v5371 = vunpack.c.l.bf16 %v5326
  %v5372 = vunpack.c.h.bf16 %v5326
  %v5373 = vunpack.c.l.bf16 %v5327
  %v5374 = vunpack.c.h.bf16 %v5327
  %v5375 = vunpack.c.l.bf16 %v5328
  %v5376 = vunpack.c.h.bf16 %v5328
  %v5377 = vunpack.c.l.bf16 %v5329
  %v5378 = vunpack.c.h.bf16 %v5329
  %v5379 = vunpack.c.l.bf16 %v5330
  %v5380 = vunpack.c.h.bf16 %v5330
  %v5381 = vunpack.c.l.bf16 %v5331
  %v5382 = vunpack.c.h.bf16 %v5331
  %v5383 = vunpack.c.l.bf16 %v5332
  %v5384 = vunpack.c.h.bf16 %v5332
  %v5385 = vunpack.c.l.bf16 %v5333
  %v5386 = vunpack.c.h.bf16 %v5333
  %v5387 = vunpack.c.l.bf16 %v5334
  %v5388 = vunpack.c.h.bf16 %v5334
  %v5389 = vunpack.c.l.bf16 %v5335
  %v5390 = vunpack.c.h.bf16 %v5335
  %v5391 = vunpack.c.l.bf16 %v5336
  %v5392 = vunpack.c.h.bf16 %v5336
  %v5393 = vunpack.c.l.bf16 %v5337
  %v5394 = vunpack.c.h.bf16 %v5337
  %v5395 = vunpack.c.l.bf16 %v5338
  %v5396 = vunpack.c.h.bf16 %v5338
  %v5397 = vunpack.c.l.bf16 %v5339
  %v5398 = vunpack.c.h.bf16 %v5339
  %v5399 = vunpack.c.l.bf16 %v5340
  %v5400 = vunpack.c.h.bf16 %v5340
  %v5401 = vunpack.c.l.bf16 %v5341
  %v5402 = vunpack.c.h.bf16 %v5341
  %v5403 = vunpack.c.l.bf16 %v5342
  %v5404 = vunpack.c.h.bf16 %v5342
  %v5405 = vunpack.c.l.bf16 %v5343
  %v5406 = vunpack.c.h.bf16 %v5343
  %v5407 = vunpack.c.l.bf16 %v5344
  %v5408 = vunpack.c.h.bf16 %v5344
  %v5473 = vrot.slane %v5345, 2
  %v5474 = vrot.slane %v5349, 1
  %v5475 = vsel %vm377, %v5474, %v5473
  %v5476 = vsel %vm380, %v5353, %v5475
  %v5477 = vrot.slane %v5357, 7
  %v5478 = vsel %vm383, %v5477, %v5476
  %v5479 = vrot.slane %v5361, 6
  %v5480 = vsel %vm386, %v5479, %v5478
  %v5481 = vrot.slane %v5365, 5
  %v5482 = vsel %vm389, %v5481, %v5480
  %v5483 = vrot.slane %v5369, 4
  %v5484 = vsel %vm392, %v5483, %v5482
  %v5485 = vrot.slane %v5373, 3
  %v5486 = vsel %vm395, %v5485, %v5484
  %v5487 = vrot.slane %v5346, 2
  %v5488 = vrot.slane %v5350, 1
  %v5489 = vsel %vm377, %v5488, %v5487
  %v5490 = vsel %vm380, %v5354, %v5489
  %v5491 = vrot.slane %v5358, 7
  %v5492 = vsel %vm383, %v5491, %v5490
  %v5493 = vrot.slane %v5362, 6
  %v5494 = vsel %vm386, %v5493, %v5492
  %v5495 = vrot.slane %v5366, 5
  %v5496 = vsel %vm389, %v5495, %v5494
  %v5497 = vrot.slane %v5370, 4
  %v5498 = vsel %vm392, %v5497, %v5496
  %v5499 = vrot.slane %v5374, 3
  %v5500 = vsel %vm395, %v5499, %v5498
  %v5501 = vrot.slane %v5347, 2
  %v5502 = vrot.slane %v5351, 1
  %v5503 = vsel %vm377, %v5502, %v5501
  %v5504 = vsel %vm380, %v5355, %v5503
  %v5505 = vrot.slane %v5359, 7
  %v5506 = vsel %vm383, %v5505, %v5504
  %v5507 = vrot.slane %v5363, 6
  %v5508 = vsel %vm386, %v5507, %v5506
  %v5509 = vrot.slane %v5367, 5
  %v5510 = vsel %vm389, %v5509, %v5508
  %v5511 = vrot.slane %v5371, 4
  %v5512 = vsel %vm392, %v5511, %v5510
  %v5513 = vrot.slane %v5375, 3
  %v5514 = vsel %vm395, %v5513, %v5512
  %v5515 = vrot.slane %v5348, 2
  %v5516 = vrot.slane %v5352, 1
  %v5517 = vsel %vm377, %v5516, %v5515
  %v5518 = vsel %vm380, %v5356, %v5517
  %v5519 = vrot.slane %v5360, 7
  %v5520 = vsel %vm383, %v5519, %v5518
  %v5521 = vrot.slane %v5364, 6
  %v5522 = vsel %vm386, %v5521, %v5520
  %v5523 = vrot.slane %v5368, 5
  %v5524 = vsel %vm389, %v5523, %v5522
  %v5525 = vrot.slane %v5372, 4
  %v5526 = vsel %vm392, %v5525, %v5524
  %v5527 = vrot.slane %v5376, 3
  %v5528 = vsel %vm395, %v5527, %v5526
  %v5529 = vrot.slane %v5377, 2
  %v5530 = vrot.slane %v5381, 1
  %v5531 = vsel %vm377, %v5530, %v5529
  %v5532 = vsel %vm380, %v5385, %v5531
  %v5533 = vrot.slane %v5389, 7
  %v5534 = vsel %vm383, %v5533, %v5532
  %v5535 = vrot.slane %v5393, 6
  %v5536 = vsel %vm386, %v5535, %v5534
  %v5537 = vrot.slane %v5397, 5
  %v5538 = vsel %vm389, %v5537, %v5536
  %v5539 = vrot.slane %v5401, 4
  %v5540 = vsel %vm392, %v5539, %v5538
  %v5541 = vrot.slane %v5405, 3
  %v5542 = vsel %vm395, %v5541, %v5540
  %v5543 = vrot.slane %v5378, 2
  %v5544 = vrot.slane %v5382, 1
  %v5545 = vsel %vm377, %v5544, %v5543
  %v5546 = vsel %vm380, %v5386, %v5545
  %v5547 = vrot.slane %v5390, 7
  %v5548 = vsel %vm383, %v5547, %v5546
  %v5549 = vrot.slane %v5394, 6
  %v5550 = vsel %vm386, %v5549, %v5548
  %v5551 = vrot.slane %v5398, 5
  %v5552 = vsel %vm389, %v5551, %v5550
  %v5553 = vrot.slane %v5402, 4
  %v5554 = vsel %vm392, %v5553, %v5552
  %v5555 = vrot.slane %v5406, 3
  %v5556 = vsel %vm395, %v5555, %v5554
  %v5557 = vrot.slane %v5379, 2
  %v5558 = vrot.slane %v5383, 1
  %v5559 = vsel %vm377, %v5558, %v5557
  %v5560 = vsel %vm380, %v5387, %v5559
  %v5561 = vrot.slane %v5391, 7
  %v5562 = vsel %vm383, %v5561, %v5560
  %v5563 = vrot.slane %v5395, 6
  %v5564 = vsel %vm386, %v5563, %v5562
  %v5565 = vrot.slane %v5399, 5
  %v5566 = vsel %vm389, %v5565, %v5564
  %v5567 = vrot.slane %v5403, 4
  %v5568 = vsel %vm392, %v5567, %v5566
  %v5569 = vrot.slane %v5407, 3
  %v5570 = vsel %vm395, %v5569, %v5568
  %v5571 = vrot.slane %v5380, 2
  %v5572 = vrot.slane %v5384, 1
  %v5573 = vsel %vm377, %v5572, %v5571
  %v5574 = vsel %vm380, %v5388, %v5573
  %v5575 = vrot.slane %v5392, 7
  %v5576 = vsel %vm383, %v5575, %v5574
  %v5577 = vrot.slane %v5396, 6
  %v5578 = vsel %vm386, %v5577, %v5576
  %v5579 = vrot.slane %v5400, 5
  %v5580 = vsel %vm389, %v5579, %v5578
  %v5581 = vrot.slane %v5404, 4
  %v5582 = vsel %vm392, %v5581, %v5580
  %v5583 = vrot.slane %v5408, 3
  %v5584 = vsel %vm395, %v5583, %v5582
  %5593 = vmatpush.bf16.msra.mxu0 %v276
  %5594 = vmatpush.bf16.msra.mxu0 %v272
  %5595 = vmatpush.bf16.msra.mxu0 %v268
  %5596 = vmatpush.bf16.msra.mxu0 %v264
  %5597 = vmatpush.bf16.msra.mxu0 %v260
  %5598 = vmatpush.bf16.msra.mxu0 %v256
  %5599 = vmatpush.bf16.msra.mxu0 %v252
  %5600 = vmatpush.bf16.msra.mxu0 %v248
  %5601 = vmatmul.bf16.gmra.mxu0 %v5312
  %v5602 = vpop.f32.mrf.mxu0
  %v5603 = vadd.f32 %v5486, %v5602
  %v5604 = vpop.f32.mrf.mxu0
  %v5605 = vadd.f32 %v5542, %v5604
  %5606 = vdwg.mxu0
  %5607 = vmatpush.bf16.msra.mxu0 %v277
  %5608 = vmatpush.bf16.msra.mxu0 %v273
  %5609 = vmatpush.bf16.msra.mxu0 %v269
  %5610 = vmatpush.bf16.msra.mxu0 %v265
  %5611 = vmatpush.bf16.msra.mxu0 %v261
  %5612 = vmatpush.bf16.msra.mxu0 %v257
  %5613 = vmatpush.bf16.msra.mxu0 %v253
  %5614 = vmatpush.bf16.msra.mxu0 %v249
  %5615 = vmatmul.bf16.gmra.mxu0 %v5312
  %v5616 = vpop.f32.mrf.mxu0
  %v5617 = vadd.f32 %v5500, %v5616
  %v5618 = vpop.f32.mrf.mxu0
  %v5619 = vadd.f32 %v5556, %v5618
  %5620 = vdwg.mxu0
  %5621 = vmatpush.bf16.msra.mxu0 %v278
  %5622 = vmatpush.bf16.msra.mxu0 %v274
  %5623 = vmatpush.bf16.msra.mxu0 %v270
  %5624 = vmatpush.bf16.msra.mxu0 %v266
  %5625 = vmatpush.bf16.msra.mxu0 %v262
  %5626 = vmatpush.bf16.msra.mxu0 %v258
  %5627 = vmatpush.bf16.msra.mxu0 %v254
  %5628 = vmatpush.bf16.msra.mxu0 %v250
  %5629 = vmatmul.bf16.gmra.mxu0 %v5312
  %v5630 = vpop.f32.mrf.mxu0
  %v5631 = vadd.f32 %v5514, %v5630
  %v5632 = vpop.f32.mrf.mxu0
  %v5633 = vadd.f32 %v5570, %v5632
  %5634 = vdwg.mxu0
  %5635 = vmatpush.bf16.msra.mxu0 %v279
  %5636 = vmatpush.bf16.msra.mxu0 %v275
  %5637 = vmatpush.bf16.msra.mxu0 %v271
  %5638 = vmatpush.bf16.msra.mxu0 %v267
  %5639 = vmatpush.bf16.msra.mxu0 %v263
  %5640 = vmatpush.bf16.msra.mxu0 %v259
  %5641 = vmatpush.bf16.msra.mxu0 %v255
  %5642 = vmatpush.bf16.msra.mxu0 %v251
  %5643 = vmatmul.bf16.gmra.mxu0 %v5312
  %v5644 = vpop.f32.mrf.mxu0
  %v5645 = vadd.f32 %v5528, %v5644
  %v5646 = vpop.f32.mrf.mxu0
  %v5647 = vadd.f32 %v5584, %v5646
  %5648 = vdwg.mxu0
  %v5649 = vxor.u32 %v5603, 2147483648
  %v5650 = vxor.u32 %v5605, 2147483648
  %v5651 = vmul.f32 %v5649, 1.442695
  %v5652 = vpow.pop %v5651
  %v5653 = vmul.f32 %v5650, 1.442695
  %v5654 = vpow.pop %v5653
  %v5655 = vadd.f32 %v5652, 1.0
  %v5656 = vadd.f32 %v5654, 1.0
  %v5657 = vrcp.pop %v5655
  %v5658 = vmul.f32 %v5655, %v5657
  %v5659 = vsub.f32 1.0, %v5658
  %v5660 = vmul.f32 %v5657, %v5659
  %v5661 = vadd.f32 %v5657, %v5660
  %vm5662 = vweird.f32 %v5655
  %vm5663 = vweird.f32 %v5657
  %vm5664 = vmor %vm5662, %vm5663
  %v5665 = vsel %vm5664, %v5657, %v5661
  %v5666 = vand.u32 2147483647, %v5655
  %vm5667 = vcmp.eq.f32.partialorder %v5666, 8.507059e+37
  %v5668 = vand.u32 %v5655, 2147483648
  %v5669 = vor.u32 1.1754944e-38, %v5668
  %v5670 = vsel %vm5667, %v5669, %v5665
  %v5671 = vmul.f32 1.0, %v5670
  %v5672 = vrcp.pop %v5656
  %v5673 = vmul.f32 %v5656, %v5672
  %v5674 = vsub.f32 1.0, %v5673
  %v5675 = vmul.f32 %v5672, %v5674
  %v5676 = vadd.f32 %v5672, %v5675
  %vm5677 = vweird.f32 %v5656
  %vm5678 = vweird.f32 %v5672
  %vm5679 = vmor %vm5677, %vm5678
  %v5680 = vsel %vm5679, %v5672, %v5676
  %v5681 = vand.u32 2147483647, %v5656
  %vm5682 = vcmp.eq.f32.partialorder %v5681, 8.507059e+37
  %v5683 = vand.u32 %v5656, 2147483648
  %v5684 = vor.u32 1.1754944e-38, %v5683
  %v5685 = vsel %vm5682, %v5684, %v5680
  %v5686 = vmul.f32 1.0, %v5685
  %v5687 = vxor.u32 %v5617, 2147483648
  %v5688 = vxor.u32 %v5619, 2147483648
  %v5689 = vmul.f32 %v5687, 1.442695
  %v5690 = vpow.pop %v5689
  %v5691 = vmul.f32 %v5688, 1.442695
  %v5692 = vpow.pop %v5691
  %v5693 = vadd.f32 %v5690, 1.0
  %v5694 = vadd.f32 %v5692, 1.0
  %v5695 = vrcp.pop %v5693
  %v5696 = vmul.f32 %v5693, %v5695
  %v5697 = vsub.f32 1.0, %v5696
  %v5698 = vmul.f32 %v5695, %v5697
  %v5699 = vadd.f32 %v5695, %v5698
  %vm5700 = vweird.f32 %v5693
  %vm5701 = vweird.f32 %v5695
  %vm5702 = vmor %vm5700, %vm5701
  %v5703 = vsel %vm5702, %v5695, %v5699
  %v5704 = vand.u32 2147483647, %v5693
  %vm5705 = vcmp.eq.f32.partialorder %v5704, 8.507059e+37
  %v5706 = vand.u32 %v5693, 2147483648
  %v5707 = vor.u32 1.1754944e-38, %v5706
  %v5708 = vsel %vm5705, %v5707, %v5703
  %v5709 = vmul.f32 1.0, %v5708
  %v5710 = vrcp.pop %v5694
  %v5711 = vmul.f32 %v5694, %v5710
  %v5712 = vsub.f32 1.0, %v5711
  %v5713 = vmul.f32 %v5710, %v5712
  %v5714 = vadd.f32 %v5710, %v5713
  %vm5715 = vweird.f32 %v5694
  %vm5716 = vweird.f32 %v5710
  %vm5717 = vmor %vm5715, %vm5716
  %v5718 = vsel %vm5717, %v5710, %v5714
  %v5719 = vand.u32 2147483647, %v5694
  %vm5720 = vcmp.eq.f32.partialorder %v5719, 8.507059e+37
  %v5721 = vand.u32 %v5694, 2147483648
  %v5722 = vor.u32 1.1754944e-38, %v5721
  %v5723 = vsel %vm5720, %v5722, %v5718
  %v5724 = vmul.f32 1.0, %v5723
  %v5725 = vtanh.pop %v5631
  %v5726 = vtanh.pop %v5633
  %v5727 = vxor.u32 %v5645, 2147483648
  %v5728 = vxor.u32 %v5647, 2147483648
  %v5729 = vmul.f32 %v5727, 1.442695
  %v5730 = vpow.pop %v5729
  %v5731 = vmul.f32 %v5728, 1.442695
  %v5732 = vpow.pop %v5731
  %v5733 = vadd.f32 %v5730, 1.0
  %v5734 = vadd.f32 %v5732, 1.0
  %v5735 = vrcp.pop %v5733
  %v5736 = vmul.f32 %v5733, %v5735
  %v5737 = vsub.f32 1.0, %v5736
  %v5738 = vmul.f32 %v5735, %v5737
  %v5739 = vadd.f32 %v5735, %v5738
  %vm5740 = vweird.f32 %v5733
  %vm5741 = vweird.f32 %v5735
  %vm5742 = vmor %vm5740, %vm5741
  %v5743 = vsel %vm5742, %v5735, %v5739
  %v5744 = vand.u32 2147483647, %v5733
  %vm5745 = vcmp.eq.f32.partialorder %v5744, 8.507059e+37
  %v5746 = vand.u32 %v5733, 2147483648
  %v5747 = vor.u32 1.1754944e-38, %v5746
  %v5748 = vsel %vm5745, %v5747, %v5743
  %v5749 = vmul.f32 1.0, %v5748
  %v5750 = vrcp.pop %v5734
  %v5751 = vmul.f32 %v5734, %v5750
  %v5752 = vsub.f32 1.0, %v5751
  %v5753 = vmul.f32 %v5750, %v5752
  %v5754 = vadd.f32 %v5750, %v5753
  %vm5755 = vweird.f32 %v5734
  %vm5756 = vweird.f32 %v5750
  %vm5757 = vmor %vm5755, %vm5756
  %v5758 = vsel %vm5757, %v5750, %v5754
  %v5759 = vand.u32 2147483647, %v5734
  %vm5760 = vcmp.eq.f32.partialorder %v5759, 8.507059e+37
  %v5761 = vand.u32 %v5734, 2147483648
  %v5762 = vor.u32 1.1754944e-38, %v5761
  %v5763 = vsel %vm5760, %v5762, %v5758
  %v5764 = vmul.f32 1.0, %v5763
  %v5765 = vmul.f32 %v5709, %v5260
  %v5766 = vmul.f32 %v5724, %v5261
  %v5767 = vmul.f32 %v5671, %v5725
  %v5768 = vmul.f32 %v5686, %v5726
  %v5769 = vadd.f32 %v5765, %v5767
  %v5770 = vadd.f32 %v5766, %v5768
  %v5771 = vtanh.pop %v5769
  %v5772 = vtanh.pop %v5770
  %v5773 = vmul.f32 %v5749, %v5771
  %v5774 = vmul.f32 %v5764, %v5772
  %v5777 = vrot.slane %v5773, 1
  %v5778 = vrot.slane %v5773, 2
  %v5779 = vrot.slane %v5773, 3
  %v5780 = vrot.slane %v5773, 4
  %v5781 = vrot.slane %v5773, 5
  %v5782 = vrot.slane %v5773, 6
  %v5783 = vrot.slane %v5773, 7
  %v5784 = vrot.slane %v5774, 1
  %v5785 = vrot.slane %v5774, 2
  %v5786 = vrot.slane %v5774, 3
  %v5787 = vrot.slane %v5774, 4
  %v5788 = vrot.slane %v5774, 5
  %v5789 = vrot.slane %v5774, 6
  %v5790 = vrot.slane %v5774, 7
  %5805 = vst [vmem:[%s2 + $0xa] sm:$0x1] %v5773
  %5806 = vst [vmem:[%s2 + $0x1a] sm:$0x1] %v5777
  %5807 = vst [vmem:[%s2 + $0x2a] sm:$0x1] %v5778
  %5808 = vst [vmem:[%s2 + $0x3a] sm:$0x1] %v5779
  %5809 = vst [vmem:[%s2 + $0x4a] sm:$0x1] %v5780
  %5810 = vst [vmem:[%s2 + $0x5a] sm:$0x1] %v5781
  %5811 = vst [vmem:[%s2 + $0x6a] sm:$0x1] %v5782
  %5812 = vst [vmem:[%s2 + $0x7a] sm:$0x1] %v5783
  %5813 = vst [vmem:[%s2 + $0x8a] sm:$0x1] %v5774
  %5814 = vst [vmem:[%s2 + $0x9a] sm:$0x1] %v5784
  %5815 = vst [vmem:[%s2 + $0xaa] sm:$0x1] %v5785
  %5816 = vst [vmem:[%s2 + $0xba] sm:$0x1] %v5786
  %5817 = vst [vmem:[%s2 + $0xca] sm:$0x1] %v5787
  %5818 = vst [vmem:[%s2 + $0xda] sm:$0x1] %v5788
  %5819 = vst [vmem:[%s2 + $0xea] sm:$0x1] %v5789
  %5820 = vst [vmem:[%s2 + $0xfa] sm:$0x1] %v5790
  %v5821 = vpack.c.bf16 %v5774, %v5773
  %v5822 = vld [vmem:[%s0 + $0x10] sm:$0x22]
  %v5823 = vld [vmem:[%s0 + $0x18] sm:$0x22]
  %v5824 = vld [vmem:[%s0 + $0x30] sm:$0x22]
  %v5825 = vld [vmem:[%s0 + $0x38] sm:$0x22]
  %v5826 = vld [vmem:[%s0 + $0x50] sm:$0x22]
  %v5827 = vld [vmem:[%s0 + $0x58] sm:$0x22]
  %v5828 = vld [vmem:[%s0 + $0x70] sm:$0x22]
  %v5829 = vld [vmem:[%s0 + $0x78] sm:$0x22]
  %v5830 = vld [vmem:[%s0 + $0x90] sm:$0x22]
  %v5831 = vld [vmem:[%s0 + $0x98] sm:$0x22]
  %v5832 = vld [vmem:[%s0 + $0xb0] sm:$0x22]
  %v5833 = vld [vmem:[%s0 + $0xb8] sm:$0x22]
  %v5834 = vld [vmem:[%s0 + $0xd0] sm:$0x22]
  %v5835 = vld [vmem:[%s0 + $0xd8] sm:$0x22]
  %v5836 = vld [vmem:[%s0 + $0xf0] sm:$0x22]
  %v5837 = vld [vmem:[%s0 + $0xf8] sm:$0x22]
  %v5838 = vld [vmem:[%s0 + $0x110] sm:$0x22]
  %v5839 = vld [vmem:[%s0 + $0x118] sm:$0x22]
  %v5840 = vld [vmem:[%s0 + $0x130] sm:$0x22]
  %v5841 = vld [vmem:[%s0 + $0x138] sm:$0x22]
  %v5842 = vld [vmem:[%s0 + $0x150] sm:$0x22]
  %v5843 = vld [vmem:[%s0 + $0x158] sm:$0x22]
  %v5844 = vld [vmem:[%s0 + $0x170] sm:$0x22]
  %v5845 = vld [vmem:[%s0 + $0x178] sm:$0x22]
  %v5846 = vld [vmem:[%s0 + $0x190] sm:$0x22]
  %v5847 = vld [vmem:[%s0 + $0x198] sm:$0x22]
  %v5848 = vld [vmem:[%s0 + $0x1b0] sm:$0x22]
  %v5849 = vld [vmem:[%s0 + $0x1b8] sm:$0x22]
  %v5850 = vld [vmem:[%s0 + $0x1d0] sm:$0x22]
  %v5851 = vld [vmem:[%s0 + $0x1d8] sm:$0x22]
  %v5852 = vld [vmem:[%s0 + $0x1f0] sm:$0x22]
  %v5853 = vld [vmem:[%s0 + $0x1f8] sm:$0x22]
  %v5854 = vunpack.c.l.bf16 %v5822
  %v5855 = vunpack.c.h.bf16 %v5822
  %v5856 = vunpack.c.l.bf16 %v5823
  %v5857 = vunpack.c.h.bf16 %v5823
  %v5858 = vunpack.c.l.bf16 %v5824
  %v5859 = vunpack.c.h.bf16 %v5824
  %v5860 = vunpack.c.l.bf16 %v5825
  %v5861 = vunpack.c.h.bf16 %v5825
  %v5862 = vunpack.c.l.bf16 %v5826
  %v5863 = vunpack.c.h.bf16 %v5826
  %v5864 = vunpack.c.l.bf16 %v5827
  %v5865 = vunpack.c.h.bf16 %v5827
  %v5866 = vunpack.c.l.bf16 %v5828
  %v5867 = vunpack.c.h.bf16 %v5828
  %v5868 = vunpack.c.l.bf16 %v5829
  %v5869 = vunpack.c.h.bf16 %v5829
  %v5870 = vunpack.c.l.bf16 %v5830
  %v5871 = vunpack.c.h.bf16 %v5830
  %v5872 = vunpack.c.l.bf16 %v5831
  %v5873 = vunpack.c.h.bf16 %v5831
  %v5874 = vunpack.c.l.bf16 %v5832
  %v5875 = vunpack.c.h.bf16 %v5832
  %v5876 = vunpack.c.l.bf16 %v5833
  %v5877 = vunpack.c.h.bf16 %v5833
  %v5878 = vunpack.c.l.bf16 %v5834
  %v5879 = vunpack.c.h.bf16 %v5834
  %v5880 = vunpack.c.l.bf16 %v5835
  %v5881 = vunpack.c.h.bf16 %v5835
  %v5882 = vunpack.c.l.bf16 %v5836
  %v5883 = vunpack.c.h.bf16 %v5836
  %v5884 = vunpack.c.l.bf16 %v5837
  %v5885 = vunpack.c.h.bf16 %v5837
  %v5886 = vunpack.c.l.bf16 %v5838
  %v5887 = vunpack.c.h.bf16 %v5838
  %v5888 = vunpack.c.l.bf16 %v5839
  %v5889 = vunpack.c.h.bf16 %v5839
  %v5890 = vunpack.c.l.bf16 %v5840
  %v5891 = vunpack.c.h.bf16 %v5840
  %v5892 = vunpack.c.l.bf16 %v5841
  %v5893 = vunpack.c.h.bf16 %v5841
  %v5894 = vunpack.c.l.bf16 %v5842
  %v5895 = vunpack.c.h.bf16 %v5842
  %v5896 = vunpack.c.l.bf16 %v5843
  %v5897 = vunpack.c.h.bf16 %v5843
  %v5898 = vunpack.c.l.bf16 %v5844
  %v5899 = vunpack.c.h.bf16 %v5844
  %v5900 = vunpack.c.l.bf16 %v5845
  %v5901 = vunpack.c.h.bf16 %v5845
  %v5902 = vunpack.c.l.bf16 %v5846
  %v5903 = vunpack.c.h.bf16 %v5846
  %v5904 = vunpack.c.l.bf16 %v5847
  %v5905 = vunpack.c.h.bf16 %v5847
  %v5906 = vunpack.c.l.bf16 %v5848
  %v5907 = vunpack.c.h.bf16 %v5848
  %v5908 = vunpack.c.l.bf16 %v5849
  %v5909 = vunpack.c.h.bf16 %v5849
  %v5910 = vunpack.c.l.bf16 %v5850
  %v5911 = vunpack.c.h.bf16 %v5850
  %v5912 = vunpack.c.l.bf16 %v5851
  %v5913 = vunpack.c.h.bf16 %v5851
  %v5914 = vunpack.c.l.bf16 %v5852
  %v5915 = vunpack.c.h.bf16 %v5852
  %v5916 = vunpack.c.l.bf16 %v5853
  %v5917 = vunpack.c.h.bf16 %v5853
  %v5982 = vrot.slane %v5854, 3
  %v5983 = vrot.slane %v5858, 2
  %v5984 = vsel %vm377, %v5983, %v5982
  %v5985 = vrot.slane %v5862, 1
  %v5986 = vsel %vm380, %v5985, %v5984
  %v5987 = vsel %vm383, %v5866, %v5986
  %v5988 = vrot.slane %v5870, 7
  %v5989 = vsel %vm386, %v5988, %v5987
  %v5990 = vrot.slane %v5874, 6
  %v5991 = vsel %vm389, %v5990, %v5989
  %v5992 = vrot.slane %v5878, 5
  %v5993 = vsel %vm392, %v5992, %v5991
  %v5994 = vrot.slane %v5882, 4
  %v5995 = vsel %vm395, %v5994, %v5993
  %v5996 = vrot.slane %v5855, 3
  %v5997 = vrot.slane %v5859, 2
  %v5998 = vsel %vm377, %v5997, %v5996
  %v5999 = vrot.slane %v5863, 1
  %v6000 = vsel %vm380, %v5999, %v5998
  %v6001 = vsel %vm383, %v5867, %v6000
  %v6002 = vrot.slane %v5871, 7
  %v6003 = vsel %vm386, %v6002, %v6001
  %v6004 = vrot.slane %v5875, 6
  %v6005 = vsel %vm389, %v6004, %v6003
  %v6006 = vrot.slane %v5879, 5
  %v6007 = vsel %vm392, %v6006, %v6005
  %v6008 = vrot.slane %v5883, 4
  %v6009 = vsel %vm395, %v6008, %v6007
  %v6010 = vrot.slane %v5856, 3
  %v6011 = vrot.slane %v5860, 2
  %v6012 = vsel %vm377, %v6011, %v6010
  %v6013 = vrot.slane %v5864, 1
  %v6014 = vsel %vm380, %v6013, %v6012
  %v6015 = vsel %vm383, %v5868, %v6014
  %v6016 = vrot.slane %v5872, 7
  %v6017 = vsel %vm386, %v6016, %v6015
  %v6018 = vrot.slane %v5876, 6
  %v6019 = vsel %vm389, %v6018, %v6017
  %v6020 = vrot.slane %v5880, 5
  %v6021 = vsel %vm392, %v6020, %v6019
  %v6022 = vrot.slane %v5884, 4
  %v6023 = vsel %vm395, %v6022, %v6021
  %v6024 = vrot.slane %v5857, 3
  %v6025 = vrot.slane %v5861, 2
  %v6026 = vsel %vm377, %v6025, %v6024
  %v6027 = vrot.slane %v5865, 1
  %v6028 = vsel %vm380, %v6027, %v6026
  %v6029 = vsel %vm383, %v5869, %v6028
  %v6030 = vrot.slane %v5873, 7
  %v6031 = vsel %vm386, %v6030, %v6029
  %v6032 = vrot.slane %v5877, 6
  %v6033 = vsel %vm389, %v6032, %v6031
  %v6034 = vrot.slane %v5881, 5
  %v6035 = vsel %vm392, %v6034, %v6033
  %v6036 = vrot.slane %v5885, 4
  %v6037 = vsel %vm395, %v6036, %v6035
  %v6038 = vrot.slane %v5886, 3
  %v6039 = vrot.slane %v5890, 2
  %v6040 = vsel %vm377, %v6039, %v6038
  %v6041 = vrot.slane %v5894, 1
  %v6042 = vsel %vm380, %v6041, %v6040
  %v6043 = vsel %vm383, %v5898, %v6042
  %v6044 = vrot.slane %v5902, 7
  %v6045 = vsel %vm386, %v6044, %v6043
  %v6046 = vrot.slane %v5906, 6
  %v6047 = vsel %vm389, %v6046, %v6045
  %v6048 = vrot.slane %v5910, 5
  %v6049 = vsel %vm392, %v6048, %v6047
  %v6050 = vrot.slane %v5914, 4
  %v6051 = vsel %vm395, %v6050, %v6049
  %v6052 = vrot.slane %v5887, 3
  %v6053 = vrot.slane %v5891, 2
  %v6054 = vsel %vm377, %v6053, %v6052
  %v6055 = vrot.slane %v5895, 1
  %v6056 = vsel %vm380, %v6055, %v6054
  %v6057 = vsel %vm383, %v5899, %v6056
  %v6058 = vrot.slane %v5903, 7
  %v6059 = vsel %vm386, %v6058, %v6057
  %v6060 = vrot.slane %v5907, 6
  %v6061 = vsel %vm389, %v6060, %v6059
  %v6062 = vrot.slane %v5911, 5
  %v6063 = vsel %vm392, %v6062, %v6061
  %v6064 = vrot.slane %v5915, 4
  %v6065 = vsel %vm395, %v6064, %v6063
  %v6066 = vrot.slane %v5888, 3
  %v6067 = vrot.slane %v5892, 2
  %v6068 = vsel %vm377, %v6067, %v6066
  %v6069 = vrot.slane %v5896, 1
  %v6070 = vsel %vm380, %v6069, %v6068
  %v6071 = vsel %vm383, %v5900, %v6070
  %v6072 = vrot.slane %v5904, 7
  %v6073 = vsel %vm386, %v6072, %v6071
  %v6074 = vrot.slane %v5908, 6
  %v6075 = vsel %vm389, %v6074, %v6073
  %v6076 = vrot.slane %v5912, 5
  %v6077 = vsel %vm392, %v6076, %v6075
  %v6078 = vrot.slane %v5916, 4
  %v6079 = vsel %vm395, %v6078, %v6077
  %v6080 = vrot.slane %v5889, 3
  %v6081 = vrot.slane %v5893, 2
  %v6082 = vsel %vm377, %v6081, %v6080
  %v6083 = vrot.slane %v5897, 1
  %v6084 = vsel %vm380, %v6083, %v6082
  %v6085 = vsel %vm383, %v5901, %v6084
  %v6086 = vrot.slane %v5905, 7
  %v6087 = vsel %vm386, %v6086, %v6085
  %v6088 = vrot.slane %v5909, 6
  %v6089 = vsel %vm389, %v6088, %v6087
  %v6090 = vrot.slane %v5913, 5
  %v6091 = vsel %vm392, %v6090, %v6089
  %v6092 = vrot.slane %v5917, 4
  %v6093 = vsel %vm395, %v6092, %v6091
  %6102 = vmatpush.bf16.msra.mxu0 %v276
  %6103 = vmatpush.bf16.msra.mxu0 %v272
  %6104 = vmatpush.bf16.msra.mxu0 %v268
  %6105 = vmatpush.bf16.msra.mxu0 %v264
  %6106 = vmatpush.bf16.msra.mxu0 %v260
  %6107 = vmatpush.bf16.msra.mxu0 %v256
  %6108 = vmatpush.bf16.msra.mxu0 %v252
  %6109 = vmatpush.bf16.msra.mxu0 %v248
  %6110 = vmatmul.bf16.gmra.mxu0 %v5821
  %v6111 = vpop.f32.mrf.mxu0
  %v6112 = vadd.f32 %v5995, %v6111
  %v6113 = vpop.f32.mrf.mxu0
  %v6114 = vadd.f32 %v6051, %v6113
  %6115 = vdwg.mxu0
  %6116 = vmatpush.bf16.msra.mxu0 %v277
  %6117 = vmatpush.bf16.msra.mxu0 %v273
  %6118 = vmatpush.bf16.msra.mxu0 %v269
  %6119 = vmatpush.bf16.msra.mxu0 %v265
  %6120 = vmatpush.bf16.msra.mxu0 %v261
  %6121 = vmatpush.bf16.msra.mxu0 %v257
  %6122 = vmatpush.bf16.msra.mxu0 %v253
  %6123 = vmatpush.bf16.msra.mxu0 %v249
  %6124 = vmatmul.bf16.gmra.mxu0 %v5821
  %v6125 = vpop.f32.mrf.mxu0
  %v6126 = vadd.f32 %v6009, %v6125
  %v6127 = vpop.f32.mrf.mxu0
  %v6128 = vadd.f32 %v6065, %v6127
  %6129 = vdwg.mxu0
  %6130 = vmatpush.bf16.msra.mxu0 %v278
  %6131 = vmatpush.bf16.msra.mxu0 %v274
  %6132 = vmatpush.bf16.msra.mxu0 %v270
  %6133 = vmatpush.bf16.msra.mxu0 %v266
  %6134 = vmatpush.bf16.msra.mxu0 %v262
  %6135 = vmatpush.bf16.msra.mxu0 %v258
  %6136 = vmatpush.bf16.msra.mxu0 %v254
  %6137 = vmatpush.bf16.msra.mxu0 %v250
  %6138 = vmatmul.bf16.gmra.mxu0 %v5821
  %v6139 = vpop.f32.mrf.mxu0
  %v6140 = vadd.f32 %v6023, %v6139
  %v6141 = vpop.f32.mrf.mxu0
  %v6142 = vadd.f32 %v6079, %v6141
  %6143 = vdwg.mxu0
  %6144 = vmatpush.bf16.msra.mxu0 %v279
  %6145 = vmatpush.bf16.msra.mxu0 %v275
  %6146 = vmatpush.bf16.msra.mxu0 %v271
  %6147 = vmatpush.bf16.msra.mxu0 %v267
  %6148 = vmatpush.bf16.msra.mxu0 %v263
  %6149 = vmatpush.bf16.msra.mxu0 %v259
  %6150 = vmatpush.bf16.msra.mxu0 %v255
  %6151 = vmatpush.bf16.msra.mxu0 %v251
  %6152 = vmatmul.bf16.gmra.mxu0 %v5821
  %v6153 = vpop.f32.mrf.mxu0
  %v6154 = vadd.f32 %v6037, %v6153
  %v6155 = vpop.f32.mrf.mxu0
  %v6156 = vadd.f32 %v6093, %v6155
  %6157 = vdwg.mxu0
  %v6158 = vxor.u32 %v6112, 2147483648
  %v6159 = vxor.u32 %v6114, 2147483648
  %v6160 = vmul.f32 %v6158, 1.442695
  %v6161 = vpow.pop %v6160
  %v6162 = vmul.f32 %v6159, 1.442695
  %v6163 = vpow.pop %v6162
  %v6164 = vadd.f32 %v6161, 1.0
  %v6165 = vadd.f32 %v6163, 1.0
  %v6166 = vrcp.pop %v6164
  %v6167 = vmul.f32 %v6164, %v6166
  %v6168 = vsub.f32 1.0, %v6167
  %v6169 = vmul.f32 %v6166, %v6168
  %v6170 = vadd.f32 %v6166, %v6169
  %vm6171 = vweird.f32 %v6164
  %vm6172 = vweird.f32 %v6166
  %vm6173 = vmor %vm6171, %vm6172
  %v6174 = vsel %vm6173, %v6166, %v6170
  %v6175 = vand.u32 2147483647, %v6164
  %vm6176 = vcmp.eq.f32.partialorder %v6175, 8.507059e+37
  %v6177 = vand.u32 %v6164, 2147483648
  %v6178 = vor.u32 1.1754944e-38, %v6177
  %v6179 = vsel %vm6176, %v6178, %v6174
  %v6180 = vmul.f32 1.0, %v6179
  %v6181 = vrcp.pop %v6165
  %v6182 = vmul.f32 %v6165, %v6181
  %v6183 = vsub.f32 1.0, %v6182
  %v6184 = vmul.f32 %v6181, %v6183
  %v6185 = vadd.f32 %v6181, %v6184
  %vm6186 = vweird.f32 %v6165
  %vm6187 = vweird.f32 %v6181
  %vm6188 = vmor %vm6186, %vm6187
  %v6189 = vsel %vm6188, %v6181, %v6185
  %v6190 = vand.u32 2147483647, %v6165
  %vm6191 = vcmp.eq.f32.partialorder %v6190, 8.507059e+37
  %v6192 = vand.u32 %v6165, 2147483648
  %v6193 = vor.u32 1.1754944e-38, %v6192
  %v6194 = vsel %vm6191, %v6193, %v6189
  %v6195 = vmul.f32 1.0, %v6194
  %v6196 = vxor.u32 %v6126, 2147483648
  %v6197 = vxor.u32 %v6128, 2147483648
  %v6198 = vmul.f32 %v6196, 1.442695
  %v6199 = vpow.pop %v6198
  %v6200 = vmul.f32 %v6197, 1.442695
  %v6201 = vpow.pop %v6200
  %v6202 = vadd.f32 %v6199, 1.0
  %v6203 = vadd.f32 %v6201, 1.0
  %v6204 = vrcp.pop %v6202
  %v6205 = vmul.f32 %v6202, %v6204
  %v6206 = vsub.f32 1.0, %v6205
  %v6207 = vmul.f32 %v6204, %v6206
  %v6208 = vadd.f32 %v6204, %v6207
  %vm6209 = vweird.f32 %v6202
  %vm6210 = vweird.f32 %v6204
  %vm6211 = vmor %vm6209, %vm6210
  %v6212 = vsel %vm6211, %v6204, %v6208
  %v6213 = vand.u32 2147483647, %v6202
  %vm6214 = vcmp.eq.f32.partialorder %v6213, 8.507059e+37
  %v6215 = vand.u32 %v6202, 2147483648
  %v6216 = vor.u32 1.1754944e-38, %v6215
  %v6217 = vsel %vm6214, %v6216, %v6212
  %v6218 = vmul.f32 1.0, %v6217
  %v6219 = vrcp.pop %v6203
  %v6220 = vmul.f32 %v6203, %v6219
  %v6221 = vsub.f32 1.0, %v6220
  %v6222 = vmul.f32 %v6219, %v6221
  %v6223 = vadd.f32 %v6219, %v6222
  %vm6224 = vweird.f32 %v6203
  %vm6225 = vweird.f32 %v6219
  %vm6226 = vmor %vm6224, %vm6225
  %v6227 = vsel %vm6226, %v6219, %v6223
  %v6228 = vand.u32 2147483647, %v6203
  %vm6229 = vcmp.eq.f32.partialorder %v6228, 8.507059e+37
  %v6230 = vand.u32 %v6203, 2147483648
  %v6231 = vor.u32 1.1754944e-38, %v6230
  %v6232 = vsel %vm6229, %v6231, %v6227
  %v6233 = vmul.f32 1.0, %v6232
  %v6234 = vtanh.pop %v6140
  %v6235 = vtanh.pop %v6142
  %v6236 = vxor.u32 %v6154, 2147483648
  %v6237 = vxor.u32 %v6156, 2147483648
  %v6238 = vmul.f32 %v6236, 1.442695
  %v6239 = vpow.pop %v6238
  %v6240 = vmul.f32 %v6237, 1.442695
  %v6241 = vpow.pop %v6240
  %v6242 = vadd.f32 %v6239, 1.0
  %v6243 = vadd.f32 %v6241, 1.0
  %v6244 = vrcp.pop %v6242
  %v6245 = vmul.f32 %v6242, %v6244
  %v6246 = vsub.f32 1.0, %v6245
  %v6247 = vmul.f32 %v6244, %v6246
  %v6248 = vadd.f32 %v6244, %v6247
  %vm6249 = vweird.f32 %v6242
  %vm6250 = vweird.f32 %v6244
  %vm6251 = vmor %vm6249, %vm6250
  %v6252 = vsel %vm6251, %v6244, %v6248
  %v6253 = vand.u32 2147483647, %v6242
  %vm6254 = vcmp.eq.f32.partialorder %v6253, 8.507059e+37
  %v6255 = vand.u32 %v6242, 2147483648
  %v6256 = vor.u32 1.1754944e-38, %v6255
  %v6257 = vsel %vm6254, %v6256, %v6252
  %v6258 = vmul.f32 1.0, %v6257
  %v6259 = vrcp.pop %v6243
  %v6260 = vmul.f32 %v6243, %v6259
  %v6261 = vsub.f32 1.0, %v6260
  %v6262 = vmul.f32 %v6259, %v6261
  %v6263 = vadd.f32 %v6259, %v6262
  %vm6264 = vweird.f32 %v6243
  %vm6265 = vweird.f32 %v6259
  %vm6266 = vmor %vm6264, %vm6265
  %v6267 = vsel %vm6266, %v6259, %v6263
  %v6268 = vand.u32 2147483647, %v6243
  %vm6269 = vcmp.eq.f32.partialorder %v6268, 8.507059e+37
  %v6270 = vand.u32 %v6243, 2147483648
  %v6271 = vor.u32 1.1754944e-38, %v6270
  %v6272 = vsel %vm6269, %v6271, %v6267
  %v6273 = vmul.f32 1.0, %v6272
  %v6274 = vmul.f32 %v6218, %v5769
  %v6275 = vmul.f32 %v6233, %v5770
  %v6276 = vmul.f32 %v6180, %v6234
  %v6277 = vmul.f32 %v6195, %v6235
  %v6278 = vadd.f32 %v6274, %v6276
  %v6279 = vadd.f32 %v6275, %v6277
  %v6280 = vtanh.pop %v6278
  %v6281 = vtanh.pop %v6279
  %v6282 = vmul.f32 %v6258, %v6280
  %v6283 = vmul.f32 %v6273, %v6281
  %v6286 = vrot.slane %v6282, 1
  %v6287 = vrot.slane %v6282, 2
  %v6288 = vrot.slane %v6282, 3
  %v6289 = vrot.slane %v6282, 4
  %v6290 = vrot.slane %v6282, 5
  %v6291 = vrot.slane %v6282, 6
  %v6292 = vrot.slane %v6282, 7
  %v6293 = vrot.slane %v6283, 1
  %v6294 = vrot.slane %v6283, 2
  %v6295 = vrot.slane %v6283, 3
  %v6296 = vrot.slane %v6283, 4
  %v6297 = vrot.slane %v6283, 5
  %v6298 = vrot.slane %v6283, 6
  %v6299 = vrot.slane %v6283, 7
  %6314 = vst [vmem:[%s2 + $0xb] sm:$0x1] %v6282
  %6315 = vst [vmem:[%s2 + $0x1b] sm:$0x1] %v6286
  %6316 = vst [vmem:[%s2 + $0x2b] sm:$0x1] %v6287
  %6317 = vst [vmem:[%s2 + $0x3b] sm:$0x1] %v6288
  %6318 = vst [vmem:[%s2 + $0x4b] sm:$0x1] %v6289
  %6319 = vst [vmem:[%s2 + $0x5b] sm:$0x1] %v6290
  %6320 = vst [vmem:[%s2 + $0x6b] sm:$0x1] %v6291
  %6321 = vst [vmem:[%s2 + $0x7b] sm:$0x1] %v6292
  %6322 = vst [vmem:[%s2 + $0x8b] sm:$0x1] %v6283
  %6323 = vst [vmem:[%s2 + $0x9b] sm:$0x1] %v6293
  %6324 = vst [vmem:[%s2 + $0xab] sm:$0x1] %v6294
  %6325 = vst [vmem:[%s2 + $0xbb] sm:$0x1] %v6295
  %6326 = vst [vmem:[%s2 + $0xcb] sm:$0x1] %v6296
  %6327 = vst [vmem:[%s2 + $0xdb] sm:$0x1] %v6297
  %6328 = vst [vmem:[%s2 + $0xeb] sm:$0x1] %v6298
  %6329 = vst [vmem:[%s2 + $0xfb] sm:$0x1] %v6299
  %v6330 = vpack.c.bf16 %v6283, %v6282
  %v6331 = vld [vmem:[%s0 + $0x10] sm:$0x44]
  %v6332 = vld [vmem:[%s0 + $0x18] sm:$0x44]
  %v6333 = vld [vmem:[%s0 + $0x30] sm:$0x44]
  %v6334 = vld [vmem:[%s0 + $0x38] sm:$0x44]
  %v6335 = vld [vmem:[%s0 + $0x50] sm:$0x44]
  %v6336 = vld [vmem:[%s0 + $0x58] sm:$0x44]
  %v6337 = vld [vmem:[%s0 + $0x70] sm:$0x44]
  %v6338 = vld [vmem:[%s0 + $0x78] sm:$0x44]
  %v6339 = vld [vmem:[%s0 + $0x90] sm:$0x44]
  %v6340 = vld [vmem:[%s0 + $0x98] sm:$0x44]
  %v6341 = vld [vmem:[%s0 + $0xb0] sm:$0x44]
  %v6342 = vld [vmem:[%s0 + $0xb8] sm:$0x44]
  %v6343 = vld [vmem:[%s0 + $0xd0] sm:$0x44]
  %v6344 = vld [vmem:[%s0 + $0xd8] sm:$0x44]
  %v6345 = vld [vmem:[%s0 + $0xf0] sm:$0x44]
  %v6346 = vld [vmem:[%s0 + $0xf8] sm:$0x44]
  %v6347 = vld [vmem:[%s0 + $0x110] sm:$0x44]
  %v6348 = vld [vmem:[%s0 + $0x118] sm:$0x44]
  %v6349 = vld [vmem:[%s0 + $0x130] sm:$0x44]
  %v6350 = vld [vmem:[%s0 + $0x138] sm:$0x44]
  %v6351 = vld [vmem:[%s0 + $0x150] sm:$0x44]
  %v6352 = vld [vmem:[%s0 + $0x158] sm:$0x44]
  %v6353 = vld [vmem:[%s0 + $0x170] sm:$0x44]
  %v6354 = vld [vmem:[%s0 + $0x178] sm:$0x44]
  %v6355 = vld [vmem:[%s0 + $0x190] sm:$0x44]
  %v6356 = vld [vmem:[%s0 + $0x198] sm:$0x44]
  %v6357 = vld [vmem:[%s0 + $0x1b0] sm:$0x44]
  %v6358 = vld [vmem:[%s0 + $0x1b8] sm:$0x44]
  %v6359 = vld [vmem:[%s0 + $0x1d0] sm:$0x44]
  %v6360 = vld [vmem:[%s0 + $0x1d8] sm:$0x44]
  %v6361 = vld [vmem:[%s0 + $0x1f0] sm:$0x44]
  %v6362 = vld [vmem:[%s0 + $0x1f8] sm:$0x44]
  %v6363 = vunpack.c.l.bf16 %v6331
  %v6364 = vunpack.c.h.bf16 %v6331
  %v6365 = vunpack.c.l.bf16 %v6332
  %v6366 = vunpack.c.h.bf16 %v6332
  %v6367 = vunpack.c.l.bf16 %v6333
  %v6368 = vunpack.c.h.bf16 %v6333
  %v6369 = vunpack.c.l.bf16 %v6334
  %v6370 = vunpack.c.h.bf16 %v6334
  %v6371 = vunpack.c.l.bf16 %v6335
  %v6372 = vunpack.c.h.bf16 %v6335
  %v6373 = vunpack.c.l.bf16 %v6336
  %v6374 = vunpack.c.h.bf16 %v6336
  %v6375 = vunpack.c.l.bf16 %v6337
  %v6376 = vunpack.c.h.bf16 %v6337
  %v6377 = vunpack.c.l.bf16 %v6338
  %v6378 = vunpack.c.h.bf16 %v6338
  %v6379 = vunpack.c.l.bf16 %v6339
  %v6380 = vunpack.c.h.bf16 %v6339
  %v6381 = vunpack.c.l.bf16 %v6340
  %v6382 = vunpack.c.h.bf16 %v6340
  %v6383 = vunpack.c.l.bf16 %v6341
  %v6384 = vunpack.c.h.bf16 %v6341
  %v6385 = vunpack.c.l.bf16 %v6342
  %v6386 = vunpack.c.h.bf16 %v6342
  %v6387 = vunpack.c.l.bf16 %v6343
  %v6388 = vunpack.c.h.bf16 %v6343
  %v6389 = vunpack.c.l.bf16 %v6344
  %v6390 = vunpack.c.h.bf16 %v6344
  %v6391 = vunpack.c.l.bf16 %v6345
  %v6392 = vunpack.c.h.bf16 %v6345
  %v6393 = vunpack.c.l.bf16 %v6346
  %v6394 = vunpack.c.h.bf16 %v6346
  %v6395 = vunpack.c.l.bf16 %v6347
  %v6396 = vunpack.c.h.bf16 %v6347
  %v6397 = vunpack.c.l.bf16 %v6348
  %v6398 = vunpack.c.h.bf16 %v6348
  %v6399 = vunpack.c.l.bf16 %v6349
  %v6400 = vunpack.c.h.bf16 %v6349
  %v6401 = vunpack.c.l.bf16 %v6350
  %v6402 = vunpack.c.h.bf16 %v6350
  %v6403 = vunpack.c.l.bf16 %v6351
  %v6404 = vunpack.c.h.bf16 %v6351
  %v6405 = vunpack.c.l.bf16 %v6352
  %v6406 = vunpack.c.h.bf16 %v6352
  %v6407 = vunpack.c.l.bf16 %v6353
  %v6408 = vunpack.c.h.bf16 %v6353
  %v6409 = vunpack.c.l.bf16 %v6354
  %v6410 = vunpack.c.h.bf16 %v6354
  %v6411 = vunpack.c.l.bf16 %v6355
  %v6412 = vunpack.c.h.bf16 %v6355
  %v6413 = vunpack.c.l.bf16 %v6356
  %v6414 = vunpack.c.h.bf16 %v6356
  %v6415 = vunpack.c.l.bf16 %v6357
  %v6416 = vunpack.c.h.bf16 %v6357
  %v6417 = vunpack.c.l.bf16 %v6358
  %v6418 = vunpack.c.h.bf16 %v6358
  %v6419 = vunpack.c.l.bf16 %v6359
  %v6420 = vunpack.c.h.bf16 %v6359
  %v6421 = vunpack.c.l.bf16 %v6360
  %v6422 = vunpack.c.h.bf16 %v6360
  %v6423 = vunpack.c.l.bf16 %v6361
  %v6424 = vunpack.c.h.bf16 %v6361
  %v6425 = vunpack.c.l.bf16 %v6362
  %v6426 = vunpack.c.h.bf16 %v6362
  %v6491 = vrot.slane %v6363, 4
  %v6492 = vrot.slane %v6367, 3
  %v6493 = vsel %vm377, %v6492, %v6491
  %v6494 = vrot.slane %v6371, 2
  %v6495 = vsel %vm380, %v6494, %v6493
  %v6496 = vrot.slane %v6375, 1
  %v6497 = vsel %vm383, %v6496, %v6495
  %v6498 = vsel %vm386, %v6379, %v6497
  %v6499 = vrot.slane %v6383, 7
  %v6500 = vsel %vm389, %v6499, %v6498
  %v6501 = vrot.slane %v6387, 6
  %v6502 = vsel %vm392, %v6501, %v6500
  %v6503 = vrot.slane %v6391, 5
  %v6504 = vsel %vm395, %v6503, %v6502
  %v6505 = vrot.slane %v6364, 4
  %v6506 = vrot.slane %v6368, 3
  %v6507 = vsel %vm377, %v6506, %v6505
  %v6508 = vrot.slane %v6372, 2
  %v6509 = vsel %vm380, %v6508, %v6507
  %v6510 = vrot.slane %v6376, 1
  %v6511 = vsel %vm383, %v6510, %v6509
  %v6512 = vsel %vm386, %v6380, %v6511
  %v6513 = vrot.slane %v6384, 7
  %v6514 = vsel %vm389, %v6513, %v6512
  %v6515 = vrot.slane %v6388, 6
  %v6516 = vsel %vm392, %v6515, %v6514
  %v6517 = vrot.slane %v6392, 5
  %v6518 = vsel %vm395, %v6517, %v6516
  %v6519 = vrot.slane %v6365, 4
  %v6520 = vrot.slane %v6369, 3
  %v6521 = vsel %vm377, %v6520, %v6519
  %v6522 = vrot.slane %v6373, 2
  %v6523 = vsel %vm380, %v6522, %v6521
  %v6524 = vrot.slane %v6377, 1
  %v6525 = vsel %vm383, %v6524, %v6523
  %v6526 = vsel %vm386, %v6381, %v6525
  %v6527 = vrot.slane %v6385, 7
  %v6528 = vsel %vm389, %v6527, %v6526
  %v6529 = vrot.slane %v6389, 6
  %v6530 = vsel %vm392, %v6529, %v6528
  %v6531 = vrot.slane %v6393, 5
  %v6532 = vsel %vm395, %v6531, %v6530
  %v6533 = vrot.slane %v6366, 4
  %v6534 = vrot.slane %v6370, 3
  %v6535 = vsel %vm377, %v6534, %v6533
  %v6536 = vrot.slane %v6374, 2
  %v6537 = vsel %vm380, %v6536, %v6535
  %v6538 = vrot.slane %v6378, 1
  %v6539 = vsel %vm383, %v6538, %v6537
  %v6540 = vsel %vm386, %v6382, %v6539
  %v6541 = vrot.slane %v6386, 7
  %v6542 = vsel %vm389, %v6541, %v6540
  %v6543 = vrot.slane %v6390, 6
  %v6544 = vsel %vm392, %v6543, %v6542
  %v6545 = vrot.slane %v6394, 5
  %v6546 = vsel %vm395, %v6545, %v6544
  %v6547 = vrot.slane %v6395, 4
  %v6548 = vrot.slane %v6399, 3
  %v6549 = vsel %vm377, %v6548, %v6547
  %v6550 = vrot.slane %v6403, 2
  %v6551 = vsel %vm380, %v6550, %v6549
  %v6552 = vrot.slane %v6407, 1
  %v6553 = vsel %vm383, %v6552, %v6551
  %v6554 = vsel %vm386, %v6411, %v6553
  %v6555 = vrot.slane %v6415, 7
  %v6556 = vsel %vm389, %v6555, %v6554
  %v6557 = vrot.slane %v6419, 6
  %v6558 = vsel %vm392, %v6557, %v6556
  %v6559 = vrot.slane %v6423, 5
  %v6560 = vsel %vm395, %v6559, %v6558
  %v6561 = vrot.slane %v6396, 4
  %v6562 = vrot.slane %v6400, 3
  %v6563 = vsel %vm377, %v6562, %v6561
  %v6564 = vrot.slane %v6404, 2
  %v6565 = vsel %vm380, %v6564, %v6563
  %v6566 = vrot.slane %v6408, 1
  %v6567 = vsel %vm383, %v6566, %v6565
  %v6568 = vsel %vm386, %v6412, %v6567
  %v6569 = vrot.slane %v6416, 7
  %v6570 = vsel %vm389, %v6569, %v6568
  %v6571 = vrot.slane %v6420, 6
  %v6572 = vsel %vm392, %v6571, %v6570
  %v6573 = vrot.slane %v6424, 5
  %v6574 = vsel %vm395, %v6573, %v6572
  %v6575 = vrot.slane %v6397, 4
  %v6576 = vrot.slane %v6401, 3
  %v6577 = vsel %vm377, %v6576, %v6575
  %v6578 = vrot.slane %v6405, 2
  %v6579 = vsel %vm380, %v6578, %v6577
  %v6580 = vrot.slane %v6409, 1
  %v6581 = vsel %vm383, %v6580, %v6579
  %v6582 = vsel %vm386, %v6413, %v6581
  %v6583 = vrot.slane %v6417, 7
  %v6584 = vsel %vm389, %v6583, %v6582
  %v6585 = vrot.slane %v6421, 6
  %v6586 = vsel %vm392, %v6585, %v6584
  %v6587 = vrot.slane %v6425, 5
  %v6588 = vsel %vm395, %v6587, %v6586
  %v6589 = vrot.slane %v6398, 4
  %v6590 = vrot.slane %v6402, 3
  %v6591 = vsel %vm377, %v6590, %v6589
  %v6592 = vrot.slane %v6406, 2
  %v6593 = vsel %vm380, %v6592, %v6591
  %v6594 = vrot.slane %v6410, 1
  %v6595 = vsel %vm383, %v6594, %v6593
  %v6596 = vsel %vm386, %v6414, %v6595
  %v6597 = vrot.slane %v6418, 7
  %v6598 = vsel %vm389, %v6597, %v6596
  %v6599 = vrot.slane %v6422, 6
  %v6600 = vsel %vm392, %v6599, %v6598
  %v6601 = vrot.slane %v6426, 5
  %v6602 = vsel %vm395, %v6601, %v6600
  %6611 = vmatpush.bf16.msra.mxu0 %v276
  %6612 = vmatpush.bf16.msra.mxu0 %v272
  %6613 = vmatpush.bf16.msra.mxu0 %v268
  %6614 = vmatpush.bf16.msra.mxu0 %v264
  %6615 = vmatpush.bf16.msra.mxu0 %v260
  %6616 = vmatpush.bf16.msra.mxu0 %v256
  %6617 = vmatpush.bf16.msra.mxu0 %v252
  %6618 = vmatpush.bf16.msra.mxu0 %v248
  %6619 = vmatmul.bf16.gmra.mxu0 %v6330
  %v6620 = vpop.f32.mrf.mxu0
  %v6621 = vadd.f32 %v6504, %v6620
  %v6622 = vpop.f32.mrf.mxu0
  %v6623 = vadd.f32 %v6560, %v6622
  %6624 = vdwg.mxu0
  %6625 = vmatpush.bf16.msra.mxu0 %v277
  %6626 = vmatpush.bf16.msra.mxu0 %v273
  %6627 = vmatpush.bf16.msra.mxu0 %v269
  %6628 = vmatpush.bf16.msra.mxu0 %v265
  %6629 = vmatpush.bf16.msra.mxu0 %v261
  %6630 = vmatpush.bf16.msra.mxu0 %v257
  %6631 = vmatpush.bf16.msra.mxu0 %v253
  %6632 = vmatpush.bf16.msra.mxu0 %v249
  %6633 = vmatmul.bf16.gmra.mxu0 %v6330
  %v6634 = vpop.f32.mrf.mxu0
  %v6635 = vadd.f32 %v6518, %v6634
  %v6636 = vpop.f32.mrf.mxu0
  %v6637 = vadd.f32 %v6574, %v6636
  %6638 = vdwg.mxu0
  %6639 = vmatpush.bf16.msra.mxu0 %v278
  %6640 = vmatpush.bf16.msra.mxu0 %v274
  %6641 = vmatpush.bf16.msra.mxu0 %v270
  %6642 = vmatpush.bf16.msra.mxu0 %v266
  %6643 = vmatpush.bf16.msra.mxu0 %v262
  %6644 = vmatpush.bf16.msra.mxu0 %v258
  %6645 = vmatpush.bf16.msra.mxu0 %v254
  %6646 = vmatpush.bf16.msra.mxu0 %v250
  %6647 = vmatmul.bf16.gmra.mxu0 %v6330
  %v6648 = vpop.f32.mrf.mxu0
  %v6649 = vadd.f32 %v6532, %v6648
  %v6650 = vpop.f32.mrf.mxu0
  %v6651 = vadd.f32 %v6588, %v6650
  %6652 = vdwg.mxu0
  %6653 = vmatpush.bf16.msra.mxu0 %v279
  %6654 = vmatpush.bf16.msra.mxu0 %v275
  %6655 = vmatpush.bf16.msra.mxu0 %v271
  %6656 = vmatpush.bf16.msra.mxu0 %v267
  %6657 = vmatpush.bf16.msra.mxu0 %v263
  %6658 = vmatpush.bf16.msra.mxu0 %v259
  %6659 = vmatpush.bf16.msra.mxu0 %v255
  %6660 = vmatpush.bf16.msra.mxu0 %v251
  %6661 = vmatmul.bf16.gmra.mxu0 %v6330
  %v6662 = vpop.f32.mrf.mxu0
  %v6663 = vadd.f32 %v6546, %v6662
  %v6664 = vpop.f32.mrf.mxu0
  %v6665 = vadd.f32 %v6602, %v6664
  %6666 = vdwg.mxu0
  %v6667 = vxor.u32 %v6621, 2147483648
  %v6668 = vxor.u32 %v6623, 2147483648
  %v6669 = vmul.f32 %v6667, 1.442695
  %v6670 = vpow.pop %v6669
  %v6671 = vmul.f32 %v6668, 1.442695
  %v6672 = vpow.pop %v6671
  %v6673 = vadd.f32 %v6670, 1.0
  %v6674 = vadd.f32 %v6672, 1.0
  %v6675 = vrcp.pop %v6673
  %v6676 = vmul.f32 %v6673, %v6675
  %v6677 = vsub.f32 1.0, %v6676
  %v6678 = vmul.f32 %v6675, %v6677
  %v6679 = vadd.f32 %v6675, %v6678
  %vm6680 = vweird.f32 %v6673
  %vm6681 = vweird.f32 %v6675
  %vm6682 = vmor %vm6680, %vm6681
  %v6683 = vsel %vm6682, %v6675, %v6679
  %v6684 = vand.u32 2147483647, %v6673
  %vm6685 = vcmp.eq.f32.partialorder %v6684, 8.507059e+37
  %v6686 = vand.u32 %v6673, 2147483648
  %v6687 = vor.u32 1.1754944e-38, %v6686
  %v6688 = vsel %vm6685, %v6687, %v6683
  %v6689 = vmul.f32 1.0, %v6688
  %v6690 = vrcp.pop %v6674
  %v6691 = vmul.f32 %v6674, %v6690
  %v6692 = vsub.f32 1.0, %v6691
  %v6693 = vmul.f32 %v6690, %v6692
  %v6694 = vadd.f32 %v6690, %v6693
  %vm6695 = vweird.f32 %v6674
  %vm6696 = vweird.f32 %v6690
  %vm6697 = vmor %vm6695, %vm6696
  %v6698 = vsel %vm6697, %v6690, %v6694
  %v6699 = vand.u32 2147483647, %v6674
  %vm6700 = vcmp.eq.f32.partialorder %v6699, 8.507059e+37
  %v6701 = vand.u32 %v6674, 2147483648
  %v6702 = vor.u32 1.1754944e-38, %v6701
  %v6703 = vsel %vm6700, %v6702, %v6698
  %v6704 = vmul.f32 1.0, %v6703
  %v6705 = vxor.u32 %v6635, 2147483648
  %v6706 = vxor.u32 %v6637, 2147483648
  %v6707 = vmul.f32 %v6705, 1.442695
  %v6708 = vpow.pop %v6707
  %v6709 = vmul.f32 %v6706, 1.442695
  %v6710 = vpow.pop %v6709
  %v6711 = vadd.f32 %v6708, 1.0
  %v6712 = vadd.f32 %v6710, 1.0
  %v6713 = vrcp.pop %v6711
  %v6714 = vmul.f32 %v6711, %v6713
  %v6715 = vsub.f32 1.0, %v6714
  %v6716 = vmul.f32 %v6713, %v6715
  %v6717 = vadd.f32 %v6713, %v6716
  %vm6718 = vweird.f32 %v6711
  %vm6719 = vweird.f32 %v6713
  %vm6720 = vmor %vm6718, %vm6719
  %v6721 = vsel %vm6720, %v6713, %v6717
  %v6722 = vand.u32 2147483647, %v6711
  %vm6723 = vcmp.eq.f32.partialorder %v6722, 8.507059e+37
  %v6724 = vand.u32 %v6711, 2147483648
  %v6725 = vor.u32 1.1754944e-38, %v6724
  %v6726 = vsel %vm6723, %v6725, %v6721
  %v6727 = vmul.f32 1.0, %v6726
  %v6728 = vrcp.pop %v6712
  %v6729 = vmul.f32 %v6712, %v6728
  %v6730 = vsub.f32 1.0, %v6729
  %v6731 = vmul.f32 %v6728, %v6730
  %v6732 = vadd.f32 %v6728, %v6731
  %vm6733 = vweird.f32 %v6712
  %vm6734 = vweird.f32 %v6728
  %vm6735 = vmor %vm6733, %vm6734
  %v6736 = vsel %vm6735, %v6728, %v6732
  %v6737 = vand.u32 2147483647, %v6712
  %vm6738 = vcmp.eq.f32.partialorder %v6737, 8.507059e+37
  %v6739 = vand.u32 %v6712, 2147483648
  %v6740 = vor.u32 1.1754944e-38, %v6739
  %v6741 = vsel %vm6738, %v6740, %v6736
  %v6742 = vmul.f32 1.0, %v6741
  %v6743 = vtanh.pop %v6649
  %v6744 = vtanh.pop %v6651
  %v6745 = vxor.u32 %v6663, 2147483648
  %v6746 = vxor.u32 %v6665, 2147483648
  %v6747 = vmul.f32 %v6745, 1.442695
  %v6748 = vpow.pop %v6747
  %v6749 = vmul.f32 %v6746, 1.442695
  %v6750 = vpow.pop %v6749
  %v6751 = vadd.f32 %v6748, 1.0
  %v6752 = vadd.f32 %v6750, 1.0
  %v6753 = vrcp.pop %v6751
  %v6754 = vmul.f32 %v6751, %v6753
  %v6755 = vsub.f32 1.0, %v6754
  %v6756 = vmul.f32 %v6753, %v6755
  %v6757 = vadd.f32 %v6753, %v6756
  %vm6758 = vweird.f32 %v6751
  %vm6759 = vweird.f32 %v6753
  %vm6760 = vmor %vm6758, %vm6759
  %v6761 = vsel %vm6760, %v6753, %v6757
  %v6762 = vand.u32 2147483647, %v6751
  %vm6763 = vcmp.eq.f32.partialorder %v6762, 8.507059e+37
  %v6764 = vand.u32 %v6751, 2147483648
  %v6765 = vor.u32 1.1754944e-38, %v6764
  %v6766 = vsel %vm6763, %v6765, %v6761
  %v6767 = vmul.f32 1.0, %v6766
  %v6768 = vrcp.pop %v6752
  %v6769 = vmul.f32 %v6752, %v6768
  %v6770 = vsub.f32 1.0, %v6769
  %v6771 = vmul.f32 %v6768, %v6770
  %v6772 = vadd.f32 %v6768, %v6771
  %vm6773 = vweird.f32 %v6752
  %vm6774 = vweird.f32 %v6768
  %vm6775 = vmor %vm6773, %vm6774
  %v6776 = vsel %vm6775, %v6768, %v6772
  %v6777 = vand.u32 2147483647, %v6752
  %vm6778 = vcmp.eq.f32.partialorder %v6777, 8.507059e+37
  %v6779 = vand.u32 %v6752, 2147483648
  %v6780 = vor.u32 1.1754944e-38, %v6779
  %v6781 = vsel %vm6778, %v6780, %v6776
  %v6782 = vmul.f32 1.0, %v6781
  %v6783 = vmul.f32 %v6727, %v6278
  %v6784 = vmul.f32 %v6742, %v6279
  %v6785 = vmul.f32 %v6689, %v6743
  %v6786 = vmul.f32 %v6704, %v6744
  %v6787 = vadd.f32 %v6783, %v6785
  %v6788 = vadd.f32 %v6784, %v6786
  %v6789 = vtanh.pop %v6787
  %v6790 = vtanh.pop %v6788
  %v6791 = vmul.f32 %v6767, %v6789
  %v6792 = vmul.f32 %v6782, %v6790
  %v6795 = vrot.slane %v6791, 1
  %v6796 = vrot.slane %v6791, 2
  %v6797 = vrot.slane %v6791, 3
  %v6798 = vrot.slane %v6791, 4
  %v6799 = vrot.slane %v6791, 5
  %v6800 = vrot.slane %v6791, 6
  %v6801 = vrot.slane %v6791, 7
  %v6802 = vrot.slane %v6792, 1
  %v6803 = vrot.slane %v6792, 2
  %v6804 = vrot.slane %v6792, 3
  %v6805 = vrot.slane %v6792, 4
  %v6806 = vrot.slane %v6792, 5
  %v6807 = vrot.slane %v6792, 6
  %v6808 = vrot.slane %v6792, 7
  %6823 = vst [vmem:[%s2 + $0xc] sm:$0x1] %v6791
  %6824 = vst [vmem:[%s2 + $0x1c] sm:$0x1] %v6795
  %6825 = vst [vmem:[%s2 + $0x2c] sm:$0x1] %v6796
  %6826 = vst [vmem:[%s2 + $0x3c] sm:$0x1] %v6797
  %6827 = vst [vmem:[%s2 + $0x4c] sm:$0x1] %v6798
  %6828 = vst [vmem:[%s2 + $0x5c] sm:$0x1] %v6799
  %6829 = vst [vmem:[%s2 + $0x6c] sm:$0x1] %v6800
  %6830 = vst [vmem:[%s2 + $0x7c] sm:$0x1] %v6801
  %6831 = vst [vmem:[%s2 + $0x8c] sm:$0x1] %v6792
  %6832 = vst [vmem:[%s2 + $0x9c] sm:$0x1] %v6802
  %6833 = vst [vmem:[%s2 + $0xac] sm:$0x1] %v6803
  %6834 = vst [vmem:[%s2 + $0xbc] sm:$0x1] %v6804
  %6835 = vst [vmem:[%s2 + $0xcc] sm:$0x1] %v6805
  %6836 = vst [vmem:[%s2 + $0xdc] sm:$0x1] %v6806
  %6837 = vst [vmem:[%s2 + $0xec] sm:$0x1] %v6807
  %6838 = vst [vmem:[%s2 + $0xfc] sm:$0x1] %v6808
  %v6839 = vpack.c.bf16 %v6792, %v6791
  %v6840 = vld [vmem:[%s0 + $0x10] sm:$0x44]
  %v6841 = vld [vmem:[%s0 + $0x18] sm:$0x44]
  %v6842 = vld [vmem:[%s0 + $0x30] sm:$0x44]
  %v6843 = vld [vmem:[%s0 + $0x38] sm:$0x44]
  %v6844 = vld [vmem:[%s0 + $0x50] sm:$0x44]
  %v6845 = vld [vmem:[%s0 + $0x58] sm:$0x44]
  %v6846 = vld [vmem:[%s0 + $0x70] sm:$0x44]
  %v6847 = vld [vmem:[%s0 + $0x78] sm:$0x44]
  %v6848 = vld [vmem:[%s0 + $0x90] sm:$0x44]
  %v6849 = vld [vmem:[%s0 + $0x98] sm:$0x44]
  %v6850 = vld [vmem:[%s0 + $0xb0] sm:$0x44]
  %v6851 = vld [vmem:[%s0 + $0xb8] sm:$0x44]
  %v6852 = vld [vmem:[%s0 + $0xd0] sm:$0x44]
  %v6853 = vld [vmem:[%s0 + $0xd8] sm:$0x44]
  %v6854 = vld [vmem:[%s0 + $0xf0] sm:$0x44]
  %v6855 = vld [vmem:[%s0 + $0xf8] sm:$0x44]
  %v6856 = vld [vmem:[%s0 + $0x110] sm:$0x44]
  %v6857 = vld [vmem:[%s0 + $0x118] sm:$0x44]
  %v6858 = vld [vmem:[%s0 + $0x130] sm:$0x44]
  %v6859 = vld [vmem:[%s0 + $0x138] sm:$0x44]
  %v6860 = vld [vmem:[%s0 + $0x150] sm:$0x44]
  %v6861 = vld [vmem:[%s0 + $0x158] sm:$0x44]
  %v6862 = vld [vmem:[%s0 + $0x170] sm:$0x44]
  %v6863 = vld [vmem:[%s0 + $0x178] sm:$0x44]
  %v6864 = vld [vmem:[%s0 + $0x190] sm:$0x44]
  %v6865 = vld [vmem:[%s0 + $0x198] sm:$0x44]
  %v6866 = vld [vmem:[%s0 + $0x1b0] sm:$0x44]
  %v6867 = vld [vmem:[%s0 + $0x1b8] sm:$0x44]
  %v6868 = vld [vmem:[%s0 + $0x1d0] sm:$0x44]
  %v6869 = vld [vmem:[%s0 + $0x1d8] sm:$0x44]
  %v6870 = vld [vmem:[%s0 + $0x1f0] sm:$0x44]
  %v6871 = vld [vmem:[%s0 + $0x1f8] sm:$0x44]
  %v6872 = vunpack.c.l.bf16 %v6840
  %v6873 = vunpack.c.h.bf16 %v6840
  %v6874 = vunpack.c.l.bf16 %v6841
  %v6875 = vunpack.c.h.bf16 %v6841
  %v6876 = vunpack.c.l.bf16 %v6842
  %v6877 = vunpack.c.h.bf16 %v6842
  %v6878 = vunpack.c.l.bf16 %v6843
  %v6879 = vunpack.c.h.bf16 %v6843
  %v6880 = vunpack.c.l.bf16 %v6844
  %v6881 = vunpack.c.h.bf16 %v6844
  %v6882 = vunpack.c.l.bf16 %v6845
  %v6883 = vunpack.c.h.bf16 %v6845
  %v6884 = vunpack.c.l.bf16 %v6846
  %v6885 = vunpack.c.h.bf16 %v6846
  %v6886 = vunpack.c.l.bf16 %v6847
  %v6887 = vunpack.c.h.bf16 %v6847
  %v6888 = vunpack.c.l.bf16 %v6848
  %v6889 = vunpack.c.h.bf16 %v6848
  %v6890 = vunpack.c.l.bf16 %v6849
  %v6891 = vunpack.c.h.bf16 %v6849
  %v6892 = vunpack.c.l.bf16 %v6850
  %v6893 = vunpack.c.h.bf16 %v6850
  %v6894 = vunpack.c.l.bf16 %v6851
  %v6895 = vunpack.c.h.bf16 %v6851
  %v6896 = vunpack.c.l.bf16 %v6852
  %v6897 = vunpack.c.h.bf16 %v6852
  %v6898 = vunpack.c.l.bf16 %v6853
  %v6899 = vunpack.c.h.bf16 %v6853
  %v6900 = vunpack.c.l.bf16 %v6854
  %v6901 = vunpack.c.h.bf16 %v6854
  %v6902 = vunpack.c.l.bf16 %v6855
  %v6903 = vunpack.c.h.bf16 %v6855
  %v6904 = vunpack.c.l.bf16 %v6856
  %v6905 = vunpack.c.h.bf16 %v6856
  %v6906 = vunpack.c.l.bf16 %v6857
  %v6907 = vunpack.c.h.bf16 %v6857
  %v6908 = vunpack.c.l.bf16 %v6858
  %v6909 = vunpack.c.h.bf16 %v6858
  %v6910 = vunpack.c.l.bf16 %v6859
  %v6911 = vunpack.c.h.bf16 %v6859
  %v6912 = vunpack.c.l.bf16 %v6860
  %v6913 = vunpack.c.h.bf16 %v6860
  %v6914 = vunpack.c.l.bf16 %v6861
  %v6915 = vunpack.c.h.bf16 %v6861
  %v6916 = vunpack.c.l.bf16 %v6862
  %v6917 = vunpack.c.h.bf16 %v6862
  %v6918 = vunpack.c.l.bf16 %v6863
  %v6919 = vunpack.c.h.bf16 %v6863
  %v6920 = vunpack.c.l.bf16 %v6864
  %v6921 = vunpack.c.h.bf16 %v6864
  %v6922 = vunpack.c.l.bf16 %v6865
  %v6923 = vunpack.c.h.bf16 %v6865
  %v6924 = vunpack.c.l.bf16 %v6866
  %v6925 = vunpack.c.h.bf16 %v6866
  %v6926 = vunpack.c.l.bf16 %v6867
  %v6927 = vunpack.c.h.bf16 %v6867
  %v6928 = vunpack.c.l.bf16 %v6868
  %v6929 = vunpack.c.h.bf16 %v6868
  %v6930 = vunpack.c.l.bf16 %v6869
  %v6931 = vunpack.c.h.bf16 %v6869
  %v6932 = vunpack.c.l.bf16 %v6870
  %v6933 = vunpack.c.h.bf16 %v6870
  %v6934 = vunpack.c.l.bf16 %v6871
  %v6935 = vunpack.c.h.bf16 %v6871
  %v7000 = vrot.slane %v6872, 5
  %v7001 = vrot.slane %v6876, 4
  %v7002 = vsel %vm377, %v7001, %v7000
  %v7003 = vrot.slane %v6880, 3
  %v7004 = vsel %vm380, %v7003, %v7002
  %v7005 = vrot.slane %v6884, 2
  %v7006 = vsel %vm383, %v7005, %v7004
  %v7007 = vrot.slane %v6888, 1
  %v7008 = vsel %vm386, %v7007, %v7006
  %v7009 = vsel %vm389, %v6892, %v7008
  %v7010 = vrot.slane %v6896, 7
  %v7011 = vsel %vm392, %v7010, %v7009
  %v7012 = vrot.slane %v6900, 6
  %v7013 = vsel %vm395, %v7012, %v7011
  %v7014 = vrot.slane %v6873, 5
  %v7015 = vrot.slane %v6877, 4
  %v7016 = vsel %vm377, %v7015, %v7014
  %v7017 = vrot.slane %v6881, 3
  %v7018 = vsel %vm380, %v7017, %v7016
  %v7019 = vrot.slane %v6885, 2
  %v7020 = vsel %vm383, %v7019, %v7018
  %v7021 = vrot.slane %v6889, 1
  %v7022 = vsel %vm386, %v7021, %v7020
  %v7023 = vsel %vm389, %v6893, %v7022
  %v7024 = vrot.slane %v6897, 7
  %v7025 = vsel %vm392, %v7024, %v7023
  %v7026 = vrot.slane %v6901, 6
  %v7027 = vsel %vm395, %v7026, %v7025
  %v7028 = vrot.slane %v6874, 5
  %v7029 = vrot.slane %v6878, 4
  %v7030 = vsel %vm377, %v7029, %v7028
  %v7031 = vrot.slane %v6882, 3
  %v7032 = vsel %vm380, %v7031, %v7030
  %v7033 = vrot.slane %v6886, 2
  %v7034 = vsel %vm383, %v7033, %v7032
  %v7035 = vrot.slane %v6890, 1
  %v7036 = vsel %vm386, %v7035, %v7034
  %v7037 = vsel %vm389, %v6894, %v7036
  %v7038 = vrot.slane %v6898, 7
  %v7039 = vsel %vm392, %v7038, %v7037
  %v7040 = vrot.slane %v6902, 6
  %v7041 = vsel %vm395, %v7040, %v7039
  %v7042 = vrot.slane %v6875, 5
  %v7043 = vrot.slane %v6879, 4
  %v7044 = vsel %vm377, %v7043, %v7042
  %v7045 = vrot.slane %v6883, 3
  %v7046 = vsel %vm380, %v7045, %v7044
  %v7047 = vrot.slane %v6887, 2
  %v7048 = vsel %vm383, %v7047, %v7046
  %v7049 = vrot.slane %v6891, 1
  %v7050 = vsel %vm386, %v7049, %v7048
  %v7051 = vsel %vm389, %v6895, %v7050
  %v7052 = vrot.slane %v6899, 7
  %v7053 = vsel %vm392, %v7052, %v7051
  %v7054 = vrot.slane %v6903, 6
  %v7055 = vsel %vm395, %v7054, %v7053
  %v7056 = vrot.slane %v6904, 5
  %v7057 = vrot.slane %v6908, 4
  %v7058 = vsel %vm377, %v7057, %v7056
  %v7059 = vrot.slane %v6912, 3
  %v7060 = vsel %vm380, %v7059, %v7058
  %v7061 = vrot.slane %v6916, 2
  %v7062 = vsel %vm383, %v7061, %v7060
  %v7063 = vrot.slane %v6920, 1
  %v7064 = vsel %vm386, %v7063, %v7062
  %v7065 = vsel %vm389, %v6924, %v7064
  %v7066 = vrot.slane %v6928, 7
  %v7067 = vsel %vm392, %v7066, %v7065
  %v7068 = vrot.slane %v6932, 6
  %v7069 = vsel %vm395, %v7068, %v7067
  %v7070 = vrot.slane %v6905, 5
  %v7071 = vrot.slane %v6909, 4
  %v7072 = vsel %vm377, %v7071, %v7070
  %v7073 = vrot.slane %v6913, 3
  %v7074 = vsel %vm380, %v7073, %v7072
  %v7075 = vrot.slane %v6917, 2
  %v7076 = vsel %vm383, %v7075, %v7074
  %v7077 = vrot.slane %v6921, 1
  %v7078 = vsel %vm386, %v7077, %v7076
  %v7079 = vsel %vm389, %v6925, %v7078
  %v7080 = vrot.slane %v6929, 7
  %v7081 = vsel %vm392, %v7080, %v7079
  %v7082 = vrot.slane %v6933, 6
  %v7083 = vsel %vm395, %v7082, %v7081
  %v7084 = vrot.slane %v6906, 5
  %v7085 = vrot.slane %v6910, 4
  %v7086 = vsel %vm377, %v7085, %v7084
  %v7087 = vrot.slane %v6914, 3
  %v7088 = vsel %vm380, %v7087, %v7086
  %v7089 = vrot.slane %v6918, 2
  %v7090 = vsel %vm383, %v7089, %v7088
  %v7091 = vrot.slane %v6922, 1
  %v7092 = vsel %vm386, %v7091, %v7090
  %v7093 = vsel %vm389, %v6926, %v7092
  %v7094 = vrot.slane %v6930, 7
  %v7095 = vsel %vm392, %v7094, %v7093
  %v7096 = vrot.slane %v6934, 6
  %v7097 = vsel %vm395, %v7096, %v7095
  %v7098 = vrot.slane %v6907, 5
  %v7099 = vrot.slane %v6911, 4
  %v7100 = vsel %vm377, %v7099, %v7098
  %v7101 = vrot.slane %v6915, 3
  %v7102 = vsel %vm380, %v7101, %v7100
  %v7103 = vrot.slane %v6919, 2
  %v7104 = vsel %vm383, %v7103, %v7102
  %v7105 = vrot.slane %v6923, 1
  %v7106 = vsel %vm386, %v7105, %v7104
  %v7107 = vsel %vm389, %v6927, %v7106
  %v7108 = vrot.slane %v6931, 7
  %v7109 = vsel %vm392, %v7108, %v7107
  %v7110 = vrot.slane %v6935, 6
  %v7111 = vsel %vm395, %v7110, %v7109
  %7120 = vmatpush.bf16.msra.mxu0 %v276
  %7121 = vmatpush.bf16.msra.mxu0 %v272
  %7122 = vmatpush.bf16.msra.mxu0 %v268
  %7123 = vmatpush.bf16.msra.mxu0 %v264
  %7124 = vmatpush.bf16.msra.mxu0 %v260
  %7125 = vmatpush.bf16.msra.mxu0 %v256
  %7126 = vmatpush.bf16.msra.mxu0 %v252
  %7127 = vmatpush.bf16.msra.mxu0 %v248
  %7128 = vmatmul.bf16.gmra.mxu0 %v6839
  %v7129 = vpop.f32.mrf.mxu0
  %v7130 = vadd.f32 %v7013, %v7129
  %v7131 = vpop.f32.mrf.mxu0
  %v7132 = vadd.f32 %v7069, %v7131
  %7133 = vdwg.mxu0
  %7134 = vmatpush.bf16.msra.mxu0 %v277
  %7135 = vmatpush.bf16.msra.mxu0 %v273
  %7136 = vmatpush.bf16.msra.mxu0 %v269
  %7137 = vmatpush.bf16.msra.mxu0 %v265
  %7138 = vmatpush.bf16.msra.mxu0 %v261
  %7139 = vmatpush.bf16.msra.mxu0 %v257
  %7140 = vmatpush.bf16.msra.mxu0 %v253
  %7141 = vmatpush.bf16.msra.mxu0 %v249
  %7142 = vmatmul.bf16.gmra.mxu0 %v6839
  %v7143 = vpop.f32.mrf.mxu0
  %v7144 = vadd.f32 %v7027, %v7143
  %v7145 = vpop.f32.mrf.mxu0
  %v7146 = vadd.f32 %v7083, %v7145
  %7147 = vdwg.mxu0
  %7148 = vmatpush.bf16.msra.mxu0 %v278
  %7149 = vmatpush.bf16.msra.mxu0 %v274
  %7150 = vmatpush.bf16.msra.mxu0 %v270
  %7151 = vmatpush.bf16.msra.mxu0 %v266
  %7152 = vmatpush.bf16.msra.mxu0 %v262
  %7153 = vmatpush.bf16.msra.mxu0 %v258
  %7154 = vmatpush.bf16.msra.mxu0 %v254
  %7155 = vmatpush.bf16.msra.mxu0 %v250
  %7156 = vmatmul.bf16.gmra.mxu0 %v6839
  %v7157 = vpop.f32.mrf.mxu0
  %v7158 = vadd.f32 %v7041, %v7157
  %v7159 = vpop.f32.mrf.mxu0
  %v7160 = vadd.f32 %v7097, %v7159
  %7161 = vdwg.mxu0
  %7162 = vmatpush.bf16.msra.mxu0 %v279
  %7163 = vmatpush.bf16.msra.mxu0 %v275
  %7164 = vmatpush.bf16.msra.mxu0 %v271
  %7165 = vmatpush.bf16.msra.mxu0 %v267
  %7166 = vmatpush.bf16.msra.mxu0 %v263
  %7167 = vmatpush.bf16.msra.mxu0 %v259
  %7168 = vmatpush.bf16.msra.mxu0 %v255
  %7169 = vmatpush.bf16.msra.mxu0 %v251
  %7170 = vmatmul.bf16.gmra.mxu0 %v6839
  %v7171 = vpop.f32.mrf.mxu0
  %v7172 = vadd.f32 %v7055, %v7171
  %v7173 = vpop.f32.mrf.mxu0
  %v7174 = vadd.f32 %v7111, %v7173
  %7175 = vdwg.mxu0
  %v7176 = vxor.u32 %v7130, 2147483648
  %v7177 = vxor.u32 %v7132, 2147483648
  %v7178 = vmul.f32 %v7176, 1.442695
  %v7179 = vpow.pop %v7178
  %v7180 = vmul.f32 %v7177, 1.442695
  %v7181 = vpow.pop %v7180
  %v7182 = vadd.f32 %v7179, 1.0
  %v7183 = vadd.f32 %v7181, 1.0
  %v7184 = vrcp.pop %v7182
  %v7185 = vmul.f32 %v7182, %v7184
  %v7186 = vsub.f32 1.0, %v7185
  %v7187 = vmul.f32 %v7184, %v7186
  %v7188 = vadd.f32 %v7184, %v7187
  %vm7189 = vweird.f32 %v7182
  %vm7190 = vweird.f32 %v7184
  %vm7191 = vmor %vm7189, %vm7190
  %v7192 = vsel %vm7191, %v7184, %v7188
  %v7193 = vand.u32 2147483647, %v7182
  %vm7194 = vcmp.eq.f32.partialorder %v7193, 8.507059e+37
  %v7195 = vand.u32 %v7182, 2147483648
  %v7196 = vor.u32 1.1754944e-38, %v7195
  %v7197 = vsel %vm7194, %v7196, %v7192
  %v7198 = vmul.f32 1.0, %v7197
  %v7199 = vrcp.pop %v7183
  %v7200 = vmul.f32 %v7183, %v7199
  %v7201 = vsub.f32 1.0, %v7200
  %v7202 = vmul.f32 %v7199, %v7201
  %v7203 = vadd.f32 %v7199, %v7202
  %vm7204 = vweird.f32 %v7183
  %vm7205 = vweird.f32 %v7199
  %vm7206 = vmor %vm7204, %vm7205
  %v7207 = vsel %vm7206, %v7199, %v7203
  %v7208 = vand.u32 2147483647, %v7183
  %vm7209 = vcmp.eq.f32.partialorder %v7208, 8.507059e+37
  %v7210 = vand.u32 %v7183, 2147483648
  %v7211 = vor.u32 1.1754944e-38, %v7210
  %v7212 = vsel %vm7209, %v7211, %v7207
  %v7213 = vmul.f32 1.0, %v7212
  %v7214 = vxor.u32 %v7144, 2147483648
  %v7215 = vxor.u32 %v7146, 2147483648
  %v7216 = vmul.f32 %v7214, 1.442695
  %v7217 = vpow.pop %v7216
  %v7218 = vmul.f32 %v7215, 1.442695
  %v7219 = vpow.pop %v7218
  %v7220 = vadd.f32 %v7217, 1.0
  %v7221 = vadd.f32 %v7219, 1.0
  %v7222 = vrcp.pop %v7220
  %v7223 = vmul.f32 %v7220, %v7222
  %v7224 = vsub.f32 1.0, %v7223
  %v7225 = vmul.f32 %v7222, %v7224
  %v7226 = vadd.f32 %v7222, %v7225
  %vm7227 = vweird.f32 %v7220
  %vm7228 = vweird.f32 %v7222
  %vm7229 = vmor %vm7227, %vm7228
  %v7230 = vsel %vm7229, %v7222, %v7226
  %v7231 = vand.u32 2147483647, %v7220
  %vm7232 = vcmp.eq.f32.partialorder %v7231, 8.507059e+37
  %v7233 = vand.u32 %v7220, 2147483648
  %v7234 = vor.u32 1.1754944e-38, %v7233
  %v7235 = vsel %vm7232, %v7234, %v7230
  %v7236 = vmul.f32 1.0, %v7235
  %v7237 = vrcp.pop %v7221
  %v7238 = vmul.f32 %v7221, %v7237
  %v7239 = vsub.f32 1.0, %v7238
  %v7240 = vmul.f32 %v7237, %v7239
  %v7241 = vadd.f32 %v7237, %v7240
  %vm7242 = vweird.f32 %v7221
  %vm7243 = vweird.f32 %v7237
  %vm7244 = vmor %vm7242, %vm7243
  %v7245 = vsel %vm7244, %v7237, %v7241
  %v7246 = vand.u32 2147483647, %v7221
  %vm7247 = vcmp.eq.f32.partialorder %v7246, 8.507059e+37
  %v7248 = vand.u32 %v7221, 2147483648
  %v7249 = vor.u32 1.1754944e-38, %v7248
  %v7250 = vsel %vm7247, %v7249, %v7245
  %v7251 = vmul.f32 1.0, %v7250
  %v7252 = vtanh.pop %v7158
  %v7253 = vtanh.pop %v7160
  %v7254 = vxor.u32 %v7172, 2147483648
  %v7255 = vxor.u32 %v7174, 2147483648
  %v7256 = vmul.f32 %v7254, 1.442695
  %v7257 = vpow.pop %v7256
  %v7258 = vmul.f32 %v7255, 1.442695
  %v7259 = vpow.pop %v7258
  %v7260 = vadd.f32 %v7257, 1.0
  %v7261 = vadd.f32 %v7259, 1.0
  %v7262 = vrcp.pop %v7260
  %v7263 = vmul.f32 %v7260, %v7262
  %v7264 = vsub.f32 1.0, %v7263
  %v7265 = vmul.f32 %v7262, %v7264
  %v7266 = vadd.f32 %v7262, %v7265
  %vm7267 = vweird.f32 %v7260
  %vm7268 = vweird.f32 %v7262
  %vm7269 = vmor %vm7267, %vm7268
  %v7270 = vsel %vm7269, %v7262, %v7266
  %v7271 = vand.u32 2147483647, %v7260
  %vm7272 = vcmp.eq.f32.partialorder %v7271, 8.507059e+37
  %v7273 = vand.u32 %v7260, 2147483648
  %v7274 = vor.u32 1.1754944e-38, %v7273
  %v7275 = vsel %vm7272, %v7274, %v7270
  %v7276 = vmul.f32 1.0, %v7275
  %v7277 = vrcp.pop %v7261
  %v7278 = vmul.f32 %v7261, %v7277
  %v7279 = vsub.f32 1.0, %v7278
  %v7280 = vmul.f32 %v7277, %v7279
  %v7281 = vadd.f32 %v7277, %v7280
  %vm7282 = vweird.f32 %v7261
  %vm7283 = vweird.f32 %v7277
  %vm7284 = vmor %vm7282, %vm7283
  %v7285 = vsel %vm7284, %v7277, %v7281
  %v7286 = vand.u32 2147483647, %v7261
  %vm7287 = vcmp.eq.f32.partialorder %v7286, 8.507059e+37
  %v7288 = vand.u32 %v7261, 2147483648
  %v7289 = vor.u32 1.1754944e-38, %v7288
  %v7290 = vsel %vm7287, %v7289, %v7285
  %v7291 = vmul.f32 1.0, %v7290
  %v7292 = vmul.f32 %v7236, %v6787
  %v7293 = vmul.f32 %v7251, %v6788
  %v7294 = vmul.f32 %v7198, %v7252
  %v7295 = vmul.f32 %v7213, %v7253
  %v7296 = vadd.f32 %v7292, %v7294
  %v7297 = vadd.f32 %v7293, %v7295
  %v7298 = vtanh.pop %v7296
  %v7299 = vtanh.pop %v7297
  %v7300 = vmul.f32 %v7276, %v7298
  %v7301 = vmul.f32 %v7291, %v7299
  %v7304 = vrot.slane %v7300, 1
  %v7305 = vrot.slane %v7300, 2
  %v7306 = vrot.slane %v7300, 3
  %v7307 = vrot.slane %v7300, 4
  %v7308 = vrot.slane %v7300, 5
  %v7309 = vrot.slane %v7300, 6
  %v7310 = vrot.slane %v7300, 7
  %v7311 = vrot.slane %v7301, 1
  %v7312 = vrot.slane %v7301, 2
  %v7313 = vrot.slane %v7301, 3
  %v7314 = vrot.slane %v7301, 4
  %v7315 = vrot.slane %v7301, 5
  %v7316 = vrot.slane %v7301, 6
  %v7317 = vrot.slane %v7301, 7
  %7332 = vst [vmem:[%s2 + $0xd] sm:$0x1] %v7300
  %7333 = vst [vmem:[%s2 + $0x1d] sm:$0x1] %v7304
  %7334 = vst [vmem:[%s2 + $0x2d] sm:$0x1] %v7305
  %7335 = vst [vmem:[%s2 + $0x3d] sm:$0x1] %v7306
  %7336 = vst [vmem:[%s2 + $0x4d] sm:$0x1] %v7307
  %7337 = vst [vmem:[%s2 + $0x5d] sm:$0x1] %v7308
  %7338 = vst [vmem:[%s2 + $0x6d] sm:$0x1] %v7309
  %7339 = vst [vmem:[%s2 + $0x7d] sm:$0x1] %v7310
  %7340 = vst [vmem:[%s2 + $0x8d] sm:$0x1] %v7301
  %7341 = vst [vmem:[%s2 + $0x9d] sm:$0x1] %v7311
  %7342 = vst [vmem:[%s2 + $0xad] sm:$0x1] %v7312
  %7343 = vst [vmem:[%s2 + $0xbd] sm:$0x1] %v7313
  %7344 = vst [vmem:[%s2 + $0xcd] sm:$0x1] %v7314
  %7345 = vst [vmem:[%s2 + $0xdd] sm:$0x1] %v7315
  %7346 = vst [vmem:[%s2 + $0xed] sm:$0x1] %v7316
  %7347 = vst [vmem:[%s2 + $0xfd] sm:$0x1] %v7317
  %v7348 = vpack.c.bf16 %v7301, %v7300
  %v7349 = vld [vmem:[%s0 + $0x10] sm:$0x88]
  %v7350 = vld [vmem:[%s0 + $0x18] sm:$0x88]
  %v7351 = vld [vmem:[%s0 + $0x30] sm:$0x88]
  %v7352 = vld [vmem:[%s0 + $0x38] sm:$0x88]
  %v7353 = vld [vmem:[%s0 + $0x50] sm:$0x88]
  %v7354 = vld [vmem:[%s0 + $0x58] sm:$0x88]
  %v7355 = vld [vmem:[%s0 + $0x70] sm:$0x88]
  %v7356 = vld [vmem:[%s0 + $0x78] sm:$0x88]
  %v7357 = vld [vmem:[%s0 + $0x90] sm:$0x88]
  %v7358 = vld [vmem:[%s0 + $0x98] sm:$0x88]
  %v7359 = vld [vmem:[%s0 + $0xb0] sm:$0x88]
  %v7360 = vld [vmem:[%s0 + $0xb8] sm:$0x88]
  %v7361 = vld [vmem:[%s0 + $0xd0] sm:$0x88]
  %v7362 = vld [vmem:[%s0 + $0xd8] sm:$0x88]
  %v7363 = vld [vmem:[%s0 + $0xf0] sm:$0x88]
  %v7364 = vld [vmem:[%s0 + $0xf8] sm:$0x88]
  %v7365 = vld [vmem:[%s0 + $0x110] sm:$0x88]
  %v7366 = vld [vmem:[%s0 + $0x118] sm:$0x88]
  %v7367 = vld [vmem:[%s0 + $0x130] sm:$0x88]
  %v7368 = vld [vmem:[%s0 + $0x138] sm:$0x88]
  %v7369 = vld [vmem:[%s0 + $0x150] sm:$0x88]
  %v7370 = vld [vmem:[%s0 + $0x158] sm:$0x88]
  %v7371 = vld [vmem:[%s0 + $0x170] sm:$0x88]
  %v7372 = vld [vmem:[%s0 + $0x178] sm:$0x88]
  %v7373 = vld [vmem:[%s0 + $0x190] sm:$0x88]
  %v7374 = vld [vmem:[%s0 + $0x198] sm:$0x88]
  %v7375 = vld [vmem:[%s0 + $0x1b0] sm:$0x88]
  %v7376 = vld [vmem:[%s0 + $0x1b8] sm:$0x88]
  %v7377 = vld [vmem:[%s0 + $0x1d0] sm:$0x88]
  %v7378 = vld [vmem:[%s0 + $0x1d8] sm:$0x88]
  %v7379 = vld [vmem:[%s0 + $0x1f0] sm:$0x88]
  %v7380 = vld [vmem:[%s0 + $0x1f8] sm:$0x88]
  %v7381 = vunpack.c.l.bf16 %v7349
  %v7382 = vunpack.c.h.bf16 %v7349
  %v7383 = vunpack.c.l.bf16 %v7350
  %v7384 = vunpack.c.h.bf16 %v7350
  %v7385 = vunpack.c.l.bf16 %v7351
  %v7386 = vunpack.c.h.bf16 %v7351
  %v7387 = vunpack.c.l.bf16 %v7352
  %v7388 = vunpack.c.h.bf16 %v7352
  %v7389 = vunpack.c.l.bf16 %v7353
  %v7390 = vunpack.c.h.bf16 %v7353
  %v7391 = vunpack.c.l.bf16 %v7354
  %v7392 = vunpack.c.h.bf16 %v7354
  %v7393 = vunpack.c.l.bf16 %v7355
  %v7394 = vunpack.c.h.bf16 %v7355
  %v7395 = vunpack.c.l.bf16 %v7356
  %v7396 = vunpack.c.h.bf16 %v7356
  %v7397 = vunpack.c.l.bf16 %v7357
  %v7398 = vunpack.c.h.bf16 %v7357
  %v7399 = vunpack.c.l.bf16 %v7358
  %v7400 = vunpack.c.h.bf16 %v7358
  %v7401 = vunpack.c.l.bf16 %v7359
  %v7402 = vunpack.c.h.bf16 %v7359
  %v7403 = vunpack.c.l.bf16 %v7360
  %v7404 = vunpack.c.h.bf16 %v7360
  %v7405 = vunpack.c.l.bf16 %v7361
  %v7406 = vunpack.c.h.bf16 %v7361
  %v7407 = vunpack.c.l.bf16 %v7362
  %v7408 = vunpack.c.h.bf16 %v7362
  %v7409 = vunpack.c.l.bf16 %v7363
  %v7410 = vunpack.c.h.bf16 %v7363
  %v7411 = vunpack.c.l.bf16 %v7364
  %v7412 = vunpack.c.h.bf16 %v7364
  %v7413 = vunpack.c.l.bf16 %v7365
  %v7414 = vunpack.c.h.bf16 %v7365
  %v7415 = vunpack.c.l.bf16 %v7366
  %v7416 = vunpack.c.h.bf16 %v7366
  %v7417 = vunpack.c.l.bf16 %v7367
  %v7418 = vunpack.c.h.bf16 %v7367
  %v7419 = vunpack.c.l.bf16 %v7368
  %v7420 = vunpack.c.h.bf16 %v7368
  %v7421 = vunpack.c.l.bf16 %v7369
  %v7422 = vunpack.c.h.bf16 %v7369
  %v7423 = vunpack.c.l.bf16 %v7370
  %v7424 = vunpack.c.h.bf16 %v7370
  %v7425 = vunpack.c.l.bf16 %v7371
  %v7426 = vunpack.c.h.bf16 %v7371
  %v7427 = vunpack.c.l.bf16 %v7372
  %v7428 = vunpack.c.h.bf16 %v7372
  %v7429 = vunpack.c.l.bf16 %v7373
  %v7430 = vunpack.c.h.bf16 %v7373
  %v7431 = vunpack.c.l.bf16 %v7374
  %v7432 = vunpack.c.h.bf16 %v7374
  %v7433 = vunpack.c.l.bf16 %v7375
  %v7434 = vunpack.c.h.bf16 %v7375
  %v7435 = vunpack.c.l.bf16 %v7376
  %v7436 = vunpack.c.h.bf16 %v7376
  %v7437 = vunpack.c.l.bf16 %v7377
  %v7438 = vunpack.c.h.bf16 %v7377
  %v7439 = vunpack.c.l.bf16 %v7378
  %v7440 = vunpack.c.h.bf16 %v7378
  %v7441 = vunpack.c.l.bf16 %v7379
  %v7442 = vunpack.c.h.bf16 %v7379
  %v7443 = vunpack.c.l.bf16 %v7380
  %v7444 = vunpack.c.h.bf16 %v7380
  %v7509 = vrot.slane %v7381, 6
  %v7510 = vrot.slane %v7385, 5
  %v7511 = vsel %vm377, %v7510, %v7509
  %v7512 = vrot.slane %v7389, 4
  %v7513 = vsel %vm380, %v7512, %v7511
  %v7514 = vrot.slane %v7393, 3
  %v7515 = vsel %vm383, %v7514, %v7513
  %v7516 = vrot.slane %v7397, 2
  %v7517 = vsel %vm386, %v7516, %v7515
  %v7518 = vrot.slane %v7401, 1
  %v7519 = vsel %vm389, %v7518, %v7517
  %v7520 = vsel %vm392, %v7405, %v7519
  %v7521 = vrot.slane %v7409, 7
  %v7522 = vsel %vm395, %v7521, %v7520
  %v7523 = vrot.slane %v7382, 6
  %v7524 = vrot.slane %v7386, 5
  %v7525 = vsel %vm377, %v7524, %v7523
  %v7526 = vrot.slane %v7390, 4
  %v7527 = vsel %vm380, %v7526, %v7525
  %v7528 = vrot.slane %v7394, 3
  %v7529 = vsel %vm383, %v7528, %v7527
  %v7530 = vrot.slane %v7398, 2
  %v7531 = vsel %vm386, %v7530, %v7529
  %v7532 = vrot.slane %v7402, 1
  %v7533 = vsel %vm389, %v7532, %v7531
  %v7534 = vsel %vm392, %v7406, %v7533
  %v7535 = vrot.slane %v7410, 7
  %v7536 = vsel %vm395, %v7535, %v7534
  %v7537 = vrot.slane %v7383, 6
  %v7538 = vrot.slane %v7387, 5
  %v7539 = vsel %vm377, %v7538, %v7537
  %v7540 = vrot.slane %v7391, 4
  %v7541 = vsel %vm380, %v7540, %v7539
  %v7542 = vrot.slane %v7395, 3
  %v7543 = vsel %vm383, %v7542, %v7541
  %v7544 = vrot.slane %v7399, 2
  %v7545 = vsel %vm386, %v7544, %v7543
  %v7546 = vrot.slane %v7403, 1
  %v7547 = vsel %vm389, %v7546, %v7545
  %v7548 = vsel %vm392, %v7407, %v7547
  %v7549 = vrot.slane %v7411, 7
  %v7550 = vsel %vm395, %v7549, %v7548
  %v7551 = vrot.slane %v7384, 6
  %v7552 = vrot.slane %v7388, 5
  %v7553 = vsel %vm377, %v7552, %v7551
  %v7554 = vrot.slane %v7392, 4
  %v7555 = vsel %vm380, %v7554, %v7553
  %v7556 = vrot.slane %v7396, 3
  %v7557 = vsel %vm383, %v7556, %v7555
  %v7558 = vrot.slane %v7400, 2
  %v7559 = vsel %vm386, %v7558, %v7557
  %v7560 = vrot.slane %v7404, 1
  %v7561 = vsel %vm389, %v7560, %v7559
  %v7562 = vsel %vm392, %v7408, %v7561
  %v7563 = vrot.slane %v7412, 7
  %v7564 = vsel %vm395, %v7563, %v7562
  %v7565 = vrot.slane %v7413, 6
  %v7566 = vrot.slane %v7417, 5
  %v7567 = vsel %vm377, %v7566, %v7565
  %v7568 = vrot.slane %v7421, 4
  %v7569 = vsel %vm380, %v7568, %v7567
  %v7570 = vrot.slane %v7425, 3
  %v7571 = vsel %vm383, %v7570, %v7569
  %v7572 = vrot.slane %v7429, 2
  %v7573 = vsel %vm386, %v7572, %v7571
  %v7574 = vrot.slane %v7433, 1
  %v7575 = vsel %vm389, %v7574, %v7573
  %v7576 = vsel %vm392, %v7437, %v7575
  %v7577 = vrot.slane %v7441, 7
  %v7578 = vsel %vm395, %v7577, %v7576
  %v7579 = vrot.slane %v7414, 6
  %v7580 = vrot.slane %v7418, 5
  %v7581 = vsel %vm377, %v7580, %v7579
  %v7582 = vrot.slane %v7422, 4
  %v7583 = vsel %vm380, %v7582, %v7581
  %v7584 = vrot.slane %v7426, 3
  %v7585 = vsel %vm383, %v7584, %v7583
  %v7586 = vrot.slane %v7430, 2
  %v7587 = vsel %vm386, %v7586, %v7585
  %v7588 = vrot.slane %v7434, 1
  %v7589 = vsel %vm389, %v7588, %v7587
  %v7590 = vsel %vm392, %v7438, %v7589
  %v7591 = vrot.slane %v7442, 7
  %v7592 = vsel %vm395, %v7591, %v7590
  %v7593 = vrot.slane %v7415, 6
  %v7594 = vrot.slane %v7419, 5
  %v7595 = vsel %vm377, %v7594, %v7593
  %v7596 = vrot.slane %v7423, 4
  %v7597 = vsel %vm380, %v7596, %v7595
  %v7598 = vrot.slane %v7427, 3
  %v7599 = vsel %vm383, %v7598, %v7597
  %v7600 = vrot.slane %v7431, 2
  %v7601 = vsel %vm386, %v7600, %v7599
  %v7602 = vrot.slane %v7435, 1
  %v7603 = vsel %vm389, %v7602, %v7601
  %v7604 = vsel %vm392, %v7439, %v7603
  %v7605 = vrot.slane %v7443, 7
  %v7606 = vsel %vm395, %v7605, %v7604
  %v7607 = vrot.slane %v7416, 6
  %v7608 = vrot.slane %v7420, 5
  %v7609 = vsel %vm377, %v7608, %v7607
  %v7610 = vrot.slane %v7424, 4
  %v7611 = vsel %vm380, %v7610, %v7609
  %v7612 = vrot.slane %v7428, 3
  %v7613 = vsel %vm383, %v7612, %v7611
  %v7614 = vrot.slane %v7432, 2
  %v7615 = vsel %vm386, %v7614, %v7613
  %v7616 = vrot.slane %v7436, 1
  %v7617 = vsel %vm389, %v7616, %v7615
  %v7618 = vsel %vm392, %v7440, %v7617
  %v7619 = vrot.slane %v7444, 7
  %v7620 = vsel %vm395, %v7619, %v7618
  %7629 = vmatpush.bf16.msra.mxu0 %v276
  %7630 = vmatpush.bf16.msra.mxu0 %v272
  %7631 = vmatpush.bf16.msra.mxu0 %v268
  %7632 = vmatpush.bf16.msra.mxu0 %v264
  %7633 = vmatpush.bf16.msra.mxu0 %v260
  %7634 = vmatpush.bf16.msra.mxu0 %v256
  %7635 = vmatpush.bf16.msra.mxu0 %v252
  %7636 = vmatpush.bf16.msra.mxu0 %v248
  %7637 = vmatmul.bf16.gmra.mxu0 %v7348
  %v7638 = vpop.f32.mrf.mxu0
  %v7639 = vadd.f32 %v7522, %v7638
  %v7640 = vpop.f32.mrf.mxu0
  %v7641 = vadd.f32 %v7578, %v7640
  %7642 = vdwg.mxu0
  %7643 = vmatpush.bf16.msra.mxu0 %v277
  %7644 = vmatpush.bf16.msra.mxu0 %v273
  %7645 = vmatpush.bf16.msra.mxu0 %v269
  %7646 = vmatpush.bf16.msra.mxu0 %v265
  %7647 = vmatpush.bf16.msra.mxu0 %v261
  %7648 = vmatpush.bf16.msra.mxu0 %v257
  %7649 = vmatpush.bf16.msra.mxu0 %v253
  %7650 = vmatpush.bf16.msra.mxu0 %v249
  %7651 = vmatmul.bf16.gmra.mxu0 %v7348
  %v7652 = vpop.f32.mrf.mxu0
  %v7653 = vadd.f32 %v7536, %v7652
  %v7654 = vpop.f32.mrf.mxu0
  %v7655 = vadd.f32 %v7592, %v7654
  %7656 = vdwg.mxu0
  %7657 = vmatpush.bf16.msra.mxu0 %v278
  %7658 = vmatpush.bf16.msra.mxu0 %v274
  %7659 = vmatpush.bf16.msra.mxu0 %v270
  %7660 = vmatpush.bf16.msra.mxu0 %v266
  %7661 = vmatpush.bf16.msra.mxu0 %v262
  %7662 = vmatpush.bf16.msra.mxu0 %v258
  %7663 = vmatpush.bf16.msra.mxu0 %v254
  %7664 = vmatpush.bf16.msra.mxu0 %v250
  %7665 = vmatmul.bf16.gmra.mxu0 %v7348
  %v7666 = vpop.f32.mrf.mxu0
  %v7667 = vadd.f32 %v7550, %v7666
  %v7668 = vpop.f32.mrf.mxu0
  %v7669 = vadd.f32 %v7606, %v7668
  %7670 = vdwg.mxu0
  %7671 = vmatpush.bf16.msra.mxu0 %v279
  %7672 = vmatpush.bf16.msra.mxu0 %v275
  %7673 = vmatpush.bf16.msra.mxu0 %v271
  %7674 = vmatpush.bf16.msra.mxu0 %v267
  %7675 = vmatpush.bf16.msra.mxu0 %v263
  %7676 = vmatpush.bf16.msra.mxu0 %v259
  %7677 = vmatpush.bf16.msra.mxu0 %v255
  %7678 = vmatpush.bf16.msra.mxu0 %v251
  %7679 = vmatmul.bf16.gmra.mxu0 %v7348
  %v7680 = vpop.f32.mrf.mxu0
  %v7681 = vadd.f32 %v7564, %v7680
  %v7682 = vpop.f32.mrf.mxu0
  %v7683 = vadd.f32 %v7620, %v7682
  %7684 = vdwg.mxu0
  %v7685 = vxor.u32 %v7639, 2147483648
  %v7686 = vxor.u32 %v7641, 2147483648
  %v7687 = vmul.f32 %v7685, 1.442695
  %v7688 = vpow.pop %v7687
  %v7689 = vmul.f32 %v7686, 1.442695
  %v7690 = vpow.pop %v7689
  %v7691 = vadd.f32 %v7688, 1.0
  %v7692 = vadd.f32 %v7690, 1.0
  %v7693 = vrcp.pop %v7691
  %v7694 = vmul.f32 %v7691, %v7693
  %v7695 = vsub.f32 1.0, %v7694
  %v7696 = vmul.f32 %v7693, %v7695
  %v7697 = vadd.f32 %v7693, %v7696
  %vm7698 = vweird.f32 %v7691
  %vm7699 = vweird.f32 %v7693
  %vm7700 = vmor %vm7698, %vm7699
  %v7701 = vsel %vm7700, %v7693, %v7697
  %v7702 = vand.u32 2147483647, %v7691
  %vm7703 = vcmp.eq.f32.partialorder %v7702, 8.507059e+37
  %v7704 = vand.u32 %v7691, 2147483648
  %v7705 = vor.u32 1.1754944e-38, %v7704
  %v7706 = vsel %vm7703, %v7705, %v7701
  %v7707 = vmul.f32 1.0, %v7706
  %v7708 = vrcp.pop %v7692
  %v7709 = vmul.f32 %v7692, %v7708
  %v7710 = vsub.f32 1.0, %v7709
  %v7711 = vmul.f32 %v7708, %v7710
  %v7712 = vadd.f32 %v7708, %v7711
  %vm7713 = vweird.f32 %v7692
  %vm7714 = vweird.f32 %v7708
  %vm7715 = vmor %vm7713, %vm7714
  %v7716 = vsel %vm7715, %v7708, %v7712
  %v7717 = vand.u32 2147483647, %v7692
  %vm7718 = vcmp.eq.f32.partialorder %v7717, 8.507059e+37
  %v7719 = vand.u32 %v7692, 2147483648
  %v7720 = vor.u32 1.1754944e-38, %v7719
  %v7721 = vsel %vm7718, %v7720, %v7716
  %v7722 = vmul.f32 1.0, %v7721
  %v7723 = vxor.u32 %v7653, 2147483648
  %v7724 = vxor.u32 %v7655, 2147483648
  %v7725 = vmul.f32 %v7723, 1.442695
  %v7726 = vpow.pop %v7725
  %v7727 = vmul.f32 %v7724, 1.442695
  %v7728 = vpow.pop %v7727
  %v7729 = vadd.f32 %v7726, 1.0
  %v7730 = vadd.f32 %v7728, 1.0
  %v7731 = vrcp.pop %v7729
  %v7732 = vmul.f32 %v7729, %v7731
  %v7733 = vsub.f32 1.0, %v7732
  %v7734 = vmul.f32 %v7731, %v7733
  %v7735 = vadd.f32 %v7731, %v7734
  %vm7736 = vweird.f32 %v7729
  %vm7737 = vweird.f32 %v7731
  %vm7738 = vmor %vm7736, %vm7737
  %v7739 = vsel %vm7738, %v7731, %v7735
  %v7740 = vand.u32 2147483647, %v7729
  %vm7741 = vcmp.eq.f32.partialorder %v7740, 8.507059e+37
  %v7742 = vand.u32 %v7729, 2147483648
  %v7743 = vor.u32 1.1754944e-38, %v7742
  %v7744 = vsel %vm7741, %v7743, %v7739
  %v7745 = vmul.f32 1.0, %v7744
  %v7746 = vrcp.pop %v7730
  %v7747 = vmul.f32 %v7730, %v7746
  %v7748 = vsub.f32 1.0, %v7747
  %v7749 = vmul.f32 %v7746, %v7748
  %v7750 = vadd.f32 %v7746, %v7749
  %vm7751 = vweird.f32 %v7730
  %vm7752 = vweird.f32 %v7746
  %vm7753 = vmor %vm7751, %vm7752
  %v7754 = vsel %vm7753, %v7746, %v7750
  %v7755 = vand.u32 2147483647, %v7730
  %vm7756 = vcmp.eq.f32.partialorder %v7755, 8.507059e+37
  %v7757 = vand.u32 %v7730, 2147483648
  %v7758 = vor.u32 1.1754944e-38, %v7757
  %v7759 = vsel %vm7756, %v7758, %v7754
  %v7760 = vmul.f32 1.0, %v7759
  %v7761 = vtanh.pop %v7667
  %v7762 = vtanh.pop %v7669
  %v7763 = vxor.u32 %v7681, 2147483648
  %v7764 = vxor.u32 %v7683, 2147483648
  %v7765 = vmul.f32 %v7763, 1.442695
  %v7766 = vpow.pop %v7765
  %v7767 = vmul.f32 %v7764, 1.442695
  %v7768 = vpow.pop %v7767
  %v7769 = vadd.f32 %v7766, 1.0
  %v7770 = vadd.f32 %v7768, 1.0
  %v7771 = vrcp.pop %v7769
  %v7772 = vmul.f32 %v7769, %v7771
  %v7773 = vsub.f32 1.0, %v7772
  %v7774 = vmul.f32 %v7771, %v7773
  %v7775 = vadd.f32 %v7771, %v7774
  %vm7776 = vweird.f32 %v7769
  %vm7777 = vweird.f32 %v7771
  %vm7778 = vmor %vm7776, %vm7777
  %v7779 = vsel %vm7778, %v7771, %v7775
  %v7780 = vand.u32 2147483647, %v7769
  %vm7781 = vcmp.eq.f32.partialorder %v7780, 8.507059e+37
  %v7782 = vand.u32 %v7769, 2147483648
  %v7783 = vor.u32 1.1754944e-38, %v7782
  %v7784 = vsel %vm7781, %v7783, %v7779
  %v7785 = vmul.f32 1.0, %v7784
  %v7786 = vrcp.pop %v7770
  %v7787 = vmul.f32 %v7770, %v7786
  %v7788 = vsub.f32 1.0, %v7787
  %v7789 = vmul.f32 %v7786, %v7788
  %v7790 = vadd.f32 %v7786, %v7789
  %vm7791 = vweird.f32 %v7770
  %vm7792 = vweird.f32 %v7786
  %vm7793 = vmor %vm7791, %vm7792
  %v7794 = vsel %vm7793, %v7786, %v7790
  %v7795 = vand.u32 2147483647, %v7770
  %vm7796 = vcmp.eq.f32.partialorder %v7795, 8.507059e+37
  %v7797 = vand.u32 %v7770, 2147483648
  %v7798 = vor.u32 1.1754944e-38, %v7797
  %v7799 = vsel %vm7796, %v7798, %v7794
  %v7800 = vmul.f32 1.0, %v7799
  %v7801 = vmul.f32 %v7745, %v7296
  %v7802 = vmul.f32 %v7760, %v7297
  %v7803 = vmul.f32 %v7707, %v7761
  %v7804 = vmul.f32 %v7722, %v7762
  %v7805 = vadd.f32 %v7801, %v7803
  %v7806 = vadd.f32 %v7802, %v7804
  %v7807 = vtanh.pop %v7805
  %v7808 = vtanh.pop %v7806
  %v7809 = vmul.f32 %v7785, %v7807
  %v7810 = vmul.f32 %v7800, %v7808
  %v7813 = vrot.slane %v7809, 1
  %v7814 = vrot.slane %v7809, 2
  %v7815 = vrot.slane %v7809, 3
  %v7816 = vrot.slane %v7809, 4
  %v7817 = vrot.slane %v7809, 5
  %v7818 = vrot.slane %v7809, 6
  %v7819 = vrot.slane %v7809, 7
  %v7820 = vrot.slane %v7810, 1
  %v7821 = vrot.slane %v7810, 2
  %v7822 = vrot.slane %v7810, 3
  %v7823 = vrot.slane %v7810, 4
  %v7824 = vrot.slane %v7810, 5
  %v7825 = vrot.slane %v7810, 6
  %v7826 = vrot.slane %v7810, 7
  %7841 = vst [vmem:[%s2 + $0xe] sm:$0x1] %v7809
  %7842 = vst [vmem:[%s2 + $0x1e] sm:$0x1] %v7813
  %7843 = vst [vmem:[%s2 + $0x2e] sm:$0x1] %v7814
  %7844 = vst [vmem:[%s2 + $0x3e] sm:$0x1] %v7815
  %7845 = vst [vmem:[%s2 + $0x4e] sm:$0x1] %v7816
  %7846 = vst [vmem:[%s2 + $0x5e] sm:$0x1] %v7817
  %7847 = vst [vmem:[%s2 + $0x6e] sm:$0x1] %v7818
  %7848 = vst [vmem:[%s2 + $0x7e] sm:$0x1] %v7819
  %7849 = vst [vmem:[%s2 + $0x8e] sm:$0x1] %v7810
  %7850 = vst [vmem:[%s2 + $0x9e] sm:$0x1] %v7820
  %7851 = vst [vmem:[%s2 + $0xae] sm:$0x1] %v7821
  %7852 = vst [vmem:[%s2 + $0xbe] sm:$0x1] %v7822
  %7853 = vst [vmem:[%s2 + $0xce] sm:$0x1] %v7823
  %7854 = vst [vmem:[%s2 + $0xde] sm:$0x1] %v7824
  %7855 = vst [vmem:[%s2 + $0xee] sm:$0x1] %v7825
  %7856 = vst [vmem:[%s2 + $0xfe] sm:$0x1] %v7826
  %v7857 = vpack.c.bf16 %v7810, %v7809
  %v7858 = vld [vmem:[%s0 + $0x10] sm:$0x88]
  %v7859 = vld [vmem:[%s0 + $0x18] sm:$0x88]
  %v7860 = vld [vmem:[%s0 + $0x30] sm:$0x88]
  %v7861 = vld [vmem:[%s0 + $0x38] sm:$0x88]
  %v7862 = vld [vmem:[%s0 + $0x50] sm:$0x88]
  %v7863 = vld [vmem:[%s0 + $0x58] sm:$0x88]
  %v7864 = vld [vmem:[%s0 + $0x70] sm:$0x88]
  %v7865 = vld [vmem:[%s0 + $0x78] sm:$0x88]
  %v7866 = vld [vmem:[%s0 + $0x90] sm:$0x88]
  %v7867 = vld [vmem:[%s0 + $0x98] sm:$0x88]
  %v7868 = vld [vmem:[%s0 + $0xb0] sm:$0x88]
  %v7869 = vld [vmem:[%s0 + $0xb8] sm:$0x88]
  %v7870 = vld [vmem:[%s0 + $0xd0] sm:$0x88]
  %v7871 = vld [vmem:[%s0 + $0xd8] sm:$0x88]
  %v7872 = vld [vmem:[%s0 + $0xf0] sm:$0x88]
  %v7873 = vld [vmem:[%s0 + $0xf8] sm:$0x88]
  %v7874 = vld [vmem:[%s0 + $0x110] sm:$0x88]
  %v7875 = vld [vmem:[%s0 + $0x118] sm:$0x88]
  %v7876 = vld [vmem:[%s0 + $0x130] sm:$0x88]
  %v7877 = vld [vmem:[%s0 + $0x138] sm:$0x88]
  %v7878 = vld [vmem:[%s0 + $0x150] sm:$0x88]
  %v7879 = vld [vmem:[%s0 + $0x158] sm:$0x88]
  %v7880 = vld [vmem:[%s0 + $0x170] sm:$0x88]
  %v7881 = vld [vmem:[%s0 + $0x178] sm:$0x88]
  %v7882 = vld [vmem:[%s0 + $0x190] sm:$0x88]
  %v7883 = vld [vmem:[%s0 + $0x198] sm:$0x88]
  %v7884 = vld [vmem:[%s0 + $0x1b0] sm:$0x88]
  %v7885 = vld [vmem:[%s0 + $0x1b8] sm:$0x88]
  %v7886 = vld [vmem:[%s0 + $0x1d0] sm:$0x88]
  %v7887 = vld [vmem:[%s0 + $0x1d8] sm:$0x88]
  %v7888 = vld [vmem:[%s0 + $0x1f0] sm:$0x88]
  %v7889 = vld [vmem:[%s0 + $0x1f8] sm:$0x88]
  %v7890 = vunpack.c.l.bf16 %v7858
  %v7891 = vunpack.c.h.bf16 %v7858
  %v7892 = vunpack.c.l.bf16 %v7859
  %v7893 = vunpack.c.h.bf16 %v7859
  %v7894 = vunpack.c.l.bf16 %v7860
  %v7895 = vunpack.c.h.bf16 %v7860
  %v7896 = vunpack.c.l.bf16 %v7861
  %v7897 = vunpack.c.h.bf16 %v7861
  %v7898 = vunpack.c.l.bf16 %v7862
  %v7899 = vunpack.c.h.bf16 %v7862
  %v7900 = vunpack.c.l.bf16 %v7863
  %v7901 = vunpack.c.h.bf16 %v7863
  %v7902 = vunpack.c.l.bf16 %v7864
  %v7903 = vunpack.c.h.bf16 %v7864
  %v7904 = vunpack.c.l.bf16 %v7865
  %v7905 = vunpack.c.h.bf16 %v7865
  %v7906 = vunpack.c.l.bf16 %v7866
  %v7907 = vunpack.c.h.bf16 %v7866
  %v7908 = vunpack.c.l.bf16 %v7867
  %v7909 = vunpack.c.h.bf16 %v7867
  %v7910 = vunpack.c.l.bf16 %v7868
  %v7911 = vunpack.c.h.bf16 %v7868
  %v7912 = vunpack.c.l.bf16 %v7869
  %v7913 = vunpack.c.h.bf16 %v7869
  %v7914 = vunpack.c.l.bf16 %v7870
  %v7915 = vunpack.c.h.bf16 %v7870
  %v7916 = vunpack.c.l.bf16 %v7871
  %v7917 = vunpack.c.h.bf16 %v7871
  %v7918 = vunpack.c.l.bf16 %v7872
  %v7919 = vunpack.c.h.bf16 %v7872
  %v7920 = vunpack.c.l.bf16 %v7873
  %v7921 = vunpack.c.h.bf16 %v7873
  %v7922 = vunpack.c.l.bf16 %v7874
  %v7923 = vunpack.c.h.bf16 %v7874
  %v7924 = vunpack.c.l.bf16 %v7875
  %v7925 = vunpack.c.h.bf16 %v7875
  %v7926 = vunpack.c.l.bf16 %v7876
  %v7927 = vunpack.c.h.bf16 %v7876
  %v7928 = vunpack.c.l.bf16 %v7877
  %v7929 = vunpack.c.h.bf16 %v7877
  %v7930 = vunpack.c.l.bf16 %v7878
  %v7931 = vunpack.c.h.bf16 %v7878
  %v7932 = vunpack.c.l.bf16 %v7879
  %v7933 = vunpack.c.h.bf16 %v7879
  %v7934 = vunpack.c.l.bf16 %v7880
  %v7935 = vunpack.c.h.bf16 %v7880
  %v7936 = vunpack.c.l.bf16 %v7881
  %v7937 = vunpack.c.h.bf16 %v7881
  %v7938 = vunpack.c.l.bf16 %v7882
  %v7939 = vunpack.c.h.bf16 %v7882
  %v7940 = vunpack.c.l.bf16 %v7883
  %v7941 = vunpack.c.h.bf16 %v7883
  %v7942 = vunpack.c.l.bf16 %v7884
  %v7943 = vunpack.c.h.bf16 %v7884
  %v7944 = vunpack.c.l.bf16 %v7885
  %v7945 = vunpack.c.h.bf16 %v7885
  %v7946 = vunpack.c.l.bf16 %v7886
  %v7947 = vunpack.c.h.bf16 %v7886
  %v7948 = vunpack.c.l.bf16 %v7887
  %v7949 = vunpack.c.h.bf16 %v7887
  %v7950 = vunpack.c.l.bf16 %v7888
  %v7951 = vunpack.c.h.bf16 %v7888
  %v7952 = vunpack.c.l.bf16 %v7889
  %v7953 = vunpack.c.h.bf16 %v7889
  %v8018 = vrot.slane %v7890, 7
  %v8019 = vrot.slane %v7894, 6
  %v8020 = vsel %vm377, %v8019, %v8018
  %v8021 = vrot.slane %v7898, 5
  %v8022 = vsel %vm380, %v8021, %v8020
  %v8023 = vrot.slane %v7902, 4
  %v8024 = vsel %vm383, %v8023, %v8022
  %v8025 = vrot.slane %v7906, 3
  %v8026 = vsel %vm386, %v8025, %v8024
  %v8027 = vrot.slane %v7910, 2
  %v8028 = vsel %vm389, %v8027, %v8026
  %v8029 = vrot.slane %v7914, 1
  %v8030 = vsel %vm392, %v8029, %v8028
  %v8031 = vsel %vm395, %v7918, %v8030
  %v8032 = vrot.slane %v7891, 7
  %v8033 = vrot.slane %v7895, 6
  %v8034 = vsel %vm377, %v8033, %v8032
  %v8035 = vrot.slane %v7899, 5
  %v8036 = vsel %vm380, %v8035, %v8034
  %v8037 = vrot.slane %v7903, 4
  %v8038 = vsel %vm383, %v8037, %v8036
  %v8039 = vrot.slane %v7907, 3
  %v8040 = vsel %vm386, %v8039, %v8038
  %v8041 = vrot.slane %v7911, 2
  %v8042 = vsel %vm389, %v8041, %v8040
  %v8043 = vrot.slane %v7915, 1
  %v8044 = vsel %vm392, %v8043, %v8042
  %v8045 = vsel %vm395, %v7919, %v8044
  %v8046 = vrot.slane %v7892, 7
  %v8047 = vrot.slane %v7896, 6
  %v8048 = vsel %vm377, %v8047, %v8046
  %v8049 = vrot.slane %v7900, 5
  %v8050 = vsel %vm380, %v8049, %v8048
  %v8051 = vrot.slane %v7904, 4
  %v8052 = vsel %vm383, %v8051, %v8050
  %v8053 = vrot.slane %v7908, 3
  %v8054 = vsel %vm386, %v8053, %v8052
  %v8055 = vrot.slane %v7912, 2
  %v8056 = vsel %vm389, %v8055, %v8054
  %v8057 = vrot.slane %v7916, 1
  %v8058 = vsel %vm392, %v8057, %v8056
  %v8059 = vsel %vm395, %v7920, %v8058
  %v8060 = vrot.slane %v7893, 7
  %v8061 = vrot.slane %v7897, 6
  %v8062 = vsel %vm377, %v8061, %v8060
  %v8063 = vrot.slane %v7901, 5
  %v8064 = vsel %vm380, %v8063, %v8062
  %v8065 = vrot.slane %v7905, 4
  %v8066 = vsel %vm383, %v8065, %v8064
  %v8067 = vrot.slane %v7909, 3
  %v8068 = vsel %vm386, %v8067, %v8066
  %v8069 = vrot.slane %v7913, 2
  %v8070 = vsel %vm389, %v8069, %v8068
  %v8071 = vrot.slane %v7917, 1
  %v8072 = vsel %vm392, %v8071, %v8070
  %v8073 = vsel %vm395, %v7921, %v8072
  %v8074 = vrot.slane %v7922, 7
  %v8075 = vrot.slane %v7926, 6
  %v8076 = vsel %vm377, %v8075, %v8074
  %v8077 = vrot.slane %v7930, 5
  %v8078 = vsel %vm380, %v8077, %v8076
  %v8079 = vrot.slane %v7934, 4
  %v8080 = vsel %vm383, %v8079, %v8078
  %v8081 = vrot.slane %v7938, 3
  %v8082 = vsel %vm386, %v8081, %v8080
  %v8083 = vrot.slane %v7942, 2
  %v8084 = vsel %vm389, %v8083, %v8082
  %v8085 = vrot.slane %v7946, 1
  %v8086 = vsel %vm392, %v8085, %v8084
  %v8087 = vsel %vm395, %v7950, %v8086
  %v8088 = vrot.slane %v7923, 7
  %v8089 = vrot.slane %v7927, 6
  %v8090 = vsel %vm377, %v8089, %v8088
  %v8091 = vrot.slane %v7931, 5
  %v8092 = vsel %vm380, %v8091, %v8090
  %v8093 = vrot.slane %v7935, 4
  %v8094 = vsel %vm383, %v8093, %v8092
  %v8095 = vrot.slane %v7939, 3
  %v8096 = vsel %vm386, %v8095, %v8094
  %v8097 = vrot.slane %v7943, 2
  %v8098 = vsel %vm389, %v8097, %v8096
  %v8099 = vrot.slane %v7947, 1
  %v8100 = vsel %vm392, %v8099, %v8098
  %v8101 = vsel %vm395, %v7951, %v8100
  %v8102 = vrot.slane %v7924, 7
  %v8103 = vrot.slane %v7928, 6
  %v8104 = vsel %vm377, %v8103, %v8102
  %v8105 = vrot.slane %v7932, 5
  %v8106 = vsel %vm380, %v8105, %v8104
  %v8107 = vrot.slane %v7936, 4
  %v8108 = vsel %vm383, %v8107, %v8106
  %v8109 = vrot.slane %v7940, 3
  %v8110 = vsel %vm386, %v8109, %v8108
  %v8111 = vrot.slane %v7944, 2
  %v8112 = vsel %vm389, %v8111, %v8110
  %v8113 = vrot.slane %v7948, 1
  %v8114 = vsel %vm392, %v8113, %v8112
  %v8115 = vsel %vm395, %v7952, %v8114
  %v8116 = vrot.slane %v7925, 7
  %v8117 = vrot.slane %v7929, 6
  %v8118 = vsel %vm377, %v8117, %v8116
  %v8119 = vrot.slane %v7933, 5
  %v8120 = vsel %vm380, %v8119, %v8118
  %v8121 = vrot.slane %v7937, 4
  %v8122 = vsel %vm383, %v8121, %v8120
  %v8123 = vrot.slane %v7941, 3
  %v8124 = vsel %vm386, %v8123, %v8122
  %v8125 = vrot.slane %v7945, 2
  %v8126 = vsel %vm389, %v8125, %v8124
  %v8127 = vrot.slane %v7949, 1
  %v8128 = vsel %vm392, %v8127, %v8126
  %v8129 = vsel %vm395, %v7953, %v8128
  %8138 = vmatpush.bf16.msra.mxu0 %v276
  %8139 = vmatpush.bf16.msra.mxu0 %v272
  %8140 = vmatpush.bf16.msra.mxu0 %v268
  %8141 = vmatpush.bf16.msra.mxu0 %v264
  %8142 = vmatpush.bf16.msra.mxu0 %v260
  %8143 = vmatpush.bf16.msra.mxu0 %v256
  %8144 = vmatpush.bf16.msra.mxu0 %v252
  %8145 = vmatpush.bf16.msra.mxu0 %v248
  %8146 = vmatmul.bf16.gmra.mxu0 %v7857
  %v8147 = vpop.f32.mrf.mxu0
  %v8148 = vadd.f32 %v8031, %v8147
  %v8149 = vpop.f32.mrf.mxu0
  %v8150 = vadd.f32 %v8087, %v8149
  %8151 = vdwg.mxu0
  %8152 = vmatpush.bf16.msra.mxu0 %v277
  %8153 = vmatpush.bf16.msra.mxu0 %v273
  %8154 = vmatpush.bf16.msra.mxu0 %v269
  %8155 = vmatpush.bf16.msra.mxu0 %v265
  %8156 = vmatpush.bf16.msra.mxu0 %v261
  %8157 = vmatpush.bf16.msra.mxu0 %v257
  %8158 = vmatpush.bf16.msra.mxu0 %v253
  %8159 = vmatpush.bf16.msra.mxu0 %v249
  %8160 = vmatmul.bf16.gmra.mxu0 %v7857
  %v8161 = vpop.f32.mrf.mxu0
  %v8162 = vadd.f32 %v8045, %v8161
  %v8163 = vpop.f32.mrf.mxu0
  %v8164 = vadd.f32 %v8101, %v8163
  %8165 = vdwg.mxu0
  %8166 = vmatpush.bf16.msra.mxu0 %v278
  %8167 = vmatpush.bf16.msra.mxu0 %v274
  %8168 = vmatpush.bf16.msra.mxu0 %v270
  %8169 = vmatpush.bf16.msra.mxu0 %v266
  %8170 = vmatpush.bf16.msra.mxu0 %v262
  %8171 = vmatpush.bf16.msra.mxu0 %v258
  %8172 = vmatpush.bf16.msra.mxu0 %v254
  %8173 = vmatpush.bf16.msra.mxu0 %v250
  %8174 = vmatmul.bf16.gmra.mxu0 %v7857
  %v8175 = vpop.f32.mrf.mxu0
  %v8176 = vadd.f32 %v8059, %v8175
  %v8177 = vpop.f32.mrf.mxu0
  %v8178 = vadd.f32 %v8115, %v8177
  %8179 = vdwg.mxu0
  %8180 = vmatpush.bf16.msra.mxu0 %v279
  %8181 = vmatpush.bf16.msra.mxu0 %v275
  %8182 = vmatpush.bf16.msra.mxu0 %v271
  %8183 = vmatpush.bf16.msra.mxu0 %v267
  %8184 = vmatpush.bf16.msra.mxu0 %v263
  %8185 = vmatpush.bf16.msra.mxu0 %v259
  %8186 = vmatpush.bf16.msra.mxu0 %v255
  %8187 = vmatpush.bf16.msra.mxu0 %v251
  %8188 = vmatmul.bf16.gmra.mxu0 %v7857
  %v8189 = vpop.f32.mrf.mxu0
  %v8190 = vadd.f32 %v8073, %v8189
  %v8191 = vpop.f32.mrf.mxu0
  %v8192 = vadd.f32 %v8129, %v8191
  %8193 = vdwg.mxu0
  %v8194 = vxor.u32 %v8148, 2147483648
  %v8195 = vxor.u32 %v8150, 2147483648
  %v8196 = vmul.f32 %v8194, 1.442695
  %v8197 = vpow.pop %v8196
  %v8198 = vmul.f32 %v8195, 1.442695
  %v8199 = vpow.pop %v8198
  %v8200 = vadd.f32 %v8197, 1.0
  %v8201 = vadd.f32 %v8199, 1.0
  %v8202 = vrcp.pop %v8200
  %v8203 = vmul.f32 %v8200, %v8202
  %v8204 = vsub.f32 1.0, %v8203
  %v8205 = vmul.f32 %v8202, %v8204
  %v8206 = vadd.f32 %v8202, %v8205
  %vm8207 = vweird.f32 %v8200
  %vm8208 = vweird.f32 %v8202
  %vm8209 = vmor %vm8207, %vm8208
  %v8210 = vsel %vm8209, %v8202, %v8206
  %v8211 = vand.u32 2147483647, %v8200
  %vm8212 = vcmp.eq.f32.partialorder %v8211, 8.507059e+37
  %v8213 = vand.u32 %v8200, 2147483648
  %v8214 = vor.u32 1.1754944e-38, %v8213
  %v8215 = vsel %vm8212, %v8214, %v8210
  %v8216 = vmul.f32 1.0, %v8215
  %v8217 = vrcp.pop %v8201
  %v8218 = vmul.f32 %v8201, %v8217
  %v8219 = vsub.f32 1.0, %v8218
  %v8220 = vmul.f32 %v8217, %v8219
  %v8221 = vadd.f32 %v8217, %v8220
  %vm8222 = vweird.f32 %v8201
  %vm8223 = vweird.f32 %v8217
  %vm8224 = vmor %vm8222, %vm8223
  %v8225 = vsel %vm8224, %v8217, %v8221
  %v8226 = vand.u32 2147483647, %v8201
  %vm8227 = vcmp.eq.f32.partialorder %v8226, 8.507059e+37
  %v8228 = vand.u32 %v8201, 2147483648
  %v8229 = vor.u32 1.1754944e-38, %v8228
  %v8230 = vsel %vm8227, %v8229, %v8225
  %v8231 = vmul.f32 1.0, %v8230
  %v8232 = vxor.u32 %v8162, 2147483648
  %v8233 = vxor.u32 %v8164, 2147483648
  %v8234 = vmul.f32 %v8232, 1.442695
  %v8235 = vpow.pop %v8234
  %v8236 = vmul.f32 %v8233, 1.442695
  %v8237 = vpow.pop %v8236
  %v8238 = vadd.f32 %v8235, 1.0
  %v8239 = vadd.f32 %v8237, 1.0
  %v8240 = vrcp.pop %v8238
  %v8241 = vmul.f32 %v8238, %v8240
  %v8242 = vsub.f32 1.0, %v8241
  %v8243 = vmul.f32 %v8240, %v8242
  %v8244 = vadd.f32 %v8240, %v8243
  %vm8245 = vweird.f32 %v8238
  %vm8246 = vweird.f32 %v8240
  %vm8247 = vmor %vm8245, %vm8246
  %v8248 = vsel %vm8247, %v8240, %v8244
  %v8249 = vand.u32 2147483647, %v8238
  %vm8250 = vcmp.eq.f32.partialorder %v8249, 8.507059e+37
  %v8251 = vand.u32 %v8238, 2147483648
  %v8252 = vor.u32 1.1754944e-38, %v8251
  %v8253 = vsel %vm8250, %v8252, %v8248
  %v8254 = vmul.f32 1.0, %v8253
  %v8255 = vrcp.pop %v8239
  %v8256 = vmul.f32 %v8239, %v8255
  %v8257 = vsub.f32 1.0, %v8256
  %v8258 = vmul.f32 %v8255, %v8257
  %v8259 = vadd.f32 %v8255, %v8258
  %vm8260 = vweird.f32 %v8239
  %vm8261 = vweird.f32 %v8255
  %vm8262 = vmor %vm8260, %vm8261
  %v8263 = vsel %vm8262, %v8255, %v8259
  %v8264 = vand.u32 2147483647, %v8239
  %vm8265 = vcmp.eq.f32.partialorder %v8264, 8.507059e+37
  %v8266 = vand.u32 %v8239, 2147483648
  %v8267 = vor.u32 1.1754944e-38, %v8266
  %v8268 = vsel %vm8265, %v8267, %v8263
  %v8269 = vmul.f32 1.0, %v8268
  %v8270 = vtanh.pop %v8176
  %v8271 = vtanh.pop %v8178
  %v8272 = vxor.u32 %v8190, 2147483648
  %v8273 = vxor.u32 %v8192, 2147483648
  %v8274 = vmul.f32 %v8272, 1.442695
  %v8275 = vpow.pop %v8274
  %v8276 = vmul.f32 %v8273, 1.442695
  %v8277 = vpow.pop %v8276
  %v8278 = vadd.f32 %v8275, 1.0
  %v8279 = vadd.f32 %v8277, 1.0
  %v8280 = vrcp.pop %v8278
  %v8281 = vmul.f32 %v8278, %v8280
  %v8282 = vsub.f32 1.0, %v8281
  %v8283 = vmul.f32 %v8280, %v8282
  %v8284 = vadd.f32 %v8280, %v8283
  %vm8285 = vweird.f32 %v8278
  %vm8286 = vweird.f32 %v8280
  %vm8287 = vmor %vm8285, %vm8286
  %v8288 = vsel %vm8287, %v8280, %v8284
  %v8289 = vand.u32 2147483647, %v8278
  %vm8290 = vcmp.eq.f32.partialorder %v8289, 8.507059e+37
  %v8291 = vand.u32 %v8278, 2147483648
  %v8292 = vor.u32 1.1754944e-38, %v8291
  %v8293 = vsel %vm8290, %v8292, %v8288
  %v8294 = vmul.f32 1.0, %v8293
  %v8295 = vrcp.pop %v8279
  %v8296 = vmul.f32 %v8279, %v8295
  %v8297 = vsub.f32 1.0, %v8296
  %v8298 = vmul.f32 %v8295, %v8297
  %v8299 = vadd.f32 %v8295, %v8298
  %vm8300 = vweird.f32 %v8279
  %vm8301 = vweird.f32 %v8295
  %vm8302 = vmor %vm8300, %vm8301
  %v8303 = vsel %vm8302, %v8295, %v8299
  %v8304 = vand.u32 2147483647, %v8279
  %vm8305 = vcmp.eq.f32.partialorder %v8304, 8.507059e+37
  %v8306 = vand.u32 %v8279, 2147483648
  %v8307 = vor.u32 1.1754944e-38, %v8306
  %v8308 = vsel %vm8305, %v8307, %v8303
  %v8309 = vmul.f32 1.0, %v8308
  %v8310 = vmul.f32 %v8254, %v7805
  %v8311 = vmul.f32 %v8269, %v7806
  %v8312 = vmul.f32 %v8216, %v8270
  %v8313 = vmul.f32 %v8231, %v8271
  %v8314 = vadd.f32 %v8310, %v8312
  %v8315 = vadd.f32 %v8311, %v8313
  %v8316 = vtanh.pop %v8314
  %v8317 = vtanh.pop %v8315
  %v8318 = vmul.f32 %v8294, %v8316
  %v8319 = vmul.f32 %v8309, %v8317
  %v8322 = vrot.slane %v8318, 1
  %v8323 = vrot.slane %v8318, 2
  %v8324 = vrot.slane %v8318, 3
  %v8325 = vrot.slane %v8318, 4
  %v8326 = vrot.slane %v8318, 5
  %v8327 = vrot.slane %v8318, 6
  %v8328 = vrot.slane %v8318, 7
  %v8329 = vrot.slane %v8319, 1
  %v8330 = vrot.slane %v8319, 2
  %v8331 = vrot.slane %v8319, 3
  %v8332 = vrot.slane %v8319, 4
  %v8333 = vrot.slane %v8319, 5
  %v8334 = vrot.slane %v8319, 6
  %v8335 = vrot.slane %v8319, 7
  %8350 = vst [vmem:[%s2 + $0xf] sm:$0x1] %v8318
  %8351 = vst [vmem:[%s2 + $0x1f] sm:$0x1] %v8322
  %8352 = vst [vmem:[%s2 + $0x2f] sm:$0x1] %v8323
  %8353 = vst [vmem:[%s2 + $0x3f] sm:$0x1] %v8324
  %8354 = vst [vmem:[%s2 + $0x4f] sm:$0x1] %v8325
  %8355 = vst [vmem:[%s2 + $0x5f] sm:$0x1] %v8326
  %8356 = vst [vmem:[%s2 + $0x6f] sm:$0x1] %v8327
  %8357 = vst [vmem:[%s2 + $0x7f] sm:$0x1] %v8328
  %8358 = vst [vmem:[%s2 + $0x8f] sm:$0x1] %v8319
  %8359 = vst [vmem:[%s2 + $0x9f] sm:$0x1] %v8329
  %8360 = vst [vmem:[%s2 + $0xaf] sm:$0x1] %v8330
  %8361 = vst [vmem:[%s2 + $0xbf] sm:$0x1] %v8331
  %8362 = vst [vmem:[%s2 + $0xcf] sm:$0x1] %v8332
  %8363 = vst [vmem:[%s2 + $0xdf] sm:$0x1] %v8333
  %8364 = vst [vmem:[%s2 + $0xef] sm:$0x1] %v8334
  %8365 = vst [vmem:[%s2 + $0xff] sm:$0x1] %v8335
  %8366 = vst [vmem:[#allocation2] sm:$0xff] %v8318
  %8367 = vst [vmem:[#allocation2 + $0x8] sm:$0xff] %v8319
  %8368 = vst [vmem:[#allocation3] sm:$0xff] %v8314
  %8369 = vst [vmem:[#allocation3 + $0x8] sm:$0xff] %v8315
  // Predicated region
  $region14: #{lstm_branch_forward.1} parent=0 // pred_check
    _
  $region15: #{lstm_branch_forward.1} parent=0 // pred_check_branch
    %8371 = sbr.rel (0) target = $region17
  $region16: #{lstm_branch_forward.1} parent=0 // pred_region
    _
  $region17: #{lstm_branch_forward.1} parent=0 // pred_fallthru
    _
  // Predicated region
  $region18: #{lstm_branch_forward.1} parent=0 // pred_check
    _
  $region19: #{lstm_branch_forward.1} parent=0 // pred_check_branch
    %8373 = sbr.rel (0) target = $region21
  $region20: #{lstm_branch_forward.1} parent=0 // pred_region
    _
  $region21: #{lstm_branch_forward.1} parent=0 // pred_fallthru
    _

</llo_original>
